<compile_context>
chip_gen: v5e
topology: v5e:2x2
jax: 0.10.0
libtpu: 0.0.40
codegen_flags: <defaults>
</compile_context>

<pallas_src>
import functools

import jax
import jax.numpy as jnp
from jax.experimental import pallas as pl
from jax.experimental.pallas import tpu as pltpu


# ------------------------------ Pallas kernels -------------------------------

def _dual_1x1_kernel(x_ref, w_ref, scale_ref, shift_ref, o0_ref, o1_ref):
    """relu((x @ [W_b0 | W_b1a]) * s + t), split into branch0 / branch1a."""
    acc = jnp.dot(x_ref[...], w_ref[...], preferred_element_type=jnp.float32)
    y = jnp.maximum(acc * scale_ref[...] + shift_ref[...], 0.0)
    c = o0_ref.shape[1]
    o0_ref[...] = y[:, :c].astype(o0_ref.dtype)
    o1_ref[...] = y[:, c:].astype(o1_ref.dtype)


def _branch1_kernel(y_ref, wb_ref, s2_ref, t2_ref, wc_ref, s3_ref, t3_ref, o_ref):
    """(1,7) conv -> BN+ReLU -> (7,1) conv -> BN+ReLU for one image.

    y_ref: (1, H, W+6, 128) bf16, already zero-padded along W.
    Each conv is one K=896 matmul: 7 shifted windows stacked along the lane
    axis; weights pre-flattened to (896, 128).  The intermediate stays in VMEM.
    """
    _, h, wp, cin = y_ref.shape
    w = wp - 6
    cout = o_ref.shape[-1]

    # --- (1,7) conv along W ---
    yp = y_ref[0]                                              # (h, w+6, cin) bf16
    stk = jnp.concatenate([yp[:, k:k + w, :] for k in range(7)], axis=-1)
    z = jnp.dot(stk.reshape(h * w, 7 * cin), wb_ref[...],
                preferred_element_type=jnp.float32)
    z = jnp.maximum(z * s2_ref[...] + t2_ref[...], 0.0)

    # --- (7,1) conv along H (zero pad built in VMEM, cast once to bf16) ---
    zimg = z.reshape(h, w, cout).astype(jnp.bfloat16)
    zhalo = jnp.zeros((3, w, cout), jnp.bfloat16)
    zpad = jnp.concatenate([zhalo, zimg, zhalo], axis=0)       # (h+6, w, cout)
    stk2 = jnp.concatenate([zpad[k:k + h, :, :] for k in range(7)], axis=-1)
    out = jnp.dot(stk2.reshape(h * w, 7 * cout), wc_ref[...],
                  preferred_element_type=jnp.float32)
    out = jnp.maximum(out * s3_ref[...] + t3_ref[...], 0.0)
    o_ref[0] = out.astype(o_ref.dtype)


def _tail_kernel(x_ref, x0_ref, x1_ref, a_ref, b_ref, c_ref,
                 w3ab_ref, w3c_ref, b3_ref, w2_ref, b2_ref, o_ref, *, scale):
    """SRM gate + conv3d + conv2d + scaled residual + ReLU for nb images."""
    x = x_ref[...]                                             # (nb, hw, 896) f32
    nb, hw, ch = x.shape
    denom = max(hw - 1, 1)                                     # torch unbiased var
    mean = jnp.mean(x, axis=1, keepdims=True)                  # (nb, 1, 896)
    var = jnp.sum((x - mean) ** 2, axis=1, keepdims=True) / denom
    std = jnp.sqrt(var + 1e-5)
    z = mean * a_ref[...] + std * b_ref[...] + c_ref[...]
    g = 1.0 / (1.0 + jnp.exp(-z))                              # sigmoid gate
    x2 = (x * g).astype(jnp.bfloat16).reshape(nb * hw, ch)

    # conv3d over cat(x0, x1, x2): one K=256 matmul + one K=896 matmul
    x01 = jnp.concatenate([x0_ref[...], x1_ref[...]], axis=-1)
    x01 = x01.reshape(nb * hw, x01.shape[-1])
    hmid = jnp.dot(x01, w3ab_ref[...], preferred_element_type=jnp.float32)
    hmid = hmid + jnp.dot(x2, w3c_ref[...], preferred_element_type=jnp.float32)
    hmid = hmid + b3_ref[...]

    out = jnp.dot(hmid.astype(jnp.bfloat16), w2_ref[...],
                  preferred_element_type=jnp.float32) + b2_ref[...]
    out = out * scale + x.reshape(nb * hw, ch)                 # residual
    o_ref[...] = jnp.maximum(out, 0.0).reshape(nb, hw, ch).astype(o_ref.dtype)


# --------------------------- pallas_call wrappers ----------------------------

def _cparams():
    # Single grid axis, independent blocks -> parallel (shards across TCs on v7x).
    # Per-program VMEM use is a few MiB; explicit limit leaves plenty of headroom.
    return pltpu.CompilerParams(dimension_semantics=("parallel",),
                                vmem_limit_bytes=64 * 1024 * 1024)


def _pick_block(m, candidates=(512, 256, 128, 64, 32, 16, 8)):
    """Largest candidate dividing m with >=2 grid steps; else cdiv-masked tile."""
    for c in candidates:
        if m % c == 0 and m // c >= 2:
            return c
    for c in candidates:
        if c < m:
            return c          # grid = cdiv(m, c); boundary block is masked
    return m


def dual_1x1(x, w, scale, shift):
    m, cin = x.shape
    cout = w.shape[1]
    half = cout // 2
    tm = _pick_block(m)
    cost = pl.CostEstimate(
        flops=2 * m * cin * cout, transcendentals=0,
        bytes_accessed=m * cin * 2 + cin * cout * 2 + m * cout * 2 + cout * 8)
    return pl.pallas_call(
        _dual_1x1_kernel,
        out_shape=(jax.ShapeDtypeStruct((m, half), jnp.bfloat16),   # branch0
                   jax.ShapeDtypeStruct((m, half), jnp.bfloat16)),  # branch1a
        grid=(pl.cdiv(m, tm),),
        in_specs=[pl.BlockSpec((tm, cin), lambda i: (i, 0)),
                  pl.BlockSpec((cin, cout), lambda i: (0, 0)),
                  pl.BlockSpec((1, cout), lambda i: (0, 0)),
                  pl.BlockSpec((1, cout), lambda i: (0, 0))],
        out_specs=(pl.BlockSpec((tm, half), lambda i: (i, 0)),
                   pl.BlockSpec((tm, half), lambda i: (i, 0))),
        compiler_params=_cparams(),
        cost_estimate=cost,
    )(x, w, scale.reshape(1, cout), shift.reshape(1, cout))


def branch1_convs(y_nhwc, wb, s2, t2, wc, s3, t3):
    # y_nhwc: (N, H, W, 128) bf16.  (1,7) conv then (7,1) conv, BN + ReLU each.
    n, h, w, cin = y_nhwc.shape
    cout = wc.shape[1]
    ypad = jnp.pad(y_nhwc, ((0, 0), (0, 0), (3, 3), (0, 0)))    # pad along W
    cost = pl.CostEstimate(
        flops=2 * n * h * w * cin * cout * 14, transcendentals=0,
        bytes_accessed=n * h * (w + 6) * cin * 2 + 14 * cin * cout * 2
        + n * h * w * cout * 2)
    return pl.pallas_call(
        _branch1_kernel,
        out_shape=jax.ShapeDtypeStruct((n, h * w, cout), jnp.bfloat16),
        grid=(n,),
        in_specs=[pl.BlockSpec((1, h, w + 6, cin), lambda i: (i, 0, 0, 0)),
                  pl.BlockSpec((7 * cin, cout), lambda i: (0, 0)),
                  pl.BlockSpec((1, cout), lambda i: (0, 0)),
                  pl.BlockSpec((1, cout), lambda i: (0, 0)),
                  pl.BlockSpec((7 * cout, cout), lambda i: (0, 0)),
                  pl.BlockSpec((1, cout), lambda i: (0, 0)),
                  pl.BlockSpec((1, cout), lambda i: (0, 0))],
        out_specs=pl.BlockSpec((1, h * w, cout), lambda i: (i, 0, 0)),
        compiler_params=_cparams(),
        cost_estimate=cost,
    )(ypad, wb, s2.reshape(1, cout), t2.reshape(1, cout),
      wc, s3.reshape(1, cout), t3.reshape(1, cout))


def tail_fused(x_nlc, x0_nlc, x1_nlc, a, b, c, w3ab, w3c, b3, w2, b2, scale):
    n, hw, ch = x_nlc.shape
    c1 = x0_nlc.shape[2]
    cmid = w3ab.shape[1]
    # batch images so matmul M >= 128 when possible, but keep >= 2 grid steps
    nb = max(1, min(max(1, n // 2), pl.cdiv(128, hw)))
    cost = pl.CostEstimate(
        flops=2 * n * hw * (2 * c1 * cmid + ch * cmid + cmid * ch),
        transcendentals=2 * n * ch,
        bytes_accessed=n * hw * (ch * 4 + 2 * c1 * 2 + ch * 4)
        + (2 * c1 * cmid + ch * cmid + cmid * ch) * 2)
    return pl.pallas_call(
        functools.partial(_tail_kernel, scale=float(scale)),
        out_shape=jax.ShapeDtypeStruct((n, hw, ch), jnp.float32),
        grid=(pl.cdiv(n, nb),),
        in_specs=[pl.BlockSpec((nb, hw, ch), lambda i: (i, 0, 0)),
                  pl.BlockSpec((nb, hw, c1), lambda i: (i, 0, 0)),
                  pl.BlockSpec((nb, hw, c1), lambda i: (i, 0, 0)),
                  pl.BlockSpec((1, ch), lambda i: (0, 0)),
                  pl.BlockSpec((1, ch), lambda i: (0, 0)),
                  pl.BlockSpec((1, ch), lambda i: (0, 0)),
                  pl.BlockSpec((2 * c1, cmid), lambda i: (0, 0)),
                  pl.BlockSpec((ch, cmid), lambda i: (0, 0)),
                  pl.BlockSpec((1, cmid), lambda i: (0, 0)),
                  pl.BlockSpec((cmid, ch), lambda i: (0, 0)),
                  pl.BlockSpec((1, ch), lambda i: (0, 0))],
        out_specs=pl.BlockSpec((nb, hw, ch), lambda i: (i, 0, 0)),
        compiler_params=_cparams(),
        cost_estimate=cost,
    )(x_nlc, x0_nlc, x1_nlc,
      a.reshape(1, ch), b.reshape(1, ch), c.reshape(1, ch),
      w3ab, w3c, b3.reshape(1, cmid), w2, b2.reshape(1, ch))


# ------------------------- parameter folding / prep --------------------------

def bn_fold(bn, eps):
    s = bn['gamma'] / jnp.sqrt(bn['rv'] + eps)
    return s, bn['beta'] - bn['rm'] * s


def prepare_params(p):
    """Fold eval-mode BN, concat the 1x1 convs, flatten 7-tap weights, bf16."""
    bf = jnp.bfloat16
    s0, t0 = bn_fold(p['b0_bn'], 1e-3)
    s1, t1 = bn_fold(p['b1a_bn'], 1e-3)
    s2, t2 = bn_fold(p['b1b_bn'], 1e-3)
    s3, t3 = bn_fold(p['b1c_bn'], 1e-3)
    inv = p['srm_bn']['gamma'] / jnp.sqrt(p['srm_bn']['rv'] + 1e-5)
    return dict(
        w01=jnp.concatenate([p['b0_w'], p['b1a_w']], axis=1).astype(bf),
        s01=jnp.concatenate([s0, s1]), t01=jnp.concatenate([t0, t1]),
        wb=p['b1b_w'].reshape(7 * 128, 128).astype(bf), s2=s2, t2=t2,
        wc=p['b1c_w'].reshape(7 * 128, 128).astype(bf), s3=s3, t3=t3,
        srm_a=p['cfc'][:, 0] * inv,
        srm_b=p['cfc'][:, 1] * inv,
        srm_c=p['srm_bn']['beta'] - p['srm_bn']['rm'] * inv,
        w3ab=p['w3d'][:256].astype(bf),    # rows for cat(x0 | x1) -> K=256 matmul
        w3c=p['w3d'][256:].astype(bf),     # rows for the SRM-gated input
        b3=p['b3d'],
        w2=p['w2d'].astype(bf), b2=p['b2d'])


# ------------------------------ Block17 forward -------------------------------

def block17_pallas(x_nchw, q, scale=1.0):
    n, c, h, w = x_nchw.shape
    m = n * h * w
    x_nlc = jnp.transpose(x_nchw, (0, 2, 3, 1)).reshape(n, h * w, c)   # NHWC f32
    xb = x_nlc.astype(jnp.bfloat16).reshape(m, c)

    # branch0 + branch1a fused 1x1 convs (folded BN + ReLU), both bf16
    x0, y = dual_1x1(xb, q['w01'], q['s01'], q['t01'])                 # (m,128) x2

    # branch1: (1,7) then (7,1) conv fused per image (intermediate stays in VMEM)
    x1 = branch1_convs(y.reshape(n, h, w, 128), q['wb'], q['s2'], q['t2'],
                       q['wc'], q['s3'], q['t3'])                      # (n,h*w,128)

    # SRM gate + conv3d + conv2d + scaled residual + ReLU, fused
    out = tail_fused(x_nlc, x0.reshape(n, h * w, 128), x1,
                     q['srm_a'], q['srm_b'], q['srm_c'],
                     q['w3ab'], q['w3c'], q['b3'], q['w2'], q['b2'], scale)
    return jnp.transpose(out.reshape(n, h, w, c), (0, 3, 1, 2))        # NCHW


# ----------------------------- pure-JAX reference -----------------------------

def block17_ref(x_nchw, q, scale=1.0):
    n, c, h, w = x_nchw.shape
    m = n * h * w
    bf, f32 = jnp.bfloat16, jnp.float32
    x_nlc = jnp.transpose(x_nchw, (0, 2, 3, 1)).reshape(n, h * w, c)
    xb = x_nlc.astype(bf).reshape(m, c)

    y01 = jnp.dot(xb, q['w01'], preferred_element_type=f32)
    y01 = jnp.maximum(y01 * q['s01'] + q['t01'], 0.0)
    x0 = y01[:, :128].astype(bf)
    y = y01[:, 128:].astype(bf)

    wb = q['wb'].reshape(7, 128, 128)
    yp = jnp.pad(y.reshape(n * h, w, 128), ((0, 0), (3, 3), (0, 0)))
    acc = jnp.zeros((m, 128), f32)
    for k in range(7):
        acc = acc + jnp.dot(yp[:, k:k + w, :].reshape(-1, 128),
                            wb[k], preferred_element_type=f32)
    z = jnp.maximum(acc * q['s2'] + q['t2'], 0.0).astype(bf)

    wc = q['wc'].reshape(7, 128, 128)
    zp = jnp.pad(z.reshape(n, h, w, 128), ((0, 0), (3, 3), (0, 0), (0, 0)))
    acc = jnp.zeros((m, 128), f32)
    for k in range(7):
        acc = acc + jnp.dot(zp[:, k:k + h].reshape(-1, 128),
                            wc[k], preferred_element_type=f32)
    x1 = jnp.maximum(acc * q['s3'] + q['t3'], 0.0).astype(bf)

    denom = max(h * w - 1, 1)
    mean = jnp.mean(x_nlc, axis=1, keepdims=True)
    var = jnp.sum((x_nlc - mean) ** 2, axis=1, keepdims=True) / denom
    std = jnp.sqrt(var + 1e-5)
    g = 1.0 / (1.0 + jnp.exp(-(mean * q['srm_a'] + std * q['srm_b'] + q['srm_c'])))
    x2 = (x_nlc * g).astype(bf).reshape(m, c)

    x01 = jnp.concatenate([x0, x1], axis=-1)
    hm = (jnp.dot(x01, q['w3ab'], preferred_element_type=f32)
          + jnp.dot(x2, q['w3c'], preferred_element_type=f32) + q['b3'])
    out = jnp.dot(hm.astype(bf), q['w2'], preferred_element_type=f32) + q['b2']
    out = jnp.maximum(out * scale + x_nlc.reshape(m, c), 0.0)
    return jnp.transpose(out.reshape(n, h, w, c), (0, 3, 1, 2))


# ------------------------------ parameter init --------------------------------

def init_params(key):
    keys = iter(jax.random.split(key, 32))

    def nrm(shape, std):
        return (std * jax.random.normal(next(keys), shape)).astype(jnp.float32)

    def bn_params(ch):
        return dict(gamma=1.0 + nrm((ch,), 0.1), beta=nrm((ch,), 0.1),
                    rm=nrm((ch,), 0.1), rv=1.0 + jnp.abs(nrm((ch,), 0.1)))

    p = {}
    p['b0_w'] = nrm((896, 128), 0.03);  p['b0_bn'] = bn_params(128)
    p['b1a_w'] = nrm((896, 128), 0.03); p['b1a_bn'] = bn_params(128)
    p['b1b_w'] = nrm((7, 128, 128), 0.03); p['b1b_bn'] = bn_params(128)   # (1,7)
    p['b1c_w'] = nrm((7, 128, 128), 0.03); p['b1c_bn'] = bn_params(128)   # (7,1)
    p['cfc'] = nrm((896, 2), 0.1)        # module fills with 0; random here
    p['srm_bn'] = bn_params(896)
    p['w3d'] = nrm((1152, 256), 0.03); p['b3d'] = nrm((256,), 0.05)
    p['w2d'] = nrm((256, 896), 0.03);  p['b2d'] = nrm((896,), 0.05)
    return p


# ------------------------------------ main -------------------------------------

if __name__ == "__main__":
    key = jax.random.PRNGKey(0)
    kx, kp = jax.random.split(key)
    N, C, H, W = 2, 896, 8, 8            # C=896 is fixed by Block17
    x = jax.random.normal(kx, (N, C, H, W), jnp.float32)
    q = prepare_params(init_params(kp))

    fwd = jax.jit(functools.partial(block17_pallas, scale=1.0))
    out = jax.block_until_ready(fwd(x, q))
    assert out.shape == (N, C, H, W)

    ref = block17_ref(x, q, scale=1.0)
    err = float(jnp.max(jnp.abs(out - ref)))
    if not bool(jnp.allclose(out, ref, atol=2e-2, rtol=2e-2)):
        raise SystemExit(f"mismatch vs pure-JAX reference: max abs err = {err}")
    print("KERNEL_OK")
</pallas_src>

<mosaic_0001>
module attributes {stable_mosaic.version = 11 : i64} {
  func.func @_dual_1x1_kernel(%arg0: i32, %arg1: memref<64x896xbf16, #tpu.memory_space<vmem>>, %arg2: memref<896x256xbf16, #tpu.memory_space<vmem>>, %arg3: memref<1x256xf32, #tpu.memory_space<vmem>>, %arg4: memref<1x256xf32, #tpu.memory_space<vmem>>, %arg5: memref<64x128xbf16, #tpu.memory_space<vmem>>, %arg6: memref<64x128xbf16, #tpu.memory_space<vmem>>) attributes {dimension_semantics = [#tpu.dimension_semantics<parallel>], iteration_bounds = array<i64: 2>, scalar_prefetch = 0 : i64, scratch_operands = 0 : i64, tpu.core_type = #tpu.core_type<tc>, window_params = [{transform_indices = @transform_0, window_bounds = array<i64: 64, 896>}, {pipeline_mode = #tpu.pipeline_mode<synchronous>, transform_indices = @transform_1, window_bounds = array<i64: 896, 256>}, {pipeline_mode = #tpu.pipeline_mode<synchronous>, transform_indices = @transform_2, window_bounds = array<i64: 1, 256>}, {pipeline_mode = #tpu.pipeline_mode<synchronous>, transform_indices = @transform_3, window_bounds = array<i64: 1, 256>}, {transform_indices = @transform_4, window_bounds = array<i64: 64, 128>}, {transform_indices = @transform_5, window_bounds = array<i64: 64, 128>}]} {
    %c0 = arith.constant 0 : index
    %c0_0 = arith.constant 0 : index
    %0 = vector.load %arg1[%c0, %c0_0] : memref<64x896xbf16, #tpu.memory_space<vmem>>, vector<64x896xbf16>
    %c0_1 = arith.constant 0 : index
    %c0_2 = arith.constant 0 : index
    %1 = vector.load %arg2[%c0_1, %c0_2] : memref<896x256xbf16, #tpu.memory_space<vmem>>, vector<896x256xbf16>
    %cst = arith.constant dense<0.000000e+00> : vector<64x256xf32>
    %2 = tpu.matmul %0, %1, %cst {dimension_numbers = #tpu.dot_dimension_numbers<[1], [0], [0], [1], [0, 0, 1, 1], [], []>} : vector<64x896xbf16>, vector<896x256xbf16>, vector<64x256xf32> -> vector<64x256xf32>
    %c0_3 = arith.constant 0 : index
    %c0_4 = arith.constant 0 : index
    %3 = vector.load %arg3[%c0_3, %c0_4] : memref<1x256xf32, #tpu.memory_space<vmem>>, vector<1x256xf32>
    %4 = vector.broadcast %3 : vector<1x256xf32> to vector<64x256xf32>
    %5 = arith.mulf %2, %4 : vector<64x256xf32>
    %c0_5 = arith.constant 0 : index
    %c0_6 = arith.constant 0 : index
    %6 = vector.load %arg4[%c0_5, %c0_6] : memref<1x256xf32, #tpu.memory_space<vmem>>, vector<1x256xf32>
    %7 = vector.broadcast %6 : vector<1x256xf32> to vector<64x256xf32>
    %8 = arith.addf %5, %7 : vector<64x256xf32>
    %cst_7 = arith.constant 0.000000e+00 : f32
    %9 = vector.broadcast %cst_7 : f32 to vector<64x256xf32>
    %10 = arith.maximumf %8, %9 : vector<64x256xf32>
    %11 = vector.extract_strided_slice %10 {offsets = [0, 0], sizes = [64, 128], strides = [1, 1]} : vector<64x256xf32> to vector<64x128xf32>
    %12 = arith.truncf %11 : vector<64x128xf32> to vector<64x128xbf16>
    %c0_8 = arith.constant 0 : index
    %c0_9 = arith.constant 0 : index
    %13 = vector.load %arg5[%c0_8, %c0_9] : memref<64x128xbf16, #tpu.memory_space<vmem>>, vector<64x128xbf16>
    tpu.vector_store %arg5[%c0_8, %c0_9], %12 {strides = array<i32>} : memref<64x128xbf16, #tpu.memory_space<vmem>>, vector<64x128xbf16>,
    %14 = vector.extract_strided_slice %10 {offsets = [0, 128], sizes = [64, 128], strides = [1, 1]} : vector<64x256xf32> to vector<64x128xf32>
    %15 = arith.truncf %14 : vector<64x128xf32> to vector<64x128xbf16>
    %c0_10 = arith.constant 0 : index
    %c0_11 = arith.constant 0 : index
    %16 = vector.load %arg6[%c0_10, %c0_11] : memref<64x128xbf16, #tpu.memory_space<vmem>>, vector<64x128xbf16>
    tpu.vector_store %arg6[%c0_10, %c0_11], %15 {strides = array<i32>} : memref<64x128xbf16, #tpu.memory_space<vmem>>, vector<64x128xbf16>,
    return
  }
  func.func @transform_0(%arg0: i32) -> (i32, i32) {
    %c0_i32 = arith.constant 0 : i32
    %c0_i32_0 = arith.constant 0 : i32
    return %arg0, %c0_i32 : i32, i32
  }
  func.func @transform_1(%arg0: i32) -> (i32, i32) {
    %c0_i32 = arith.constant 0 : i32
    %c0_i32_0 = arith.constant 0 : i32
    %c0_i32_1 = arith.constant 0 : i32
    return %c0_i32, %c0_i32_0 : i32, i32
  }
  func.func @transform_2(%arg0: i32) -> (i32, i32) {
    %c0_i32 = arith.constant 0 : i32
    %c0_i32_0 = arith.constant 0 : i32
    %c0_i32_1 = arith.constant 0 : i32
    return %c0_i32, %c0_i32_0 : i32, i32
  }
  func.func @transform_3(%arg0: i32) -> (i32, i32) {
    %c0_i32 = arith.constant 0 : i32
    %c0_i32_0 = arith.constant 0 : i32
    %c0_i32_1 = arith.constant 0 : i32
    return %c0_i32, %c0_i32_0 : i32, i32
  }
  func.func @transform_4(%arg0: i32) -> (i32, i32) {
    %c0_i32 = arith.constant 0 : i32
    %c0_i32_0 = arith.constant 0 : i32
    return %arg0, %c0_i32 : i32, i32
  }
  func.func @transform_5(%arg0: i32) -> (i32, i32) {
    %c0_i32 = arith.constant 0 : i32
    %c0_i32_0 = arith.constant 0 : i32
    return %arg0, %c0_i32 : i32, i32
  }
}

module attributes {stable_mosaic.version = 11 : i64} {
  func.func @_tail_kernel(%arg0: i32, %arg1: memref<1x64x896xf32, #tpu.memory_space<vmem>>, %arg2: memref<1x64x128xbf16, #tpu.memory_space<vmem>>, %arg3: memref<1x64x128xbf16, #tpu.memory_space<vmem>>, %arg4: memref<1x896xf32, #tpu.memory_space<vmem>>, %arg5: memref<1x896xf32, #tpu.memory_space<vmem>>, %arg6: memref<1x896xf32, #tpu.memory_space<vmem>>, %arg7: memref<256x256xbf16, #tpu.memory_space<vmem>>, %arg8: memref<896x256xbf16, #tpu.memory_space<vmem>>, %arg9: memref<1x256xf32, #tpu.memory_space<vmem>>, %arg10: memref<256x896xbf16, #tpu.memory_space<vmem>>, %arg11: memref<1x896xf32, #tpu.memory_space<vmem>>, %arg12: memref<1x64x896xf32, #tpu.memory_space<vmem>>) attributes {dimension_semantics = [#tpu.dimension_semantics<parallel>], iteration_bounds = array<i64: 2>, scalar_prefetch = 0 : i64, scratch_operands = 0 : i64, tpu.core_type = #tpu.core_type<tc>, window_params = [{transform_indices = @transform_0, window_bounds = array<i64: 1, 64, 896>}, {transform_indices = @transform_1, window_bounds = array<i64: 1, 64, 128>}, {transform_indices = @transform_2, window_bounds = array<i64: 1, 64, 128>}, {pipeline_mode = #tpu.pipeline_mode<synchronous>, transform_indices = @transform_3, window_bounds = array<i64: 1, 896>}, {pipeline_mode = #tpu.pipeline_mode<synchronous>, transform_indices = @transform_4, window_bounds = array<i64: 1, 896>}, {pipeline_mode = #tpu.pipeline_mode<synchronous>, transform_indices = @transform_5, window_bounds = array<i64: 1, 896>}, {pipeline_mode = #tpu.pipeline_mode<synchronous>, transform_indices = @transform_6, window_bounds = array<i64: 256, 256>}, {pipeline_mode = #tpu.pipeline_mode<synchronous>, transform_indices = @transform_7, window_bounds = array<i64: 896, 256>}, {pipeline_mode = #tpu.pipeline_mode<synchronous>, transform_indices = @transform_8, window_bounds = array<i64: 1, 256>}, {pipeline_mode = #tpu.pipeline_mode<synchronous>, transform_indices = @transform_9, window_bounds = array<i64: 256, 896>}, {pipeline_mode = #tpu.pipeline_mode<synchronous>, transform_indices = @transform_10, window_bounds = array<i64: 1, 896>}, {transform_indices = @transform_11, window_bounds = array<i64: 1, 64, 896>}]} {
    %c0 = arith.constant 0 : index
    %c0_0 = arith.constant 0 : index
    %c0_1 = arith.constant 0 : index
    %0 = vector.load %arg1[%c0, %c0_0, %c0_1] : memref<1x64x896xf32, #tpu.memory_space<vmem>>, vector<1x64x896xf32>
    %cst = arith.constant dense<0.000000e+00> : vector<1x896xf32>
    %1 = vector.multi_reduction <add>, %0, %cst [1] : vector<1x64x896xf32> to vector<1x896xf32>
    %2 = vector.shape_cast %1 : vector<1x896xf32> to vector<1x1x896xf32>
    %cst_2 = arith.constant 6.400000e+01 : f32
    %3 = vector.broadcast %cst_2 : f32 to vector<1x1x896xf32>
    %4 = arith.divf %2, %3 : vector<1x1x896xf32>
    %5 = vector.broadcast %4 : vector<1x1x896xf32> to vector<1x64x896xf32>
    %6 = arith.subf %0, %5 : vector<1x64x896xf32>
    %7 = arith.mulf %6, %6 : vector<1x64x896xf32>
    %cst_3 = arith.constant dense<0.000000e+00> : vector<1x896xf32>
    %8 = vector.multi_reduction <add>, %7, %cst_3 [1] : vector<1x64x896xf32> to vector<1x896xf32>
    %9 = vector.shape_cast %8 : vector<1x896xf32> to vector<1x1x896xf32>
    %cst_4 = arith.constant 6.300000e+01 : f32
    %10 = vector.broadcast %cst_4 : f32 to vector<1x1x896xf32>
    %11 = arith.divf %9, %10 : vector<1x1x896xf32>
    %cst_5 = arith.constant 9.99999974E-6 : f32
    %12 = vector.broadcast %cst_5 : f32 to vector<1x1x896xf32>
    %13 = arith.addf %11, %12 : vector<1x1x896xf32>
    %14 = math.sqrt %13 : vector<1x1x896xf32>
    %c0_6 = arith.constant 0 : index
    %c0_7 = arith.constant 0 : index
    %15 = vector.load %arg4[%c0_6, %c0_7] : memref<1x896xf32, #tpu.memory_space<vmem>>, vector<1x896xf32>
    %16 = vector.shape_cast %15 : vector<1x896xf32> to vector<1x1x896xf32>
    %17 = arith.mulf %4, %16 : vector<1x1x896xf32>
    %c0_8 = arith.constant 0 : index
    %c0_9 = arith.constant 0 : index
    %18 = vector.load %arg5[%c0_8, %c0_9] : memref<1x896xf32, #tpu.memory_space<vmem>>, vector<1x896xf32>
    %19 = vector.shape_cast %18 : vector<1x896xf32> to vector<1x1x896xf32>
    %20 = arith.mulf %14, %19 : vector<1x1x896xf32>
    %21 = arith.addf %17, %20 : vector<1x1x896xf32>
    %c0_10 = arith.constant 0 : index
    %c0_11 = arith.constant 0 : index
    %22 = vector.load %arg6[%c0_10, %c0_11] : memref<1x896xf32, #tpu.memory_space<vmem>>, vector<1x896xf32>
    %23 = vector.shape_cast %22 : vector<1x896xf32> to vector<1x1x896xf32>
    %24 = arith.addf %21, %23 : vector<1x1x896xf32>
    %cst_12 = arith.constant 0.000000e+00 : f32
    %25 = vector.broadcast %cst_12 : f32 to vector<1x1x896xf32>
    %26 = arith.subf %25, %24 : vector<1x1x896xf32>
    %27 = math.exp %26 : vector<1x1x896xf32>
    %cst_13 = arith.constant 1.000000e+00 : f32
    %28 = vector.broadcast %cst_13 : f32 to vector<1x1x896xf32>
    %29 = arith.addf %28, %27 : vector<1x1x896xf32>
    %cst_14 = arith.constant 1.000000e+00 : f32
    %30 = vector.broadcast %cst_14 : f32 to vector<1x1x896xf32>
    %31 = arith.divf %30, %29 : vector<1x1x896xf32>
    %32 = vector.broadcast %31 : vector<1x1x896xf32> to vector<1x64x896xf32>
    %33 = arith.mulf %0, %32 : vector<1x64x896xf32>
    %34 = arith.truncf %33 : vector<1x64x896xf32> to vector<1x64x896xbf16>
    %35 = vector.shape_cast %34 : vector<1x64x896xbf16> to vector<64x896xbf16>
    %c0_15 = arith.constant 0 : index
    %c0_16 = arith.constant 0 : index
    %c0_17 = arith.constant 0 : index
    %36 = vector.load %arg2[%c0_15, %c0_16, %c0_17] : memref<1x64x128xbf16, #tpu.memory_space<vmem>>, vector<1x64x128xbf16>
    %c0_18 = arith.constant 0 : index
    %c0_19 = arith.constant 0 : index
    %c0_20 = arith.constant 0 : index
    %37 = vector.load %arg3[%c0_18, %c0_19, %c0_20] : memref<1x64x128xbf16, #tpu.memory_space<vmem>>, vector<1x64x128xbf16>
    %38 = tpu.concatenate %36, %37 in 2 : vector<1x64x128xbf16>, vector<1x64x128xbf16> -> vector<1x64x256xbf16>
    %39 = vector.shape_cast %38 : vector<1x64x256xbf16> to vector<64x256xbf16>
    %c0_21 = arith.constant 0 : index
    %c0_22 = arith.constant 0 : index
    %40 = vector.load %arg7[%c0_21, %c0_22] : memref<256x256xbf16, #tpu.memory_space<vmem>>, vector<256x256xbf16>
    %cst_23 = arith.constant dense<0.000000e+00> : vector<64x256xf32>
    %41 = tpu.matmul %39, %40, %cst_23 {dimension_numbers = #tpu.dot_dimension_numbers<[1], [0], [0], [1], [0, 0, 1, 1], [], []>} : vector<64x256xbf16>, vector<256x256xbf16>, vector<64x256xf32> -> vector<64x256xf32>
    %c0_24 = arith.constant 0 : index
    %c0_25 = arith.constant 0 : index
    %42 = vector.load %arg8[%c0_24, %c0_25] : memref<896x256xbf16, #tpu.memory_space<vmem>>, vector<896x256xbf16>
    %cst_26 = arith.constant dense<0.000000e+00> : vector<64x256xf32>
    %43 = tpu.matmul %35, %42, %cst_26 {dimension_numbers = #tpu.dot_dimension_numbers<[1], [0], [0], [1], [0, 0, 1, 1], [], []>} : vector<64x896xbf16>, vector<896x256xbf16>, vector<64x256xf32> -> vector<64x256xf32>
    %44 = arith.addf %41, %43 : vector<64x256xf32>
    %c0_27 = arith.constant 0 : index
    %c0_28 = arith.constant 0 : index
    %45 = vector.load %arg9[%c0_27, %c0_28] : memref<1x256xf32, #tpu.memory_space<vmem>>, vector<1x256xf32>
    %46 = vector.broadcast %45 : vector<1x256xf32> to vector<64x256xf32>
    %47 = arith.addf %44, %46 : vector<64x256xf32>
    %48 = arith.truncf %47 : vector<64x256xf32> to vector<64x256xbf16>
    %c0_29 = arith.constant 0 : index
    %c0_30 = arith.constant 0 : index
    %49 = vector.load %arg10[%c0_29, %c0_30] : memref<256x896xbf16, #tpu.memory_space<vmem>>, vector<256x896xbf16>
    %cst_31 = arith.constant dense<0.000000e+00> : vector<64x896xf32>
    %50 = tpu.matmul %48, %49, %cst_31 {dimension_numbers = #tpu.dot_dimension_numbers<[1], [0], [0], [1], [0, 0, 1, 1], [], []>} : vector<64x256xbf16>, vector<256x896xbf16>, vector<64x896xf32> -> vector<64x896xf32>
    %c0_32 = arith.constant 0 : index
    %c0_33 = arith.constant 0 : index
    %51 = vector.load %arg11[%c0_32, %c0_33] : memref<1x896xf32, #tpu.memory_space<vmem>>, vector<1x896xf32>
    %52 = vector.broadcast %51 : vector<1x896xf32> to vector<64x896xf32>
    %53 = arith.addf %50, %52 : vector<64x896xf32>
    %cst_34 = arith.constant 1.000000e+00 : f32
    %54 = vector.broadcast %cst_34 : f32 to vector<64x896xf32>
    %55 = arith.mulf %53, %54 : vector<64x896xf32>
    %56 = vector.shape_cast %0 : vector<1x64x896xf32> to vector<64x896xf32>
    %57 = arith.addf %55, %56 : vector<64x896xf32>
    %cst_35 = arith.constant 0.000000e+00 : f32
    %58 = vector.broadcast %cst_35 : f32 to vector<64x896xf32>
    %59 = arith.maximumf %57, %58 : vector<64x896xf32>
    %60 = vector.shape_cast %59 : vector<64x896xf32> to vector<1x64x896xf32>
    %c0_36 = arith.constant 0 : index
    %c0_37 = arith.constant 0 : index
    %c0_38 = arith.constant 0 : index
    %61 = vector.load %arg12[%c0_36, %c0_37, %c0_38] : memref<1x64x896xf32, #tpu.memory_space<vmem>>, vector<1x64x896xf32>
    tpu.vector_store %arg12[%c0_36, %c0_37, %c0_38], %60 {strides = array<i32>} : memref<1x64x896xf32, #tpu.memory_space<vmem>>, vector<1x64x896xf32>,
    return
  }
  func.func @transform_0(%arg0: i32) -> (i32, i32, i32) {
    %c0_i32 = arith.constant 0 : i32
    %c0_i32_0 = arith.constant 0 : i32
    %c0_i32_1 = arith.constant 0 : i32
    return %arg0, %c0_i32, %c0_i32_0 : i32, i32, i32
  }
  func.func @transform_1(%arg0: i32) -> (i32, i32, i32) {
    %c0_i32 = arith.constant 0 : i32
    %c0_i32_0 = arith.constant 0 : i32
    %c0_i32_1 = arith.constant 0 : i32
    return %arg0, %c0_i32, %c0_i32_0 : i32, i32, i32
  }
  func.func @transform_2(%arg0: i32) -> (i32, i32, i32) {
    %c0_i32 = arith.constant 0 : i32
    %c0_i32_0 = arith.constant 0 : i32
    %c0_i32_1 = arith.constant 0 : i32
    return %arg0, %c0_i32, %c0_i32_0 : i32, i32, i32
  }
  func.func @transform_3(%arg0: i32) -> (i32, i32) {
    %c0_i32 = arith.constant 0 : i32
    %c0_i32_0 = arith.constant 0 : i32
    %c0_i32_1 = arith.constant 0 : i32
    return %c0_i32, %c0_i32_0 : i32, i32
  }
  func.func @transform_4(%arg0: i32) -> (i32, i32) {
    %c0_i32 = arith.constant 0 : i32
    %c0_i32_0 = arith.constant 0 : i32
    %c0_i32_1 = arith.constant 0 : i32
    return %c0_i32, %c0_i32_0 : i32, i32
  }
  func.func @transform_5(%arg0: i32) -> (i32, i32) {
    %c0_i32 = arith.constant 0 : i32
    %c0_i32_0 = arith.constant 0 : i32
    %c0_i32_1 = arith.constant 0 : i32
    return %c0_i32, %c0_i32_0 : i32, i32
  }
  func.func @transform_6(%arg0: i32) -> (i32, i32) {
    %c0_i32 = arith.constant 0 : i32
    %c0_i32_0 = arith.constant 0 : i32
    %c0_i32_1 = arith.constant 0 : i32
    return %c0_i32, %c0_i32_0 : i32, i32
  }
  func.func @transform_7(%arg0: i32) -> (i32, i32) {
    %c0_i32 = arith.constant 0 : i32
    %c0_i32_0 = arith.constant 0 : i32
    %c0_i32_1 = arith.constant 0 : i32
    return %c0_i32, %c0_i32_0 : i32, i32
  }
  func.func @transform_8(%arg0: i32) -> (i32, i32) {
    %c0_i32 = arith.constant 0 : i32
    %c0_i32_0 = arith.constant 0 : i32
    %c0_i32_1 = arith.constant 0 : i32
    return %c0_i32, %c0_i32_0 : i32, i32
  }
  func.func @transform_9(%arg0: i32) -> (i32, i32) {
    %c0_i32 = arith.constant 0 : i32
    %c0_i32_0 = arith.constant 0 : i32
    %c0_i32_1 = arith.constant 0 : i32
    return %c0_i32, %c0_i32_0 : i32, i32
  }
  func.func @transform_10(%arg0: i32) -> (i32, i32) {
    %c0_i32 = arith.constant 0 : i32
    %c0_i32_0 = arith.constant 0 : i32
    %c0_i32_1 = arith.constant 0 : i32
    return %c0_i32, %c0_i32_0 : i32, i32
  }
  func.func @transform_11(%arg0: i32) -> (i32, i32, i32) {
    %c0_i32 = arith.constant 0 : i32
    %c0_i32_0 = arith.constant 0 : i32
    %c0_i32_1 = arith.constant 0 : i32
    return %arg0, %c0_i32, %c0_i32_0 : i32, i32, i32
  }
}

module attributes {stable_mosaic.version = 11 : i64} {
  func.func @_branch1_kernel(%arg0: i32, %arg1: memref<1x8x14x128xbf16, #tpu.memory_space<vmem>>, %arg2: memref<896x128xbf16, #tpu.memory_space<vmem>>, %arg3: memref<1x128xf32, #tpu.memory_space<vmem>>, %arg4: memref<1x128xf32, #tpu.memory_space<vmem>>, %arg5: memref<896x128xbf16, #tpu.memory_space<vmem>>, %arg6: memref<1x128xf32, #tpu.memory_space<vmem>>, %arg7: memref<1x128xf32, #tpu.memory_space<vmem>>, %arg8: memref<1x64x128xbf16, #tpu.memory_space<vmem>>) attributes {dimension_semantics = [#tpu.dimension_semantics<parallel>], iteration_bounds = array<i64: 2>, scalar_prefetch = 0 : i64, scratch_operands = 0 : i64, tpu.core_type = #tpu.core_type<tc>, window_params = [{transform_indices = @transform_0, window_bounds = array<i64: 1, 8, 14, 128>}, {pipeline_mode = #tpu.pipeline_mode<synchronous>, transform_indices = @transform_1, window_bounds = array<i64: 896, 128>}, {pipeline_mode = #tpu.pipeline_mode<synchronous>, transform_indices = @transform_2, window_bounds = array<i64: 1, 128>}, {pipeline_mode = #tpu.pipeline_mode<synchronous>, transform_indices = @transform_3, window_bounds = array<i64: 1, 128>}, {pipeline_mode = #tpu.pipeline_mode<synchronous>, transform_indices = @transform_4, window_bounds = array<i64: 896, 128>}, {pipeline_mode = #tpu.pipeline_mode<synchronous>, transform_indices = @transform_5, window_bounds = array<i64: 1, 128>}, {pipeline_mode = #tpu.pipeline_mode<synchronous>, transform_indices = @transform_6, window_bounds = array<i64: 1, 128>}, {transform_indices = @transform_7, window_bounds = array<i64: 1, 64, 128>}]} {
    %c0 = arith.constant 0 : index
    %c0_0 = arith.constant 0 : index
    %c0_1 = arith.constant 0 : index
    %c0_2 = arith.constant 0 : index
    %0 = vector.load %arg1[%c0, %c0_0, %c0_1, %c0_2] : memref<1x8x14x128xbf16, #tpu.memory_space<vmem>>, vector<1x8x14x128xbf16>
    %1 = vector.shape_cast %0 : vector<1x8x14x128xbf16> to vector<8x14x128xbf16>
    %2 = vector.extract_strided_slice %1 {offsets = [0, 0, 0], sizes = [8, 8, 128], strides = [1, 1, 1]} : vector<8x14x128xbf16> to vector<8x8x128xbf16>
    %3 = vector.extract_strided_slice %1 {offsets = [0, 1, 0], sizes = [8, 8, 128], strides = [1, 1, 1]} : vector<8x14x128xbf16> to vector<8x8x128xbf16>
    %4 = vector.extract_strided_slice %1 {offsets = [0, 2, 0], sizes = [8, 8, 128], strides = [1, 1, 1]} : vector<8x14x128xbf16> to vector<8x8x128xbf16>
    %5 = vector.extract_strided_slice %1 {offsets = [0, 3, 0], sizes = [8, 8, 128], strides = [1, 1, 1]} : vector<8x14x128xbf16> to vector<8x8x128xbf16>
    %6 = vector.extract_strided_slice %1 {offsets = [0, 4, 0], sizes = [8, 8, 128], strides = [1, 1, 1]} : vector<8x14x128xbf16> to vector<8x8x128xbf16>
    %7 = vector.extract_strided_slice %1 {offsets = [0, 5, 0], sizes = [8, 8, 128], strides = [1, 1, 1]} : vector<8x14x128xbf16> to vector<8x8x128xbf16>
    %8 = vector.extract_strided_slice %1 {offsets = [0, 6, 0], sizes = [8, 8, 128], strides = [1, 1, 1]} : vector<8x14x128xbf16> to vector<8x8x128xbf16>
    %9 = tpu.concatenate %2, %3, %4, %5, %6, %7, %8 in 2 : vector<8x8x128xbf16>, vector<8x8x128xbf16>, vector<8x8x128xbf16>, vector<8x8x128xbf16>, vector<8x8x128xbf16>, vector<8x8x128xbf16>, vector<8x8x128xbf16> -> vector<8x8x896xbf16>
    %10 = vector.shape_cast %9 : vector<8x8x896xbf16> to vector<64x896xbf16>
    %c0_3 = arith.constant 0 : index
    %c0_4 = arith.constant 0 : index
    %11 = vector.load %arg2[%c0_3, %c0_4] : memref<896x128xbf16, #tpu.memory_space<vmem>>, vector<896x128xbf16>
    %cst = arith.constant dense<0.000000e+00> : vector<64x128xf32>
    %12 = tpu.matmul %10, %11, %cst {dimension_numbers = #tpu.dot_dimension_numbers<[1], [0], [0], [1], [0, 0, 1, 1], [], []>} : vector<64x896xbf16>, vector<896x128xbf16>, vector<64x128xf32> -> vector<64x128xf32>
    %c0_5 = arith.constant 0 : index
    %c0_6 = arith.constant 0 : index
    %13 = vector.load %arg3[%c0_5, %c0_6] : memref<1x128xf32, #tpu.memory_space<vmem>>, vector<1x128xf32>
    %14 = vector.broadcast %13 : vector<1x128xf32> to vector<64x128xf32>
    %15 = arith.mulf %12, %14 : vector<64x128xf32>
    %c0_7 = arith.constant 0 : index
    %c0_8 = arith.constant 0 : index
    %16 = vector.load %arg4[%c0_7, %c0_8] : memref<1x128xf32, #tpu.memory_space<vmem>>, vector<1x128xf32>
    %17 = vector.broadcast %16 : vector<1x128xf32> to vector<64x128xf32>
    %18 = arith.addf %15, %17 : vector<64x128xf32>
    %cst_9 = arith.constant 0.000000e+00 : f32
    %19 = vector.broadcast %cst_9 : f32 to vector<64x128xf32>
    %20 = arith.maximumf %18, %19 : vector<64x128xf32>
    %21 = vector.shape_cast %20 : vector<64x128xf32> to vector<8x8x128xf32>
    %22 = arith.truncf %21 : vector<8x8x128xf32> to vector<8x8x128xbf16>
    %cst_10 = arith.constant 0.000000e+00 : bf16
    %23 = vector.broadcast %cst_10 : bf16 to vector<3x8x128xbf16>
    %24 = tpu.concatenate %23, %22, %23 in 0 : vector<3x8x128xbf16>, vector<8x8x128xbf16>, vector<3x8x128xbf16> -> vector<14x8x128xbf16>
    %25 = vector.extract_strided_slice %24 {offsets = [0, 0, 0], sizes = [8, 8, 128], strides = [1, 1, 1]} : vector<14x8x128xbf16> to vector<8x8x128xbf16>
    %26 = vector.extract_strided_slice %24 {offsets = [1, 0, 0], sizes = [8, 8, 128], strides = [1, 1, 1]} : vector<14x8x128xbf16> to vector<8x8x128xbf16>
    %27 = vector.extract_strided_slice %24 {offsets = [2, 0, 0], sizes = [8, 8, 128], strides = [1, 1, 1]} : vector<14x8x128xbf16> to vector<8x8x128xbf16>
    %28 = vector.extract_strided_slice %24 {offsets = [3, 0, 0], sizes = [8, 8, 128], strides = [1, 1, 1]} : vector<14x8x128xbf16> to vector<8x8x128xbf16>
    %29 = vector.extract_strided_slice %24 {offsets = [4, 0, 0], sizes = [8, 8, 128], strides = [1, 1, 1]} : vector<14x8x128xbf16> to vector<8x8x128xbf16>
    %30 = vector.extract_strided_slice %24 {offsets = [5, 0, 0], sizes = [8, 8, 128], strides = [1, 1, 1]} : vector<14x8x128xbf16> to vector<8x8x128xbf16>
    %31 = vector.extract_strided_slice %24 {offsets = [6, 0, 0], sizes = [8, 8, 128], strides = [1, 1, 1]} : vector<14x8x128xbf16> to vector<8x8x128xbf16>
    %32 = tpu.concatenate %25, %26, %27, %28, %29, %30, %31 in 2 : vector<8x8x128xbf16>, vector<8x8x128xbf16>, vector<8x8x128xbf16>, vector<8x8x128xbf16>, vector<8x8x128xbf16>, vector<8x8x128xbf16>, vector<8x8x128xbf16> -> vector<8x8x896xbf16>
    %33 = vector.shape_cast %32 : vector<8x8x896xbf16> to vector<64x896xbf16>
    %c0_11 = arith.constant 0 : index
    %c0_12 = arith.constant 0 : index
    %34 = vector.load %arg5[%c0_11, %c0_12] : memref<896x128xbf16, #tpu.memory_space<vmem>>, vector<896x128xbf16>
    %cst_13 = arith.constant dense<0.000000e+00> : vector<64x128xf32>
    %35 = tpu.matmul %33, %34, %cst_13 {dimension_numbers = #tpu.dot_dimension_numbers<[1], [0], [0], [1], [0, 0, 1, 1], [], []>} : vector<64x896xbf16>, vector<896x128xbf16>, vector<64x128xf32> -> vector<64x128xf32>
    %c0_14 = arith.constant 0 : index
    %c0_15 = arith.constant 0 : index
    %36 = vector.load %arg6[%c0_14, %c0_15] : memref<1x128xf32, #tpu.memory_space<vmem>>, vector<1x128xf32>
    %37 = vector.broadcast %36 : vector<1x128xf32> to vector<64x128xf32>
    %38 = arith.mulf %35, %37 : vector<64x128xf32>
    %c0_16 = arith.constant 0 : index
    %c0_17 = arith.constant 0 : index
    %39 = vector.load %arg7[%c0_16, %c0_17] : memref<1x128xf32, #tpu.memory_space<vmem>>, vector<1x128xf32>
    %40 = vector.broadcast %39 : vector<1x128xf32> to vector<64x128xf32>
    %41 = arith.addf %38, %40 : vector<64x128xf32>
    %cst_18 = arith.constant 0.000000e+00 : f32
    %42 = vector.broadcast %cst_18 : f32 to vector<64x128xf32>
    %43 = arith.maximumf %41, %42 : vector<64x128xf32>
    %44 = arith.truncf %43 : vector<64x128xf32> to vector<64x128xbf16>
    %c0_19 = arith.constant 0 : index
    %c0_20 = arith.constant 0 : index
    %c0_21 = arith.constant 0 : index
    %45 = vector.load %arg8[%c0_19, %c0_20, %c0_21] : memref<1x64x128xbf16, #tpu.memory_space<vmem>>, vector<1x64x128xbf16>
    %46 = vector.shape_cast %45 : vector<1x64x128xbf16> to vector<64x128xbf16>
    %47 = vector.shape_cast %44 : vector<64x128xbf16> to vector<1x64x128xbf16>
    tpu.vector_store %arg8[%c0_19, %c0_20, %c0_21], %47 {strides = array<i32>} : memref<1x64x128xbf16, #tpu.memory_space<vmem>>, vector<1x64x128xbf16>,
    return
  }
  func.func @transform_0(%arg0: i32) -> (i32, i32, i32, i32) {
    %c0_i32 = arith.constant 0 : i32
    %c0_i32_0 = arith.constant 0 : i32
    %c0_i32_1 = arith.constant 0 : i32
    %c0_i32_2 = arith.constant 0 : i32
    return %arg0, %c0_i32, %c0_i32_0, %c0_i32_1 : i32, i32, i32, i32
  }
  func.func @transform_1(%arg0: i32) -> (i32, i32) {
    %c0_i32 = arith.constant 0 : i32
    %c0_i32_0 = arith.constant 0 : i32
    %c0_i32_1 = arith.constant 0 : i32
    return %c0_i32, %c0_i32_0 : i32, i32
  }
  func.func @transform_2(%arg0: i32) -> (i32, i32) {
    %c0_i32 = arith.constant 0 : i32
    %c0_i32_0 = arith.constant 0 : i32
    %c0_i32_1 = arith.constant 0 : i32
    return %c0_i32, %c0_i32_0 : i32, i32
  }
  func.func @transform_3(%arg0: i32) -> (i32, i32) {
    %c0_i32 = arith.constant 0 : i32
    %c0_i32_0 = arith.constant 0 : i32
    %c0_i32_1 = arith.constant 0 : i32
    return %c0_i32, %c0_i32_0 : i32, i32
  }
  func.func @transform_4(%arg0: i32) -> (i32, i32) {
    %c0_i32 = arith.constant 0 : i32
    %c0_i32_0 = arith.constant 0 : i32
    %c0_i32_1 = arith.constant 0 : i32
    return %c0_i32, %c0_i32_0 : i32, i32
  }
  func.func @transform_5(%arg0: i32) -> (i32, i32) {
    %c0_i32 = arith.constant 0 : i32
    %c0_i32_0 = arith.constant 0 : i32
    %c0_i32_1 = arith.constant 0 : i32
    return %c0_i32, %c0_i32_0 : i32, i32
  }
  func.func @transform_6(%arg0: i32) -> (i32, i32) {
    %c0_i32 = arith.constant 0 : i32
    %c0_i32_0 = arith.constant 0 : i32
    %c0_i32_1 = arith.constant 0 : i32
    return %c0_i32, %c0_i32_0 : i32, i32
  }
  func.func @transform_7(%arg0: i32) -> (i32, i32, i32) {
    %c0_i32 = arith.constant 0 : i32
    %c0_i32_0 = arith.constant 0 : i32
    %c0_i32_1 = arith.constant 0 : i32
    return %arg0, %c0_i32, %c0_i32_0 : i32, i32, i32
  }
}

</mosaic_0001>

<llo_original>
// kernel: block17_pallas.3
$region0: #{block17_pallas.3}
  #allocation0 [shape = 'u32[]', space=smem, size = 0x4, offset = 0x4, fixed_abs, tag = 'smem constant byte address 0x4 - core index']
  #allocation1 [shape = 'u32[72,128]{1,0:T(1,128)}', space=vmem, size = 0x9000, scoped, tag = 'internal scratch']
  %s0 = inlined_call_operand.vmem [shape: bf16[128,896], index: 0, kind: input, shape index: {}]
  %s1 = inlined_call_operand.vmem [shape: bf16[896,256], index: 1, kind: input, shape index: {}]
  %s2 = inlined_call_operand.vmem [shape: f32[1,256], index: 2, kind: input, shape index: {}]
  %s3 = inlined_call_operand.vmem [shape: f32[1,256], index: 3, kind: input, shape index: {}]
  %s4 = inlined_call_operand.vmem [shape: bf16[128,128], index: 4, kind: output, shape index: {0}]
  %s5 = inlined_call_operand.vmem [shape: bf16[128,128], index: 5, kind: output, shape index: {1}]
  %6 = xla_tuple %s4, %s5
  %s7 = sld [smem:[#allocation0]]
  $region57: #{block17_pallas.3} parent=0
    _
  %s9 = ssub.s32 1, %s7
  %s10 = scalar_select 0, %s9, %s7
  loop: start=0, step=1, limit=4
  $region2: #{block17_pallas.3} parent=0 // loop_pre_header
    _
  $region3: #{block17_pallas.3} parent=0 // loop_header
    %s12 = sphi 0, %s16
    %p13 = scmp.ge.s32.totalorder %s12, 4
    %s22 = sphi 0, %s24
    %s25 = sphi 0, %s22
    %s26 = sphi 0, %s25
    %s42 = sphi 0, %s26
    %s46 = sphi 0, %s46
    %s48 = sphi 0, %s46
    %s49 = sphi 0, %s48
    %s63 = sphi 0, %s49
    %s67 = sphi 0, %s67
    %s69 = sphi 0, %s67
    %s70 = sphi 0, %s69
    %s84 = sphi 0, %s70
    %s88 = sphi 0, %s88
    %s90 = sphi 0, %s88
    %s91 = sphi 0, %s90
    %s105 = sphi 0, %s91
    %s111 = sphi 0, %s113
    %s114 = sphi 0, %s111
    %s115 = sphi 0, %s114
    %s131 = sphi 0, %s115
    %s137 = sphi 0, %s139
    %s140 = sphi 0, %s137
    %s141 = sphi 0, %s140
    %s157 = sphi 0, %s141
  $region4: #{block17_pallas.3} parent=0 // loop_header_branch
    %15 = sbr.rel (%p13) target = $region8
  $region5: #{block17_pallas.3} parent=0 // loop_body
    %s17 = ssub.s32 %s12, 1
    %s18 = ssub.s32 %s12, 2
    %s19 = sadd.s32 %s12, 1
    %s20 = ssub.s32 %s12, %s19
    %p21 = scmp.eq.s32.totalorder %s20, 0
    %s23 = sadd.s32 %s22, 1
    %s24 = scalar_select %p21, %s22, %s23
    %p27 = pneg %p21
    %p28 = scmp.eq.s32.totalorder %s12, 1
    %p29 = por %p27, %p28
    %p30 = scmp.ne.s32.totalorder %s22, %s25
    %p31 = scmp.eq.s32.totalorder %s12, 0
    %p32 = por %p30, %p31
    %p33 = scmp.ne.s32.totalorder %s22, %s25
    %p34 = scmp.eq.s32.totalorder %s17, 1
    %p35 = por %p33, %p34
    %p36 = scmp.ne.s32.totalorder %s25, %s26
    %p37 = scmp.eq.s32.totalorder %s17, 0
    %p38 = por %p36, %p37
    %p39 = scmp.ne.s32.totalorder %s25, %s26
    %p40 = scmp.eq.s32.totalorder %s18, 1
    %p41 = por %p39, %p40
    %p43 = scmp.ne.s32.totalorder %s26, %s42
    %p44 = scmp.eq.s32.totalorder %s18, 0
    %p45 = por %p43, %p44
    %s47 = sadd.s32 %s46, 1
    %p50 = scmp.eq.s32.totalorder %s12, 1
    %p51 = scmp.ne.s32.totalorder %s46, %s48
    %p52 = scmp.eq.s32.totalorder %s12, 0
    %p53 = por %p51, %p52
    %p54 = scmp.ne.s32.totalorder %s46, %s48
    %p55 = scmp.eq.s32.totalorder %s17, 1
    %p56 = por %p54, %p55
    %p57 = scmp.ne.s32.totalorder %s48, %s49
    %p58 = scmp.eq.s32.totalorder %s17, 0
    %p59 = por %p57, %p58
    %p60 = scmp.ne.s32.totalorder %s48, %s49
    %p61 = scmp.eq.s32.totalorder %s18, 1
    %p62 = por %p60, %p61
    %p64 = scmp.ne.s32.totalorder %s49, %s63
    %p65 = scmp.eq.s32.totalorder %s18, 0
    %p66 = por %p64, %p65
    %s68 = sadd.s32 %s67, 1
    %p71 = scmp.eq.s32.totalorder %s12, 1
    %p72 = scmp.ne.s32.totalorder %s67, %s69
    %p73 = scmp.eq.s32.totalorder %s12, 0
    %p74 = por %p72, %p73
    %p75 = scmp.ne.s32.totalorder %s67, %s69
    %p76 = scmp.eq.s32.totalorder %s17, 1
    %p77 = por %p75, %p76
    %p78 = scmp.ne.s32.totalorder %s69, %s70
    %p79 = scmp.eq.s32.totalorder %s17, 0
    %p80 = por %p78, %p79
    %p81 = scmp.ne.s32.totalorder %s69, %s70
    %p82 = scmp.eq.s32.totalorder %s18, 1
    %p83 = por %p81, %p82
    %p85 = scmp.ne.s32.totalorder %s70, %s84
    %p86 = scmp.eq.s32.totalorder %s18, 0
    %p87 = por %p85, %p86
    %s89 = sadd.s32 %s88, 1
    %p92 = scmp.eq.s32.totalorder %s12, 1
    %p93 = scmp.ne.s32.totalorder %s88, %s90
    %p94 = scmp.eq.s32.totalorder %s12, 0
    %p95 = por %p93, %p94
    %p96 = scmp.ne.s32.totalorder %s88, %s90
    %p97 = scmp.eq.s32.totalorder %s17, 1
    %p98 = por %p96, %p97
    %p99 = scmp.ne.s32.totalorder %s90, %s91
    %p100 = scmp.eq.s32.totalorder %s17, 0
    %p101 = por %p99, %p100
    %p102 = scmp.ne.s32.totalorder %s90, %s91
    %p103 = scmp.eq.s32.totalorder %s18, 1
    %p104 = por %p102, %p103
    %p106 = scmp.ne.s32.totalorder %s91, %s105
    %p107 = scmp.eq.s32.totalorder %s18, 0
    %p108 = por %p106, %p107
    %s109 = ssub.s32 %s12, %s19
    %p110 = scmp.eq.s32.totalorder %s109, 0
    %s112 = sadd.s32 %s111, 1
    %s113 = scalar_select %p110, %s111, %s112
    %p116 = pneg %p110
    %p117 = scmp.eq.s32.totalorder %s12, 1
    %p118 = por %p116, %p117
    %p119 = scmp.ne.s32.totalorder %s111, %s114
    %p120 = scmp.eq.s32.totalorder %s12, 0
    %p121 = por %p119, %p120
    %p122 = scmp.ne.s32.totalorder %s111, %s114
    %p123 = scmp.eq.s32.totalorder %s17, 1
    %p124 = por %p122, %p123
    %p125 = scmp.ne.s32.totalorder %s114, %s115
    %p126 = scmp.eq.s32.totalorder %s17, 0
    %p127 = por %p125, %p126
    %p128 = scmp.ne.s32.totalorder %s114, %s115
    %p129 = scmp.eq.s32.totalorder %s18, 1
    %p130 = por %p128, %p129
    %p132 = scmp.ne.s32.totalorder %s115, %s131
    %p133 = scmp.eq.s32.totalorder %s18, 0
    %p134 = por %p132, %p133
    %s135 = ssub.s32 %s12, %s19
    %p136 = scmp.eq.s32.totalorder %s135, 0
    %s138 = sadd.s32 %s137, 1
    %s139 = scalar_select %p136, %s137, %s138
    %p142 = pneg %p136
    %p143 = scmp.eq.s32.totalorder %s12, 1
    %p144 = por %p142, %p143
    %p145 = scmp.ne.s32.totalorder %s137, %s140
    %p146 = scmp.eq.s32.totalorder %s12, 0
    %p147 = por %p145, %p146
    %p148 = scmp.ne.s32.totalorder %s137, %s140
    %p149 = scmp.eq.s32.totalorder %s17, 1
    %p150 = por %p148, %p149
    %p151 = scmp.ne.s32.totalorder %s140, %s141
    %p152 = scmp.eq.s32.totalorder %s17, 0
    %p153 = por %p151, %p152
    %p154 = scmp.ne.s32.totalorder %s140, %s141
    %p155 = scmp.eq.s32.totalorder %s18, 1
    %p156 = por %p154, %p155
    %p158 = scmp.ne.s32.totalorder %s141, %s157
    %p159 = scmp.eq.s32.totalorder %s18, 0
    %p160 = por %p158, %p159
    %p161 = scmp.le.s32.totalorder 1, %s12
    %p162 = scmp.lt.s32.totalorder %s12, 3
    %p163 = pnand %p161, %p162
    %p164 = pneg %p163
    // Predicated region
    $region9: #{block17_pallas.3} parent=5 // pred_check
      _
    $region10: #{block17_pallas.3} parent=5 // pred_check_branch
      %166 = sbr.rel (%p163) target = $region12
    $region11: #{block17_pallas.3} parent=5 // pred_region
      %s167 = ssub.s32 %s12, 1
      // Predicated region
      $region13: #{block17_pallas.3} parent=11 // pred_check
        %p168 = pneg %p59
      $region14: #{block17_pallas.3} parent=11 // pred_check_branch
        %170 = sbr.rel (%p168) target = $region16
      $region15: #{block17_pallas.3} parent=11 // pred_region
        _
      $region16: #{block17_pallas.3} parent=11 // pred_fallthru
        _
      // Predicated region
      $region17: #{block17_pallas.3} parent=11 // pred_check
        %p171 = pneg %p80
      $region18: #{block17_pallas.3} parent=11 // pred_check_branch
        %173 = sbr.rel (%p171) target = $region20
      $region19: #{block17_pallas.3} parent=11 // pred_region
        _
      $region20: #{block17_pallas.3} parent=11 // pred_fallthru
        _
      // Predicated region
      $region21: #{block17_pallas.3} parent=11 // pred_check
        %p174 = pneg %p101
      $region22: #{block17_pallas.3} parent=11 // pred_check_branch
        %176 = sbr.rel (%p174) target = $region24
      $region23: #{block17_pallas.3} parent=11 // pred_region
        _
      $region24: #{block17_pallas.3} parent=11 // pred_fallthru
        _
    $region12: #{block17_pallas.3} parent=5 // pred_fallthru
      _
    %p177 = scmp.lt.s32.totalorder %s12, 2
    // Predicated region
    $region25: #{block17_pallas.3} parent=5 // pred_check
      %p178 = pneg %p177
    $region26: #{block17_pallas.3} parent=5 // pred_check_branch
      %180 = sbr.rel (%p178) target = $region28
    $region27: #{block17_pallas.3} parent=5 // pred_region
      // Predicated region
      $region29: #{block17_pallas.3} parent=27 // pred_check
        %p181 = pneg %p32
      $region30: #{block17_pallas.3} parent=27 // pred_check_branch
        %183 = sbr.rel (%p181) target = $region32
      $region31: #{block17_pallas.3} parent=27 // pred_region
        %s184 = smul.u32 8, %s12
        %p185 = scmp.lt.s32.totalorder %s184, 15
        %s186 = scalar_select %p185, %s184, 15
        %s187 = smul.addr %s186, 7
        %s188 = smul.addr %s187, 4
        %s189 = scalar_lea.vmem %s0, %s188
        %s190 = smul.u32 8, %s12
      $region32: #{block17_pallas.3} parent=27 // pred_fallthru
        _
    $region28: #{block17_pallas.3} parent=5 // pred_fallthru
      _
    %p191 = scmp.le.s32.totalorder 1, %s12
    %p192 = scmp.lt.s32.totalorder %s12, 3
    %p193 = pnand %p191, %p192
    %p194 = pneg %p193
    // Predicated region
    $region33: #{block17_pallas.3} parent=5 // pred_check
      _
    $region34: #{block17_pallas.3} parent=5 // pred_check_branch
      %196 = sbr.rel (%p193) target = $region36
    $region35: #{block17_pallas.3} parent=5 // pred_region
      %s197 = ssub.s32 %s12, 1
      %s198 = smul.u32 8, %s17
      %p199 = scmp.lt.s32.totalorder %s198, 15
      %s200 = scalar_select %p199, %s198, 15
      %s201 = smul.addr %s200, 7
      %s202 = smul.addr %s201, 4
      %s203 = scalar_lea.vmem %s0, %s202
      %p204 = pneg %p38
      %p205 = pneg %p35
      %p206 = pneg %p59
      %p207 = pneg %p56
      %p208 = pneg %p80
      %p209 = pneg %p77
      %p210 = pneg %p101
      %p211 = pneg %p98
      %p212 = pneg %p127
      %p213 = pneg %p124
      %s214 = smul.u32 8, %s17
      %p215 = scmp.lt.s32.totalorder %s214, 15
      %s216 = scalar_select %p215, %s214, 15
      %s217 = smul.addr %s216, 4
      %s218 = scalar_lea.vmem %s4, %s217
      %p219 = pneg %p153
      %p220 = pneg %p150
      %s221 = smul.u32 8, %s17
      %p222 = scmp.lt.s32.totalorder %s221, 15
      %s223 = scalar_select %p222, %s221, 15
      %s224 = smul.addr %s223, 4
      %s225 = scalar_lea.vmem %s5, %s224
      %s226 = smul.u32 8, %s17
      %p227 = scmp.lt.s32.totalorder %s226, 15
      %s228 = scalar_select %p227, %s226, 15
      %s229 = smul.addr %s228, 7
      %s230 = smul.addr %s229, 4
      %s231 = scalar_lea.vmem %s0, %s230
      %s232 = smul.u32 8, %s17
      %s233 = smul.u32 8, %s17
      %p234 = scmp.lt.s32.totalorder %s233, 15
      %s235 = scalar_select %p234, %s233, 15
      %s236 = smul.addr %s235, 4
      %s237 = scalar_lea.vmem %s4, %s236
      %s238 = smul.u32 8, %s17
      %s239 = smul.u32 8, %s17
      %p240 = scmp.lt.s32.totalorder %s239, 15
      %s241 = scalar_select %p240, %s239, 15
      %s242 = smul.addr %s241, 4
      %s243 = scalar_lea.vmem %s5, %s242
      %s244 = smul.u32 8, %s17
      %v245 = vld [vmem:[%s231] sm:$0xff]
      %v246 = vld [vmem:[%s231 + $0x8] sm:$0xff]
      %v247 = vld [vmem:[%s231 + $0x10] sm:$0xff]
      %v248 = vld [vmem:[%s231 + $0x18] sm:$0xf]
      %v249 = vld [vmem:[%s231 + $0x1c] sm:$0xff]
      %v250 = vld [vmem:[%s231 + $0x24] sm:$0xff]
      %v251 = vld [vmem:[%s231 + $0x2c] sm:$0xff]
      %v252 = vld [vmem:[%s231 + $0x34] sm:$0xf]
      %v253 = vld [vmem:[%s231 + $0x38] sm:$0xff]
      %v254 = vld [vmem:[%s231 + $0x40] sm:$0xff]
      %v255 = vld [vmem:[%s231 + $0x48] sm:$0xff]
      %v256 = vld [vmem:[%s231 + $0x50] sm:$0xf]
      %v257 = vld [vmem:[%s231 + $0x54] sm:$0xff]
      %v258 = vld [vmem:[%s231 + $0x5c] sm:$0xff]
      %v259 = vld [vmem:[%s231 + $0x64] sm:$0xff]
      %v260 = vld [vmem:[%s231 + $0x6c] sm:$0xf]
      %v261 = vld [vmem:[%s231 + $0x70] sm:$0xff]
      %v262 = vld [vmem:[%s231 + $0x78] sm:$0xff]
      %v263 = vld [vmem:[%s231 + $0x80] sm:$0xff]
      %v264 = vld [vmem:[%s231 + $0x88] sm:$0xf]
      %v265 = vld [vmem:[%s231 + $0x8c] sm:$0xff]
      %v266 = vld [vmem:[%s231 + $0x94] sm:$0xff]
      %v267 = vld [vmem:[%s231 + $0x9c] sm:$0xff]
      %v268 = vld [vmem:[%s231 + $0xa4] sm:$0xf]
      %v269 = vld [vmem:[%s231 + $0xa8] sm:$0xff]
      %v270 = vld [vmem:[%s231 + $0xb0] sm:$0xff]
      %v271 = vld [vmem:[%s231 + $0xb8] sm:$0xff]
      %v272 = vld [vmem:[%s231 + $0xc0] sm:$0xf]
      %v273 = vld [vmem:[%s231 + $0xc4] sm:$0xff]
      %v274 = vld [vmem:[%s231 + $0xcc] sm:$0xff]
      %v275 = vld [vmem:[%s231 + $0xd4] sm:$0xff]
      %v276 = vld [vmem:[%s231 + $0xdc] sm:$0xf]
      %v277 = vld [vmem:[%s1] sm:$0xff]
      %v278 = vld [vmem:[%s1 + $0x8] sm:$0xff]
      %v279 = vld [vmem:[%s1 + $0x10] sm:$0xff]
      %v280 = vld [vmem:[%s1 + $0x18] sm:$0xff]
      %v281 = vld [vmem:[%s1 + $0x20] sm:$0xff]
      %v282 = vld [vmem:[%s1 + $0x28] sm:$0xff]
      %v283 = vld [vmem:[%s1 + $0x30] sm:$0xff]
      %v284 = vld [vmem:[%s1 + $0x38] sm:$0xff]
      %v285 = vld [vmem:[%s1 + $0x40] sm:$0xff]
      %v286 = vld [vmem:[%s1 + $0x48] sm:$0xff]
      %v287 = vld [vmem:[%s1 + $0x50] sm:$0xff]
      %v288 = vld [vmem:[%s1 + $0x58] sm:$0xff]
      %v289 = vld [vmem:[%s1 + $0x60] sm:$0xff]
      %v290 = vld [vmem:[%s1 + $0x68] sm:$0xff]
      %v291 = vld [vmem:[%s1 + $0x70] sm:$0xff]
      %v292 = vld [vmem:[%s1 + $0x78] sm:$0xff]
      %v293 = vld [vmem:[%s1 + $0x80] sm:$0xff]
      %v294 = vld [vmem:[%s1 + $0x88] sm:$0xff]
      %v295 = vld [vmem:[%s1 + $0x90] sm:$0xff]
      %v296 = vld [vmem:[%s1 + $0x98] sm:$0xff]
      %v297 = vld [vmem:[%s1 + $0xa0] sm:$0xff]
      %v298 = vld [vmem:[%s1 + $0xa8] sm:$0xff]
      %v299 = vld [vmem:[%s1 + $0xb0] sm:$0xff]
      %v300 = vld [vmem:[%s1 + $0xb8] sm:$0xff]
      %v301 = vld [vmem:[%s1 + $0xc0] sm:$0xff]
      %v302 = vld [vmem:[%s1 + $0xc8] sm:$0xff]
      %v303 = vld [vmem:[%s1 + $0xd0] sm:$0xff]
      %v304 = vld [vmem:[%s1 + $0xd8] sm:$0xff]
      %v305 = vld [vmem:[%s1 + $0xe0] sm:$0xff]
      %v306 = vld [vmem:[%s1 + $0xe8] sm:$0xff]
      %v307 = vld [vmem:[%s1 + $0xf0] sm:$0xff]
      %v308 = vld [vmem:[%s1 + $0xf8] sm:$0xff]
      %v309 = vld [vmem:[%s1 + $0x100] sm:$0xff]
      %v310 = vld [vmem:[%s1 + $0x108] sm:$0xff]
      %v311 = vld [vmem:[%s1 + $0x110] sm:$0xff]
      %v312 = vld [vmem:[%s1 + $0x118] sm:$0xff]
      %v313 = vld [vmem:[%s1 + $0x120] sm:$0xff]
      %v314 = vld [vmem:[%s1 + $0x128] sm:$0xff]
      %v315 = vld [vmem:[%s1 + $0x130] sm:$0xff]
      %v316 = vld [vmem:[%s1 + $0x138] sm:$0xff]
      %v317 = vld [vmem:[%s1 + $0x140] sm:$0xff]
      %v318 = vld [vmem:[%s1 + $0x148] sm:$0xff]
      %v319 = vld [vmem:[%s1 + $0x150] sm:$0xff]
      %v320 = vld [vmem:[%s1 + $0x158] sm:$0xff]
      %v321 = vld [vmem:[%s1 + $0x160] sm:$0xff]
      %v322 = vld [vmem:[%s1 + $0x168] sm:$0xff]
      %v323 = vld [vmem:[%s1 + $0x170] sm:$0xff]
      %v324 = vld [vmem:[%s1 + $0x178] sm:$0xff]
      %v325 = vld [vmem:[%s1 + $0x180] sm:$0xff]
      %v326 = vld [vmem:[%s1 + $0x188] sm:$0xff]
      %v327 = vld [vmem:[%s1 + $0x190] sm:$0xff]
      %v328 = vld [vmem:[%s1 + $0x198] sm:$0xff]
      %v329 = vld [vmem:[%s1 + $0x1a0] sm:$0xff]
      %v330 = vld [vmem:[%s1 + $0x1a8] sm:$0xff]
      %v331 = vld [vmem:[%s1 + $0x1b0] sm:$0xff]
      %v332 = vld [vmem:[%s1 + $0x1b8] sm:$0xff]
      %v333 = vld [vmem:[%s1 + $0x1c0] sm:$0xff]
      %v334 = vld [vmem:[%s1 + $0x1c8] sm:$0xff]
      %v335 = vld [vmem:[%s1 + $0x1d0] sm:$0xff]
      %v336 = vld [vmem:[%s1 + $0x1d8] sm:$0xff]
      %v337 = vld [vmem:[%s1 + $0x1e0] sm:$0xff]
      %v338 = vld [vmem:[%s1 + $0x1e8] sm:$0xff]
      %v339 = vld [vmem:[%s1 + $0x1f0] sm:$0xff]
      %v340 = vld [vmem:[%s1 + $0x1f8] sm:$0xff]
      %v341 = vld [vmem:[%s1 + $0x200] sm:$0xff]
      %v342 = vld [vmem:[%s1 + $0x208] sm:$0xff]
      %v343 = vld [vmem:[%s1 + $0x210] sm:$0xff]
      %v344 = vld [vmem:[%s1 + $0x218] sm:$0xff]
      %v345 = vld [vmem:[%s1 + $0x220] sm:$0xff]
      %v346 = vld [vmem:[%s1 + $0x228] sm:$0xff]
      %v347 = vld [vmem:[%s1 + $0x230] sm:$0xff]
      %v348 = vld [vmem:[%s1 + $0x238] sm:$0xff]
      %v349 = vld [vmem:[%s1 + $0x240] sm:$0xff]
      %v350 = vld [vmem:[%s1 + $0x248] sm:$0xff]
      %v351 = vld [vmem:[%s1 + $0x250] sm:$0xff]
      %v352 = vld [vmem:[%s1 + $0x258] sm:$0xff]
      %v353 = vld [vmem:[%s1 + $0x260] sm:$0xff]
      %v354 = vld [vmem:[%s1 + $0x268] sm:$0xff]
      %v355 = vld [vmem:[%s1 + $0x270] sm:$0xff]
      %v356 = vld [vmem:[%s1 + $0x278] sm:$0xff]
      %v357 = vld [vmem:[%s1 + $0x280] sm:$0xff]
      %v358 = vld [vmem:[%s1 + $0x288] sm:$0xff]
      %v359 = vld [vmem:[%s1 + $0x290] sm:$0xff]
      %v360 = vld [vmem:[%s1 + $0x298] sm:$0xff]
      %v361 = vld [vmem:[%s1 + $0x2a0] sm:$0xff]
      %v362 = vld [vmem:[%s1 + $0x2a8] sm:$0xff]
      %v363 = vld [vmem:[%s1 + $0x2b0] sm:$0xff]
      %v364 = vld [vmem:[%s1 + $0x2b8] sm:$0xff]
      %v365 = vld [vmem:[%s1 + $0x2c0] sm:$0xff]
      %v366 = vld [vmem:[%s1 + $0x2c8] sm:$0xff]
      %v367 = vld [vmem:[%s1 + $0x2d0] sm:$0xff]
      %v368 = vld [vmem:[%s1 + $0x2d8] sm:$0xff]
      %v369 = vld [vmem:[%s1 + $0x2e0] sm:$0xff]
      %v370 = vld [vmem:[%s1 + $0x2e8] sm:$0xff]
      %v371 = vld [vmem:[%s1 + $0x2f0] sm:$0xff]
      %v372 = vld [vmem:[%s1 + $0x2f8] sm:$0xff]
      %v373 = vld [vmem:[%s1 + $0x300] sm:$0xff]
      %v374 = vld [vmem:[%s1 + $0x308] sm:$0xff]
      %v375 = vld [vmem:[%s1 + $0x310] sm:$0xff]
      %v376 = vld [vmem:[%s1 + $0x318] sm:$0xff]
      %v377 = vld [vmem:[%s1 + $0x320] sm:$0xff]
      %v378 = vld [vmem:[%s1 + $0x328] sm:$0xff]
      %v379 = vld [vmem:[%s1 + $0x330] sm:$0xff]
      %v380 = vld [vmem:[%s1 + $0x338] sm:$0xff]
      %v381 = vld [vmem:[%s1 + $0x340] sm:$0xff]
      %v382 = vld [vmem:[%s1 + $0x348] sm:$0xff]
      %v383 = vld [vmem:[%s1 + $0x350] sm:$0xff]
      %v384 = vld [vmem:[%s1 + $0x358] sm:$0xff]
      %v385 = vld [vmem:[%s1 + $0x360] sm:$0xff]
      %v386 = vld [vmem:[%s1 + $0x368] sm:$0xff]
      %v387 = vld [vmem:[%s1 + $0x370] sm:$0xff]
      %v388 = vld [vmem:[%s1 + $0x378] sm:$0xff]
      %v421 = vunpack.c.l.b16 %v245
      %v422 = vunpack.c.h.b16 %v245
      %v423 = vunpack.c.l.b16 %v246
      %v424 = vunpack.c.h.b16 %v246
      %v425 = vunpack.c.l.b16 %v247
      %v426 = vunpack.c.h.b16 %v247
      %v427 = vunpack.c.l.b16 %v248
      %v428 = vunpack.c.l.b16 %v249
      %v429 = vunpack.c.h.b16 %v249
      %v430 = vunpack.c.l.b16 %v250
      %v431 = vunpack.c.h.b16 %v250
      %v432 = vunpack.c.l.b16 %v251
      %v433 = vunpack.c.h.b16 %v251
      %v434 = vunpack.c.l.b16 %v252
      %v435 = vunpack.c.l.b16 %v253
      %v436 = vunpack.c.h.b16 %v253
      %v437 = vunpack.c.l.b16 %v254
      %v438 = vunpack.c.h.b16 %v254
      %v439 = vunpack.c.l.b16 %v255
      %v440 = vunpack.c.h.b16 %v255
      %v441 = vunpack.c.l.b16 %v256
      %v442 = vunpack.c.l.b16 %v257
      %v443 = vunpack.c.h.b16 %v257
      %v444 = vunpack.c.l.b16 %v258
      %v445 = vunpack.c.h.b16 %v258
      %v446 = vunpack.c.l.b16 %v259
      %v447 = vunpack.c.h.b16 %v259
      %v448 = vunpack.c.l.b16 %v260
      %v449 = vunpack.c.l.b16 %v261
      %v450 = vunpack.c.h.b16 %v261
      %v451 = vunpack.c.l.b16 %v262
      %v452 = vunpack.c.h.b16 %v262
      %v453 = vunpack.c.l.b16 %v263
      %v454 = vunpack.c.h.b16 %v263
      %v455 = vunpack.c.l.b16 %v264
      %v456 = vunpack.c.l.b16 %v265
      %v457 = vunpack.c.h.b16 %v265
      %v458 = vunpack.c.l.b16 %v266
      %v459 = vunpack.c.h.b16 %v266
      %v460 = vunpack.c.l.b16 %v267
      %v461 = vunpack.c.h.b16 %v267
      %v462 = vunpack.c.l.b16 %v268
      %v463 = vunpack.c.l.b16 %v269
      %v464 = vunpack.c.h.b16 %v269
      %v465 = vunpack.c.l.b16 %v270
      %v466 = vunpack.c.h.b16 %v270
      %v467 = vunpack.c.l.b16 %v271
      %v468 = vunpack.c.h.b16 %v271
      %v469 = vunpack.c.l.b16 %v272
      %v470 = vunpack.c.l.b16 %v273
      %v471 = vunpack.c.h.b16 %v273
      %v472 = vunpack.c.l.b16 %v274
      %v473 = vunpack.c.h.b16 %v274
      %v474 = vunpack.c.l.b16 %v275
      %v475 = vunpack.c.h.b16 %v275
      %v476 = vunpack.c.l.b16 %v276
      %v477 = vpack.c.b16 %v428, %v421
      %v478 = vpack.c.b16 %v429, %v422
      %v479 = vpack.c.b16 %v430, %v423
      %v480 = vpack.c.b16 %v431, %v424
      %v481 = vpack.c.b16 %v432, %v425
      %v482 = vpack.c.b16 %v433, %v426
      %v483 = vpack.c.b16 %v434, %v427
      %v484 = vpack.c.b16 %v442, %v435
      %v485 = vpack.c.b16 %v443, %v436
      %v486 = vpack.c.b16 %v444, %v437
      %v487 = vpack.c.b16 %v445, %v438
      %v488 = vpack.c.b16 %v446, %v439
      %v489 = vpack.c.b16 %v447, %v440
      %v490 = vpack.c.b16 %v448, %v441
      %v491 = vpack.c.b16 %v456, %v449
      %v492 = vpack.c.b16 %v457, %v450
      %v493 = vpack.c.b16 %v458, %v451
      %v494 = vpack.c.b16 %v459, %v452
      %v495 = vpack.c.b16 %v460, %v453
      %v496 = vpack.c.b16 %v461, %v454
      %v497 = vpack.c.b16 %v462, %v455
      %v498 = vpack.c.b16 %v470, %v463
      %v499 = vpack.c.b16 %v471, %v464
      %v500 = vpack.c.b16 %v472, %v465
      %v501 = vpack.c.b16 %v473, %v466
      %v502 = vpack.c.b16 %v474, %v467
      %v503 = vpack.c.b16 %v475, %v468
      %v504 = vpack.c.b16 %v476, %v469
      %v645 = vunpack.c.l.b16 %v277
      %v646 = vunpack.c.h.b16 %v277
      %v647 = vunpack.c.l.b16 %v278
      %v648 = vunpack.c.h.b16 %v278
      %v649 = vunpack.c.l.b16 %v279
      %v650 = vunpack.c.h.b16 %v279
      %v651 = vunpack.c.l.b16 %v280
      %v652 = vunpack.c.h.b16 %v280
      %v653 = vunpack.c.l.b16 %v281
      %v654 = vunpack.c.h.b16 %v281
      %v655 = vunpack.c.l.b16 %v282
      %v656 = vunpack.c.h.b16 %v282
      %v657 = vunpack.c.l.b16 %v283
      %v658 = vunpack.c.h.b16 %v283
      %v659 = vunpack.c.l.b16 %v284
      %v660 = vunpack.c.h.b16 %v284
      %v661 = vunpack.c.l.b16 %v285
      %v662 = vunpack.c.h.b16 %v285
      %v663 = vunpack.c.l.b16 %v286
      %v664 = vunpack.c.h.b16 %v286
      %v665 = vunpack.c.l.b16 %v287
      %v666 = vunpack.c.h.b16 %v287
      %v667 = vunpack.c.l.b16 %v288
      %v668 = vunpack.c.h.b16 %v288
      %v669 = vunpack.c.l.b16 %v289
      %v670 = vunpack.c.h.b16 %v289
      %v671 = vunpack.c.l.b16 %v290
      %v672 = vunpack.c.h.b16 %v290
      %v673 = vunpack.c.l.b16 %v291
      %v674 = vunpack.c.h.b16 %v291
      %v675 = vunpack.c.l.b16 %v292
      %v676 = vunpack.c.h.b16 %v292
      %v677 = vunpack.c.l.b16 %v293
      %v678 = vunpack.c.h.b16 %v293
      %v679 = vunpack.c.l.b16 %v294
      %v680 = vunpack.c.h.b16 %v294
      %v681 = vunpack.c.l.b16 %v295
      %v682 = vunpack.c.h.b16 %v295
      %v683 = vunpack.c.l.b16 %v296
      %v684 = vunpack.c.h.b16 %v296
      %v685 = vunpack.c.l.b16 %v297
      %v686 = vunpack.c.h.b16 %v297
      %v687 = vunpack.c.l.b16 %v298
      %v688 = vunpack.c.h.b16 %v298
      %v689 = vunpack.c.l.b16 %v299
      %v690 = vunpack.c.h.b16 %v299
      %v691 = vunpack.c.l.b16 %v300
      %v692 = vunpack.c.h.b16 %v300
      %v693 = vunpack.c.l.b16 %v301
      %v694 = vunpack.c.h.b16 %v301
      %v695 = vunpack.c.l.b16 %v302
      %v696 = vunpack.c.h.b16 %v302
      %v697 = vunpack.c.l.b16 %v303
      %v698 = vunpack.c.h.b16 %v303
      %v699 = vunpack.c.l.b16 %v304
      %v700 = vunpack.c.h.b16 %v304
      %v701 = vunpack.c.l.b16 %v305
      %v702 = vunpack.c.h.b16 %v305
      %v703 = vunpack.c.l.b16 %v306
      %v704 = vunpack.c.h.b16 %v306
      %v705 = vunpack.c.l.b16 %v307
      %v706 = vunpack.c.h.b16 %v307
      %v707 = vunpack.c.l.b16 %v308
      %v708 = vunpack.c.h.b16 %v308
      %v709 = vunpack.c.l.b16 %v309
      %v710 = vunpack.c.h.b16 %v309
      %v711 = vunpack.c.l.b16 %v310
      %v712 = vunpack.c.h.b16 %v310
      %v713 = vunpack.c.l.b16 %v311
      %v714 = vunpack.c.h.b16 %v311
      %v715 = vunpack.c.l.b16 %v312
      %v716 = vunpack.c.h.b16 %v312
      %v717 = vunpack.c.l.b16 %v313
      %v718 = vunpack.c.h.b16 %v313
      %v719 = vunpack.c.l.b16 %v314
      %v720 = vunpack.c.h.b16 %v314
      %v721 = vunpack.c.l.b16 %v315
      %v722 = vunpack.c.h.b16 %v315
      %v723 = vunpack.c.l.b16 %v316
      %v724 = vunpack.c.h.b16 %v316
      %v725 = vunpack.c.l.b16 %v317
      %v726 = vunpack.c.h.b16 %v317
      %v727 = vunpack.c.l.b16 %v318
      %v728 = vunpack.c.h.b16 %v318
      %v729 = vunpack.c.l.b16 %v319
      %v730 = vunpack.c.h.b16 %v319
      %v731 = vunpack.c.l.b16 %v320
      %v732 = vunpack.c.h.b16 %v320
      %v733 = vunpack.c.l.b16 %v321
      %v734 = vunpack.c.h.b16 %v321
      %v735 = vunpack.c.l.b16 %v322
      %v736 = vunpack.c.h.b16 %v322
      %v737 = vunpack.c.l.b16 %v323
      %v738 = vunpack.c.h.b16 %v323
      %v739 = vunpack.c.l.b16 %v324
      %v740 = vunpack.c.h.b16 %v324
      %v741 = vunpack.c.l.b16 %v325
      %v742 = vunpack.c.h.b16 %v325
      %v743 = vunpack.c.l.b16 %v326
      %v744 = vunpack.c.h.b16 %v326
      %v745 = vunpack.c.l.b16 %v327
      %v746 = vunpack.c.h.b16 %v327
      %v747 = vunpack.c.l.b16 %v328
      %v748 = vunpack.c.h.b16 %v328
      %v749 = vunpack.c.l.b16 %v329
      %v750 = vunpack.c.h.b16 %v329
      %v751 = vunpack.c.l.b16 %v330
      %v752 = vunpack.c.h.b16 %v330
      %v753 = vunpack.c.l.b16 %v331
      %v754 = vunpack.c.h.b16 %v331
      %v755 = vunpack.c.l.b16 %v332
      %v756 = vunpack.c.h.b16 %v332
      %v757 = vunpack.c.l.b16 %v333
      %v758 = vunpack.c.h.b16 %v333
      %v759 = vunpack.c.l.b16 %v334
      %v760 = vunpack.c.h.b16 %v334
      %v761 = vunpack.c.l.b16 %v335
      %v762 = vunpack.c.h.b16 %v335
      %v763 = vunpack.c.l.b16 %v336
      %v764 = vunpack.c.h.b16 %v336
      %v765 = vunpack.c.l.b16 %v337
      %v766 = vunpack.c.h.b16 %v337
      %v767 = vunpack.c.l.b16 %v338
      %v768 = vunpack.c.h.b16 %v338
      %v769 = vunpack.c.l.b16 %v339
      %v770 = vunpack.c.h.b16 %v339
      %v771 = vunpack.c.l.b16 %v340
      %v772 = vunpack.c.h.b16 %v340
      %v773 = vunpack.c.l.b16 %v341
      %v774 = vunpack.c.h.b16 %v341
      %v775 = vunpack.c.l.b16 %v342
      %v776 = vunpack.c.h.b16 %v342
      %v777 = vunpack.c.l.b16 %v343
      %v778 = vunpack.c.h.b16 %v343
      %v779 = vunpack.c.l.b16 %v344
      %v780 = vunpack.c.h.b16 %v344
      %v781 = vunpack.c.l.b16 %v345
      %v782 = vunpack.c.h.b16 %v345
      %v783 = vunpack.c.l.b16 %v346
      %v784 = vunpack.c.h.b16 %v346
      %v785 = vunpack.c.l.b16 %v347
      %v786 = vunpack.c.h.b16 %v347
      %v787 = vunpack.c.l.b16 %v348
      %v788 = vunpack.c.h.b16 %v348
      %v789 = vunpack.c.l.b16 %v349
      %v790 = vunpack.c.h.b16 %v349
      %v791 = vunpack.c.l.b16 %v350
      %v792 = vunpack.c.h.b16 %v350
      %v793 = vunpack.c.l.b16 %v351
      %v794 = vunpack.c.h.b16 %v351
      %v795 = vunpack.c.l.b16 %v352
      %v796 = vunpack.c.h.b16 %v352
      %v797 = vunpack.c.l.b16 %v353
      %v798 = vunpack.c.h.b16 %v353
      %v799 = vunpack.c.l.b16 %v354
      %v800 = vunpack.c.h.b16 %v354
      %v801 = vunpack.c.l.b16 %v355
      %v802 = vunpack.c.h.b16 %v355
      %v803 = vunpack.c.l.b16 %v356
      %v804 = vunpack.c.h.b16 %v356
      %v805 = vunpack.c.l.b16 %v357
      %v806 = vunpack.c.h.b16 %v357
      %v807 = vunpack.c.l.b16 %v358
      %v808 = vunpack.c.h.b16 %v358
      %v809 = vunpack.c.l.b16 %v359
      %v810 = vunpack.c.h.b16 %v359
      %v811 = vunpack.c.l.b16 %v360
      %v812 = vunpack.c.h.b16 %v360
      %v813 = vunpack.c.l.b16 %v361
      %v814 = vunpack.c.h.b16 %v361
      %v815 = vunpack.c.l.b16 %v362
      %v816 = vunpack.c.h.b16 %v362
      %v817 = vunpack.c.l.b16 %v363
      %v818 = vunpack.c.h.b16 %v363
      %v819 = vunpack.c.l.b16 %v364
      %v820 = vunpack.c.h.b16 %v364
      %v821 = vunpack.c.l.b16 %v365
      %v822 = vunpack.c.h.b16 %v365
      %v823 = vunpack.c.l.b16 %v366
      %v824 = vunpack.c.h.b16 %v366
      %v825 = vunpack.c.l.b16 %v367
      %v826 = vunpack.c.h.b16 %v367
      %v827 = vunpack.c.l.b16 %v368
      %v828 = vunpack.c.h.b16 %v368
      %v829 = vunpack.c.l.b16 %v369
      %v830 = vunpack.c.h.b16 %v369
      %v831 = vunpack.c.l.b16 %v370
      %v832 = vunpack.c.h.b16 %v370
      %v833 = vunpack.c.l.b16 %v371
      %v834 = vunpack.c.h.b16 %v371
      %v835 = vunpack.c.l.b16 %v372
      %v836 = vunpack.c.h.b16 %v372
      %v837 = vunpack.c.l.b16 %v373
      %v838 = vunpack.c.h.b16 %v373
      %v839 = vunpack.c.l.b16 %v374
      %v840 = vunpack.c.h.b16 %v374
      %v841 = vunpack.c.l.b16 %v375
      %v842 = vunpack.c.h.b16 %v375
      %v843 = vunpack.c.l.b16 %v376
      %v844 = vunpack.c.h.b16 %v376
      %v845 = vunpack.c.l.b16 %v377
      %v846 = vunpack.c.h.b16 %v377
      %v847 = vunpack.c.l.b16 %v378
      %v848 = vunpack.c.h.b16 %v378
      %v849 = vunpack.c.l.b16 %v379
      %v850 = vunpack.c.h.b16 %v379
      %v851 = vunpack.c.l.b16 %v380
      %v852 = vunpack.c.h.b16 %v380
      %v853 = vunpack.c.l.b16 %v381
      %v854 = vunpack.c.h.b16 %v381
      %v855 = vunpack.c.l.b16 %v382
      %v856 = vunpack.c.h.b16 %v382
      %v857 = vunpack.c.l.b16 %v383
      %v858 = vunpack.c.h.b16 %v383
      %v859 = vunpack.c.l.b16 %v384
      %v860 = vunpack.c.h.b16 %v384
      %v861 = vunpack.c.l.b16 %v385
      %v862 = vunpack.c.h.b16 %v385
      %v863 = vunpack.c.l.b16 %v386
      %v864 = vunpack.c.h.b16 %v386
      %v865 = vunpack.c.l.b16 %v387
      %v866 = vunpack.c.h.b16 %v387
      %v867 = vunpack.c.l.b16 %v388
      %v868 = vunpack.c.h.b16 %v388
      %v869 = vpack.c.b16 %v647, %v645
      %v870 = vpack.c.b16 %v648, %v646
      %v871 = vpack.c.b16 %v651, %v649
      %v872 = vpack.c.b16 %v652, %v650
      %v873 = vpack.c.b16 %v655, %v653
      %v874 = vpack.c.b16 %v656, %v654
      %v875 = vpack.c.b16 %v659, %v657
      %v876 = vpack.c.b16 %v660, %v658
      %v877 = vpack.c.b16 %v663, %v661
      %v878 = vpack.c.b16 %v664, %v662
      %v879 = vpack.c.b16 %v667, %v665
      %v880 = vpack.c.b16 %v668, %v666
      %v881 = vpack.c.b16 %v671, %v669
      %v882 = vpack.c.b16 %v672, %v670
      %v883 = vpack.c.b16 %v675, %v673
      %v884 = vpack.c.b16 %v676, %v674
      %v885 = vpack.c.b16 %v679, %v677
      %v886 = vpack.c.b16 %v680, %v678
      %v887 = vpack.c.b16 %v683, %v681
      %v888 = vpack.c.b16 %v684, %v682
      %v889 = vpack.c.b16 %v687, %v685
      %v890 = vpack.c.b16 %v688, %v686
      %v891 = vpack.c.b16 %v691, %v689
      %v892 = vpack.c.b16 %v692, %v690
      %v893 = vpack.c.b16 %v695, %v693
      %v894 = vpack.c.b16 %v696, %v694
      %v895 = vpack.c.b16 %v699, %v697
      %v896 = vpack.c.b16 %v700, %v698
      %v897 = vpack.c.b16 %v703, %v701
      %v898 = vpack.c.b16 %v704, %v702
      %v899 = vpack.c.b16 %v707, %v705
      %v900 = vpack.c.b16 %v708, %v706
      %v901 = vpack.c.b16 %v711, %v709
      %v902 = vpack.c.b16 %v712, %v710
      %v903 = vpack.c.b16 %v715, %v713
      %v904 = vpack.c.b16 %v716, %v714
      %v905 = vpack.c.b16 %v719, %v717
      %v906 = vpack.c.b16 %v720, %v718
      %v907 = vpack.c.b16 %v723, %v721
      %v908 = vpack.c.b16 %v724, %v722
      %v909 = vpack.c.b16 %v727, %v725
      %v910 = vpack.c.b16 %v728, %v726
      %v911 = vpack.c.b16 %v731, %v729
      %v912 = vpack.c.b16 %v732, %v730
      %v913 = vpack.c.b16 %v735, %v733
      %v914 = vpack.c.b16 %v736, %v734
      %v915 = vpack.c.b16 %v739, %v737
      %v916 = vpack.c.b16 %v740, %v738
      %v917 = vpack.c.b16 %v743, %v741
      %v918 = vpack.c.b16 %v744, %v742
      %v919 = vpack.c.b16 %v747, %v745
      %v920 = vpack.c.b16 %v748, %v746
      %v921 = vpack.c.b16 %v751, %v749
      %v922 = vpack.c.b16 %v752, %v750
      %v923 = vpack.c.b16 %v755, %v753
      %v924 = vpack.c.b16 %v756, %v754
      %v925 = vpack.c.b16 %v759, %v757
      %v926 = vpack.c.b16 %v760, %v758
      %v927 = vpack.c.b16 %v763, %v761
      %v928 = vpack.c.b16 %v764, %v762
      %v929 = vpack.c.b16 %v767, %v765
      %v930 = vpack.c.b16 %v768, %v766
      %v931 = vpack.c.b16 %v771, %v769
      %v932 = vpack.c.b16 %v772, %v770
      %v933 = vpack.c.b16 %v775, %v773
      %v934 = vpack.c.b16 %v776, %v774
      %v935 = vpack.c.b16 %v779, %v777
      %v936 = vpack.c.b16 %v780, %v778
      %v937 = vpack.c.b16 %v783, %v781
      %v938 = vpack.c.b16 %v784, %v782
      %v939 = vpack.c.b16 %v787, %v785
      %v940 = vpack.c.b16 %v788, %v786
      %v941 = vpack.c.b16 %v791, %v789
      %v942 = vpack.c.b16 %v792, %v790
      %v943 = vpack.c.b16 %v795, %v793
      %v944 = vpack.c.b16 %v796, %v794
      %v945 = vpack.c.b16 %v799, %v797
      %v946 = vpack.c.b16 %v800, %v798
      %v947 = vpack.c.b16 %v803, %v801
      %v948 = vpack.c.b16 %v804, %v802
      %v949 = vpack.c.b16 %v807, %v805
      %v950 = vpack.c.b16 %v808, %v806
      %v951 = vpack.c.b16 %v811, %v809
      %v952 = vpack.c.b16 %v812, %v810
      %v953 = vpack.c.b16 %v815, %v813
      %v954 = vpack.c.b16 %v816, %v814
      %v955 = vpack.c.b16 %v819, %v817
      %v956 = vpack.c.b16 %v820, %v818
      %v957 = vpack.c.b16 %v823, %v821
      %v958 = vpack.c.b16 %v824, %v822
      %v959 = vpack.c.b16 %v827, %v825
      %v960 = vpack.c.b16 %v828, %v826
      %v961 = vpack.c.b16 %v831, %v829
      %v962 = vpack.c.b16 %v832, %v830
      %v963 = vpack.c.b16 %v835, %v833
      %v964 = vpack.c.b16 %v836, %v834
      %v965 = vpack.c.b16 %v839, %v837
      %v966 = vpack.c.b16 %v840, %v838
      %v967 = vpack.c.b16 %v843, %v841
      %v968 = vpack.c.b16 %v844, %v842
      %v969 = vpack.c.b16 %v847, %v845
      %v970 = vpack.c.b16 %v848, %v846
      %v971 = vpack.c.b16 %v851, %v849
      %v972 = vpack.c.b16 %v852, %v850
      %v973 = vpack.c.b16 %v855, %v853
      %v974 = vpack.c.b16 %v856, %v854
      %v975 = vpack.c.b16 %v859, %v857
      %v976 = vpack.c.b16 %v860, %v858
      %v977 = vpack.c.b16 %v863, %v861
      %v978 = vpack.c.b16 %v864, %v862
      %v979 = vpack.c.b16 %v867, %v865
      %v980 = vpack.c.b16 %v868, %v866
      %1093 = vmatpush.bf16.msra.mxu0 %v883
      %1094 = vmatpush.bf16.msra.mxu0 %v881
      %1095 = vmatpush.bf16.msra.mxu0 %v879
      %1096 = vmatpush.bf16.msra.mxu0 %v877
      %1097 = vmatpush.bf16.msra.mxu0 %v875
      %1098 = vmatpush.bf16.msra.mxu0 %v873
      %1099 = vmatpush.bf16.msra.mxu0 %v871
      %1100 = vmatpush.bf16.msra.mxu0 %v869
      %1101 = vmatmul.bf16.gmra.mxu0 %v477
      %v1102 = vpop.f32.mrf.mxu0
      %v1103 = vadd.f32 0.0, %v1102
      %v1104 = vpop.f32.mrf.mxu0
      %v1105 = vadd.f32 0.0, %v1104
      %1106 = vmatmul.bf16.gmra.mxu0 %v484
      %v1107 = vpop.f32.mrf.mxu0
      %v1108 = vadd.f32 0.0, %v1107
      %v1109 = vpop.f32.mrf.mxu0
      %v1110 = vadd.f32 0.0, %v1109
      %1111 = vmatmul.bf16.gmra.mxu0 %v491
      %v1112 = vpop.f32.mrf.mxu0
      %v1113 = vadd.f32 0.0, %v1112
      %v1114 = vpop.f32.mrf.mxu0
      %v1115 = vadd.f32 0.0, %v1114
      %1116 = vmatmul.bf16.gmra.mxu0 %v498
      %v1117 = vpop.f32.mrf.mxu0
      %v1118 = vadd.f32 0.0, %v1117
      %v1119 = vpop.f32.mrf.mxu0
      %v1120 = vadd.f32 0.0, %v1119
      %1121 = vdwg.mxu0
      %1122 = vmatpush.bf16.msra.mxu0 %v899
      %1123 = vmatpush.bf16.msra.mxu0 %v897
      %1124 = vmatpush.bf16.msra.mxu0 %v895
      %1125 = vmatpush.bf16.msra.mxu0 %v893
      %1126 = vmatpush.bf16.msra.mxu0 %v891
      %1127 = vmatpush.bf16.msra.mxu0 %v889
      %1128 = vmatpush.bf16.msra.mxu0 %v887
      %1129 = vmatpush.bf16.msra.mxu0 %v885
      %1130 = vmatmul.bf16.gmra.mxu0 %v478
      %v1131 = vpop.f32.mrf.mxu0
      %v1132 = vadd.f32 %v1103, %v1131
      %v1133 = vpop.f32.mrf.mxu0
      %v1134 = vadd.f32 %v1105, %v1133
      %1135 = vmatmul.bf16.gmra.mxu0 %v485
      %v1136 = vpop.f32.mrf.mxu0
      %v1137 = vadd.f32 %v1108, %v1136
      %v1138 = vpop.f32.mrf.mxu0
      %v1139 = vadd.f32 %v1110, %v1138
      %1140 = vmatmul.bf16.gmra.mxu0 %v492
      %v1141 = vpop.f32.mrf.mxu0
      %v1142 = vadd.f32 %v1113, %v1141
      %v1143 = vpop.f32.mrf.mxu0
      %v1144 = vadd.f32 %v1115, %v1143
      %1145 = vmatmul.bf16.gmra.mxu0 %v499
      %v1146 = vpop.f32.mrf.mxu0
      %v1147 = vadd.f32 %v1118, %v1146
      %v1148 = vpop.f32.mrf.mxu0
      %v1149 = vadd.f32 %v1120, %v1148
      %1150 = vdwg.mxu0
      %1151 = vmatpush.bf16.msra.mxu0 %v915
      %1152 = vmatpush.bf16.msra.mxu0 %v913
      %1153 = vmatpush.bf16.msra.mxu0 %v911
      %1154 = vmatpush.bf16.msra.mxu0 %v909
      %1155 = vmatpush.bf16.msra.mxu0 %v907
      %1156 = vmatpush.bf16.msra.mxu0 %v905
      %1157 = vmatpush.bf16.msra.mxu0 %v903
      %1158 = vmatpush.bf16.msra.mxu0 %v901
      %1159 = vmatmul.bf16.gmra.mxu0 %v479
      %v1160 = vpop.f32.mrf.mxu0
      %v1161 = vadd.f32 %v1132, %v1160
      %v1162 = vpop.f32.mrf.mxu0
      %v1163 = vadd.f32 %v1134, %v1162
      %1164 = vmatmul.bf16.gmra.mxu0 %v486
      %v1165 = vpop.f32.mrf.mxu0
      %v1166 = vadd.f32 %v1137, %v1165
      %v1167 = vpop.f32.mrf.mxu0
      %v1168 = vadd.f32 %v1139, %v1167
      %1169 = vmatmul.bf16.gmra.mxu0 %v493
      %v1170 = vpop.f32.mrf.mxu0
      %v1171 = vadd.f32 %v1142, %v1170
      %v1172 = vpop.f32.mrf.mxu0
      %v1173 = vadd.f32 %v1144, %v1172
      %1174 = vmatmul.bf16.gmra.mxu0 %v500
      %v1175 = vpop.f32.mrf.mxu0
      %v1176 = vadd.f32 %v1147, %v1175
      %v1177 = vpop.f32.mrf.mxu0
      %v1178 = vadd.f32 %v1149, %v1177
      %1179 = vdwg.mxu0
      %1180 = vmatpush.bf16.msra.mxu0 %v931
      %1181 = vmatpush.bf16.msra.mxu0 %v929
      %1182 = vmatpush.bf16.msra.mxu0 %v927
      %1183 = vmatpush.bf16.msra.mxu0 %v925
      %1184 = vmatpush.bf16.msra.mxu0 %v923
      %1185 = vmatpush.bf16.msra.mxu0 %v921
      %1186 = vmatpush.bf16.msra.mxu0 %v919
      %1187 = vmatpush.bf16.msra.mxu0 %v917
      %1188 = vmatmul.bf16.gmra.mxu0 %v480
      %v1189 = vpop.f32.mrf.mxu0
      %v1190 = vadd.f32 %v1161, %v1189
      %v1191 = vpop.f32.mrf.mxu0
      %v1192 = vadd.f32 %v1163, %v1191
      %1193 = vmatmul.bf16.gmra.mxu0 %v487
      %v1194 = vpop.f32.mrf.mxu0
      %v1195 = vadd.f32 %v1166, %v1194
      %v1196 = vpop.f32.mrf.mxu0
      %v1197 = vadd.f32 %v1168, %v1196
      %1198 = vmatmul.bf16.gmra.mxu0 %v494
      %v1199 = vpop.f32.mrf.mxu0
      %v1200 = vadd.f32 %v1171, %v1199
      %v1201 = vpop.f32.mrf.mxu0
      %v1202 = vadd.f32 %v1173, %v1201
      %1203 = vmatmul.bf16.gmra.mxu0 %v501
      %v1204 = vpop.f32.mrf.mxu0
      %v1205 = vadd.f32 %v1176, %v1204
      %v1206 = vpop.f32.mrf.mxu0
      %v1207 = vadd.f32 %v1178, %v1206
      %1208 = vdwg.mxu0
      %1209 = vmatpush.bf16.msra.mxu0 %v947
      %1210 = vmatpush.bf16.msra.mxu0 %v945
      %1211 = vmatpush.bf16.msra.mxu0 %v943
      %1212 = vmatpush.bf16.msra.mxu0 %v941
      %1213 = vmatpush.bf16.msra.mxu0 %v939
      %1214 = vmatpush.bf16.msra.mxu0 %v937
      %1215 = vmatpush.bf16.msra.mxu0 %v935
      %1216 = vmatpush.bf16.msra.mxu0 %v933
      %1217 = vmatmul.bf16.gmra.mxu0 %v481
      %v1218 = vpop.f32.mrf.mxu0
      %v1219 = vadd.f32 %v1190, %v1218
      %v1220 = vpop.f32.mrf.mxu0
      %v1221 = vadd.f32 %v1192, %v1220
      %1222 = vmatmul.bf16.gmra.mxu0 %v488
      %v1223 = vpop.f32.mrf.mxu0
      %v1224 = vadd.f32 %v1195, %v1223
      %v1225 = vpop.f32.mrf.mxu0
      %v1226 = vadd.f32 %v1197, %v1225
      %1227 = vmatmul.bf16.gmra.mxu0 %v495
      %v1228 = vpop.f32.mrf.mxu0
      %v1229 = vadd.f32 %v1200, %v1228
      %v1230 = vpop.f32.mrf.mxu0
      %v1231 = vadd.f32 %v1202, %v1230
      %1232 = vmatmul.bf16.gmra.mxu0 %v502
      %v1233 = vpop.f32.mrf.mxu0
      %v1234 = vadd.f32 %v1205, %v1233
      %v1235 = vpop.f32.mrf.mxu0
      %v1236 = vadd.f32 %v1207, %v1235
      %1237 = vdwg.mxu0
      %1238 = vmatpush.bf16.msra.mxu0 %v963
      %1239 = vmatpush.bf16.msra.mxu0 %v961
      %1240 = vmatpush.bf16.msra.mxu0 %v959
      %1241 = vmatpush.bf16.msra.mxu0 %v957
      %1242 = vmatpush.bf16.msra.mxu0 %v955
      %1243 = vmatpush.bf16.msra.mxu0 %v953
      %1244 = vmatpush.bf16.msra.mxu0 %v951
      %1245 = vmatpush.bf16.msra.mxu0 %v949
      %1246 = vmatmul.bf16.gmra.mxu0 %v482
      %v1247 = vpop.f32.mrf.mxu0
      %v1248 = vadd.f32 %v1219, %v1247
      %v1249 = vpop.f32.mrf.mxu0
      %v1250 = vadd.f32 %v1221, %v1249
      %1251 = vmatmul.bf16.gmra.mxu0 %v489
      %v1252 = vpop.f32.mrf.mxu0
      %v1253 = vadd.f32 %v1224, %v1252
      %v1254 = vpop.f32.mrf.mxu0
      %v1255 = vadd.f32 %v1226, %v1254
      %1256 = vmatmul.bf16.gmra.mxu0 %v496
      %v1257 = vpop.f32.mrf.mxu0
      %v1258 = vadd.f32 %v1229, %v1257
      %v1259 = vpop.f32.mrf.mxu0
      %v1260 = vadd.f32 %v1231, %v1259
      %1261 = vmatmul.bf16.gmra.mxu0 %v503
      %v1262 = vpop.f32.mrf.mxu0
      %v1263 = vadd.f32 %v1234, %v1262
      %v1264 = vpop.f32.mrf.mxu0
      %v1265 = vadd.f32 %v1236, %v1264
      %1266 = vdwg.mxu0
      %1267 = vmatpush.bf16.msra.mxu0 %v979
      %1268 = vmatpush.bf16.msra.mxu0 %v977
      %1269 = vmatpush.bf16.msra.mxu0 %v975
      %1270 = vmatpush.bf16.msra.mxu0 %v973
      %1271 = vmatpush.bf16.msra.mxu0 %v971
      %1272 = vmatpush.bf16.msra.mxu0 %v969
      %1273 = vmatpush.bf16.msra.mxu0 %v967
      %1274 = vmatpush.bf16.msra.mxu0 %v965
      %1275 = vmatmul.bf16.gmra.mxu0 %v483
      %v1276 = vpop.f32.mrf.mxu0
      %v1277 = vadd.f32 %v1248, %v1276
      %v1278 = vpop.f32.mrf.mxu0
      %v1279 = vadd.f32 %v1250, %v1278
      %1280 = vmatmul.bf16.gmra.mxu0 %v490
      %v1281 = vpop.f32.mrf.mxu0
      %v1282 = vadd.f32 %v1253, %v1281
      %v1283 = vpop.f32.mrf.mxu0
      %v1284 = vadd.f32 %v1255, %v1283
      %1285 = vmatmul.bf16.gmra.mxu0 %v497
      %v1286 = vpop.f32.mrf.mxu0
      %v1287 = vadd.f32 %v1258, %v1286
      %v1288 = vpop.f32.mrf.mxu0
      %v1289 = vadd.f32 %v1260, %v1288
      %1290 = vmatmul.bf16.gmra.mxu0 %v504
      %v1291 = vpop.f32.mrf.mxu0
      %v1292 = vadd.f32 %v1263, %v1291
      %v1293 = vpop.f32.mrf.mxu0
      %v1294 = vadd.f32 %v1265, %v1293
      %1295 = vdwg.mxu0
      %1296 = vmatpush.bf16.msra.mxu0 %v884
      %1297 = vmatpush.bf16.msra.mxu0 %v882
      %1298 = vmatpush.bf16.msra.mxu0 %v880
      %1299 = vmatpush.bf16.msra.mxu0 %v878
      %1300 = vmatpush.bf16.msra.mxu0 %v876
      %1301 = vmatpush.bf16.msra.mxu0 %v874
      %1302 = vmatpush.bf16.msra.mxu0 %v872
      %1303 = vmatpush.bf16.msra.mxu0 %v870
      %1304 = vmatmul.bf16.gmra.mxu0 %v477
      %v1305 = vpop.f32.mrf.mxu0
      %v1306 = vadd.f32 0.0, %v1305
      %v1307 = vpop.f32.mrf.mxu0
      %v1308 = vadd.f32 0.0, %v1307
      %1309 = vmatmul.bf16.gmra.mxu0 %v484
      %v1310 = vpop.f32.mrf.mxu0
      %v1311 = vadd.f32 0.0, %v1310
      %v1312 = vpop.f32.mrf.mxu0
      %v1313 = vadd.f32 0.0, %v1312
      %1314 = vmatmul.bf16.gmra.mxu0 %v491
      %v1315 = vpop.f32.mrf.mxu0
      %v1316 = vadd.f32 0.0, %v1315
      %v1317 = vpop.f32.mrf.mxu0
      %v1318 = vadd.f32 0.0, %v1317
      %1319 = vmatmul.bf16.gmra.mxu0 %v498
      %v1320 = vpop.f32.mrf.mxu0
      %v1321 = vadd.f32 0.0, %v1320
      %v1322 = vpop.f32.mrf.mxu0
      %v1323 = vadd.f32 0.0, %v1322
      %1324 = vdwg.mxu0
      %1325 = vmatpush.bf16.msra.mxu0 %v900
      %1326 = vmatpush.bf16.msra.mxu0 %v898
      %1327 = vmatpush.bf16.msra.mxu0 %v896
      %1328 = vmatpush.bf16.msra.mxu0 %v894
      %1329 = vmatpush.bf16.msra.mxu0 %v892
      %1330 = vmatpush.bf16.msra.mxu0 %v890
      %1331 = vmatpush.bf16.msra.mxu0 %v888
      %1332 = vmatpush.bf16.msra.mxu0 %v886
      %1333 = vmatmul.bf16.gmra.mxu0 %v478
      %v1334 = vpop.f32.mrf.mxu0
      %v1335 = vadd.f32 %v1306, %v1334
      %v1336 = vpop.f32.mrf.mxu0
      %v1337 = vadd.f32 %v1308, %v1336
      %1338 = vmatmul.bf16.gmra.mxu0 %v485
      %v1339 = vpop.f32.mrf.mxu0
      %v1340 = vadd.f32 %v1311, %v1339
      %v1341 = vpop.f32.mrf.mxu0
      %v1342 = vadd.f32 %v1313, %v1341
      %1343 = vmatmul.bf16.gmra.mxu0 %v492
      %v1344 = vpop.f32.mrf.mxu0
      %v1345 = vadd.f32 %v1316, %v1344
      %v1346 = vpop.f32.mrf.mxu0
      %v1347 = vadd.f32 %v1318, %v1346
      %1348 = vmatmul.bf16.gmra.mxu0 %v499
      %v1349 = vpop.f32.mrf.mxu0
      %v1350 = vadd.f32 %v1321, %v1349
      %v1351 = vpop.f32.mrf.mxu0
      %v1352 = vadd.f32 %v1323, %v1351
      %1353 = vdwg.mxu0
      %1354 = vmatpush.bf16.msra.mxu0 %v916
      %1355 = vmatpush.bf16.msra.mxu0 %v914
      %1356 = vmatpush.bf16.msra.mxu0 %v912
      %1357 = vmatpush.bf16.msra.mxu0 %v910
      %1358 = vmatpush.bf16.msra.mxu0 %v908
      %1359 = vmatpush.bf16.msra.mxu0 %v906
      %1360 = vmatpush.bf16.msra.mxu0 %v904
      %1361 = vmatpush.bf16.msra.mxu0 %v902
      %1362 = vmatmul.bf16.gmra.mxu0 %v479
      %v1363 = vpop.f32.mrf.mxu0
      %v1364 = vadd.f32 %v1335, %v1363
      %v1365 = vpop.f32.mrf.mxu0
      %v1366 = vadd.f32 %v1337, %v1365
      %1367 = vmatmul.bf16.gmra.mxu0 %v486
      %v1368 = vpop.f32.mrf.mxu0
      %v1369 = vadd.f32 %v1340, %v1368
      %v1370 = vpop.f32.mrf.mxu0
      %v1371 = vadd.f32 %v1342, %v1370
      %1372 = vmatmul.bf16.gmra.mxu0 %v493
      %v1373 = vpop.f32.mrf.mxu0
      %v1374 = vadd.f32 %v1345, %v1373
      %v1375 = vpop.f32.mrf.mxu0
      %v1376 = vadd.f32 %v1347, %v1375
      %1377 = vmatmul.bf16.gmra.mxu0 %v500
      %v1378 = vpop.f32.mrf.mxu0
      %v1379 = vadd.f32 %v1350, %v1378
      %v1380 = vpop.f32.mrf.mxu0
      %v1381 = vadd.f32 %v1352, %v1380
      %1382 = vdwg.mxu0
      %1383 = vmatpush.bf16.msra.mxu0 %v932
      %1384 = vmatpush.bf16.msra.mxu0 %v930
      %1385 = vmatpush.bf16.msra.mxu0 %v928
      %1386 = vmatpush.bf16.msra.mxu0 %v926
      %1387 = vmatpush.bf16.msra.mxu0 %v924
      %1388 = vmatpush.bf16.msra.mxu0 %v922
      %1389 = vmatpush.bf16.msra.mxu0 %v920
      %1390 = vmatpush.bf16.msra.mxu0 %v918
      %1391 = vmatmul.bf16.gmra.mxu0 %v480
      %v1392 = vpop.f32.mrf.mxu0
      %v1393 = vadd.f32 %v1364, %v1392
      %v1394 = vpop.f32.mrf.mxu0
      %v1395 = vadd.f32 %v1366, %v1394
      %1396 = vmatmul.bf16.gmra.mxu0 %v487
      %v1397 = vpop.f32.mrf.mxu0
      %v1398 = vadd.f32 %v1369, %v1397
      %v1399 = vpop.f32.mrf.mxu0
      %v1400 = vadd.f32 %v1371, %v1399
      %1401 = vmatmul.bf16.gmra.mxu0 %v494
      %v1402 = vpop.f32.mrf.mxu0
      %v1403 = vadd.f32 %v1374, %v1402
      %v1404 = vpop.f32.mrf.mxu0
      %v1405 = vadd.f32 %v1376, %v1404
      %1406 = vmatmul.bf16.gmra.mxu0 %v501
      %v1407 = vpop.f32.mrf.mxu0
      %v1408 = vadd.f32 %v1379, %v1407
      %v1409 = vpop.f32.mrf.mxu0
      %v1410 = vadd.f32 %v1381, %v1409
      %1411 = vdwg.mxu0
      %1412 = vmatpush.bf16.msra.mxu0 %v948
      %1413 = vmatpush.bf16.msra.mxu0 %v946
      %1414 = vmatpush.bf16.msra.mxu0 %v944
      %1415 = vmatpush.bf16.msra.mxu0 %v942
      %1416 = vmatpush.bf16.msra.mxu0 %v940
      %1417 = vmatpush.bf16.msra.mxu0 %v938
      %1418 = vmatpush.bf16.msra.mxu0 %v936
      %1419 = vmatpush.bf16.msra.mxu0 %v934
      %1420 = vmatmul.bf16.gmra.mxu0 %v481
      %v1421 = vpop.f32.mrf.mxu0
      %v1422 = vadd.f32 %v1393, %v1421
      %v1423 = vpop.f32.mrf.mxu0
      %v1424 = vadd.f32 %v1395, %v1423
      %1425 = vmatmul.bf16.gmra.mxu0 %v488
      %v1426 = vpop.f32.mrf.mxu0
      %v1427 = vadd.f32 %v1398, %v1426
      %v1428 = vpop.f32.mrf.mxu0
      %v1429 = vadd.f32 %v1400, %v1428
      %1430 = vmatmul.bf16.gmra.mxu0 %v495
      %v1431 = vpop.f32.mrf.mxu0
      %v1432 = vadd.f32 %v1403, %v1431
      %v1433 = vpop.f32.mrf.mxu0
      %v1434 = vadd.f32 %v1405, %v1433
      %1435 = vmatmul.bf16.gmra.mxu0 %v502
      %v1436 = vpop.f32.mrf.mxu0
      %v1437 = vadd.f32 %v1408, %v1436
      %v1438 = vpop.f32.mrf.mxu0
      %v1439 = vadd.f32 %v1410, %v1438
      %1440 = vdwg.mxu0
      %1441 = vmatpush.bf16.msra.mxu0 %v964
      %1442 = vmatpush.bf16.msra.mxu0 %v962
      %1443 = vmatpush.bf16.msra.mxu0 %v960
      %1444 = vmatpush.bf16.msra.mxu0 %v958
      %1445 = vmatpush.bf16.msra.mxu0 %v956
      %1446 = vmatpush.bf16.msra.mxu0 %v954
      %1447 = vmatpush.bf16.msra.mxu0 %v952
      %1448 = vmatpush.bf16.msra.mxu0 %v950
      %1449 = vmatmul.bf16.gmra.mxu0 %v482
      %v1450 = vpop.f32.mrf.mxu0
      %v1451 = vadd.f32 %v1422, %v1450
      %v1452 = vpop.f32.mrf.mxu0
      %v1453 = vadd.f32 %v1424, %v1452
      %1454 = vmatmul.bf16.gmra.mxu0 %v489
      %v1455 = vpop.f32.mrf.mxu0
      %v1456 = vadd.f32 %v1427, %v1455
      %v1457 = vpop.f32.mrf.mxu0
      %v1458 = vadd.f32 %v1429, %v1457
      %1459 = vmatmul.bf16.gmra.mxu0 %v496
      %v1460 = vpop.f32.mrf.mxu0
      %v1461 = vadd.f32 %v1432, %v1460
      %v1462 = vpop.f32.mrf.mxu0
      %v1463 = vadd.f32 %v1434, %v1462
      %1464 = vmatmul.bf16.gmra.mxu0 %v503
      %v1465 = vpop.f32.mrf.mxu0
      %v1466 = vadd.f32 %v1437, %v1465
      %v1467 = vpop.f32.mrf.mxu0
      %v1468 = vadd.f32 %v1439, %v1467
      %1469 = vdwg.mxu0
      %1470 = vmatpush.bf16.msra.mxu0 %v980
      %1471 = vmatpush.bf16.msra.mxu0 %v978
      %1472 = vmatpush.bf16.msra.mxu0 %v976
      %1473 = vmatpush.bf16.msra.mxu0 %v974
      %1474 = vmatpush.bf16.msra.mxu0 %v972
      %1475 = vmatpush.bf16.msra.mxu0 %v970
      %1476 = vmatpush.bf16.msra.mxu0 %v968
      %1477 = vmatpush.bf16.msra.mxu0 %v966
      %1478 = vmatmul.bf16.gmra.mxu0 %v483
      %v1479 = vpop.f32.mrf.mxu0
      %v1480 = vadd.f32 %v1451, %v1479
      %v1481 = vpop.f32.mrf.mxu0
      %v1482 = vadd.f32 %v1453, %v1481
      %1483 = vmatmul.bf16.gmra.mxu0 %v490
      %v1484 = vpop.f32.mrf.mxu0
      %v1485 = vadd.f32 %v1456, %v1484
      %v1486 = vpop.f32.mrf.mxu0
      %v1487 = vadd.f32 %v1458, %v1486
      %1488 = vmatmul.bf16.gmra.mxu0 %v497
      %v1489 = vpop.f32.mrf.mxu0
      %v1490 = vadd.f32 %v1461, %v1489
      %v1491 = vpop.f32.mrf.mxu0
      %v1492 = vadd.f32 %v1463, %v1491
      %1493 = vmatmul.bf16.gmra.mxu0 %v504
      %v1494 = vpop.f32.mrf.mxu0
      %v1495 = vadd.f32 %v1466, %v1494
      %v1496 = vpop.f32.mrf.mxu0
      %v1497 = vadd.f32 %v1468, %v1496
      %1498 = vdwg.mxu0
      %v1499 = vld [vmem:[%s2] sm:$0x3]
      %v1501 = vperm.slane %v1499, 0
      %v1502 = vperm.slane %v1499, 1
      %v1505 = vmul.f32 %v1277, %v1501
      %v1506 = vmul.f32 %v1480, %v1502
      %v1507 = vmul.f32 %v1279, %v1501
      %v1508 = vmul.f32 %v1482, %v1502
      %v1509 = vmul.f32 %v1282, %v1501
      %v1510 = vmul.f32 %v1485, %v1502
      %v1511 = vmul.f32 %v1284, %v1501
      %v1512 = vmul.f32 %v1487, %v1502
      %v1513 = vmul.f32 %v1287, %v1501
      %v1514 = vmul.f32 %v1490, %v1502
      %v1515 = vmul.f32 %v1289, %v1501
      %v1516 = vmul.f32 %v1492, %v1502
      %v1517 = vmul.f32 %v1292, %v1501
      %v1518 = vmul.f32 %v1495, %v1502
      %v1519 = vmul.f32 %v1294, %v1501
      %v1520 = vmul.f32 %v1497, %v1502
      %v1521 = vld [vmem:[%s3] sm:$0x3]
      %v1523 = vperm.slane %v1521, 0
      %v1524 = vperm.slane %v1521, 1
      %v1527 = vadd.f32 %v1505, %v1523
      %v1528 = vadd.f32 %v1506, %v1524
      %v1529 = vadd.f32 %v1507, %v1523
      %v1530 = vadd.f32 %v1508, %v1524
      %v1531 = vadd.f32 %v1509, %v1523
      %v1532 = vadd.f32 %v1510, %v1524
      %v1533 = vadd.f32 %v1511, %v1523
      %v1534 = vadd.f32 %v1512, %v1524
      %v1535 = vadd.f32 %v1513, %v1523
      %v1536 = vadd.f32 %v1514, %v1524
      %v1537 = vadd.f32 %v1515, %v1523
      %v1538 = vadd.f32 %v1516, %v1524
      %v1539 = vadd.f32 %v1517, %v1523
      %v1540 = vadd.f32 %v1518, %v1524
      %v1541 = vadd.f32 %v1519, %v1523
      %v1542 = vadd.f32 %v1520, %v1524
      %v1543 = vmax.f32 %v1527, 0.0
      %v1544 = vmax.f32 %v1528, 0.0
      %v1545 = vmax.f32 %v1529, 0.0
      %v1546 = vmax.f32 %v1530, 0.0
      %v1547 = vmax.f32 %v1531, 0.0
      %v1548 = vmax.f32 %v1532, 0.0
      %v1549 = vmax.f32 %v1533, 0.0
      %v1550 = vmax.f32 %v1534, 0.0
      %v1551 = vmax.f32 %v1535, 0.0
      %v1552 = vmax.f32 %v1536, 0.0
      %v1553 = vmax.f32 %v1537, 0.0
      %v1554 = vmax.f32 %v1538, 0.0
      %v1555 = vmax.f32 %v1539, 0.0
      %v1556 = vmax.f32 %v1540, 0.0
      %v1557 = vmax.f32 %v1541, 0.0
      %v1558 = vmax.f32 %v1542, 0.0
      %v1559 = vpack.c.bf16 %v1543, %v1543
      %v1560 = vpack.c.bf16 %v1545, %v1545
      %v1561 = vpack.c.bf16 %v1547, %v1547
      %v1562 = vpack.c.bf16 %v1549, %v1549
      %v1563 = vpack.c.bf16 %v1551, %v1551
      %v1564 = vpack.c.bf16 %v1553, %v1553
      %v1565 = vpack.c.bf16 %v1555, %v1555
      %v1566 = vpack.c.bf16 %v1557, %v1557
      %1567 = vst [vmem:[%s237] sm:$0xf] %v1559
      %1568 = vst [vmem:[%s237 + $0x4] sm:$0xf] %v1560
      %1569 = vst [vmem:[%s237 + $0x8] sm:$0xf] %v1561
      %1570 = vst [vmem:[%s237 + $0xc] sm:$0xf] %v1562
      %1571 = vst [vmem:[%s237 + $0x10] sm:$0xf] %v1563
      %1572 = vst [vmem:[%s237 + $0x14] sm:$0xf] %v1564
      %1573 = vst [vmem:[%s237 + $0x18] sm:$0xf] %v1565
      %1574 = vst [vmem:[%s237 + $0x1c] sm:$0xf] %v1566
      %v1575 = vpack.c.bf16 %v1544, %v1544
      %v1576 = vpack.c.bf16 %v1546, %v1546
      %v1577 = vpack.c.bf16 %v1548, %v1548
      %v1578 = vpack.c.bf16 %v1550, %v1550
      %v1579 = vpack.c.bf16 %v1552, %v1552
      %v1580 = vpack.c.bf16 %v1554, %v1554
      %v1581 = vpack.c.bf16 %v1556, %v1556
      %v1582 = vpack.c.bf16 %v1558, %v1558
      %1583 = vst [vmem:[%s243] sm:$0xf] %v1575
      %1584 = vst [vmem:[%s243 + $0x4] sm:$0xf] %v1576
      %1585 = vst [vmem:[%s243 + $0x8] sm:$0xf] %v1577
      %1586 = vst [vmem:[%s243 + $0xc] sm:$0xf] %v1578
      %1587 = vst [vmem:[%s243 + $0x10] sm:$0xf] %v1579
      %1588 = vst [vmem:[%s243 + $0x14] sm:$0xf] %v1580
      %1589 = vst [vmem:[%s243 + $0x18] sm:$0xf] %v1581
      %1590 = vst [vmem:[%s243 + $0x1c] sm:$0xf] %v1582
      %s1591 = smul.u32 8, %s17
      %p1592 = scmp.lt.s32.totalorder %s1591, 15
      %s1593 = scalar_select %p1592, %s1591, 15
      %s1594 = smul.addr %s1593, 4
      %s1595 = scalar_lea.vmem %s4, %s1594
      %s1596 = smul.u32 8, %s17
      %p1597 = scmp.lt.s32.totalorder %s1596, 15
      %s1598 = scalar_select %p1597, %s1596, 15
      %s1599 = smul.addr %s1598, 4
      %s1600 = scalar_lea.vmem %s5, %s1599
      // Predicated region
      $region37: #{block17_pallas.3} parent=35 // pred_check
        %p1601 = pneg %p124
      $region38: #{block17_pallas.3} parent=35 // pred_check_branch
        %1603 = sbr.rel (%p1601) target = $region40
      $region39: #{block17_pallas.3} parent=35 // pred_region
        %s1604 = smul.u32 8, %s17
      $region40: #{block17_pallas.3} parent=35 // pred_fallthru
        _
      // Predicated region
      $region41: #{block17_pallas.3} parent=35 // pred_check
        %p1605 = pneg %p150
      $region42: #{block17_pallas.3} parent=35 // pred_check_branch
        %1607 = sbr.rel (%p1605) target = $region44
      $region43: #{block17_pallas.3} parent=35 // pred_region
        %s1608 = smul.u32 8, %s17
      $region44: #{block17_pallas.3} parent=35 // pred_fallthru
        _
    $region36: #{block17_pallas.3} parent=5 // pred_fallthru
      _
    %p1609 = scmp.le.s32.totalorder 2, %s12
    // Predicated region
    $region45: #{block17_pallas.3} parent=5 // pred_check
      %p1610 = pneg %p1609
    $region46: #{block17_pallas.3} parent=5 // pred_check_branch
      %1612 = sbr.rel (%p1610) target = $region48
    $region47: #{block17_pallas.3} parent=5 // pred_region
      %s1613 = ssub.s32 %s12, 2
      // Predicated region
      $region49: #{block17_pallas.3} parent=47 // pred_check
        %p1614 = pneg %p130
      $region50: #{block17_pallas.3} parent=47 // pred_check_branch
        %1616 = sbr.rel (%p1614) target = $region52
      $region51: #{block17_pallas.3} parent=47 // pred_region
        %s1617 = smul.u32 8, %s18
        %p1618 = scmp.lt.s32.totalorder %s1617, 15
        %s1619 = scalar_select %p1618, %s1617, 15
        %s1620 = smul.addr %s1619, 4
        %s1621 = scalar_lea.vmem %s4, %s1620
      $region52: #{block17_pallas.3} parent=47 // pred_fallthru
        _
      // Predicated region
      $region53: #{block17_pallas.3} parent=47 // pred_check
        %p1622 = pneg %p156
      $region54: #{block17_pallas.3} parent=47 // pred_check_branch
        %1624 = sbr.rel (%p1622) target = $region56
      $region55: #{block17_pallas.3} parent=47 // pred_region
        %s1625 = smul.u32 8, %s18
        %p1626 = scmp.lt.s32.totalorder %s1625, 15
        %s1627 = scalar_select %p1626, %s1625, 15
        %s1628 = smul.addr %s1627, 4
        %s1629 = scalar_lea.vmem %s5, %s1628
      $region56: #{block17_pallas.3} parent=47 // pred_fallthru
        _
    $region48: #{block17_pallas.3} parent=5 // pred_fallthru
      _
  $region6: #{block17_pallas.3} parent=0 // loop_footer
    %s16 = sadd.s32 1, %s12
  $region7: #{block17_pallas.3} parent=0 // loop_footer_branch
    %11 = sbr.rel target = $region3
  $region8: #{block17_pallas.3} parent=0 // loop_exit
    _

// kernel: block17_pallas.5
$region0: #{block17_pallas.5}
  #allocation0 [shape = 'u32[]', space=smem, size = 0x4, offset = 0x4, fixed_abs, tag = 'smem constant byte address 0x4 - core index']
  #allocation1 [shape = 'u32[72,128]{1,0:T(1,128)}', space=vmem, size = 0x9000, scoped, tag = 'internal scratch']
  %s0 = inlined_call_operand.vmem [shape: f32[2,64,896], index: 0, kind: input, shape index: {}]
  %s1 = inlined_call_operand.vmem [shape: bf16[2,64,128], index: 1, kind: input, shape index: {}]
  %s2 = inlined_call_operand.vmem [shape: bf16[2,64,128], index: 2, kind: input, shape index: {}]
  %s3 = inlined_call_operand.vmem [shape: f32[1,896], index: 3, kind: input, shape index: {}]
  %s4 = inlined_call_operand.vmem [shape: f32[1,896], index: 4, kind: input, shape index: {}]
  %s5 = inlined_call_operand.vmem [shape: f32[1,896], index: 5, kind: input, shape index: {}]
  %s6 = inlined_call_operand.hbm [shape: bf16[256,256], index: 6, kind: input, shape index: {}]
  %s7 = inlined_call_operand.vmem [shape: bf16[896,256], index: 7, kind: input, shape index: {}]
  %s8 = inlined_call_operand.vmem [shape: f32[1,256], index: 8, kind: input, shape index: {}]
  %s9 = inlined_call_operand.vmem [shape: bf16[256,896], index: 9, kind: input, shape index: {}]
  %s10 = inlined_call_operand.vmem [shape: f32[1,896], index: 10, kind: input, shape index: {}]
  %s11 = inlined_call_operand.hbm [shape: f32[2,64,896], index: 11, kind: output, shape index: {}]
  %s12 = sld [smem:[#allocation0]]
  $region81: #{block17_pallas.5} parent=0
    _
  %s14 = ssub.s32 1, %s12
  %s15 = scalar_select 0, %s14, %s12
  $region1: #{block17_pallas.5} parent=0
    #allocation2 [shape = 'u8[131072]{0}', space=vmem, size = 0x20000, scoped, tag = 'input window, operand 6, single buffered']
    #allocation3 [shape = 's32[2]{0}', space=sflag, size = 0x8, scoped, tag = 'scoped memory for block17_pallas.5']
    #allocation4 [shape = 's32[2]{0}', space=sflag, size = 0x8, scoped, tag = 'scoped memory for block17_pallas.5']
    #allocation5 [shape = 'u8[458752]{0}', space=vmem, size = 0x70000, scoped, tag = 'output window, operand 0']
    %16 = vsyncpa [#allocation3], 0
    %17 = vsyncpa [#allocation4], 0
    %s18 = scalar_lea.sflag [#allocation4], 1
    %19 = vsyncpa %s18, 0
    loop: start=0, step=1, limit=4
    $region2: #{block17_pallas.5} parent=1 // loop_pre_header
      _
    $region3: #{block17_pallas.5} parent=1 // loop_header
      %s21 = sphi 0, %s25
      %p22 = scmp.ge.s32.totalorder %s21, 4
      %s31 = sphi 0, %s33
      %s34 = sphi 0, %s31
      %s35 = sphi 0, %s34
      %s51 = sphi 0, %s35
      %s57 = sphi 0, %s59
      %s60 = sphi 0, %s57
      %s61 = sphi 0, %s60
      %s77 = sphi 0, %s61
      %s83 = sphi 0, %s85
      %s86 = sphi 0, %s83
      %s87 = sphi 0, %s86
      %s103 = sphi 0, %s87
      %s107 = sphi 0, %s107
      %s109 = sphi 0, %s107
      %s110 = sphi 0, %s109
      %s124 = sphi 0, %s110
      %s128 = sphi 0, %s128
      %s130 = sphi 0, %s128
      %s131 = sphi 0, %s130
      %s145 = sphi 0, %s131
      %s149 = sphi 0, %s149
      %s151 = sphi 0, %s149
      %s152 = sphi 0, %s151
      %s166 = sphi 0, %s152
      %s170 = sphi 0, %s170
      %s172 = sphi 0, %s170
      %s173 = sphi 0, %s172
      %s187 = sphi 0, %s173
      %s191 = sphi 0, %s191
      %s193 = sphi 0, %s191
      %s194 = sphi 0, %s193
      %s208 = sphi 0, %s194
      %s212 = sphi 0, %s212
      %s214 = sphi 0, %s212
      %s215 = sphi 0, %s214
      %s229 = sphi 0, %s215
      %s233 = sphi 0, %s233
      %s235 = sphi 0, %s233
      %s236 = sphi 0, %s235
      %s250 = sphi 0, %s236
      %s254 = sphi 0, %s254
      %s256 = sphi 0, %s254
      %s257 = sphi 0, %s256
      %s271 = sphi 0, %s257
      %s277 = sphi 0, %s279
      %s280 = sphi 0, %s277
      %s281 = sphi 0, %s280
      %s297 = sphi 0, %s281
    $region4: #{block17_pallas.5} parent=1 // loop_header_branch
      %24 = sbr.rel (%p22) target = $region8
    $region5: #{block17_pallas.5} parent=1 // loop_body
      %s26 = ssub.s32 %s21, 1
      %s27 = ssub.s32 %s21, 2
      %s28 = sadd.s32 %s21, 1
      %s29 = ssub.s32 %s21, %s28
      %p30 = scmp.eq.s32.totalorder %s29, 0
      %s32 = sadd.s32 %s31, 1
      %s33 = scalar_select %p30, %s31, %s32
      %p36 = pneg %p30
      %p37 = scmp.eq.s32.totalorder %s21, 1
      %p38 = por %p36, %p37
      %p39 = scmp.ne.s32.totalorder %s31, %s34
      %p40 = scmp.eq.s32.totalorder %s21, 0
      %p41 = por %p39, %p40
      %p42 = scmp.ne.s32.totalorder %s31, %s34
      %p43 = scmp.eq.s32.totalorder %s26, 1
      %p44 = por %p42, %p43
      %p45 = scmp.ne.s32.totalorder %s34, %s35
      %p46 = scmp.eq.s32.totalorder %s26, 0
      %p47 = por %p45, %p46
      %p48 = scmp.ne.s32.totalorder %s34, %s35
      %p49 = scmp.eq.s32.totalorder %s27, 1
      %p50 = por %p48, %p49
      %p52 = scmp.ne.s32.totalorder %s35, %s51
      %p53 = scmp.eq.s32.totalorder %s27, 0
      %p54 = por %p52, %p53
      %s55 = ssub.s32 %s21, %s28
      %p56 = scmp.eq.s32.totalorder %s55, 0
      %s58 = sadd.s32 %s57, 1
      %s59 = scalar_select %p56, %s57, %s58
      %p62 = pneg %p56
      %p63 = scmp.eq.s32.totalorder %s21, 1
      %p64 = por %p62, %p63
      %p65 = scmp.ne.s32.totalorder %s57, %s60
      %p66 = scmp.eq.s32.totalorder %s21, 0
      %p67 = por %p65, %p66
      %p68 = scmp.ne.s32.totalorder %s57, %s60
      %p69 = scmp.eq.s32.totalorder %s26, 1
      %p70 = por %p68, %p69
      %p71 = scmp.ne.s32.totalorder %s60, %s61
      %p72 = scmp.eq.s32.totalorder %s26, 0
      %p73 = por %p71, %p72
      %p74 = scmp.ne.s32.totalorder %s60, %s61
      %p75 = scmp.eq.s32.totalorder %s27, 1
      %p76 = por %p74, %p75
      %p78 = scmp.ne.s32.totalorder %s61, %s77
      %p79 = scmp.eq.s32.totalorder %s27, 0
      %p80 = por %p78, %p79
      %s81 = ssub.s32 %s21, %s28
      %p82 = scmp.eq.s32.totalorder %s81, 0
      %s84 = sadd.s32 %s83, 1
      %s85 = scalar_select %p82, %s83, %s84
      %p88 = pneg %p82
      %p89 = scmp.eq.s32.totalorder %s21, 1
      %p90 = por %p88, %p89
      %p91 = scmp.ne.s32.totalorder %s83, %s86
      %p92 = scmp.eq.s32.totalorder %s21, 0
      %p93 = por %p91, %p92
      %p94 = scmp.ne.s32.totalorder %s83, %s86
      %p95 = scmp.eq.s32.totalorder %s26, 1
      %p96 = por %p94, %p95
      %p97 = scmp.ne.s32.totalorder %s86, %s87
      %p98 = scmp.eq.s32.totalorder %s26, 0
      %p99 = por %p97, %p98
      %p100 = scmp.ne.s32.totalorder %s86, %s87
      %p101 = scmp.eq.s32.totalorder %s27, 1
      %p102 = por %p100, %p101
      %p104 = scmp.ne.s32.totalorder %s87, %s103
      %p105 = scmp.eq.s32.totalorder %s27, 0
      %p106 = por %p104, %p105
      %s108 = sadd.s32 %s107, 1
      %p111 = scmp.eq.s32.totalorder %s21, 1
      %p112 = scmp.ne.s32.totalorder %s107, %s109
      %p113 = scmp.eq.s32.totalorder %s21, 0
      %p114 = por %p112, %p113
      %p115 = scmp.ne.s32.totalorder %s107, %s109
      %p116 = scmp.eq.s32.totalorder %s26, 1
      %p117 = por %p115, %p116
      %p118 = scmp.ne.s32.totalorder %s109, %s110
      %p119 = scmp.eq.s32.totalorder %s26, 0
      %p120 = por %p118, %p119
      %p121 = scmp.ne.s32.totalorder %s109, %s110
      %p122 = scmp.eq.s32.totalorder %s27, 1
      %p123 = por %p121, %p122
      %p125 = scmp.ne.s32.totalorder %s110, %s124
      %p126 = scmp.eq.s32.totalorder %s27, 0
      %p127 = por %p125, %p126
      %s129 = sadd.s32 %s128, 1
      %p132 = scmp.eq.s32.totalorder %s21, 1
      %p133 = scmp.ne.s32.totalorder %s128, %s130
      %p134 = scmp.eq.s32.totalorder %s21, 0
      %p135 = por %p133, %p134
      %p136 = scmp.ne.s32.totalorder %s128, %s130
      %p137 = scmp.eq.s32.totalorder %s26, 1
      %p138 = por %p136, %p137
      %p139 = scmp.ne.s32.totalorder %s130, %s131
      %p140 = scmp.eq.s32.totalorder %s26, 0
      %p141 = por %p139, %p140
      %p142 = scmp.ne.s32.totalorder %s130, %s131
      %p143 = scmp.eq.s32.totalorder %s27, 1
      %p144 = por %p142, %p143
      %p146 = scmp.ne.s32.totalorder %s131, %s145
      %p147 = scmp.eq.s32.totalorder %s27, 0
      %p148 = por %p146, %p147
      %s150 = sadd.s32 %s149, 1
      %p153 = scmp.eq.s32.totalorder %s21, 1
      %p154 = scmp.ne.s32.totalorder %s149, %s151
      %p155 = scmp.eq.s32.totalorder %s21, 0
      %p156 = por %p154, %p155
      %p157 = scmp.ne.s32.totalorder %s149, %s151
      %p158 = scmp.eq.s32.totalorder %s26, 1
      %p159 = por %p157, %p158
      %p160 = scmp.ne.s32.totalorder %s151, %s152
      %p161 = scmp.eq.s32.totalorder %s26, 0
      %p162 = por %p160, %p161
      %p163 = scmp.ne.s32.totalorder %s151, %s152
      %p164 = scmp.eq.s32.totalorder %s27, 1
      %p165 = por %p163, %p164
      %p167 = scmp.ne.s32.totalorder %s152, %s166
      %p168 = scmp.eq.s32.totalorder %s27, 0
      %p169 = por %p167, %p168
      %s171 = sadd.s32 %s170, 1
      %p174 = scmp.eq.s32.totalorder %s21, 1
      %p175 = scmp.ne.s32.totalorder %s170, %s172
      %p176 = scmp.eq.s32.totalorder %s21, 0
      %p177 = por %p175, %p176
      %p178 = scmp.ne.s32.totalorder %s170, %s172
      %p179 = scmp.eq.s32.totalorder %s26, 1
      %p180 = por %p178, %p179
      %p181 = scmp.ne.s32.totalorder %s172, %s173
      %p182 = scmp.eq.s32.totalorder %s26, 0
      %p183 = por %p181, %p182
      %p184 = scmp.ne.s32.totalorder %s172, %s173
      %p185 = scmp.eq.s32.totalorder %s27, 1
      %p186 = por %p184, %p185
      %p188 = scmp.ne.s32.totalorder %s173, %s187
      %p189 = scmp.eq.s32.totalorder %s27, 0
      %p190 = por %p188, %p189
      %s192 = sadd.s32 %s191, 1
      %p195 = scmp.eq.s32.totalorder %s21, 1
      %p196 = scmp.ne.s32.totalorder %s191, %s193
      %p197 = scmp.eq.s32.totalorder %s21, 0
      %p198 = por %p196, %p197
      %p199 = scmp.ne.s32.totalorder %s191, %s193
      %p200 = scmp.eq.s32.totalorder %s26, 1
      %p201 = por %p199, %p200
      %p202 = scmp.ne.s32.totalorder %s193, %s194
      %p203 = scmp.eq.s32.totalorder %s26, 0
      %p204 = por %p202, %p203
      %p205 = scmp.ne.s32.totalorder %s193, %s194
      %p206 = scmp.eq.s32.totalorder %s27, 1
      %p207 = por %p205, %p206
      %p209 = scmp.ne.s32.totalorder %s194, %s208
      %p210 = scmp.eq.s32.totalorder %s27, 0
      %p211 = por %p209, %p210
      %s213 = sadd.s32 %s212, 1
      %p216 = scmp.eq.s32.totalorder %s21, 1
      %p217 = scmp.ne.s32.totalorder %s212, %s214
      %p218 = scmp.eq.s32.totalorder %s21, 0
      %p219 = por %p217, %p218
      %p220 = scmp.ne.s32.totalorder %s212, %s214
      %p221 = scmp.eq.s32.totalorder %s26, 1
      %p222 = por %p220, %p221
      %p223 = scmp.ne.s32.totalorder %s214, %s215
      %p224 = scmp.eq.s32.totalorder %s26, 0
      %p225 = por %p223, %p224
      %p226 = scmp.ne.s32.totalorder %s214, %s215
      %p227 = scmp.eq.s32.totalorder %s27, 1
      %p228 = por %p226, %p227
      %p230 = scmp.ne.s32.totalorder %s215, %s229
      %p231 = scmp.eq.s32.totalorder %s27, 0
      %p232 = por %p230, %p231
      %s234 = sadd.s32 %s233, 1
      %p237 = scmp.eq.s32.totalorder %s21, 1
      %p238 = scmp.ne.s32.totalorder %s233, %s235
      %p239 = scmp.eq.s32.totalorder %s21, 0
      %p240 = por %p238, %p239
      %p241 = scmp.ne.s32.totalorder %s233, %s235
      %p242 = scmp.eq.s32.totalorder %s26, 1
      %p243 = por %p241, %p242
      %p244 = scmp.ne.s32.totalorder %s235, %s236
      %p245 = scmp.eq.s32.totalorder %s26, 0
      %p246 = por %p244, %p245
      %p247 = scmp.ne.s32.totalorder %s235, %s236
      %p248 = scmp.eq.s32.totalorder %s27, 1
      %p249 = por %p247, %p248
      %p251 = scmp.ne.s32.totalorder %s236, %s250
      %p252 = scmp.eq.s32.totalorder %s27, 0
      %p253 = por %p251, %p252
      %s255 = sadd.s32 %s254, 1
      %p258 = scmp.eq.s32.totalorder %s21, 1
      %p259 = scmp.ne.s32.totalorder %s254, %s256
      %p260 = scmp.eq.s32.totalorder %s21, 0
      %p261 = por %p259, %p260
      %p262 = scmp.ne.s32.totalorder %s254, %s256
      %p263 = scmp.eq.s32.totalorder %s26, 1
      %p264 = por %p262, %p263
      %p265 = scmp.ne.s32.totalorder %s256, %s257
      %p266 = scmp.eq.s32.totalorder %s26, 0
      %p267 = por %p265, %p266
      %p268 = scmp.ne.s32.totalorder %s256, %s257
      %p269 = scmp.eq.s32.totalorder %s27, 1
      %p270 = por %p268, %p269
      %p272 = scmp.ne.s32.totalorder %s257, %s271
      %p273 = scmp.eq.s32.totalorder %s27, 0
      %p274 = por %p272, %p273
      %s275 = ssub.s32 %s21, %s28
      %p276 = scmp.eq.s32.totalorder %s275, 0
      %s278 = sadd.s32 %s277, 1
      %s279 = scalar_select %p276, %s277, %s278
      %p282 = pneg %p276
      %p283 = scmp.eq.s32.totalorder %s21, 1
      %p284 = por %p282, %p283
      %p285 = scmp.ne.s32.totalorder %s277, %s280
      %p286 = scmp.eq.s32.totalorder %s21, 0
      %p287 = por %p285, %p286
      %p288 = scmp.ne.s32.totalorder %s277, %s280
      %p289 = scmp.eq.s32.totalorder %s26, 1
      %p290 = por %p288, %p289
      %p291 = scmp.ne.s32.totalorder %s280, %s281
      %p292 = scmp.eq.s32.totalorder %s26, 0
      %p293 = por %p291, %p292
      %p294 = scmp.ne.s32.totalorder %s280, %s281
      %p295 = scmp.eq.s32.totalorder %s27, 1
      %p296 = por %p294, %p295
      %p298 = scmp.ne.s32.totalorder %s281, %s297
      %p299 = scmp.eq.s32.totalorder %s27, 0
      %p300 = por %p298, %p299
      %p301 = scmp.le.s32.totalorder 1, %s21
      %p302 = scmp.lt.s32.totalorder %s21, 3
      %p303 = pnand %p301, %p302
      %p304 = pneg %p303
      // Predicated region
      $region9: #{block17_pallas.5} parent=5 // pred_check
        _
      $region10: #{block17_pallas.5} parent=5 // pred_check_branch
        %306 = sbr.rel (%p303) target = $region12
      $region11: #{block17_pallas.5} parent=5 // pred_region
        %s307 = ssub.s32 %s21, 1
        // Predicated region
        $region13: #{block17_pallas.5} parent=11 // pred_check
          %p308 = pneg %p120
        $region14: #{block17_pallas.5} parent=11 // pred_check_branch
          %310 = sbr.rel (%p308) target = $region16
        $region15: #{block17_pallas.5} parent=11 // pred_region
          _
        $region16: #{block17_pallas.5} parent=11 // pred_fallthru
          _
        // Predicated region
        $region17: #{block17_pallas.5} parent=11 // pred_check
          %p311 = pneg %p141
        $region18: #{block17_pallas.5} parent=11 // pred_check_branch
          %313 = sbr.rel (%p311) target = $region20
        $region19: #{block17_pallas.5} parent=11 // pred_region
          _
        $region20: #{block17_pallas.5} parent=11 // pred_fallthru
          _
        // Predicated region
        $region21: #{block17_pallas.5} parent=11 // pred_check
          %p314 = pneg %p162
        $region22: #{block17_pallas.5} parent=11 // pred_check_branch
          %316 = sbr.rel (%p314) target = $region24
        $region23: #{block17_pallas.5} parent=11 // pred_region
          _
        $region24: #{block17_pallas.5} parent=11 // pred_fallthru
          _
        // Predicated region
        $region25: #{block17_pallas.5} parent=11 // pred_check
          %p317 = pneg %p183
        $region26: #{block17_pallas.5} parent=11 // pred_check_branch
          %319 = sbr.rel (%p317) target = $region28
        $region27: #{block17_pallas.5} parent=11 // pred_region
          %321 = vsyncadd [#allocation3], 0
          %s322 = sshll.u32 %s6, 4
          %s323 = int_to_ptr.hbm [resolvable:$true] %s322
          %s324 = sshll.u32 [#allocation2], 4
          %s325 = int_to_ptr.vmem [resolvable:$true] %s324
          %330 = dma.hbm_to_vmem [thread:$0]  %s323, 4096, %s325, [#allocation3], 128, 128, 8
        $region28: #{block17_pallas.5} parent=11 // pred_fallthru
          _
        // Predicated region
        $region29: #{block17_pallas.5} parent=11 // pred_check
          %p331 = pneg %p204
        $region30: #{block17_pallas.5} parent=11 // pred_check_branch
          %333 = sbr.rel (%p331) target = $region32
        $region31: #{block17_pallas.5} parent=11 // pred_region
          _
        $region32: #{block17_pallas.5} parent=11 // pred_fallthru
          _
        // Predicated region
        $region33: #{block17_pallas.5} parent=11 // pred_check
          %p334 = pneg %p225
        $region34: #{block17_pallas.5} parent=11 // pred_check_branch
          %336 = sbr.rel (%p334) target = $region36
        $region35: #{block17_pallas.5} parent=11 // pred_region
          _
        $region36: #{block17_pallas.5} parent=11 // pred_fallthru
          _
        // Predicated region
        $region37: #{block17_pallas.5} parent=11 // pred_check
          %p337 = pneg %p246
        $region38: #{block17_pallas.5} parent=11 // pred_check_branch
          %339 = sbr.rel (%p337) target = $region40
        $region39: #{block17_pallas.5} parent=11 // pred_region
          _
        $region40: #{block17_pallas.5} parent=11 // pred_fallthru
          _
        // Predicated region
        $region41: #{block17_pallas.5} parent=11 // pred_check
          %p340 = pneg %p267
        $region42: #{block17_pallas.5} parent=11 // pred_check_branch
          %342 = sbr.rel (%p340) target = $region44
        $region43: #{block17_pallas.5} parent=11 // pred_region
          _
        $region44: #{block17_pallas.5} parent=11 // pred_fallthru
          _
      $region12: #{block17_pallas.5} parent=5 // pred_fallthru
        _
      %p343 = scmp.lt.s32.totalorder %s21, 2
      // Predicated region
      $region45: #{block17_pallas.5} parent=5 // pred_check
        %p344 = pneg %p343
      $region46: #{block17_pallas.5} parent=5 // pred_check_branch
        %346 = sbr.rel (%p344) target = $region48
      $region47: #{block17_pallas.5} parent=5 // pred_region
        // Predicated region
        $region49: #{block17_pallas.5} parent=47 // pred_check
          %p347 = pneg %p41
        $region50: #{block17_pallas.5} parent=47 // pred_check_branch
          %349 = sbr.rel (%p347) target = $region52
        $region51: #{block17_pallas.5} parent=47 // pred_region
          %p350 = scmp.lt.s32.totalorder %s21, 1
          %s351 = scalar_select %p350, %s21, 1
          %s352 = smul.addr %s351, 56
          %s353 = smul.addr %s352, 8
          %s354 = scalar_lea.vmem %s0, %s353
        $region52: #{block17_pallas.5} parent=47 // pred_fallthru
          _
        // Predicated region
        $region53: #{block17_pallas.5} parent=47 // pred_check
          %p355 = pneg %p67
        $region54: #{block17_pallas.5} parent=47 // pred_check_branch
          %357 = sbr.rel (%p355) target = $region56
        $region55: #{block17_pallas.5} parent=47 // pred_region
          %p358 = scmp.lt.s32.totalorder %s21, 1
          %s359 = scalar_select %p358, %s21, 1
          %s360 = smul.addr %s359, 8
          %s361 = smul.addr %s360, 4
          %s362 = scalar_lea.vmem %s1, %s361
        $region56: #{block17_pallas.5} parent=47 // pred_fallthru
          _
        // Predicated region
        $region57: #{block17_pallas.5} parent=47 // pred_check
          %p363 = pneg %p93
        $region58: #{block17_pallas.5} parent=47 // pred_check_branch
          %365 = sbr.rel (%p363) target = $region60
        $region59: #{block17_pallas.5} parent=47 // pred_region
          %p366 = scmp.lt.s32.totalorder %s21, 1
          %s367 = scalar_select %p366, %s21, 1
          %s368 = smul.addr %s367, 8
          %s369 = smul.addr %s368, 4
          %s370 = scalar_lea.vmem %s2, %s369
        $region60: #{block17_pallas.5} parent=47 // pred_fallthru
          _
      $region48: #{block17_pallas.5} parent=5 // pred_fallthru
        _
      %p371 = scmp.le.s32.totalorder 1, %s21
      %p372 = scmp.lt.s32.totalorder %s21, 3
      %p373 = pnand %p371, %p372
      %p374 = pneg %p373
      // Predicated region
      $region61: #{block17_pallas.5} parent=5 // pred_check
        _
      $region62: #{block17_pallas.5} parent=5 // pred_check_branch
        %376 = sbr.rel (%p373) target = $region64
      $region63: #{block17_pallas.5} parent=5 // pred_region
        %s377 = ssub.s32 %s21, 1
        // Predicated region
        $region65: #{block17_pallas.5} parent=63 // pred_check
          %p378 = pneg %p183
        $region66: #{block17_pallas.5} parent=63 // pred_check_branch
          %380 = sbr.rel (%p378) target = $region68
        $region67: #{block17_pallas.5} parent=63 // pred_region
          %382 = dma.done [#allocation3], 4096
        $region68: #{block17_pallas.5} parent=63 // pred_fallthru
          _
        %p383 = scmp.lt.s32.totalorder %s26, 1
        %s384 = scalar_select %p383, %s26, 1
        %s385 = smul.addr %s384, 56
        %s386 = smul.addr %s385, 8
        %s387 = scalar_lea.vmem %s0, %s386
        %p388 = pneg %p47
        %p389 = pneg %p44
        %p390 = scmp.lt.s32.totalorder %s26, 1
        %s391 = scalar_select %p390, %s26, 1
        %s392 = smul.addr %s391, 8
        %s393 = smul.addr %s392, 4
        %s394 = scalar_lea.vmem %s1, %s393
        %p395 = pneg %p73
        %p396 = pneg %p70
        %p397 = scmp.lt.s32.totalorder %s26, 1
        %s398 = scalar_select %p397, %s26, 1
        %s399 = smul.addr %s398, 8
        %s400 = smul.addr %s399, 4
        %s401 = scalar_lea.vmem %s2, %s400
        %p402 = pneg %p99
        %p403 = pneg %p96
        %p404 = pneg %p120
        %p405 = pneg %p117
        %p406 = pneg %p141
        %p407 = pneg %p138
        %p408 = pneg %p162
        %p409 = pneg %p159
        %p410 = pneg %p183
        %p411 = pneg %p180
        %p412 = pneg %p204
        %p413 = pneg %p201
        %p414 = pneg %p225
        %p415 = pneg %p222
        %p416 = pneg %p246
        %p417 = pneg %p243
        %p418 = pneg %p267
        %p419 = pneg %p264
        %p420 = pneg %p293
        %p421 = pneg %p290
        %s422 = sand.u32 %s280, 1
        %s423 = scalar_lea.sflag [#allocation4], %s422
        %s424 = sand.u32 %s280, 1
        %s425 = smul.addr %s424, 448
        %s426 = scalar_lea.vmem [#allocation5], %s425
        %p427 = scmp.lt.s32.totalorder %s26, 1
        %s428 = scalar_select %p427, %s26, 1
        %s429 = smul.addr %s428, 56
        %s430 = smul.addr %s429, 8
        %s431 = scalar_lea.vmem %s0, %s430
        %p432 = scmp.lt.s32.totalorder %s26, 1
        %s433 = scalar_select %p432, %s26, 1
        %s434 = smul.addr %s433, 8
        %s435 = smul.addr %s434, 4
        %s436 = scalar_lea.vmem %s1, %s435
        %p437 = scmp.lt.s32.totalorder %s26, 1
        %s438 = scalar_select %p437, %s26, 1
        %s439 = smul.addr %s438, 8
        %s440 = smul.addr %s439, 4
        %s441 = scalar_lea.vmem %s2, %s440
        %v442 = vld [vmem:[%s431] sm:$0xff]
        %v443 = vld [vmem:[%s431 + $0x8] sm:$0xff]
        %v444 = vld [vmem:[%s431 + $0x10] sm:$0xff]
        %v445 = vld [vmem:[%s431 + $0x18] sm:$0xff]
        %v446 = vld [vmem:[%s431 + $0x20] sm:$0xff]
        %v447 = vld [vmem:[%s431 + $0x28] sm:$0xff]
        %v448 = vld [vmem:[%s431 + $0x30] sm:$0xff]
        %v449 = vld [vmem:[%s431 + $0x38] sm:$0xff]
        %v450 = vld [vmem:[%s431 + $0x40] sm:$0xff]
        %v451 = vld [vmem:[%s431 + $0x48] sm:$0xff]
        %v452 = vld [vmem:[%s431 + $0x50] sm:$0xff]
        %v453 = vld [vmem:[%s431 + $0x58] sm:$0xff]
        %v454 = vld [vmem:[%s431 + $0x60] sm:$0xff]
        %v455 = vld [vmem:[%s431 + $0x68] sm:$0xff]
        %v456 = vld [vmem:[%s431 + $0x70] sm:$0xff]
        %v457 = vld [vmem:[%s431 + $0x78] sm:$0xff]
        %v458 = vld [vmem:[%s431 + $0x80] sm:$0xff]
        %v459 = vld [vmem:[%s431 + $0x88] sm:$0xff]
        %v460 = vld [vmem:[%s431 + $0x90] sm:$0xff]
        %v461 = vld [vmem:[%s431 + $0x98] sm:$0xff]
        %v462 = vld [vmem:[%s431 + $0xa0] sm:$0xff]
        %v463 = vld [vmem:[%s431 + $0xa8] sm:$0xff]
        %v464 = vld [vmem:[%s431 + $0xb0] sm:$0xff]
        %v465 = vld [vmem:[%s431 + $0xb8] sm:$0xff]
        %v466 = vld [vmem:[%s431 + $0xc0] sm:$0xff]
        %v467 = vld [vmem:[%s431 + $0xc8] sm:$0xff]
        %v468 = vld [vmem:[%s431 + $0xd0] sm:$0xff]
        %v469 = vld [vmem:[%s431 + $0xd8] sm:$0xff]
        %v470 = vld [vmem:[%s431 + $0xe0] sm:$0xff]
        %v471 = vld [vmem:[%s431 + $0xe8] sm:$0xff]
        %v472 = vld [vmem:[%s431 + $0xf0] sm:$0xff]
        %v473 = vld [vmem:[%s431 + $0xf8] sm:$0xff]
        %v474 = vld [vmem:[%s431 + $0x100] sm:$0xff]
        %v475 = vld [vmem:[%s431 + $0x108] sm:$0xff]
        %v476 = vld [vmem:[%s431 + $0x110] sm:$0xff]
        %v477 = vld [vmem:[%s431 + $0x118] sm:$0xff]
        %v478 = vld [vmem:[%s431 + $0x120] sm:$0xff]
        %v479 = vld [vmem:[%s431 + $0x128] sm:$0xff]
        %v480 = vld [vmem:[%s431 + $0x130] sm:$0xff]
        %v481 = vld [vmem:[%s431 + $0x138] sm:$0xff]
        %v482 = vld [vmem:[%s431 + $0x140] sm:$0xff]
        %v483 = vld [vmem:[%s431 + $0x148] sm:$0xff]
        %v484 = vld [vmem:[%s431 + $0x150] sm:$0xff]
        %v485 = vld [vmem:[%s431 + $0x158] sm:$0xff]
        %v486 = vld [vmem:[%s431 + $0x160] sm:$0xff]
        %v487 = vld [vmem:[%s431 + $0x168] sm:$0xff]
        %v488 = vld [vmem:[%s431 + $0x170] sm:$0xff]
        %v489 = vld [vmem:[%s431 + $0x178] sm:$0xff]
        %v490 = vld [vmem:[%s431 + $0x180] sm:$0xff]
        %v491 = vld [vmem:[%s431 + $0x188] sm:$0xff]
        %v492 = vld [vmem:[%s431 + $0x190] sm:$0xff]
        %v493 = vld [vmem:[%s431 + $0x198] sm:$0xff]
        %v494 = vld [vmem:[%s431 + $0x1a0] sm:$0xff]
        %v495 = vld [vmem:[%s431 + $0x1a8] sm:$0xff]
        %v496 = vld [vmem:[%s431 + $0x1b0] sm:$0xff]
        %v497 = vld [vmem:[%s431 + $0x1b8] sm:$0xff]
        %v498 = vadd.f32 %v442, %v449
        %v499 = vadd.f32 %v498, %v456
        %v500 = vadd.f32 %v499, %v463
        %v501 = vadd.f32 %v500, %v470
        %v502 = vadd.f32 %v501, %v477
        %v503 = vadd.f32 %v502, %v484
        %v504 = vadd.f32 %v503, %v491
        %v505 = vrot.slane %v504, 4
        %v506 = vadd.f32 %v504, %v505
        %v507 = vrot.slane %v506, 2
        %v508 = vadd.f32 %v506, %v507
        %v509 = vrot.slane %v508, 1
        %v510 = vadd.f32 %v508, %v509
        %v511 = vadd.f32 %v443, %v450
        %v512 = vadd.f32 %v511, %v457
        %v513 = vadd.f32 %v512, %v464
        %v514 = vadd.f32 %v513, %v471
        %v515 = vadd.f32 %v514, %v478
        %v516 = vadd.f32 %v515, %v485
        %v517 = vadd.f32 %v516, %v492
        %v518 = vrot.slane %v517, 4
        %v519 = vadd.f32 %v517, %v518
        %v520 = vrot.slane %v519, 2
        %v521 = vadd.f32 %v519, %v520
        %v522 = vrot.slane %v521, 1
        %v523 = vadd.f32 %v521, %v522
        %v524 = vadd.f32 %v444, %v451
        %v525 = vadd.f32 %v524, %v458
        %v526 = vadd.f32 %v525, %v465
        %v527 = vadd.f32 %v526, %v472
        %v528 = vadd.f32 %v527, %v479
        %v529 = vadd.f32 %v528, %v486
        %v530 = vadd.f32 %v529, %v493
        %v531 = vrot.slane %v530, 4
        %v532 = vadd.f32 %v530, %v531
        %v533 = vrot.slane %v532, 2
        %v534 = vadd.f32 %v532, %v533
        %v535 = vrot.slane %v534, 1
        %v536 = vadd.f32 %v534, %v535
        %v537 = vadd.f32 %v445, %v452
        %v538 = vadd.f32 %v537, %v459
        %v539 = vadd.f32 %v538, %v466
        %v540 = vadd.f32 %v539, %v473
        %v541 = vadd.f32 %v540, %v480
        %v542 = vadd.f32 %v541, %v487
        %v543 = vadd.f32 %v542, %v494
        %v544 = vrot.slane %v543, 4
        %v545 = vadd.f32 %v543, %v544
        %v546 = vrot.slane %v545, 2
        %v547 = vadd.f32 %v545, %v546
        %v548 = vrot.slane %v547, 1
        %v549 = vadd.f32 %v547, %v548
        %v550 = vadd.f32 %v446, %v453
        %v551 = vadd.f32 %v550, %v460
        %v552 = vadd.f32 %v551, %v467
        %v553 = vadd.f32 %v552, %v474
        %v554 = vadd.f32 %v553, %v481
        %v555 = vadd.f32 %v554, %v488
        %v556 = vadd.f32 %v555, %v495
        %v557 = vrot.slane %v556, 4
        %v558 = vadd.f32 %v556, %v557
        %v559 = vrot.slane %v558, 2
        %v560 = vadd.f32 %v558, %v559
        %v561 = vrot.slane %v560, 1
        %v562 = vadd.f32 %v560, %v561
        %v563 = vadd.f32 %v447, %v454
        %v564 = vadd.f32 %v563, %v461
        %v565 = vadd.f32 %v564, %v468
        %v566 = vadd.f32 %v565, %v475
        %v567 = vadd.f32 %v566, %v482
        %v568 = vadd.f32 %v567, %v489
        %v569 = vadd.f32 %v568, %v496
        %v570 = vrot.slane %v569, 4
        %v571 = vadd.f32 %v569, %v570
        %v572 = vrot.slane %v571, 2
        %v573 = vadd.f32 %v571, %v572
        %v574 = vrot.slane %v573, 1
        %v575 = vadd.f32 %v573, %v574
        %v576 = vadd.f32 %v448, %v455
        %v577 = vadd.f32 %v576, %v462
        %v578 = vadd.f32 %v577, %v469
        %v579 = vadd.f32 %v578, %v476
        %v580 = vadd.f32 %v579, %v483
        %v581 = vadd.f32 %v580, %v490
        %v582 = vadd.f32 %v581, %v497
        %v583 = vrot.slane %v582, 4
        %v584 = vadd.f32 %v582, %v583
        %v585 = vrot.slane %v584, 2
        %v586 = vadd.f32 %v584, %v585
        %v587 = vrot.slane %v586, 1
        %v588 = vadd.f32 %v586, %v587
        %v589 = vrcp.pop 64.0
        %v590 = vmul.f32 64.0, %v589
        %v591 = vsub.f32 1.0, %v590
        %v592 = vmul.f32 %v589, %v591
        %v593 = vadd.f32 %v589, %v592
        %vm594 = vweird.f32 %v589
        %v595 = vsel %vm594, %v589, %v593
        %v596 = vmul.f32 %v510, %v595
        %v597 = vmul.f32 %v523, %v595
        %v598 = vmul.f32 %v536, %v595
        %v599 = vmul.f32 %v549, %v595
        %v600 = vmul.f32 %v562, %v595
        %v601 = vmul.f32 %v575, %v595
        %v602 = vmul.f32 %v588, %v595
        %v603 = vsub.f32 %v442, %v596
        %v604 = vsub.f32 %v443, %v597
        %v605 = vsub.f32 %v444, %v598
        %v606 = vsub.f32 %v445, %v599
        %v607 = vsub.f32 %v446, %v600
        %v608 = vsub.f32 %v447, %v601
        %v609 = vsub.f32 %v448, %v602
        %v610 = vsub.f32 %v449, %v596
        %v611 = vsub.f32 %v450, %v597
        %v612 = vsub.f32 %v451, %v598
        %v613 = vsub.f32 %v452, %v599
        %v614 = vsub.f32 %v453, %v600
        %v615 = vsub.f32 %v454, %v601
        %v616 = vsub.f32 %v455, %v602
        %v617 = vsub.f32 %v456, %v596
        %v618 = vsub.f32 %v457, %v597
        %v619 = vsub.f32 %v458, %v598
        %v620 = vsub.f32 %v459, %v599
        %v621 = vsub.f32 %v460, %v600
        %v622 = vsub.f32 %v461, %v601
        %v623 = vsub.f32 %v462, %v602
        %v624 = vsub.f32 %v463, %v596
        %v625 = vsub.f32 %v464, %v597
        %v626 = vsub.f32 %v465, %v598
        %v627 = vsub.f32 %v466, %v599
        %v628 = vsub.f32 %v467, %v600
        %v629 = vsub.f32 %v468, %v601
        %v630 = vsub.f32 %v469, %v602
        %v631 = vsub.f32 %v470, %v596
        %v632 = vsub.f32 %v471, %v597
        %v633 = vsub.f32 %v472, %v598
        %v634 = vsub.f32 %v473, %v599
        %v635 = vsub.f32 %v474, %v600
        %v636 = vsub.f32 %v475, %v601
        %v637 = vsub.f32 %v476, %v602
        %v638 = vsub.f32 %v477, %v596
        %v639 = vsub.f32 %v478, %v597
        %v640 = vsub.f32 %v479, %v598
        %v641 = vsub.f32 %v480, %v599
        %v642 = vsub.f32 %v481, %v600
        %v643 = vsub.f32 %v482, %v601
        %v644 = vsub.f32 %v483, %v602
        %v645 = vsub.f32 %v484, %v596
        %v646 = vsub.f32 %v485, %v597
        %v647 = vsub.f32 %v486, %v598
        %v648 = vsub.f32 %v487, %v599
        %v649 = vsub.f32 %v488, %v600
        %v650 = vsub.f32 %v489, %v601
        %v651 = vsub.f32 %v490, %v602
        %v652 = vsub.f32 %v491, %v596
        %v653 = vsub.f32 %v492, %v597
        %v654 = vsub.f32 %v493, %v598
        %v655 = vsub.f32 %v494, %v599
        %v656 = vsub.f32 %v495, %v600
        %v657 = vsub.f32 %v496, %v601
        %v658 = vsub.f32 %v497, %v602
        %v659 = vmul.f32 %v603, %v603
        %v660 = vmul.f32 %v604, %v604
        %v661 = vmul.f32 %v605, %v605
        %v662 = vmul.f32 %v606, %v606
        %v663 = vmul.f32 %v607, %v607
        %v664 = vmul.f32 %v608, %v608
        %v665 = vmul.f32 %v609, %v609
        %v666 = vmul.f32 %v610, %v610
        %v667 = vmul.f32 %v611, %v611
        %v668 = vmul.f32 %v612, %v612
        %v669 = vmul.f32 %v613, %v613
        %v670 = vmul.f32 %v614, %v614
        %v671 = vmul.f32 %v615, %v615
        %v672 = vmul.f32 %v616, %v616
        %v673 = vmul.f32 %v617, %v617
        %v674 = vmul.f32 %v618, %v618
        %v675 = vmul.f32 %v619, %v619
        %v676 = vmul.f32 %v620, %v620
        %v677 = vmul.f32 %v621, %v621
        %v678 = vmul.f32 %v622, %v622
        %v679 = vmul.f32 %v623, %v623
        %v680 = vmul.f32 %v624, %v624
        %v681 = vmul.f32 %v625, %v625
        %v682 = vmul.f32 %v626, %v626
        %v683 = vmul.f32 %v627, %v627
        %v684 = vmul.f32 %v628, %v628
        %v685 = vmul.f32 %v629, %v629
        %v686 = vmul.f32 %v630, %v630
        %v687 = vmul.f32 %v631, %v631
        %v688 = vmul.f32 %v632, %v632
        %v689 = vmul.f32 %v633, %v633
        %v690 = vmul.f32 %v634, %v634
        %v691 = vmul.f32 %v635, %v635
        %v692 = vmul.f32 %v636, %v636
        %v693 = vmul.f32 %v637, %v637
        %v694 = vmul.f32 %v638, %v638
        %v695 = vmul.f32 %v639, %v639
        %v696 = vmul.f32 %v640, %v640
        %v697 = vmul.f32 %v641, %v641
        %v698 = vmul.f32 %v642, %v642
        %v699 = vmul.f32 %v643, %v643
        %v700 = vmul.f32 %v644, %v644
        %v701 = vmul.f32 %v645, %v645
        %v702 = vmul.f32 %v646, %v646
        %v703 = vmul.f32 %v647, %v647
        %v704 = vmul.f32 %v648, %v648
        %v705 = vmul.f32 %v649, %v649
        %v706 = vmul.f32 %v650, %v650
        %v707 = vmul.f32 %v651, %v651
        %v708 = vmul.f32 %v652, %v652
        %v709 = vmul.f32 %v653, %v653
        %v710 = vmul.f32 %v654, %v654
        %v711 = vmul.f32 %v655, %v655
        %v712 = vmul.f32 %v656, %v656
        %v713 = vmul.f32 %v657, %v657
        %v714 = vmul.f32 %v658, %v658
        %v715 = vadd.f32 %v659, %v666
        %v716 = vadd.f32 %v715, %v673
        %v717 = vadd.f32 %v716, %v680
        %v718 = vadd.f32 %v717, %v687
        %v719 = vadd.f32 %v718, %v694
        %v720 = vadd.f32 %v719, %v701
        %v721 = vadd.f32 %v720, %v708
        %v722 = vrot.slane %v721, 4
        %v723 = vadd.f32 %v721, %v722
        %v724 = vrot.slane %v723, 2
        %v725 = vadd.f32 %v723, %v724
        %v726 = vrot.slane %v725, 1
        %v727 = vadd.f32 %v725, %v726
        %v728 = vadd.f32 %v660, %v667
        %v729 = vadd.f32 %v728, %v674
        %v730 = vadd.f32 %v729, %v681
        %v731 = vadd.f32 %v730, %v688
        %v732 = vadd.f32 %v731, %v695
        %v733 = vadd.f32 %v732, %v702
        %v734 = vadd.f32 %v733, %v709
        %v735 = vrot.slane %v734, 4
        %v736 = vadd.f32 %v734, %v735
        %v737 = vrot.slane %v736, 2
        %v738 = vadd.f32 %v736, %v737
        %v739 = vrot.slane %v738, 1
        %v740 = vadd.f32 %v738, %v739
        %v741 = vadd.f32 %v661, %v668
        %v742 = vadd.f32 %v741, %v675
        %v743 = vadd.f32 %v742, %v682
        %v744 = vadd.f32 %v743, %v689
        %v745 = vadd.f32 %v744, %v696
        %v746 = vadd.f32 %v745, %v703
        %v747 = vadd.f32 %v746, %v710
        %v748 = vrot.slane %v747, 4
        %v749 = vadd.f32 %v747, %v748
        %v750 = vrot.slane %v749, 2
        %v751 = vadd.f32 %v749, %v750
        %v752 = vrot.slane %v751, 1
        %v753 = vadd.f32 %v751, %v752
        %v754 = vadd.f32 %v662, %v669
        %v755 = vadd.f32 %v754, %v676
        %v756 = vadd.f32 %v755, %v683
        %v757 = vadd.f32 %v756, %v690
        %v758 = vadd.f32 %v757, %v697
        %v759 = vadd.f32 %v758, %v704
        %v760 = vadd.f32 %v759, %v711
        %v761 = vrot.slane %v760, 4
        %v762 = vadd.f32 %v760, %v761
        %v763 = vrot.slane %v762, 2
        %v764 = vadd.f32 %v762, %v763
        %v765 = vrot.slane %v764, 1
        %v766 = vadd.f32 %v764, %v765
        %v767 = vadd.f32 %v663, %v670
        %v768 = vadd.f32 %v767, %v677
        %v769 = vadd.f32 %v768, %v684
        %v770 = vadd.f32 %v769, %v691
        %v771 = vadd.f32 %v770, %v698
        %v772 = vadd.f32 %v771, %v705
        %v773 = vadd.f32 %v772, %v712
        %v774 = vrot.slane %v773, 4
        %v775 = vadd.f32 %v773, %v774
        %v776 = vrot.slane %v775, 2
        %v777 = vadd.f32 %v775, %v776
        %v778 = vrot.slane %v777, 1
        %v779 = vadd.f32 %v777, %v778
        %v780 = vadd.f32 %v664, %v671
        %v781 = vadd.f32 %v780, %v678
        %v782 = vadd.f32 %v781, %v685
        %v783 = vadd.f32 %v782, %v692
        %v784 = vadd.f32 %v783, %v699
        %v785 = vadd.f32 %v784, %v706
        %v786 = vadd.f32 %v785, %v713
        %v787 = vrot.slane %v786, 4
        %v788 = vadd.f32 %v786, %v787
        %v789 = vrot.slane %v788, 2
        %v790 = vadd.f32 %v788, %v789
        %v791 = vrot.slane %v790, 1
        %v792 = vadd.f32 %v790, %v791
        %v793 = vadd.f32 %v665, %v672
        %v794 = vadd.f32 %v793, %v679
        %v795 = vadd.f32 %v794, %v686
        %v796 = vadd.f32 %v795, %v693
        %v797 = vadd.f32 %v796, %v700
        %v798 = vadd.f32 %v797, %v707
        %v799 = vadd.f32 %v798, %v714
        %v800 = vrot.slane %v799, 4
        %v801 = vadd.f32 %v799, %v800
        %v802 = vrot.slane %v801, 2
        %v803 = vadd.f32 %v801, %v802
        %v804 = vrot.slane %v803, 1
        %v805 = vadd.f32 %v803, %v804
        %v806 = vrcp.pop 63.0
        %v807 = vmul.f32 63.0, %v806
        %v808 = vsub.f32 1.0, %v807
        %v809 = vmul.f32 %v806, %v808
        %v810 = vadd.f32 %v806, %v809
        %vm811 = vweird.f32 %v806
        %v812 = vsel %vm811, %v806, %v810
        %v813 = vmul.f32 %v727, %v812
        %v814 = vmul.f32 %v740, %v812
        %v815 = vmul.f32 %v753, %v812
        %v816 = vmul.f32 %v766, %v812
        %v817 = vmul.f32 %v779, %v812
        %v818 = vmul.f32 %v792, %v812
        %v819 = vmul.f32 %v805, %v812
        %v820 = vadd.f32 %v813, 1e-05
        %v821 = vadd.f32 %v814, 1e-05
        %v822 = vadd.f32 %v815, 1e-05
        %v823 = vadd.f32 %v816, 1e-05
        %v824 = vadd.f32 %v817, 1e-05
        %v825 = vadd.f32 %v818, 1e-05
        %v826 = vadd.f32 %v819, 1e-05
        %v827 = vrsqrt.pop %v820
        %v828 = vmul.f32 %v827, %v820
        %v829 = vmul.f32 %v828, %v827
        %v830 = vmul.f32 0.5, %v829
        %v831 = vsub.f32 1.5, %v830
        %v832 = vmul.f32 %v827, %v831
        %v833 = vmul.f32 %v820, %v832
        %vm834 = vcmp.eq.f32.partialorder %v820, inf
        %v835 = vsel %vm834, %v820, %v833
        %vm836 = vcmp.eq.f32.partialorder %v820, 0.0
        %v837 = vand.u32 %v820, 2147483648
        %v838 = vsel %vm836, %v837, %v835
        %v839 = vrsqrt.pop %v821
        %v840 = vmul.f32 %v839, %v821
        %v841 = vmul.f32 %v840, %v839
        %v842 = vmul.f32 0.5, %v841
        %v843 = vsub.f32 1.5, %v842
        %v844 = vmul.f32 %v839, %v843
        %v845 = vmul.f32 %v821, %v844
        %vm846 = vcmp.eq.f32.partialorder %v821, inf
        %v847 = vsel %vm846, %v821, %v845
        %vm848 = vcmp.eq.f32.partialorder %v821, 0.0
        %v849 = vand.u32 %v821, 2147483648
        %v850 = vsel %vm848, %v849, %v847
        %v851 = vrsqrt.pop %v822
        %v852 = vmul.f32 %v851, %v822
        %v853 = vmul.f32 %v852, %v851
        %v854 = vmul.f32 0.5, %v853
        %v855 = vsub.f32 1.5, %v854
        %v856 = vmul.f32 %v851, %v855
        %v857 = vmul.f32 %v822, %v856
        %vm858 = vcmp.eq.f32.partialorder %v822, inf
        %v859 = vsel %vm858, %v822, %v857
        %vm860 = vcmp.eq.f32.partialorder %v822, 0.0
        %v861 = vand.u32 %v822, 2147483648
        %v862 = vsel %vm860, %v861, %v859
        %v863 = vrsqrt.pop %v823
        %v864 = vmul.f32 %v863, %v823
        %v865 = vmul.f32 %v864, %v863
        %v866 = vmul.f32 0.5, %v865
        %v867 = vsub.f32 1.5, %v866
        %v868 = vmul.f32 %v863, %v867
        %v869 = vmul.f32 %v823, %v868
        %vm870 = vcmp.eq.f32.partialorder %v823, inf
        %v871 = vsel %vm870, %v823, %v869
        %vm872 = vcmp.eq.f32.partialorder %v823, 0.0
        %v873 = vand.u32 %v823, 2147483648
        %v874 = vsel %vm872, %v873, %v871
        %v875 = vrsqrt.pop %v824
        %v876 = vmul.f32 %v875, %v824
        %v877 = vmul.f32 %v876, %v875
        %v878 = vmul.f32 0.5, %v877
        %v879 = vsub.f32 1.5, %v878
        %v880 = vmul.f32 %v875, %v879
        %v881 = vmul.f32 %v824, %v880
        %vm882 = vcmp.eq.f32.partialorder %v824, inf
        %v883 = vsel %vm882, %v824, %v881
        %vm884 = vcmp.eq.f32.partialorder %v824, 0.0
        %v885 = vand.u32 %v824, 2147483648
        %v886 = vsel %vm884, %v885, %v883
        %v887 = vrsqrt.pop %v825
        %v888 = vmul.f32 %v887, %v825
        %v889 = vmul.f32 %v888, %v887
        %v890 = vmul.f32 0.5, %v889
        %v891 = vsub.f32 1.5, %v890
        %v892 = vmul.f32 %v887, %v891
        %v893 = vmul.f32 %v825, %v892
        %vm894 = vcmp.eq.f32.partialorder %v825, inf
        %v895 = vsel %vm894, %v825, %v893
        %vm896 = vcmp.eq.f32.partialorder %v825, 0.0
        %v897 = vand.u32 %v825, 2147483648
        %v898 = vsel %vm896, %v897, %v895
        %v899 = vrsqrt.pop %v826
        %v900 = vmul.f32 %v899, %v826
        %v901 = vmul.f32 %v900, %v899
        %v902 = vmul.f32 0.5, %v901
        %v903 = vsub.f32 1.5, %v902
        %v904 = vmul.f32 %v899, %v903
        %v905 = vmul.f32 %v826, %v904
        %vm906 = vcmp.eq.f32.partialorder %v826, inf
        %v907 = vsel %vm906, %v826, %v905
        %vm908 = vcmp.eq.f32.partialorder %v826, 0.0
        %v909 = vand.u32 %v826, 2147483648
        %v910 = vsel %vm908, %v909, %v907
        %v911 = vld [vmem:[%s3] sm:$0xff]
        %v913 = vperm.slane %v911, 0
        %v914 = vperm.slane %v911, 1
        %v915 = vperm.slane %v911, 2
        %v916 = vperm.slane %v911, 3
        %v917 = vperm.slane %v911, 4
        %v918 = vperm.slane %v911, 5
        %v919 = vperm.slane %v911, 6
        %v927 = vmul.f32 %v596, %v913
        %v928 = vmul.f32 %v597, %v914
        %v929 = vmul.f32 %v598, %v915
        %v930 = vmul.f32 %v599, %v916
        %v931 = vmul.f32 %v600, %v917
        %v932 = vmul.f32 %v601, %v918
        %v933 = vmul.f32 %v602, %v919
        %v934 = vld [vmem:[%s4] sm:$0xff]
        %v936 = vperm.slane %v934, 0
        %v937 = vperm.slane %v934, 1
        %v938 = vperm.slane %v934, 2
        %v939 = vperm.slane %v934, 3
        %v940 = vperm.slane %v934, 4
        %v941 = vperm.slane %v934, 5
        %v942 = vperm.slane %v934, 6
        %v950 = vmul.f32 %v838, %v936
        %v951 = vmul.f32 %v850, %v937
        %v952 = vmul.f32 %v862, %v938
        %v953 = vmul.f32 %v874, %v939
        %v954 = vmul.f32 %v886, %v940
        %v955 = vmul.f32 %v898, %v941
        %v956 = vmul.f32 %v910, %v942
        %v957 = vadd.f32 %v927, %v950
        %v958 = vadd.f32 %v928, %v951
        %v959 = vadd.f32 %v929, %v952
        %v960 = vadd.f32 %v930, %v953
        %v961 = vadd.f32 %v931, %v954
        %v962 = vadd.f32 %v932, %v955
        %v963 = vadd.f32 %v933, %v956
        %v964 = vld [vmem:[%s5] sm:$0xff]
        %v966 = vperm.slane %v964, 0
        %v967 = vperm.slane %v964, 1
        %v968 = vperm.slane %v964, 2
        %v969 = vperm.slane %v964, 3
        %v970 = vperm.slane %v964, 4
        %v971 = vperm.slane %v964, 5
        %v972 = vperm.slane %v964, 6
        %v980 = vadd.f32 %v957, %v966
        %v981 = vadd.f32 %v958, %v967
        %v982 = vadd.f32 %v959, %v968
        %v983 = vadd.f32 %v960, %v969
        %v984 = vadd.f32 %v961, %v970
        %v985 = vadd.f32 %v962, %v971
        %v986 = vadd.f32 %v963, %v972
        %v987 = vsub.f32 0.0, %v980
        %v988 = vsub.f32 0.0, %v981
        %v989 = vsub.f32 0.0, %v982
        %v990 = vsub.f32 0.0, %v983
        %v991 = vsub.f32 0.0, %v984
        %v992 = vsub.f32 0.0, %v985
        %v993 = vsub.f32 0.0, %v986
        %v994 = vmul.f32 %v987, 1.442695
        %v995 = vpow.pop %v994
        %v996 = vmul.f32 %v988, 1.442695
        %v997 = vpow.pop %v996
        %v998 = vmul.f32 %v989, 1.442695
        %v999 = vpow.pop %v998
        %v1000 = vmul.f32 %v990, 1.442695
        %v1001 = vpow.pop %v1000
        %v1002 = vmul.f32 %v991, 1.442695
        %v1003 = vpow.pop %v1002
        %v1004 = vmul.f32 %v992, 1.442695
        %v1005 = vpow.pop %v1004
        %v1006 = vmul.f32 %v993, 1.442695
        %v1007 = vpow.pop %v1006
        %v1008 = vadd.f32 %v995, 1.0
        %v1009 = vadd.f32 %v997, 1.0
        %v1010 = vadd.f32 %v999, 1.0
        %v1011 = vadd.f32 %v1001, 1.0
        %v1012 = vadd.f32 %v1003, 1.0
        %v1013 = vadd.f32 %v1005, 1.0
        %v1014 = vadd.f32 %v1007, 1.0
        %v1015 = vrcp.pop %v1008
        %v1016 = vmul.f32 %v1008, %v1015
        %v1017 = vsub.f32 1.0, %v1016
        %v1018 = vmul.f32 %v1015, %v1017
        %v1019 = vadd.f32 %v1015, %v1018
        %vm1020 = vweird.f32 %v1008
        %vm1021 = vweird.f32 %v1015
        %vm1022 = vmor %vm1020, %vm1021
        %v1023 = vsel %vm1022, %v1015, %v1019
        %v1024 = vand.u32 2147483647, %v1008
        %vm1025 = vcmp.eq.f32.partialorder %v1024, 8.507059e+37
        %v1026 = vand.u32 %v1008, 2147483648
        %v1027 = vor.u32 1.1754944e-38, %v1026
        %v1028 = vsel %vm1025, %v1027, %v1023
        %v1029 = vmul.f32 1.0, %v1028
        %v1030 = vrcp.pop %v1009
        %v1031 = vmul.f32 %v1009, %v1030
        %v1032 = vsub.f32 1.0, %v1031
        %v1033 = vmul.f32 %v1030, %v1032
        %v1034 = vadd.f32 %v1030, %v1033
        %vm1035 = vweird.f32 %v1009
        %vm1036 = vweird.f32 %v1030
        %vm1037 = vmor %vm1035, %vm1036
        %v1038 = vsel %vm1037, %v1030, %v1034
        %v1039 = vand.u32 2147483647, %v1009
        %vm1040 = vcmp.eq.f32.partialorder %v1039, 8.507059e+37
        %v1041 = vand.u32 %v1009, 2147483648
        %v1042 = vor.u32 1.1754944e-38, %v1041
        %v1043 = vsel %vm1040, %v1042, %v1038
        %v1044 = vmul.f32 1.0, %v1043
        %v1045 = vrcp.pop %v1010
        %v1046 = vmul.f32 %v1010, %v1045
        %v1047 = vsub.f32 1.0, %v1046
        %v1048 = vmul.f32 %v1045, %v1047
        %v1049 = vadd.f32 %v1045, %v1048
        %vm1050 = vweird.f32 %v1010
        %vm1051 = vweird.f32 %v1045
        %vm1052 = vmor %vm1050, %vm1051
        %v1053 = vsel %vm1052, %v1045, %v1049
        %v1054 = vand.u32 2147483647, %v1010
        %vm1055 = vcmp.eq.f32.partialorder %v1054, 8.507059e+37
        %v1056 = vand.u32 %v1010, 2147483648
        %v1057 = vor.u32 1.1754944e-38, %v1056
        %v1058 = vsel %vm1055, %v1057, %v1053
        %v1059 = vmul.f32 1.0, %v1058
        %v1060 = vrcp.pop %v1011
        %v1061 = vmul.f32 %v1011, %v1060
        %v1062 = vsub.f32 1.0, %v1061
        %v1063 = vmul.f32 %v1060, %v1062
        %v1064 = vadd.f32 %v1060, %v1063
        %vm1065 = vweird.f32 %v1011
        %vm1066 = vweird.f32 %v1060
        %vm1067 = vmor %vm1065, %vm1066
        %v1068 = vsel %vm1067, %v1060, %v1064
        %v1069 = vand.u32 2147483647, %v1011
        %vm1070 = vcmp.eq.f32.partialorder %v1069, 8.507059e+37
        %v1071 = vand.u32 %v1011, 2147483648
        %v1072 = vor.u32 1.1754944e-38, %v1071
        %v1073 = vsel %vm1070, %v1072, %v1068
        %v1074 = vmul.f32 1.0, %v1073
        %v1075 = vrcp.pop %v1012
        %v1076 = vmul.f32 %v1012, %v1075
        %v1077 = vsub.f32 1.0, %v1076
        %v1078 = vmul.f32 %v1075, %v1077
        %v1079 = vadd.f32 %v1075, %v1078
        %vm1080 = vweird.f32 %v1012
        %vm1081 = vweird.f32 %v1075
        %vm1082 = vmor %vm1080, %vm1081
        %v1083 = vsel %vm1082, %v1075, %v1079
        %v1084 = vand.u32 2147483647, %v1012
        %vm1085 = vcmp.eq.f32.partialorder %v1084, 8.507059e+37
        %v1086 = vand.u32 %v1012, 2147483648
        %v1087 = vor.u32 1.1754944e-38, %v1086
        %v1088 = vsel %vm1085, %v1087, %v1083
        %v1089 = vmul.f32 1.0, %v1088
        %v1090 = vrcp.pop %v1013
        %v1091 = vmul.f32 %v1013, %v1090
        %v1092 = vsub.f32 1.0, %v1091
        %v1093 = vmul.f32 %v1090, %v1092
        %v1094 = vadd.f32 %v1090, %v1093
        %vm1095 = vweird.f32 %v1013
        %vm1096 = vweird.f32 %v1090
        %vm1097 = vmor %vm1095, %vm1096
        %v1098 = vsel %vm1097, %v1090, %v1094
        %v1099 = vand.u32 2147483647, %v1013
        %vm1100 = vcmp.eq.f32.partialorder %v1099, 8.507059e+37
        %v1101 = vand.u32 %v1013, 2147483648
        %v1102 = vor.u32 1.1754944e-38, %v1101
        %v1103 = vsel %vm1100, %v1102, %v1098
        %v1104 = vmul.f32 1.0, %v1103
        %v1105 = vrcp.pop %v1014
        %v1106 = vmul.f32 %v1014, %v1105
        %v1107 = vsub.f32 1.0, %v1106
        %v1108 = vmul.f32 %v1105, %v1107
        %v1109 = vadd.f32 %v1105, %v1108
        %vm1110 = vweird.f32 %v1014
        %vm1111 = vweird.f32 %v1105
        %vm1112 = vmor %vm1110, %vm1111
        %v1113 = vsel %vm1112, %v1105, %v1109
        %v1114 = vand.u32 2147483647, %v1014
        %vm1115 = vcmp.eq.f32.partialorder %v1114, 8.507059e+37
        %v1116 = vand.u32 %v1014, 2147483648
        %v1117 = vor.u32 1.1754944e-38, %v1116
        %v1118 = vsel %vm1115, %v1117, %v1113
        %v1119 = vmul.f32 1.0, %v1118
        %v1120 = vperm.slane %v1029, 0
        %v1121 = vperm.slane %v1044, 0
        %v1122 = vperm.slane %v1059, 0
        %v1123 = vperm.slane %v1074, 0
        %v1124 = vperm.slane %v1089, 0
        %v1125 = vperm.slane %v1104, 0
        %v1126 = vperm.slane %v1119, 0
        %v1127 = vmul.f32 %v442, %v1120
        %v1128 = vmul.f32 %v443, %v1121
        %v1129 = vmul.f32 %v444, %v1122
        %v1130 = vmul.f32 %v445, %v1123
        %v1131 = vmul.f32 %v446, %v1124
        %v1132 = vmul.f32 %v447, %v1125
        %v1133 = vmul.f32 %v448, %v1126
        %v1134 = vmul.f32 %v449, %v1120
        %v1135 = vmul.f32 %v450, %v1121
        %v1136 = vmul.f32 %v451, %v1122
        %v1137 = vmul.f32 %v452, %v1123
        %v1138 = vmul.f32 %v453, %v1124
        %v1139 = vmul.f32 %v454, %v1125
        %v1140 = vmul.f32 %v455, %v1126
        %v1141 = vmul.f32 %v456, %v1120
        %v1142 = vmul.f32 %v457, %v1121
        %v1143 = vmul.f32 %v458, %v1122
        %v1144 = vmul.f32 %v459, %v1123
        %v1145 = vmul.f32 %v460, %v1124
        %v1146 = vmul.f32 %v461, %v1125
        %v1147 = vmul.f32 %v462, %v1126
        %v1148 = vmul.f32 %v463, %v1120
        %v1149 = vmul.f32 %v464, %v1121
        %v1150 = vmul.f32 %v465, %v1122
        %v1151 = vmul.f32 %v466, %v1123
        %v1152 = vmul.f32 %v467, %v1124
        %v1153 = vmul.f32 %v468, %v1125
        %v1154 = vmul.f32 %v469, %v1126
        %v1155 = vmul.f32 %v470, %v1120
        %v1156 = vmul.f32 %v471, %v1121
        %v1157 = vmul.f32 %v472, %v1122
        %v1158 = vmul.f32 %v473, %v1123
        %v1159 = vmul.f32 %v474, %v1124
        %v1160 = vmul.f32 %v475, %v1125
        %v1161 = vmul.f32 %v476, %v1126
        %v1162 = vmul.f32 %v477, %v1120
        %v1163 = vmul.f32 %v478, %v1121
        %v1164 = vmul.f32 %v479, %v1122
        %v1165 = vmul.f32 %v480, %v1123
        %v1166 = vmul.f32 %v481, %v1124
        %v1167 = vmul.f32 %v482, %v1125
        %v1168 = vmul.f32 %v483, %v1126
        %v1169 = vmul.f32 %v484, %v1120
        %v1170 = vmul.f32 %v485, %v1121
        %v1171 = vmul.f32 %v486, %v1122
        %v1172 = vmul.f32 %v487, %v1123
        %v1173 = vmul.f32 %v488, %v1124
        %v1174 = vmul.f32 %v489, %v1125
        %v1175 = vmul.f32 %v490, %v1126
        %v1176 = vmul.f32 %v491, %v1120
        %v1177 = vmul.f32 %v492, %v1121
        %v1178 = vmul.f32 %v493, %v1122
        %v1179 = vmul.f32 %v494, %v1123
        %v1180 = vmul.f32 %v495, %v1124
        %v1181 = vmul.f32 %v496, %v1125
        %v1182 = vmul.f32 %v497, %v1126
        %v1183 = vpack.c.bf16 %v1128, %v1127
        %v1184 = vpack.c.bf16 %v1130, %v1129
        %v1185 = vpack.c.bf16 %v1132, %v1131
        %v1186 = vpack.c.bf16 %v1133, %v1133
        %v1187 = vpack.c.bf16 %v1135, %v1134
        %v1188 = vpack.c.bf16 %v1137, %v1136
        %v1189 = vpack.c.bf16 %v1139, %v1138
        %v1190 = vpack.c.bf16 %v1140, %v1140
        %v1191 = vpack.c.bf16 %v1142, %v1141
        %v1192 = vpack.c.bf16 %v1144, %v1143
        %v1193 = vpack.c.bf16 %v1146, %v1145
        %v1194 = vpack.c.bf16 %v1147, %v1147
        %v1195 = vpack.c.bf16 %v1149, %v1148
        %v1196 = vpack.c.bf16 %v1151, %v1150
        %v1197 = vpack.c.bf16 %v1153, %v1152
        %v1198 = vpack.c.bf16 %v1154, %v1154
        %v1199 = vpack.c.bf16 %v1156, %v1155
        %v1200 = vpack.c.bf16 %v1158, %v1157
        %v1201 = vpack.c.bf16 %v1160, %v1159
        %v1202 = vpack.c.bf16 %v1161, %v1161
        %v1203 = vpack.c.bf16 %v1163, %v1162
        %v1204 = vpack.c.bf16 %v1165, %v1164
        %v1205 = vpack.c.bf16 %v1167, %v1166
        %v1206 = vpack.c.bf16 %v1168, %v1168
        %v1207 = vpack.c.bf16 %v1170, %v1169
        %v1208 = vpack.c.bf16 %v1172, %v1171
        %v1209 = vpack.c.bf16 %v1174, %v1173
        %v1210 = vpack.c.bf16 %v1175, %v1175
        %v1211 = vpack.c.bf16 %v1177, %v1176
        %v1212 = vpack.c.bf16 %v1179, %v1178
        %v1213 = vpack.c.bf16 %v1181, %v1180
        %v1214 = vpack.c.bf16 %v1182, %v1182
        %v1215 = vld [vmem:[%s436] sm:$0xf]
        %v1216 = vld [vmem:[%s436 + $0x4] sm:$0xf]
        %v1217 = vld [vmem:[%s436 + $0x8] sm:$0xf]
        %v1218 = vld [vmem:[%s436 + $0xc] sm:$0xf]
        %v1219 = vld [vmem:[%s436 + $0x10] sm:$0xf]
        %v1220 = vld [vmem:[%s436 + $0x14] sm:$0xf]
        %v1221 = vld [vmem:[%s436 + $0x18] sm:$0xf]
        %v1222 = vld [vmem:[%s436 + $0x1c] sm:$0xf]
        %v1223 = vld [vmem:[%s441] sm:$0xf]
        %v1224 = vld [vmem:[%s441 + $0x4] sm:$0xf]
        %v1225 = vld [vmem:[%s441 + $0x8] sm:$0xf]
        %v1226 = vld [vmem:[%s441 + $0xc] sm:$0xf]
        %v1227 = vld [vmem:[%s441 + $0x10] sm:$0xf]
        %v1228 = vld [vmem:[%s441 + $0x14] sm:$0xf]
        %v1229 = vld [vmem:[%s441 + $0x18] sm:$0xf]
        %v1230 = vld [vmem:[%s441 + $0x1c] sm:$0xf]
        %v1239 = vunpack.c.l.b16 %v1215
        %v1240 = vunpack.c.l.b16 %v1216
        %v1241 = vunpack.c.l.b16 %v1217
        %v1242 = vunpack.c.l.b16 %v1218
        %v1243 = vunpack.c.l.b16 %v1219
        %v1244 = vunpack.c.l.b16 %v1220
        %v1245 = vunpack.c.l.b16 %v1221
        %v1246 = vunpack.c.l.b16 %v1222
        %v1247 = vpack.c.b16 %v1240, %v1239
        %v1248 = vpack.c.b16 %v1242, %v1241
        %v1249 = vpack.c.b16 %v1244, %v1243
        %v1250 = vpack.c.b16 %v1246, %v1245
        %v1263 = vunpack.c.l.b16 %v1223
        %v1264 = vunpack.c.l.b16 %v1224
        %v1265 = vunpack.c.l.b16 %v1225
        %v1266 = vunpack.c.l.b16 %v1226
        %v1267 = vunpack.c.l.b16 %v1227
        %v1268 = vunpack.c.l.b16 %v1228
        %v1269 = vunpack.c.l.b16 %v1229
        %v1270 = vunpack.c.l.b16 %v1230
        %v1271 = vpack.c.b16 %v1264, %v1263
        %v1272 = vpack.c.b16 %v1266, %v1265
        %v1273 = vpack.c.b16 %v1268, %v1267
        %v1274 = vpack.c.b16 %v1270, %v1269
        %v1279 = vld [vmem:[#allocation2] sm:$0xff]
        %v1280 = vld [vmem:[#allocation2 + $0x8] sm:$0xff]
        %v1281 = vld [vmem:[#allocation2 + $0x10] sm:$0xff]
        %v1282 = vld [vmem:[#allocation2 + $0x18] sm:$0xff]
        %v1283 = vld [vmem:[#allocation2 + $0x20] sm:$0xff]
        %v1284 = vld [vmem:[#allocation2 + $0x28] sm:$0xff]
        %v1285 = vld [vmem:[#allocation2 + $0x30] sm:$0xff]
        %v1286 = vld [vmem:[#allocation2 + $0x38] sm:$0xff]
        %v1287 = vld [vmem:[#allocation2 + $0x40] sm:$0xff]
        %v1288 = vld [vmem:[#allocation2 + $0x48] sm:$0xff]
        %v1289 = vld [vmem:[#allocation2 + $0x50] sm:$0xff]
        %v1290 = vld [vmem:[#allocation2 + $0x58] sm:$0xff]
        %v1291 = vld [vmem:[#allocation2 + $0x60] sm:$0xff]
        %v1292 = vld [vmem:[#allocation2 + $0x68] sm:$0xff]
        %v1293 = vld [vmem:[#allocation2 + $0x70] sm:$0xff]
        %v1294 = vld [vmem:[#allocation2 + $0x78] sm:$0xff]
        %v1295 = vld [vmem:[#allocation2 + $0x80] sm:$0xff]
        %v1296 = vld [vmem:[#allocation2 + $0x88] sm:$0xff]
        %v1297 = vld [vmem:[#allocation2 + $0x90] sm:$0xff]
        %v1298 = vld [vmem:[#allocation2 + $0x98] sm:$0xff]
        %v1299 = vld [vmem:[#allocation2 + $0xa0] sm:$0xff]
        %v1300 = vld [vmem:[#allocation2 + $0xa8] sm:$0xff]
        %v1301 = vld [vmem:[#allocation2 + $0xb0] sm:$0xff]
        %v1302 = vld [vmem:[#allocation2 + $0xb8] sm:$0xff]
        %v1303 = vld [vmem:[#allocation2 + $0xc0] sm:$0xff]
        %v1304 = vld [vmem:[#allocation2 + $0xc8] sm:$0xff]
        %v1305 = vld [vmem:[#allocation2 + $0xd0] sm:$0xff]
        %v1306 = vld [vmem:[#allocation2 + $0xd8] sm:$0xff]
        %v1307 = vld [vmem:[#allocation2 + $0xe0] sm:$0xff]
        %v1308 = vld [vmem:[#allocation2 + $0xe8] sm:$0xff]
        %v1309 = vld [vmem:[#allocation2 + $0xf0] sm:$0xff]
        %v1310 = vld [vmem:[#allocation2 + $0xf8] sm:$0xff]
        %v1311 = vld [vmem:[%s7] sm:$0xff]
        %v1312 = vld [vmem:[%s7 + $0x8] sm:$0xff]
        %v1313 = vld [vmem:[%s7 + $0x10] sm:$0xff]
        %v1314 = vld [vmem:[%s7 + $0x18] sm:$0xff]
        %v1315 = vld [vmem:[%s7 + $0x20] sm:$0xff]
        %v1316 = vld [vmem:[%s7 + $0x28] sm:$0xff]
        %v1317 = vld [vmem:[%s7 + $0x30] sm:$0xff]
        %v1318 = vld [vmem:[%s7 + $0x38] sm:$0xff]
        %v1319 = vld [vmem:[%s7 + $0x40] sm:$0xff]
        %v1320 = vld [vmem:[%s7 + $0x48] sm:$0xff]
        %v1321 = vld [vmem:[%s7 + $0x50] sm:$0xff]
        %v1322 = vld [vmem:[%s7 + $0x58] sm:$0xff]
        %v1323 = vld [vmem:[%s7 + $0x60] sm:$0xff]
        %v1324 = vld [vmem:[%s7 + $0x68] sm:$0xff]
        %v1325 = vld [vmem:[%s7 + $0x70] sm:$0xff]
        %v1326 = vld [vmem:[%s7 + $0x78] sm:$0xff]
        %v1327 = vld [vmem:[%s7 + $0x80] sm:$0xff]
        %v1328 = vld [vmem:[%s7 + $0x88] sm:$0xff]
        %v1329 = vld [vmem:[%s7 + $0x90] sm:$0xff]
        %v1330 = vld [vmem:[%s7 + $0x98] sm:$0xff]
        %v1331 = vld [vmem:[%s7 + $0xa0] sm:$0xff]
        %v1332 = vld [vmem:[%s7 + $0xa8] sm:$0xff]
        %v1333 = vld [vmem:[%s7 + $0xb0] sm:$0xff]
        %v1334 = vld [vmem:[%s7 + $0xb8] sm:$0xff]
        %v1335 = vld [vmem:[%s7 + $0xc0] sm:$0xff]
        %v1336 = vld [vmem:[%s7 + $0xc8] sm:$0xff]
        %v1337 = vld [vmem:[%s7 + $0xd0] sm:$0xff]
        %v1338 = vld [vmem:[%s7 + $0xd8] sm:$0xff]
        %v1339 = vld [vmem:[%s7 + $0xe0] sm:$0xff]
        %v1340 = vld [vmem:[%s7 + $0xe8] sm:$0xff]
        %v1341 = vld [vmem:[%s7 + $0xf0] sm:$0xff]
        %v1342 = vld [vmem:[%s7 + $0xf8] sm:$0xff]
        %v1343 = vld [vmem:[%s7 + $0x100] sm:$0xff]
        %v1344 = vld [vmem:[%s7 + $0x108] sm:$0xff]
        %v1345 = vld [vmem:[%s7 + $0x110] sm:$0xff]
        %v1346 = vld [vmem:[%s7 + $0x118] sm:$0xff]
        %v1347 = vld [vmem:[%s7 + $0x120] sm:$0xff]
        %v1348 = vld [vmem:[%s7 + $0x128] sm:$0xff]
        %v1349 = vld [vmem:[%s7 + $0x130] sm:$0xff]
        %v1350 = vld [vmem:[%s7 + $0x138] sm:$0xff]
        %v1351 = vld [vmem:[%s7 + $0x140] sm:$0xff]
        %v1352 = vld [vmem:[%s7 + $0x148] sm:$0xff]
        %v1353 = vld [vmem:[%s7 + $0x150] sm:$0xff]
        %v1354 = vld [vmem:[%s7 + $0x158] sm:$0xff]
        %v1355 = vld [vmem:[%s7 + $0x160] sm:$0xff]
        %v1356 = vld [vmem:[%s7 + $0x168] sm:$0xff]
        %v1357 = vld [vmem:[%s7 + $0x170] sm:$0xff]
        %v1358 = vld [vmem:[%s7 + $0x178] sm:$0xff]
        %v1359 = vld [vmem:[%s7 + $0x180] sm:$0xff]
        %v1360 = vld [vmem:[%s7 + $0x188] sm:$0xff]
        %v1361 = vld [vmem:[%s7 + $0x190] sm:$0xff]
        %v1362 = vld [vmem:[%s7 + $0x198] sm:$0xff]
        %v1363 = vld [vmem:[%s7 + $0x1a0] sm:$0xff]
        %v1364 = vld [vmem:[%s7 + $0x1a8] sm:$0xff]
        %v1365 = vld [vmem:[%s7 + $0x1b0] sm:$0xff]
        %v1366 = vld [vmem:[%s7 + $0x1b8] sm:$0xff]
        %v1367 = vld [vmem:[%s7 + $0x1c0] sm:$0xff]
        %v1368 = vld [vmem:[%s7 + $0x1c8] sm:$0xff]
        %v1369 = vld [vmem:[%s7 + $0x1d0] sm:$0xff]
        %v1370 = vld [vmem:[%s7 + $0x1d8] sm:$0xff]
        %v1371 = vld [vmem:[%s7 + $0x1e0] sm:$0xff]
        %v1372 = vld [vmem:[%s7 + $0x1e8] sm:$0xff]
        %v1373 = vld [vmem:[%s7 + $0x1f0] sm:$0xff]
        %v1374 = vld [vmem:[%s7 + $0x1f8] sm:$0xff]
        %v1375 = vld [vmem:[%s7 + $0x200] sm:$0xff]
        %v1376 = vld [vmem:[%s7 + $0x208] sm:$0xff]
        %v1377 = vld [vmem:[%s7 + $0x210] sm:$0xff]
        %v1378 = vld [vmem:[%s7 + $0x218] sm:$0xff]
        %v1379 = vld [vmem:[%s7 + $0x220] sm:$0xff]
        %v1380 = vld [vmem:[%s7 + $0x228] sm:$0xff]
        %v1381 = vld [vmem:[%s7 + $0x230] sm:$0xff]
        %v1382 = vld [vmem:[%s7 + $0x238] sm:$0xff]
        %v1383 = vld [vmem:[%s7 + $0x240] sm:$0xff]
        %v1384 = vld [vmem:[%s7 + $0x248] sm:$0xff]
        %v1385 = vld [vmem:[%s7 + $0x250] sm:$0xff]
        %v1386 = vld [vmem:[%s7 + $0x258] sm:$0xff]
        %v1387 = vld [vmem:[%s7 + $0x260] sm:$0xff]
        %v1388 = vld [vmem:[%s7 + $0x268] sm:$0xff]
        %v1389 = vld [vmem:[%s7 + $0x270] sm:$0xff]
        %v1390 = vld [vmem:[%s7 + $0x278] sm:$0xff]
        %v1391 = vld [vmem:[%s7 + $0x280] sm:$0xff]
        %v1392 = vld [vmem:[%s7 + $0x288] sm:$0xff]
        %v1393 = vld [vmem:[%s7 + $0x290] sm:$0xff]
        %v1394 = vld [vmem:[%s7 + $0x298] sm:$0xff]
        %v1395 = vld [vmem:[%s7 + $0x2a0] sm:$0xff]
        %v1396 = vld [vmem:[%s7 + $0x2a8] sm:$0xff]
        %v1397 = vld [vmem:[%s7 + $0x2b0] sm:$0xff]
        %v1398 = vld [vmem:[%s7 + $0x2b8] sm:$0xff]
        %v1399 = vld [vmem:[%s7 + $0x2c0] sm:$0xff]
        %v1400 = vld [vmem:[%s7 + $0x2c8] sm:$0xff]
        %v1401 = vld [vmem:[%s7 + $0x2d0] sm:$0xff]
        %v1402 = vld [vmem:[%s7 + $0x2d8] sm:$0xff]
        %v1403 = vld [vmem:[%s7 + $0x2e0] sm:$0xff]
        %v1404 = vld [vmem:[%s7 + $0x2e8] sm:$0xff]
        %v1405 = vld [vmem:[%s7 + $0x2f0] sm:$0xff]
        %v1406 = vld [vmem:[%s7 + $0x2f8] sm:$0xff]
        %v1407 = vld [vmem:[%s7 + $0x300] sm:$0xff]
        %v1408 = vld [vmem:[%s7 + $0x308] sm:$0xff]
        %v1409 = vld [vmem:[%s7 + $0x310] sm:$0xff]
        %v1410 = vld [vmem:[%s7 + $0x318] sm:$0xff]
        %v1411 = vld [vmem:[%s7 + $0x320] sm:$0xff]
        %v1412 = vld [vmem:[%s7 + $0x328] sm:$0xff]
        %v1413 = vld [vmem:[%s7 + $0x330] sm:$0xff]
        %v1414 = vld [vmem:[%s7 + $0x338] sm:$0xff]
        %v1415 = vld [vmem:[%s7 + $0x340] sm:$0xff]
        %v1416 = vld [vmem:[%s7 + $0x348] sm:$0xff]
        %v1417 = vld [vmem:[%s7 + $0x350] sm:$0xff]
        %v1418 = vld [vmem:[%s7 + $0x358] sm:$0xff]
        %v1419 = vld [vmem:[%s7 + $0x360] sm:$0xff]
        %v1420 = vld [vmem:[%s7 + $0x368] sm:$0xff]
        %v1421 = vld [vmem:[%s7 + $0x370] sm:$0xff]
        %v1422 = vld [vmem:[%s7 + $0x378] sm:$0xff]
        %v1455 = vunpack.c.l.b16 %v1183
        %v1456 = vunpack.c.h.b16 %v1183
        %v1457 = vunpack.c.l.b16 %v1184
        %v1458 = vunpack.c.h.b16 %v1184
        %v1459 = vunpack.c.l.b16 %v1185
        %v1460 = vunpack.c.h.b16 %v1185
        %v1461 = vunpack.c.l.b16 %v1186
        %v1462 = vunpack.c.l.b16 %v1187
        %v1463 = vunpack.c.h.b16 %v1187
        %v1464 = vunpack.c.l.b16 %v1188
        %v1465 = vunpack.c.h.b16 %v1188
        %v1466 = vunpack.c.l.b16 %v1189
        %v1467 = vunpack.c.h.b16 %v1189
        %v1468 = vunpack.c.l.b16 %v1190
        %v1469 = vunpack.c.l.b16 %v1191
        %v1470 = vunpack.c.h.b16 %v1191
        %v1471 = vunpack.c.l.b16 %v1192
        %v1472 = vunpack.c.h.b16 %v1192
        %v1473 = vunpack.c.l.b16 %v1193
        %v1474 = vunpack.c.h.b16 %v1193
        %v1475 = vunpack.c.l.b16 %v1194
        %v1476 = vunpack.c.l.b16 %v1195
        %v1477 = vunpack.c.h.b16 %v1195
        %v1478 = vunpack.c.l.b16 %v1196
        %v1479 = vunpack.c.h.b16 %v1196
        %v1480 = vunpack.c.l.b16 %v1197
        %v1481 = vunpack.c.h.b16 %v1197
        %v1482 = vunpack.c.l.b16 %v1198
        %v1483 = vunpack.c.l.b16 %v1199
        %v1484 = vunpack.c.h.b16 %v1199
        %v1485 = vunpack.c.l.b16 %v1200
        %v1486 = vunpack.c.h.b16 %v1200
        %v1487 = vunpack.c.l.b16 %v1201
        %v1488 = vunpack.c.h.b16 %v1201
        %v1489 = vunpack.c.l.b16 %v1202
        %v1490 = vunpack.c.l.b16 %v1203
        %v1491 = vunpack.c.h.b16 %v1203
        %v1492 = vunpack.c.l.b16 %v1204
        %v1493 = vunpack.c.h.b16 %v1204
        %v1494 = vunpack.c.l.b16 %v1205
        %v1495 = vunpack.c.h.b16 %v1205
        %v1496 = vunpack.c.l.b16 %v1206
        %v1497 = vunpack.c.l.b16 %v1207
        %v1498 = vunpack.c.h.b16 %v1207
        %v1499 = vunpack.c.l.b16 %v1208
        %v1500 = vunpack.c.h.b16 %v1208
        %v1501 = vunpack.c.l.b16 %v1209
        %v1502 = vunpack.c.h.b16 %v1209
        %v1503 = vunpack.c.l.b16 %v1210
        %v1504 = vunpack.c.l.b16 %v1211
        %v1505 = vunpack.c.h.b16 %v1211
        %v1506 = vunpack.c.l.b16 %v1212
        %v1507 = vunpack.c.h.b16 %v1212
        %v1508 = vunpack.c.l.b16 %v1213
        %v1509 = vunpack.c.h.b16 %v1213
        %v1510 = vunpack.c.l.b16 %v1214
        %v1511 = vpack.c.b16 %v1462, %v1455
        %v1512 = vpack.c.b16 %v1463, %v1456
        %v1513 = vpack.c.b16 %v1464, %v1457
        %v1514 = vpack.c.b16 %v1465, %v1458
        %v1515 = vpack.c.b16 %v1466, %v1459
        %v1516 = vpack.c.b16 %v1467, %v1460
        %v1517 = vpack.c.b16 %v1468, %v1461
        %v1518 = vpack.c.b16 %v1476, %v1469
        %v1519 = vpack.c.b16 %v1477, %v1470
        %v1520 = vpack.c.b16 %v1478, %v1471
        %v1521 = vpack.c.b16 %v1479, %v1472
        %v1522 = vpack.c.b16 %v1480, %v1473
        %v1523 = vpack.c.b16 %v1481, %v1474
        %v1524 = vpack.c.b16 %v1482, %v1475
        %v1525 = vpack.c.b16 %v1490, %v1483
        %v1526 = vpack.c.b16 %v1491, %v1484
        %v1527 = vpack.c.b16 %v1492, %v1485
        %v1528 = vpack.c.b16 %v1493, %v1486
        %v1529 = vpack.c.b16 %v1494, %v1487
        %v1530 = vpack.c.b16 %v1495, %v1488
        %v1531 = vpack.c.b16 %v1496, %v1489
        %v1532 = vpack.c.b16 %v1504, %v1497
        %v1533 = vpack.c.b16 %v1505, %v1498
        %v1534 = vpack.c.b16 %v1506, %v1499
        %v1535 = vpack.c.b16 %v1507, %v1500
        %v1536 = vpack.c.b16 %v1508, %v1501
        %v1537 = vpack.c.b16 %v1509, %v1502
        %v1538 = vpack.c.b16 %v1510, %v1503
        %v1679 = vunpack.c.l.b16 %v1311
        %v1680 = vunpack.c.h.b16 %v1311
        %v1681 = vunpack.c.l.b16 %v1312
        %v1682 = vunpack.c.h.b16 %v1312
        %v1683 = vunpack.c.l.b16 %v1313
        %v1684 = vunpack.c.h.b16 %v1313
        %v1685 = vunpack.c.l.b16 %v1314
        %v1686 = vunpack.c.h.b16 %v1314
        %v1687 = vunpack.c.l.b16 %v1315
        %v1688 = vunpack.c.h.b16 %v1315
        %v1689 = vunpack.c.l.b16 %v1316
        %v1690 = vunpack.c.h.b16 %v1316
        %v1691 = vunpack.c.l.b16 %v1317
        %v1692 = vunpack.c.h.b16 %v1317
        %v1693 = vunpack.c.l.b16 %v1318
        %v1694 = vunpack.c.h.b16 %v1318
        %v1695 = vunpack.c.l.b16 %v1319
        %v1696 = vunpack.c.h.b16 %v1319
        %v1697 = vunpack.c.l.b16 %v1320
        %v1698 = vunpack.c.h.b16 %v1320
        %v1699 = vunpack.c.l.b16 %v1321
        %v1700 = vunpack.c.h.b16 %v1321
        %v1701 = vunpack.c.l.b16 %v1322
        %v1702 = vunpack.c.h.b16 %v1322
        %v1703 = vunpack.c.l.b16 %v1323
        %v1704 = vunpack.c.h.b16 %v1323
        %v1705 = vunpack.c.l.b16 %v1324
        %v1706 = vunpack.c.h.b16 %v1324
        %v1707 = vunpack.c.l.b16 %v1325
        %v1708 = vunpack.c.h.b16 %v1325
        %v1709 = vunpack.c.l.b16 %v1326
        %v1710 = vunpack.c.h.b16 %v1326
        %v1711 = vunpack.c.l.b16 %v1327
        %v1712 = vunpack.c.h.b16 %v1327
        %v1713 = vunpack.c.l.b16 %v1328
        %v1714 = vunpack.c.h.b16 %v1328
        %v1715 = vunpack.c.l.b16 %v1329
        %v1716 = vunpack.c.h.b16 %v1329
        %v1717 = vunpack.c.l.b16 %v1330
        %v1718 = vunpack.c.h.b16 %v1330
        %v1719 = vunpack.c.l.b16 %v1331
        %v1720 = vunpack.c.h.b16 %v1331
        %v1721 = vunpack.c.l.b16 %v1332
        %v1722 = vunpack.c.h.b16 %v1332
        %v1723 = vunpack.c.l.b16 %v1333
        %v1724 = vunpack.c.h.b16 %v1333
        %v1725 = vunpack.c.l.b16 %v1334
        %v1726 = vunpack.c.h.b16 %v1334
        %v1727 = vunpack.c.l.b16 %v1335
        %v1728 = vunpack.c.h.b16 %v1335
        %v1729 = vunpack.c.l.b16 %v1336
        %v1730 = vunpack.c.h.b16 %v1336
        %v1731 = vunpack.c.l.b16 %v1337
        %v1732 = vunpack.c.h.b16 %v1337
        %v1733 = vunpack.c.l.b16 %v1338
        %v1734 = vunpack.c.h.b16 %v1338
        %v1735 = vunpack.c.l.b16 %v1339
        %v1736 = vunpack.c.h.b16 %v1339
        %v1737 = vunpack.c.l.b16 %v1340
        %v1738 = vunpack.c.h.b16 %v1340
        %v1739 = vunpack.c.l.b16 %v1341
        %v1740 = vunpack.c.h.b16 %v1341
        %v1741 = vunpack.c.l.b16 %v1342
        %v1742 = vunpack.c.h.b16 %v1342
        %v1743 = vunpack.c.l.b16 %v1343
        %v1744 = vunpack.c.h.b16 %v1343
        %v1745 = vunpack.c.l.b16 %v1344
        %v1746 = vunpack.c.h.b16 %v1344
        %v1747 = vunpack.c.l.b16 %v1345
        %v1748 = vunpack.c.h.b16 %v1345
        %v1749 = vunpack.c.l.b16 %v1346
        %v1750 = vunpack.c.h.b16 %v1346
        %v1751 = vunpack.c.l.b16 %v1347
        %v1752 = vunpack.c.h.b16 %v1347
        %v1753 = vunpack.c.l.b16 %v1348
        %v1754 = vunpack.c.h.b16 %v1348
        %v1755 = vunpack.c.l.b16 %v1349
        %v1756 = vunpack.c.h.b16 %v1349
        %v1757 = vunpack.c.l.b16 %v1350
        %v1758 = vunpack.c.h.b16 %v1350
        %v1759 = vunpack.c.l.b16 %v1351
        %v1760 = vunpack.c.h.b16 %v1351
        %v1761 = vunpack.c.l.b16 %v1352
        %v1762 = vunpack.c.h.b16 %v1352
        %v1763 = vunpack.c.l.b16 %v1353
        %v1764 = vunpack.c.h.b16 %v1353
        %v1765 = vunpack.c.l.b16 %v1354
        %v1766 = vunpack.c.h.b16 %v1354
        %v1767 = vunpack.c.l.b16 %v1355
        %v1768 = vunpack.c.h.b16 %v1355
        %v1769 = vunpack.c.l.b16 %v1356
        %v1770 = vunpack.c.h.b16 %v1356
        %v1771 = vunpack.c.l.b16 %v1357
        %v1772 = vunpack.c.h.b16 %v1357
        %v1773 = vunpack.c.l.b16 %v1358
        %v1774 = vunpack.c.h.b16 %v1358
        %v1775 = vunpack.c.l.b16 %v1359
        %v1776 = vunpack.c.h.b16 %v1359
        %v1777 = vunpack.c.l.b16 %v1360
        %v1778 = vunpack.c.h.b16 %v1360
        %v1779 = vunpack.c.l.b16 %v1361
        %v1780 = vunpack.c.h.b16 %v1361
        %v1781 = vunpack.c.l.b16 %v1362
        %v1782 = vunpack.c.h.b16 %v1362
        %v1783 = vunpack.c.l.b16 %v1363
        %v1784 = vunpack.c.h.b16 %v1363
        %v1785 = vunpack.c.l.b16 %v1364
        %v1786 = vunpack.c.h.b16 %v1364
        %v1787 = vunpack.c.l.b16 %v1365
        %v1788 = vunpack.c.h.b16 %v1365
        %v1789 = vunpack.c.l.b16 %v1366
        %v1790 = vunpack.c.h.b16 %v1366
        %v1791 = vunpack.c.l.b16 %v1367
        %v1792 = vunpack.c.h.b16 %v1367
        %v1793 = vunpack.c.l.b16 %v1368
        %v1794 = vunpack.c.h.b16 %v1368
        %v1795 = vunpack.c.l.b16 %v1369
        %v1796 = vunpack.c.h.b16 %v1369
        %v1797 = vunpack.c.l.b16 %v1370
        %v1798 = vunpack.c.h.b16 %v1370
        %v1799 = vunpack.c.l.b16 %v1371
        %v1800 = vunpack.c.h.b16 %v1371
        %v1801 = vunpack.c.l.b16 %v1372
        %v1802 = vunpack.c.h.b16 %v1372
        %v1803 = vunpack.c.l.b16 %v1373
        %v1804 = vunpack.c.h.b16 %v1373
        %v1805 = vunpack.c.l.b16 %v1374
        %v1806 = vunpack.c.h.b16 %v1374
        %v1807 = vunpack.c.l.b16 %v1375
        %v1808 = vunpack.c.h.b16 %v1375
        %v1809 = vunpack.c.l.b16 %v1376
        %v1810 = vunpack.c.h.b16 %v1376
        %v1811 = vunpack.c.l.b16 %v1377
        %v1812 = vunpack.c.h.b16 %v1377
        %v1813 = vunpack.c.l.b16 %v1378
        %v1814 = vunpack.c.h.b16 %v1378
        %v1815 = vunpack.c.l.b16 %v1379
        %v1816 = vunpack.c.h.b16 %v1379
        %v1817 = vunpack.c.l.b16 %v1380
        %v1818 = vunpack.c.h.b16 %v1380
        %v1819 = vunpack.c.l.b16 %v1381
        %v1820 = vunpack.c.h.b16 %v1381
        %v1821 = vunpack.c.l.b16 %v1382
        %v1822 = vunpack.c.h.b16 %v1382
        %v1823 = vunpack.c.l.b16 %v1383
        %v1824 = vunpack.c.h.b16 %v1383
        %v1825 = vunpack.c.l.b16 %v1384
        %v1826 = vunpack.c.h.b16 %v1384
        %v1827 = vunpack.c.l.b16 %v1385
        %v1828 = vunpack.c.h.b16 %v1385
        %v1829 = vunpack.c.l.b16 %v1386
        %v1830 = vunpack.c.h.b16 %v1386
        %v1831 = vunpack.c.l.b16 %v1387
        %v1832 = vunpack.c.h.b16 %v1387
        %v1833 = vunpack.c.l.b16 %v1388
        %v1834 = vunpack.c.h.b16 %v1388
        %v1835 = vunpack.c.l.b16 %v1389
        %v1836 = vunpack.c.h.b16 %v1389
        %v1837 = vunpack.c.l.b16 %v1390
        %v1838 = vunpack.c.h.b16 %v1390
        %v1839 = vunpack.c.l.b16 %v1391
        %v1840 = vunpack.c.h.b16 %v1391
        %v1841 = vunpack.c.l.b16 %v1392
        %v1842 = vunpack.c.h.b16 %v1392
        %v1843 = vunpack.c.l.b16 %v1393
        %v1844 = vunpack.c.h.b16 %v1393
        %v1845 = vunpack.c.l.b16 %v1394
        %v1846 = vunpack.c.h.b16 %v1394
        %v1847 = vunpack.c.l.b16 %v1395
        %v1848 = vunpack.c.h.b16 %v1395
        %v1849 = vunpack.c.l.b16 %v1396
        %v1850 = vunpack.c.h.b16 %v1396
        %v1851 = vunpack.c.l.b16 %v1397
        %v1852 = vunpack.c.h.b16 %v1397
        %v1853 = vunpack.c.l.b16 %v1398
        %v1854 = vunpack.c.h.b16 %v1398
        %v1855 = vunpack.c.l.b16 %v1399
        %v1856 = vunpack.c.h.b16 %v1399
        %v1857 = vunpack.c.l.b16 %v1400
        %v1858 = vunpack.c.h.b16 %v1400
        %v1859 = vunpack.c.l.b16 %v1401
        %v1860 = vunpack.c.h.b16 %v1401
        %v1861 = vunpack.c.l.b16 %v1402
        %v1862 = vunpack.c.h.b16 %v1402
        %v1863 = vunpack.c.l.b16 %v1403
        %v1864 = vunpack.c.h.b16 %v1403
        %v1865 = vunpack.c.l.b16 %v1404
        %v1866 = vunpack.c.h.b16 %v1404
        %v1867 = vunpack.c.l.b16 %v1405
        %v1868 = vunpack.c.h.b16 %v1405
        %v1869 = vunpack.c.l.b16 %v1406
        %v1870 = vunpack.c.h.b16 %v1406
        %v1871 = vunpack.c.l.b16 %v1407
        %v1872 = vunpack.c.h.b16 %v1407
        %v1873 = vunpack.c.l.b16 %v1408
        %v1874 = vunpack.c.h.b16 %v1408
        %v1875 = vunpack.c.l.b16 %v1409
        %v1876 = vunpack.c.h.b16 %v1409
        %v1877 = vunpack.c.l.b16 %v1410
        %v1878 = vunpack.c.h.b16 %v1410
        %v1879 = vunpack.c.l.b16 %v1411
        %v1880 = vunpack.c.h.b16 %v1411
        %v1881 = vunpack.c.l.b16 %v1412
        %v1882 = vunpack.c.h.b16 %v1412
        %v1883 = vunpack.c.l.b16 %v1413
        %v1884 = vunpack.c.h.b16 %v1413
        %v1885 = vunpack.c.l.b16 %v1414
        %v1886 = vunpack.c.h.b16 %v1414
        %v1887 = vunpack.c.l.b16 %v1415
        %v1888 = vunpack.c.h.b16 %v1415
        %v1889 = vunpack.c.l.b16 %v1416
        %v1890 = vunpack.c.h.b16 %v1416
        %v1891 = vunpack.c.l.b16 %v1417
        %v1892 = vunpack.c.h.b16 %v1417
        %v1893 = vunpack.c.l.b16 %v1418
        %v1894 = vunpack.c.h.b16 %v1418
        %v1895 = vunpack.c.l.b16 %v1419
        %v1896 = vunpack.c.h.b16 %v1419
        %v1897 = vunpack.c.l.b16 %v1420
        %v1898 = vunpack.c.h.b16 %v1420
        %v1899 = vunpack.c.l.b16 %v1421
        %v1900 = vunpack.c.h.b16 %v1421
        %v1901 = vunpack.c.l.b16 %v1422
        %v1902 = vunpack.c.h.b16 %v1422
        %v1903 = vpack.c.b16 %v1681, %v1679
        %v1904 = vpack.c.b16 %v1682, %v1680
        %v1905 = vpack.c.b16 %v1685, %v1683
        %v1906 = vpack.c.b16 %v1686, %v1684
        %v1907 = vpack.c.b16 %v1689, %v1687
        %v1908 = vpack.c.b16 %v1690, %v1688
        %v1909 = vpack.c.b16 %v1693, %v1691
        %v1910 = vpack.c.b16 %v1694, %v1692
        %v1911 = vpack.c.b16 %v1697, %v1695
        %v1912 = vpack.c.b16 %v1698, %v1696
        %v1913 = vpack.c.b16 %v1701, %v1699
        %v1914 = vpack.c.b16 %v1702, %v1700
        %v1915 = vpack.c.b16 %v1705, %v1703
        %v1916 = vpack.c.b16 %v1706, %v1704
        %v1917 = vpack.c.b16 %v1709, %v1707
        %v1918 = vpack.c.b16 %v1710, %v1708
        %v1919 = vpack.c.b16 %v1713, %v1711
        %v1920 = vpack.c.b16 %v1714, %v1712
        %v1921 = vpack.c.b16 %v1717, %v1715
        %v1922 = vpack.c.b16 %v1718, %v1716
        %v1923 = vpack.c.b16 %v1721, %v1719
        %v1924 = vpack.c.b16 %v1722, %v1720
        %v1925 = vpack.c.b16 %v1725, %v1723
        %v1926 = vpack.c.b16 %v1726, %v1724
        %v1927 = vpack.c.b16 %v1729, %v1727
        %v1928 = vpack.c.b16 %v1730, %v1728
        %v1929 = vpack.c.b16 %v1733, %v1731
        %v1930 = vpack.c.b16 %v1734, %v1732
        %v1931 = vpack.c.b16 %v1737, %v1735
        %v1932 = vpack.c.b16 %v1738, %v1736
        %v1933 = vpack.c.b16 %v1741, %v1739
        %v1934 = vpack.c.b16 %v1742, %v1740
        %v1935 = vpack.c.b16 %v1745, %v1743
        %v1936 = vpack.c.b16 %v1746, %v1744
        %v1937 = vpack.c.b16 %v1749, %v1747
        %v1938 = vpack.c.b16 %v1750, %v1748
        %v1939 = vpack.c.b16 %v1753, %v1751
        %v1940 = vpack.c.b16 %v1754, %v1752
        %v1941 = vpack.c.b16 %v1757, %v1755
        %v1942 = vpack.c.b16 %v1758, %v1756
        %v1943 = vpack.c.b16 %v1761, %v1759
        %v1944 = vpack.c.b16 %v1762, %v1760
        %v1945 = vpack.c.b16 %v1765, %v1763
        %v1946 = vpack.c.b16 %v1766, %v1764
        %v1947 = vpack.c.b16 %v1769, %v1767
        %v1948 = vpack.c.b16 %v1770, %v1768
        %v1949 = vpack.c.b16 %v1773, %v1771
        %v1950 = vpack.c.b16 %v1774, %v1772
        %v1951 = vpack.c.b16 %v1777, %v1775
        %v1952 = vpack.c.b16 %v1778, %v1776
        %v1953 = vpack.c.b16 %v1781, %v1779
        %v1954 = vpack.c.b16 %v1782, %v1780
        %v1955 = vpack.c.b16 %v1785, %v1783
        %v1956 = vpack.c.b16 %v1786, %v1784
        %v1957 = vpack.c.b16 %v1789, %v1787
        %v1958 = vpack.c.b16 %v1790, %v1788
        %v1959 = vpack.c.b16 %v1793, %v1791
        %v1960 = vpack.c.b16 %v1794, %v1792
        %v1961 = vpack.c.b16 %v1797, %v1795
        %v1962 = vpack.c.b16 %v1798, %v1796
        %v1963 = vpack.c.b16 %v1801, %v1799
        %v1964 = vpack.c.b16 %v1802, %v1800
        %v1965 = vpack.c.b16 %v1805, %v1803
        %v1966 = vpack.c.b16 %v1806, %v1804
        %v1967 = vpack.c.b16 %v1809, %v1807
        %v1968 = vpack.c.b16 %v1810, %v1808
        %v1969 = vpack.c.b16 %v1813, %v1811
        %v1970 = vpack.c.b16 %v1814, %v1812
        %v1971 = vpack.c.b16 %v1817, %v1815
        %v1972 = vpack.c.b16 %v1818, %v1816
        %v1973 = vpack.c.b16 %v1821, %v1819
        %v1974 = vpack.c.b16 %v1822, %v1820
        %v1975 = vpack.c.b16 %v1825, %v1823
        %v1976 = vpack.c.b16 %v1826, %v1824
        %v1977 = vpack.c.b16 %v1829, %v1827
        %v1978 = vpack.c.b16 %v1830, %v1828
        %v1979 = vpack.c.b16 %v1833, %v1831
        %v1980 = vpack.c.b16 %v1834, %v1832
        %v1981 = vpack.c.b16 %v1837, %v1835
        %v1982 = vpack.c.b16 %v1838, %v1836
        %v1983 = vpack.c.b16 %v1841, %v1839
        %v1984 = vpack.c.b16 %v1842, %v1840
        %v1985 = vpack.c.b16 %v1845, %v1843
        %v1986 = vpack.c.b16 %v1846, %v1844
        %v1987 = vpack.c.b16 %v1849, %v1847
        %v1988 = vpack.c.b16 %v1850, %v1848
        %v1989 = vpack.c.b16 %v1853, %v1851
        %v1990 = vpack.c.b16 %v1854, %v1852
        %v1991 = vpack.c.b16 %v1857, %v1855
        %v1992 = vpack.c.b16 %v1858, %v1856
        %v1993 = vpack.c.b16 %v1861, %v1859
        %v1994 = vpack.c.b16 %v1862, %v1860
        %v1995 = vpack.c.b16 %v1865, %v1863
        %v1996 = vpack.c.b16 %v1866, %v1864
        %v1997 = vpack.c.b16 %v1869, %v1867
        %v1998 = vpack.c.b16 %v1870, %v1868
        %v1999 = vpack.c.b16 %v1873, %v1871
        %v2000 = vpack.c.b16 %v1874, %v1872
        %v2001 = vpack.c.b16 %v1877, %v1875
        %v2002 = vpack.c.b16 %v1878, %v1876
        %v2003 = vpack.c.b16 %v1881, %v1879
        %v2004 = vpack.c.b16 %v1882, %v1880
        %v2005 = vpack.c.b16 %v1885, %v1883
        %v2006 = vpack.c.b16 %v1886, %v1884
        %v2007 = vpack.c.b16 %v1889, %v1887
        %v2008 = vpack.c.b16 %v1890, %v1888
        %v2009 = vpack.c.b16 %v1893, %v1891
        %v2010 = vpack.c.b16 %v1894, %v1892
        %v2011 = vpack.c.b16 %v1897, %v1895
        %v2012 = vpack.c.b16 %v1898, %v1896
        %v2013 = vpack.c.b16 %v1901, %v1899
        %v2014 = vpack.c.b16 %v1902, %v1900
        %2127 = vmatpush.bf16.msra.mxu0 %v1917
        %2128 = vmatpush.bf16.msra.mxu0 %v1915
        %2129 = vmatpush.bf16.msra.mxu0 %v1913
        %2130 = vmatpush.bf16.msra.mxu0 %v1911
        %2131 = vmatpush.bf16.msra.mxu0 %v1909
        %2132 = vmatpush.bf16.msra.mxu0 %v1907
        %2133 = vmatpush.bf16.msra.mxu0 %v1905
        %2134 = vmatpush.bf16.msra.mxu0 %v1903
        %2135 = vmatmul.bf16.gmra.mxu0 %v1511
        %v2136 = vpop.f32.mrf.mxu0
        %v2137 = vadd.f32 0.0, %v2136
        %v2138 = vpop.f32.mrf.mxu0
        %v2139 = vadd.f32 0.0, %v2138
        %2140 = vmatmul.bf16.gmra.mxu0 %v1518
        %v2141 = vpop.f32.mrf.mxu0
        %v2142 = vadd.f32 0.0, %v2141
        %v2143 = vpop.f32.mrf.mxu0
        %v2144 = vadd.f32 0.0, %v2143
        %2145 = vmatmul.bf16.gmra.mxu0 %v1525
        %v2146 = vpop.f32.mrf.mxu0
        %v2147 = vadd.f32 0.0, %v2146
        %v2148 = vpop.f32.mrf.mxu0
        %v2149 = vadd.f32 0.0, %v2148
        %2150 = vmatmul.bf16.gmra.mxu0 %v1532
        %v2151 = vpop.f32.mrf.mxu0
        %v2152 = vadd.f32 0.0, %v2151
        %v2153 = vpop.f32.mrf.mxu0
        %v2154 = vadd.f32 0.0, %v2153
        %2155 = vdwg.mxu0
        %2156 = vmatpush.bf16.msra.mxu0 %v1933
        %2157 = vmatpush.bf16.msra.mxu0 %v1931
        %2158 = vmatpush.bf16.msra.mxu0 %v1929
        %2159 = vmatpush.bf16.msra.mxu0 %v1927
        %2160 = vmatpush.bf16.msra.mxu0 %v1925
        %2161 = vmatpush.bf16.msra.mxu0 %v1923
        %2162 = vmatpush.bf16.msra.mxu0 %v1921
        %2163 = vmatpush.bf16.msra.mxu0 %v1919
        %2164 = vmatmul.bf16.gmra.mxu0 %v1512
        %v2165 = vpop.f32.mrf.mxu0
        %v2166 = vadd.f32 %v2137, %v2165
        %v2167 = vpop.f32.mrf.mxu0
        %v2168 = vadd.f32 %v2139, %v2167
        %2169 = vmatmul.bf16.gmra.mxu0 %v1519
        %v2170 = vpop.f32.mrf.mxu0
        %v2171 = vadd.f32 %v2142, %v2170
        %v2172 = vpop.f32.mrf.mxu0
        %v2173 = vadd.f32 %v2144, %v2172
        %2174 = vmatmul.bf16.gmra.mxu0 %v1526
        %v2175 = vpop.f32.mrf.mxu0
        %v2176 = vadd.f32 %v2147, %v2175
        %v2177 = vpop.f32.mrf.mxu0
        %v2178 = vadd.f32 %v2149, %v2177
        %2179 = vmatmul.bf16.gmra.mxu0 %v1533
        %v2180 = vpop.f32.mrf.mxu0
        %v2181 = vadd.f32 %v2152, %v2180
        %v2182 = vpop.f32.mrf.mxu0
        %v2183 = vadd.f32 %v2154, %v2182
        %2184 = vdwg.mxu0
        %2185 = vmatpush.bf16.msra.mxu0 %v1949
        %2186 = vmatpush.bf16.msra.mxu0 %v1947
        %2187 = vmatpush.bf16.msra.mxu0 %v1945
        %2188 = vmatpush.bf16.msra.mxu0 %v1943
        %2189 = vmatpush.bf16.msra.mxu0 %v1941
        %2190 = vmatpush.bf16.msra.mxu0 %v1939
        %2191 = vmatpush.bf16.msra.mxu0 %v1937
        %2192 = vmatpush.bf16.msra.mxu0 %v1935
        %2193 = vmatmul.bf16.gmra.mxu0 %v1513
        %v2194 = vpop.f32.mrf.mxu0
        %v2195 = vadd.f32 %v2166, %v2194
        %v2196 = vpop.f32.mrf.mxu0
        %v2197 = vadd.f32 %v2168, %v2196
        %2198 = vmatmul.bf16.gmra.mxu0 %v1520
        %v2199 = vpop.f32.mrf.mxu0
        %v2200 = vadd.f32 %v2171, %v2199
        %v2201 = vpop.f32.mrf.mxu0
        %v2202 = vadd.f32 %v2173, %v2201
        %2203 = vmatmul.bf16.gmra.mxu0 %v1527
        %v2204 = vpop.f32.mrf.mxu0
        %v2205 = vadd.f32 %v2176, %v2204
        %v2206 = vpop.f32.mrf.mxu0
        %v2207 = vadd.f32 %v2178, %v2206
        %2208 = vmatmul.bf16.gmra.mxu0 %v1534
        %v2209 = vpop.f32.mrf.mxu0
        %v2210 = vadd.f32 %v2181, %v2209
        %v2211 = vpop.f32.mrf.mxu0
        %v2212 = vadd.f32 %v2183, %v2211
        %2213 = vdwg.mxu0
        %2214 = vmatpush.bf16.msra.mxu0 %v1965
        %2215 = vmatpush.bf16.msra.mxu0 %v1963
        %2216 = vmatpush.bf16.msra.mxu0 %v1961
        %2217 = vmatpush.bf16.msra.mxu0 %v1959
        %2218 = vmatpush.bf16.msra.mxu0 %v1957
        %2219 = vmatpush.bf16.msra.mxu0 %v1955
        %2220 = vmatpush.bf16.msra.mxu0 %v1953
        %2221 = vmatpush.bf16.msra.mxu0 %v1951
        %2222 = vmatmul.bf16.gmra.mxu0 %v1514
        %v2223 = vpop.f32.mrf.mxu0
        %v2224 = vadd.f32 %v2195, %v2223
        %v2225 = vpop.f32.mrf.mxu0
        %v2226 = vadd.f32 %v2197, %v2225
        %2227 = vmatmul.bf16.gmra.mxu0 %v1521
        %v2228 = vpop.f32.mrf.mxu0
        %v2229 = vadd.f32 %v2200, %v2228
        %v2230 = vpop.f32.mrf.mxu0
        %v2231 = vadd.f32 %v2202, %v2230
        %2232 = vmatmul.bf16.gmra.mxu0 %v1528
        %v2233 = vpop.f32.mrf.mxu0
        %v2234 = vadd.f32 %v2205, %v2233
        %v2235 = vpop.f32.mrf.mxu0
        %v2236 = vadd.f32 %v2207, %v2235
        %2237 = vmatmul.bf16.gmra.mxu0 %v1535
        %v2238 = vpop.f32.mrf.mxu0
        %v2239 = vadd.f32 %v2210, %v2238
        %v2240 = vpop.f32.mrf.mxu0
        %v2241 = vadd.f32 %v2212, %v2240
        %2242 = vdwg.mxu0
        %2243 = vmatpush.bf16.msra.mxu0 %v1981
        %2244 = vmatpush.bf16.msra.mxu0 %v1979
        %2245 = vmatpush.bf16.msra.mxu0 %v1977
        %2246 = vmatpush.bf16.msra.mxu0 %v1975
        %2247 = vmatpush.bf16.msra.mxu0 %v1973
        %2248 = vmatpush.bf16.msra.mxu0 %v1971
        %2249 = vmatpush.bf16.msra.mxu0 %v1969
        %2250 = vmatpush.bf16.msra.mxu0 %v1967
        %2251 = vmatmul.bf16.gmra.mxu0 %v1515
        %v2252 = vpop.f32.mrf.mxu0
        %v2253 = vadd.f32 %v2224, %v2252
        %v2254 = vpop.f32.mrf.mxu0
        %v2255 = vadd.f32 %v2226, %v2254
        %2256 = vmatmul.bf16.gmra.mxu0 %v1522
        %v2257 = vpop.f32.mrf.mxu0
        %v2258 = vadd.f32 %v2229, %v2257
        %v2259 = vpop.f32.mrf.mxu0
        %v2260 = vadd.f32 %v2231, %v2259
        %2261 = vmatmul.bf16.gmra.mxu0 %v1529
        %v2262 = vpop.f32.mrf.mxu0
        %v2263 = vadd.f32 %v2234, %v2262
        %v2264 = vpop.f32.mrf.mxu0
        %v2265 = vadd.f32 %v2236, %v2264
        %2266 = vmatmul.bf16.gmra.mxu0 %v1536
        %v2267 = vpop.f32.mrf.mxu0
        %v2268 = vadd.f32 %v2239, %v2267
        %v2269 = vpop.f32.mrf.mxu0
        %v2270 = vadd.f32 %v2241, %v2269
        %2271 = vdwg.mxu0
        %2272 = vmatpush.bf16.msra.mxu0 %v1997
        %2273 = vmatpush.bf16.msra.mxu0 %v1995
        %2274 = vmatpush.bf16.msra.mxu0 %v1993
        %2275 = vmatpush.bf16.msra.mxu0 %v1991
        %2276 = vmatpush.bf16.msra.mxu0 %v1989
        %2277 = vmatpush.bf16.msra.mxu0 %v1987
        %2278 = vmatpush.bf16.msra.mxu0 %v1985
        %2279 = vmatpush.bf16.msra.mxu0 %v1983
        %2280 = vmatmul.bf16.gmra.mxu0 %v1516
        %v2281 = vpop.f32.mrf.mxu0
        %v2282 = vadd.f32 %v2253, %v2281
        %v2283 = vpop.f32.mrf.mxu0
        %v2284 = vadd.f32 %v2255, %v2283
        %2285 = vmatmul.bf16.gmra.mxu0 %v1523
        %v2286 = vpop.f32.mrf.mxu0
        %v2287 = vadd.f32 %v2258, %v2286
        %v2288 = vpop.f32.mrf.mxu0
        %v2289 = vadd.f32 %v2260, %v2288
        %2290 = vmatmul.bf16.gmra.mxu0 %v1530
        %v2291 = vpop.f32.mrf.mxu0
        %v2292 = vadd.f32 %v2263, %v2291
        %v2293 = vpop.f32.mrf.mxu0
        %v2294 = vadd.f32 %v2265, %v2293
        %2295 = vmatmul.bf16.gmra.mxu0 %v1537
        %v2296 = vpop.f32.mrf.mxu0
        %v2297 = vadd.f32 %v2268, %v2296
        %v2298 = vpop.f32.mrf.mxu0
        %v2299 = vadd.f32 %v2270, %v2298
        %2300 = vdwg.mxu0
        %2301 = vmatpush.bf16.msra.mxu0 %v2013
        %2302 = vmatpush.bf16.msra.mxu0 %v2011
        %2303 = vmatpush.bf16.msra.mxu0 %v2009
        %2304 = vmatpush.bf16.msra.mxu0 %v2007
        %2305 = vmatpush.bf16.msra.mxu0 %v2005
        %2306 = vmatpush.bf16.msra.mxu0 %v2003
        %2307 = vmatpush.bf16.msra.mxu0 %v2001
        %2308 = vmatpush.bf16.msra.mxu0 %v1999
        %2309 = vmatmul.bf16.gmra.mxu0 %v1517
        %v2310 = vpop.f32.mrf.mxu0
        %v2311 = vadd.f32 %v2282, %v2310
        %v2312 = vpop.f32.mrf.mxu0
        %v2313 = vadd.f32 %v2284, %v2312
        %2314 = vmatmul.bf16.gmra.mxu0 %v1524
        %v2315 = vpop.f32.mrf.mxu0
        %v2316 = vadd.f32 %v2287, %v2315
        %v2317 = vpop.f32.mrf.mxu0
        %v2318 = vadd.f32 %v2289, %v2317
        %2319 = vmatmul.bf16.gmra.mxu0 %v1531
        %v2320 = vpop.f32.mrf.mxu0
        %v2321 = vadd.f32 %v2292, %v2320
        %v2322 = vpop.f32.mrf.mxu0
        %v2323 = vadd.f32 %v2294, %v2322
        %2324 = vmatmul.bf16.gmra.mxu0 %v1538
        %v2325 = vpop.f32.mrf.mxu0
        %v2326 = vadd.f32 %v2297, %v2325
        %v2327 = vpop.f32.mrf.mxu0
        %v2328 = vadd.f32 %v2299, %v2327
        %2329 = vdwg.mxu0
        %2330 = vmatpush.bf16.msra.mxu0 %v1918
        %2331 = vmatpush.bf16.msra.mxu0 %v1916
        %2332 = vmatpush.bf16.msra.mxu0 %v1914
        %2333 = vmatpush.bf16.msra.mxu0 %v1912
        %2334 = vmatpush.bf16.msra.mxu0 %v1910
        %2335 = vmatpush.bf16.msra.mxu0 %v1908
        %2336 = vmatpush.bf16.msra.mxu0 %v1906
        %2337 = vmatpush.bf16.msra.mxu0 %v1904
        %2338 = vmatmul.bf16.gmra.mxu0 %v1511
        %v2339 = vpop.f32.mrf.mxu0
        %v2340 = vadd.f32 0.0, %v2339
        %v2341 = vpop.f32.mrf.mxu0
        %v2342 = vadd.f32 0.0, %v2341
        %2343 = vmatmul.bf16.gmra.mxu0 %v1518
        %v2344 = vpop.f32.mrf.mxu0
        %v2345 = vadd.f32 0.0, %v2344
        %v2346 = vpop.f32.mrf.mxu0
        %v2347 = vadd.f32 0.0, %v2346
        %2348 = vmatmul.bf16.gmra.mxu0 %v1525
        %v2349 = vpop.f32.mrf.mxu0
        %v2350 = vadd.f32 0.0, %v2349
        %v2351 = vpop.f32.mrf.mxu0
        %v2352 = vadd.f32 0.0, %v2351
        %2353 = vmatmul.bf16.gmra.mxu0 %v1532
        %v2354 = vpop.f32.mrf.mxu0
        %v2355 = vadd.f32 0.0, %v2354
        %v2356 = vpop.f32.mrf.mxu0
        %v2357 = vadd.f32 0.0, %v2356
        %2358 = vdwg.mxu0
        %2359 = vmatpush.bf16.msra.mxu0 %v1934
        %2360 = vmatpush.bf16.msra.mxu0 %v1932
        %2361 = vmatpush.bf16.msra.mxu0 %v1930
        %2362 = vmatpush.bf16.msra.mxu0 %v1928
        %2363 = vmatpush.bf16.msra.mxu0 %v1926
        %2364 = vmatpush.bf16.msra.mxu0 %v1924
        %2365 = vmatpush.bf16.msra.mxu0 %v1922
        %2366 = vmatpush.bf16.msra.mxu0 %v1920
        %2367 = vmatmul.bf16.gmra.mxu0 %v1512
        %v2368 = vpop.f32.mrf.mxu0
        %v2369 = vadd.f32 %v2340, %v2368
        %v2370 = vpop.f32.mrf.mxu0
        %v2371 = vadd.f32 %v2342, %v2370
        %2372 = vmatmul.bf16.gmra.mxu0 %v1519
        %v2373 = vpop.f32.mrf.mxu0
        %v2374 = vadd.f32 %v2345, %v2373
        %v2375 = vpop.f32.mrf.mxu0
        %v2376 = vadd.f32 %v2347, %v2375
        %2377 = vmatmul.bf16.gmra.mxu0 %v1526
        %v2378 = vpop.f32.mrf.mxu0
        %v2379 = vadd.f32 %v2350, %v2378
        %v2380 = vpop.f32.mrf.mxu0
        %v2381 = vadd.f32 %v2352, %v2380
        %2382 = vmatmul.bf16.gmra.mxu0 %v1533
        %v2383 = vpop.f32.mrf.mxu0
        %v2384 = vadd.f32 %v2355, %v2383
        %v2385 = vpop.f32.mrf.mxu0
        %v2386 = vadd.f32 %v2357, %v2385
        %2387 = vdwg.mxu0
        %2388 = vmatpush.bf16.msra.mxu0 %v1950
        %2389 = vmatpush.bf16.msra.mxu0 %v1948
        %2390 = vmatpush.bf16.msra.mxu0 %v1946
        %2391 = vmatpush.bf16.msra.mxu0 %v1944
        %2392 = vmatpush.bf16.msra.mxu0 %v1942
        %2393 = vmatpush.bf16.msra.mxu0 %v1940
        %2394 = vmatpush.bf16.msra.mxu0 %v1938
        %2395 = vmatpush.bf16.msra.mxu0 %v1936
        %2396 = vmatmul.bf16.gmra.mxu0 %v1513
        %v2397 = vpop.f32.mrf.mxu0
        %v2398 = vadd.f32 %v2369, %v2397
        %v2399 = vpop.f32.mrf.mxu0
        %v2400 = vadd.f32 %v2371, %v2399
        %2401 = vmatmul.bf16.gmra.mxu0 %v1520
        %v2402 = vpop.f32.mrf.mxu0
        %v2403 = vadd.f32 %v2374, %v2402
        %v2404 = vpop.f32.mrf.mxu0
        %v2405 = vadd.f32 %v2376, %v2404
        %2406 = vmatmul.bf16.gmra.mxu0 %v1527
        %v2407 = vpop.f32.mrf.mxu0
        %v2408 = vadd.f32 %v2379, %v2407
        %v2409 = vpop.f32.mrf.mxu0
        %v2410 = vadd.f32 %v2381, %v2409
        %2411 = vmatmul.bf16.gmra.mxu0 %v1534
        %v2412 = vpop.f32.mrf.mxu0
        %v2413 = vadd.f32 %v2384, %v2412
        %v2414 = vpop.f32.mrf.mxu0
        %v2415 = vadd.f32 %v2386, %v2414
        %2416 = vdwg.mxu0
        %2417 = vmatpush.bf16.msra.mxu0 %v1966
        %2418 = vmatpush.bf16.msra.mxu0 %v1964
        %2419 = vmatpush.bf16.msra.mxu0 %v1962
        %2420 = vmatpush.bf16.msra.mxu0 %v1960
        %2421 = vmatpush.bf16.msra.mxu0 %v1958
        %2422 = vmatpush.bf16.msra.mxu0 %v1956
        %2423 = vmatpush.bf16.msra.mxu0 %v1954
        %2424 = vmatpush.bf16.msra.mxu0 %v1952
        %2425 = vmatmul.bf16.gmra.mxu0 %v1514
        %v2426 = vpop.f32.mrf.mxu0
        %v2427 = vadd.f32 %v2398, %v2426
        %v2428 = vpop.f32.mrf.mxu0
        %v2429 = vadd.f32 %v2400, %v2428
        %2430 = vmatmul.bf16.gmra.mxu0 %v1521
        %v2431 = vpop.f32.mrf.mxu0
        %v2432 = vadd.f32 %v2403, %v2431
        %v2433 = vpop.f32.mrf.mxu0
        %v2434 = vadd.f32 %v2405, %v2433
        %2435 = vmatmul.bf16.gmra.mxu0 %v1528
        %v2436 = vpop.f32.mrf.mxu0
        %v2437 = vadd.f32 %v2408, %v2436
        %v2438 = vpop.f32.mrf.mxu0
        %v2439 = vadd.f32 %v2410, %v2438
        %2440 = vmatmul.bf16.gmra.mxu0 %v1535
        %v2441 = vpop.f32.mrf.mxu0
        %v2442 = vadd.f32 %v2413, %v2441
        %v2443 = vpop.f32.mrf.mxu0
        %v2444 = vadd.f32 %v2415, %v2443
        %2445 = vdwg.mxu0
        %2446 = vmatpush.bf16.msra.mxu0 %v1982
        %2447 = vmatpush.bf16.msra.mxu0 %v1980
        %2448 = vmatpush.bf16.msra.mxu0 %v1978
        %2449 = vmatpush.bf16.msra.mxu0 %v1976
        %2450 = vmatpush.bf16.msra.mxu0 %v1974
        %2451 = vmatpush.bf16.msra.mxu0 %v1972
        %2452 = vmatpush.bf16.msra.mxu0 %v1970
        %2453 = vmatpush.bf16.msra.mxu0 %v1968
        %2454 = vmatmul.bf16.gmra.mxu0 %v1515
        %v2455 = vpop.f32.mrf.mxu0
        %v2456 = vadd.f32 %v2427, %v2455
        %v2457 = vpop.f32.mrf.mxu0
        %v2458 = vadd.f32 %v2429, %v2457
        %2459 = vmatmul.bf16.gmra.mxu0 %v1522
        %v2460 = vpop.f32.mrf.mxu0
        %v2461 = vadd.f32 %v2432, %v2460
        %v2462 = vpop.f32.mrf.mxu0
        %v2463 = vadd.f32 %v2434, %v2462
        %2464 = vmatmul.bf16.gmra.mxu0 %v1529
        %v2465 = vpop.f32.mrf.mxu0
        %v2466 = vadd.f32 %v2437, %v2465
        %v2467 = vpop.f32.mrf.mxu0
        %v2468 = vadd.f32 %v2439, %v2467
        %2469 = vmatmul.bf16.gmra.mxu0 %v1536
        %v2470 = vpop.f32.mrf.mxu0
        %v2471 = vadd.f32 %v2442, %v2470
        %v2472 = vpop.f32.mrf.mxu0
        %v2473 = vadd.f32 %v2444, %v2472
        %2474 = vdwg.mxu0
        %2475 = vmatpush.bf16.msra.mxu0 %v1998
        %2476 = vmatpush.bf16.msra.mxu0 %v1996
        %2477 = vmatpush.bf16.msra.mxu0 %v1994
        %2478 = vmatpush.bf16.msra.mxu0 %v1992
        %2479 = vmatpush.bf16.msra.mxu0 %v1990
        %2480 = vmatpush.bf16.msra.mxu0 %v1988
        %2481 = vmatpush.bf16.msra.mxu0 %v1986
        %2482 = vmatpush.bf16.msra.mxu0 %v1984
        %2483 = vmatmul.bf16.gmra.mxu0 %v1516
        %v2484 = vpop.f32.mrf.mxu0
        %v2485 = vadd.f32 %v2456, %v2484
        %v2486 = vpop.f32.mrf.mxu0
        %v2487 = vadd.f32 %v2458, %v2486
        %2488 = vmatmul.bf16.gmra.mxu0 %v1523
        %v2489 = vpop.f32.mrf.mxu0
        %v2490 = vadd.f32 %v2461, %v2489
        %v2491 = vpop.f32.mrf.mxu0
        %v2492 = vadd.f32 %v2463, %v2491
        %2493 = vmatmul.bf16.gmra.mxu0 %v1530
        %v2494 = vpop.f32.mrf.mxu0
        %v2495 = vadd.f32 %v2466, %v2494
        %v2496 = vpop.f32.mrf.mxu0
        %v2497 = vadd.f32 %v2468, %v2496
        %2498 = vmatmul.bf16.gmra.mxu0 %v1537
        %v2499 = vpop.f32.mrf.mxu0
        %v2500 = vadd.f32 %v2471, %v2499
        %v2501 = vpop.f32.mrf.mxu0
        %v2502 = vadd.f32 %v2473, %v2501
        %2503 = vdwg.mxu0
        %2504 = vmatpush.bf16.msra.mxu0 %v2014
        %2505 = vmatpush.bf16.msra.mxu0 %v2012
        %2506 = vmatpush.bf16.msra.mxu0 %v2010
        %2507 = vmatpush.bf16.msra.mxu0 %v2008
        %2508 = vmatpush.bf16.msra.mxu0 %v2006
        %2509 = vmatpush.bf16.msra.mxu0 %v2004
        %2510 = vmatpush.bf16.msra.mxu0 %v2002
        %2511 = vmatpush.bf16.msra.mxu0 %v2000
        %2512 = vmatmul.bf16.gmra.mxu0 %v1517
        %v2513 = vpop.f32.mrf.mxu0
        %v2514 = vadd.f32 %v2485, %v2513
        %v2515 = vpop.f32.mrf.mxu0
        %v2516 = vadd.f32 %v2487, %v2515
        %2517 = vmatmul.bf16.gmra.mxu0 %v1524
        %v2518 = vpop.f32.mrf.mxu0
        %v2519 = vadd.f32 %v2490, %v2518
        %v2520 = vpop.f32.mrf.mxu0
        %v2521 = vadd.f32 %v2492, %v2520
        %2522 = vmatmul.bf16.gmra.mxu0 %v1531
        %v2523 = vpop.f32.mrf.mxu0
        %v2524 = vadd.f32 %v2495, %v2523
        %v2525 = vpop.f32.mrf.mxu0
        %v2526 = vadd.f32 %v2497, %v2525
        %2527 = vmatmul.bf16.gmra.mxu0 %v1538
        %v2528 = vpop.f32.mrf.mxu0
        %v2529 = vadd.f32 %v2500, %v2528
        %v2530 = vpop.f32.mrf.mxu0
        %v2531 = vadd.f32 %v2502, %v2530
        %2532 = vdwg.mxu0
        %v2565 = vunpack.c.l.b16 %v1279
        %v2566 = vunpack.c.h.b16 %v1279
        %v2567 = vunpack.c.l.b16 %v1280
        %v2568 = vunpack.c.h.b16 %v1280
        %v2569 = vunpack.c.l.b16 %v1281
        %v2570 = vunpack.c.h.b16 %v1281
        %v2571 = vunpack.c.l.b16 %v1282
        %v2572 = vunpack.c.h.b16 %v1282
        %v2573 = vunpack.c.l.b16 %v1283
        %v2574 = vunpack.c.h.b16 %v1283
        %v2575 = vunpack.c.l.b16 %v1284
        %v2576 = vunpack.c.h.b16 %v1284
        %v2577 = vunpack.c.l.b16 %v1285
        %v2578 = vunpack.c.h.b16 %v1285
        %v2579 = vunpack.c.l.b16 %v1286
        %v2580 = vunpack.c.h.b16 %v1286
        %v2581 = vunpack.c.l.b16 %v1287
        %v2582 = vunpack.c.h.b16 %v1287
        %v2583 = vunpack.c.l.b16 %v1288
        %v2584 = vunpack.c.h.b16 %v1288
        %v2585 = vunpack.c.l.b16 %v1289
        %v2586 = vunpack.c.h.b16 %v1289
        %v2587 = vunpack.c.l.b16 %v1290
        %v2588 = vunpack.c.h.b16 %v1290
        %v2589 = vunpack.c.l.b16 %v1291
        %v2590 = vunpack.c.h.b16 %v1291
        %v2591 = vunpack.c.l.b16 %v1292
        %v2592 = vunpack.c.h.b16 %v1292
        %v2593 = vunpack.c.l.b16 %v1293
        %v2594 = vunpack.c.h.b16 %v1293
        %v2595 = vunpack.c.l.b16 %v1294
        %v2596 = vunpack.c.h.b16 %v1294
        %v2597 = vunpack.c.l.b16 %v1295
        %v2598 = vunpack.c.h.b16 %v1295
        %v2599 = vunpack.c.l.b16 %v1296
        %v2600 = vunpack.c.h.b16 %v1296
        %v2601 = vunpack.c.l.b16 %v1297
        %v2602 = vunpack.c.h.b16 %v1297
        %v2603 = vunpack.c.l.b16 %v1298
        %v2604 = vunpack.c.h.b16 %v1298
        %v2605 = vunpack.c.l.b16 %v1299
        %v2606 = vunpack.c.h.b16 %v1299
        %v2607 = vunpack.c.l.b16 %v1300
        %v2608 = vunpack.c.h.b16 %v1300
        %v2609 = vunpack.c.l.b16 %v1301
        %v2610 = vunpack.c.h.b16 %v1301
        %v2611 = vunpack.c.l.b16 %v1302
        %v2612 = vunpack.c.h.b16 %v1302
        %v2613 = vunpack.c.l.b16 %v1303
        %v2614 = vunpack.c.h.b16 %v1303
        %v2615 = vunpack.c.l.b16 %v1304
        %v2616 = vunpack.c.h.b16 %v1304
        %v2617 = vunpack.c.l.b16 %v1305
        %v2618 = vunpack.c.h.b16 %v1305
        %v2619 = vunpack.c.l.b16 %v1306
        %v2620 = vunpack.c.h.b16 %v1306
        %v2621 = vunpack.c.l.b16 %v1307
        %v2622 = vunpack.c.h.b16 %v1307
        %v2623 = vunpack.c.l.b16 %v1308
        %v2624 = vunpack.c.h.b16 %v1308
        %v2625 = vunpack.c.l.b16 %v1309
        %v2626 = vunpack.c.h.b16 %v1309
        %v2627 = vunpack.c.l.b16 %v1310
        %v2628 = vunpack.c.h.b16 %v1310
        %v2629 = vpack.c.b16 %v2567, %v2565
        %v2630 = vpack.c.b16 %v2568, %v2566
        %v2631 = vpack.c.b16 %v2571, %v2569
        %v2632 = vpack.c.b16 %v2572, %v2570
        %v2633 = vpack.c.b16 %v2575, %v2573
        %v2634 = vpack.c.b16 %v2576, %v2574
        %v2635 = vpack.c.b16 %v2579, %v2577
        %v2636 = vpack.c.b16 %v2580, %v2578
        %v2637 = vpack.c.b16 %v2583, %v2581
        %v2638 = vpack.c.b16 %v2584, %v2582
        %v2639 = vpack.c.b16 %v2587, %v2585
        %v2640 = vpack.c.b16 %v2588, %v2586
        %v2641 = vpack.c.b16 %v2591, %v2589
        %v2642 = vpack.c.b16 %v2592, %v2590
        %v2643 = vpack.c.b16 %v2595, %v2593
        %v2644 = vpack.c.b16 %v2596, %v2594
        %v2645 = vpack.c.b16 %v2599, %v2597
        %v2646 = vpack.c.b16 %v2600, %v2598
        %v2647 = vpack.c.b16 %v2603, %v2601
        %v2648 = vpack.c.b16 %v2604, %v2602
        %v2649 = vpack.c.b16 %v2607, %v2605
        %v2650 = vpack.c.b16 %v2608, %v2606
        %v2651 = vpack.c.b16 %v2611, %v2609
        %v2652 = vpack.c.b16 %v2612, %v2610
        %v2653 = vpack.c.b16 %v2615, %v2613
        %v2654 = vpack.c.b16 %v2616, %v2614
        %v2655 = vpack.c.b16 %v2619, %v2617
        %v2656 = vpack.c.b16 %v2620, %v2618
        %v2657 = vpack.c.b16 %v2623, %v2621
        %v2658 = vpack.c.b16 %v2624, %v2622
        %v2659 = vpack.c.b16 %v2627, %v2625
        %v2660 = vpack.c.b16 %v2628, %v2626
        %2693 = vmatpush.bf16.msra.mxu0 %v2643
        %2694 = vmatpush.bf16.msra.mxu0 %v2641
        %2695 = vmatpush.bf16.msra.mxu0 %v2639
        %2696 = vmatpush.bf16.msra.mxu0 %v2637
        %2697 = vmatpush.bf16.msra.mxu0 %v2635
        %2698 = vmatpush.bf16.msra.mxu0 %v2633
        %2699 = vmatpush.bf16.msra.mxu0 %v2631
        %2700 = vmatpush.bf16.msra.mxu0 %v2629
        %2701 = vmatmul.bf16.gmra.mxu0 %v1247
        %v2702 = vpop.f32.mrf.mxu0
        %v2703 = vadd.f32 %v2311, %v2702
        %v2704 = vpop.f32.mrf.mxu0
        %v2705 = vadd.f32 %v2313, %v2704
        %2706 = vmatmul.bf16.gmra.mxu0 %v1248
        %v2707 = vpop.f32.mrf.mxu0
        %v2708 = vadd.f32 %v2316, %v2707
        %v2709 = vpop.f32.mrf.mxu0
        %v2710 = vadd.f32 %v2318, %v2709
        %2711 = vmatmul.bf16.gmra.mxu0 %v1249
        %v2712 = vpop.f32.mrf.mxu0
        %v2713 = vadd.f32 %v2321, %v2712
        %v2714 = vpop.f32.mrf.mxu0
        %v2715 = vadd.f32 %v2323, %v2714
        %2716 = vmatmul.bf16.gmra.mxu0 %v1250
        %v2717 = vpop.f32.mrf.mxu0
        %v2718 = vadd.f32 %v2326, %v2717
        %v2719 = vpop.f32.mrf.mxu0
        %v2720 = vadd.f32 %v2328, %v2719
        %2721 = vdwg.mxu0
        %2722 = vmatpush.bf16.msra.mxu0 %v2659
        %2723 = vmatpush.bf16.msra.mxu0 %v2657
        %2724 = vmatpush.bf16.msra.mxu0 %v2655
        %2725 = vmatpush.bf16.msra.mxu0 %v2653
        %2726 = vmatpush.bf16.msra.mxu0 %v2651
        %2727 = vmatpush.bf16.msra.mxu0 %v2649
        %2728 = vmatpush.bf16.msra.mxu0 %v2647
        %2729 = vmatpush.bf16.msra.mxu0 %v2645
        %2730 = vmatmul.bf16.gmra.mxu0 %v1271
        %v2731 = vpop.f32.mrf.mxu0
        %v2732 = vadd.f32 %v2703, %v2731
        %v2733 = vpop.f32.mrf.mxu0
        %v2734 = vadd.f32 %v2705, %v2733
        %2735 = vmatmul.bf16.gmra.mxu0 %v1272
        %v2736 = vpop.f32.mrf.mxu0
        %v2737 = vadd.f32 %v2708, %v2736
        %v2738 = vpop.f32.mrf.mxu0
        %v2739 = vadd.f32 %v2710, %v2738
        %2740 = vmatmul.bf16.gmra.mxu0 %v1273
        %v2741 = vpop.f32.mrf.mxu0
        %v2742 = vadd.f32 %v2713, %v2741
        %v2743 = vpop.f32.mrf.mxu0
        %v2744 = vadd.f32 %v2715, %v2743
        %2745 = vmatmul.bf16.gmra.mxu0 %v1274
        %v2746 = vpop.f32.mrf.mxu0
        %v2747 = vadd.f32 %v2718, %v2746
        %v2748 = vpop.f32.mrf.mxu0
        %v2749 = vadd.f32 %v2720, %v2748
        %2750 = vdwg.mxu0
        %2751 = vmatpush.bf16.msra.mxu0 %v2644
        %2752 = vmatpush.bf16.msra.mxu0 %v2642
        %2753 = vmatpush.bf16.msra.mxu0 %v2640
        %2754 = vmatpush.bf16.msra.mxu0 %v2638
        %2755 = vmatpush.bf16.msra.mxu0 %v2636
        %2756 = vmatpush.bf16.msra.mxu0 %v2634
        %2757 = vmatpush.bf16.msra.mxu0 %v2632
        %2758 = vmatpush.bf16.msra.mxu0 %v2630
        %2759 = vmatmul.bf16.gmra.mxu0 %v1247
        %v2760 = vpop.f32.mrf.mxu0
        %v2761 = vadd.f32 %v2514, %v2760
        %v2762 = vpop.f32.mrf.mxu0
        %v2763 = vadd.f32 %v2516, %v2762
        %2764 = vmatmul.bf16.gmra.mxu0 %v1248
        %v2765 = vpop.f32.mrf.mxu0
        %v2766 = vadd.f32 %v2519, %v2765
        %v2767 = vpop.f32.mrf.mxu0
        %v2768 = vadd.f32 %v2521, %v2767
        %2769 = vmatmul.bf16.gmra.mxu0 %v1249
        %v2770 = vpop.f32.mrf.mxu0
        %v2771 = vadd.f32 %v2524, %v2770
        %v2772 = vpop.f32.mrf.mxu0
        %v2773 = vadd.f32 %v2526, %v2772
        %2774 = vmatmul.bf16.gmra.mxu0 %v1250
        %v2775 = vpop.f32.mrf.mxu0
        %v2776 = vadd.f32 %v2529, %v2775
        %v2777 = vpop.f32.mrf.mxu0
        %v2778 = vadd.f32 %v2531, %v2777
        %2779 = vdwg.mxu0
        %2780 = vmatpush.bf16.msra.mxu0 %v2660
        %2781 = vmatpush.bf16.msra.mxu0 %v2658
        %2782 = vmatpush.bf16.msra.mxu0 %v2656
        %2783 = vmatpush.bf16.msra.mxu0 %v2654
        %2784 = vmatpush.bf16.msra.mxu0 %v2652
        %2785 = vmatpush.bf16.msra.mxu0 %v2650
        %2786 = vmatpush.bf16.msra.mxu0 %v2648
        %2787 = vmatpush.bf16.msra.mxu0 %v2646
        %2788 = vmatmul.bf16.gmra.mxu0 %v1271
        %v2789 = vpop.f32.mrf.mxu0
        %v2790 = vadd.f32 %v2761, %v2789
        %v2791 = vpop.f32.mrf.mxu0
        %v2792 = vadd.f32 %v2763, %v2791
        %2793 = vmatmul.bf16.gmra.mxu0 %v1272
        %v2794 = vpop.f32.mrf.mxu0
        %v2795 = vadd.f32 %v2766, %v2794
        %v2796 = vpop.f32.mrf.mxu0
        %v2797 = vadd.f32 %v2768, %v2796
        %2798 = vmatmul.bf16.gmra.mxu0 %v1273
        %v2799 = vpop.f32.mrf.mxu0
        %v2800 = vadd.f32 %v2771, %v2799
        %v2801 = vpop.f32.mrf.mxu0
        %v2802 = vadd.f32 %v2773, %v2801
        %2803 = vmatmul.bf16.gmra.mxu0 %v1274
        %v2804 = vpop.f32.mrf.mxu0
        %v2805 = vadd.f32 %v2776, %v2804
        %v2806 = vpop.f32.mrf.mxu0
        %v2807 = vadd.f32 %v2778, %v2806
        %2808 = vdwg.mxu0
        %v2809 = vld [vmem:[%s8] sm:$0x3]
        %v2811 = vperm.slane %v2809, 0
        %v2812 = vperm.slane %v2809, 1
        %v2815 = vadd.f32 %v2732, %v2811
        %v2816 = vadd.f32 %v2790, %v2812
        %v2817 = vadd.f32 %v2734, %v2811
        %v2818 = vadd.f32 %v2792, %v2812
        %v2819 = vadd.f32 %v2737, %v2811
        %v2820 = vadd.f32 %v2795, %v2812
        %v2821 = vadd.f32 %v2739, %v2811
        %v2822 = vadd.f32 %v2797, %v2812
        %v2823 = vadd.f32 %v2742, %v2811
        %v2824 = vadd.f32 %v2800, %v2812
        %v2825 = vadd.f32 %v2744, %v2811
        %v2826 = vadd.f32 %v2802, %v2812
        %v2827 = vadd.f32 %v2747, %v2811
        %v2828 = vadd.f32 %v2805, %v2812
        %v2829 = vadd.f32 %v2749, %v2811
        %v2830 = vadd.f32 %v2807, %v2812
        %v2831 = vpack.c.bf16 %v2817, %v2815
        %v2832 = vpack.c.bf16 %v2818, %v2816
        %v2833 = vpack.c.bf16 %v2821, %v2819
        %v2834 = vpack.c.bf16 %v2822, %v2820
        %v2835 = vpack.c.bf16 %v2825, %v2823
        %v2836 = vpack.c.bf16 %v2826, %v2824
        %v2837 = vpack.c.bf16 %v2829, %v2827
        %v2838 = vpack.c.bf16 %v2830, %v2828
        %v2839 = vld [vmem:[%s9] sm:$0xff]
        %v2840 = vld [vmem:[%s9 + $0x8] sm:$0xff]
        %v2841 = vld [vmem:[%s9 + $0x10] sm:$0xff]
        %v2842 = vld [vmem:[%s9 + $0x18] sm:$0xf]
        %v2843 = vld [vmem:[%s9 + $0x1c] sm:$0xff]
        %v2844 = vld [vmem:[%s9 + $0x24] sm:$0xff]
        %v2845 = vld [vmem:[%s9 + $0x2c] sm:$0xff]
        %v2846 = vld [vmem:[%s9 + $0x34] sm:$0xf]
        %v2847 = vld [vmem:[%s9 + $0x38] sm:$0xff]
        %v2848 = vld [vmem:[%s9 + $0x40] sm:$0xff]
        %v2849 = vld [vmem:[%s9 + $0x48] sm:$0xff]
        %v2850 = vld [vmem:[%s9 + $0x50] sm:$0xf]
        %v2851 = vld [vmem:[%s9 + $0x54] sm:$0xff]
        %v2852 = vld [vmem:[%s9 + $0x5c] sm:$0xff]
        %v2853 = vld [vmem:[%s9 + $0x64] sm:$0xff]
        %v2854 = vld [vmem:[%s9 + $0x6c] sm:$0xf]
        %v2855 = vld [vmem:[%s9 + $0x70] sm:$0xff]
        %v2856 = vld [vmem:[%s9 + $0x78] sm:$0xff]
        %v2857 = vld [vmem:[%s9 + $0x80] sm:$0xff]
        %v2858 = vld [vmem:[%s9 + $0x88] sm:$0xf]
        %v2859 = vld [vmem:[%s9 + $0x8c] sm:$0xff]
        %v2860 = vld [vmem:[%s9 + $0x94] sm:$0xff]
        %v2861 = vld [vmem:[%s9 + $0x9c] sm:$0xff]
        %v2862 = vld [vmem:[%s9 + $0xa4] sm:$0xf]
        %v2863 = vld [vmem:[%s9 + $0xa8] sm:$0xff]
        %v2864 = vld [vmem:[%s9 + $0xb0] sm:$0xff]
        %v2865 = vld [vmem:[%s9 + $0xb8] sm:$0xff]
        %v2866 = vld [vmem:[%s9 + $0xc0] sm:$0xf]
        %v2867 = vld [vmem:[%s9 + $0xc4] sm:$0xff]
        %v2868 = vld [vmem:[%s9 + $0xcc] sm:$0xff]
        %v2869 = vld [vmem:[%s9 + $0xd4] sm:$0xff]
        %v2870 = vld [vmem:[%s9 + $0xdc] sm:$0xf]
        %v2871 = vld [vmem:[%s9 + $0xe0] sm:$0xff]
        %v2872 = vld [vmem:[%s9 + $0xe8] sm:$0xff]
        %v2873 = vld [vmem:[%s9 + $0xf0] sm:$0xff]
        %v2874 = vld [vmem:[%s9 + $0xf8] sm:$0xf]
        %v2875 = vld [vmem:[%s9 + $0xfc] sm:$0xff]
        %v2876 = vld [vmem:[%s9 + $0x104] sm:$0xff]
        %v2877 = vld [vmem:[%s9 + $0x10c] sm:$0xff]
        %v2878 = vld [vmem:[%s9 + $0x114] sm:$0xf]
        %v2879 = vld [vmem:[%s9 + $0x118] sm:$0xff]
        %v2880 = vld [vmem:[%s9 + $0x120] sm:$0xff]
        %v2881 = vld [vmem:[%s9 + $0x128] sm:$0xff]
        %v2882 = vld [vmem:[%s9 + $0x130] sm:$0xf]
        %v2883 = vld [vmem:[%s9 + $0x134] sm:$0xff]
        %v2884 = vld [vmem:[%s9 + $0x13c] sm:$0xff]
        %v2885 = vld [vmem:[%s9 + $0x144] sm:$0xff]
        %v2886 = vld [vmem:[%s9 + $0x14c] sm:$0xf]
        %v2887 = vld [vmem:[%s9 + $0x150] sm:$0xff]
        %v2888 = vld [vmem:[%s9 + $0x158] sm:$0xff]
        %v2889 = vld [vmem:[%s9 + $0x160] sm:$0xff]
        %v2890 = vld [vmem:[%s9 + $0x168] sm:$0xf]
        %v2891 = vld [vmem:[%s9 + $0x16c] sm:$0xff]
        %v2892 = vld [vmem:[%s9 + $0x174] sm:$0xff]
        %v2893 = vld [vmem:[%s9 + $0x17c] sm:$0xff]
        %v2894 = vld [vmem:[%s9 + $0x184] sm:$0xf]
        %v2895 = vld [vmem:[%s9 + $0x188] sm:$0xff]
        %v2896 = vld [vmem:[%s9 + $0x190] sm:$0xff]
        %v2897 = vld [vmem:[%s9 + $0x198] sm:$0xff]
        %v2898 = vld [vmem:[%s9 + $0x1a0] sm:$0xf]
        %v2899 = vld [vmem:[%s9 + $0x1a4] sm:$0xff]
        %v2900 = vld [vmem:[%s9 + $0x1ac] sm:$0xff]
        %v2901 = vld [vmem:[%s9 + $0x1b4] sm:$0xff]
        %v2902 = vld [vmem:[%s9 + $0x1bc] sm:$0xf]
        %v2903 = vld [vmem:[%s9 + $0x1c0] sm:$0xff]
        %v2904 = vld [vmem:[%s9 + $0x1c8] sm:$0xff]
        %v2905 = vld [vmem:[%s9 + $0x1d0] sm:$0xff]
        %v2906 = vld [vmem:[%s9 + $0x1d8] sm:$0xf]
        %v2907 = vld [vmem:[%s9 + $0x1dc] sm:$0xff]
        %v2908 = vld [vmem:[%s9 + $0x1e4] sm:$0xff]
        %v2909 = vld [vmem:[%s9 + $0x1ec] sm:$0xff]
        %v2910 = vld [vmem:[%s9 + $0x1f4] sm:$0xf]
        %v2911 = vld [vmem:[%s9 + $0x1f8] sm:$0xff]
        %v2912 = vld [vmem:[%s9 + $0x200] sm:$0xff]
        %v2913 = vld [vmem:[%s9 + $0x208] sm:$0xff]
        %v2914 = vld [vmem:[%s9 + $0x210] sm:$0xf]
        %v2915 = vld [vmem:[%s9 + $0x214] sm:$0xff]
        %v2916 = vld [vmem:[%s9 + $0x21c] sm:$0xff]
        %v2917 = vld [vmem:[%s9 + $0x224] sm:$0xff]
        %v2918 = vld [vmem:[%s9 + $0x22c] sm:$0xf]
        %v2919 = vld [vmem:[%s9 + $0x230] sm:$0xff]
        %v2920 = vld [vmem:[%s9 + $0x238] sm:$0xff]
        %v2921 = vld [vmem:[%s9 + $0x240] sm:$0xff]
        %v2922 = vld [vmem:[%s9 + $0x248] sm:$0xf]
        %v2923 = vld [vmem:[%s9 + $0x24c] sm:$0xff]
        %v2924 = vld [vmem:[%s9 + $0x254] sm:$0xff]
        %v2925 = vld [vmem:[%s9 + $0x25c] sm:$0xff]
        %v2926 = vld [vmem:[%s9 + $0x264] sm:$0xf]
        %v2927 = vld [vmem:[%s9 + $0x268] sm:$0xff]
        %v2928 = vld [vmem:[%s9 + $0x270] sm:$0xff]
        %v2929 = vld [vmem:[%s9 + $0x278] sm:$0xff]
        %v2930 = vld [vmem:[%s9 + $0x280] sm:$0xf]
        %v2931 = vld [vmem:[%s9 + $0x284] sm:$0xff]
        %v2932 = vld [vmem:[%s9 + $0x28c] sm:$0xff]
        %v2933 = vld [vmem:[%s9 + $0x294] sm:$0xff]
        %v2934 = vld [vmem:[%s9 + $0x29c] sm:$0xf]
        %v2935 = vld [vmem:[%s9 + $0x2a0] sm:$0xff]
        %v2936 = vld [vmem:[%s9 + $0x2a8] sm:$0xff]
        %v2937 = vld [vmem:[%s9 + $0x2b0] sm:$0xff]
        %v2938 = vld [vmem:[%s9 + $0x2b8] sm:$0xf]
        %v2939 = vld [vmem:[%s9 + $0x2bc] sm:$0xff]
        %v2940 = vld [vmem:[%s9 + $0x2c4] sm:$0xff]
        %v2941 = vld [vmem:[%s9 + $0x2cc] sm:$0xff]
        %v2942 = vld [vmem:[%s9 + $0x2d4] sm:$0xf]
        %v2943 = vld [vmem:[%s9 + $0x2d8] sm:$0xff]
        %v2944 = vld [vmem:[%s9 + $0x2e0] sm:$0xff]
        %v2945 = vld [vmem:[%s9 + $0x2e8] sm:$0xff]
        %v2946 = vld [vmem:[%s9 + $0x2f0] sm:$0xf]
        %v2947 = vld [vmem:[%s9 + $0x2f4] sm:$0xff]
        %v2948 = vld [vmem:[%s9 + $0x2fc] sm:$0xff]
        %v2949 = vld [vmem:[%s9 + $0x304] sm:$0xff]
        %v2950 = vld [vmem:[%s9 + $0x30c] sm:$0xf]
        %v2951 = vld [vmem:[%s9 + $0x310] sm:$0xff]
        %v2952 = vld [vmem:[%s9 + $0x318] sm:$0xff]
        %v2953 = vld [vmem:[%s9 + $0x320] sm:$0xff]
        %v2954 = vld [vmem:[%s9 + $0x328] sm:$0xf]
        %v2955 = vld [vmem:[%s9 + $0x32c] sm:$0xff]
        %v2956 = vld [vmem:[%s9 + $0x334] sm:$0xff]
        %v2957 = vld [vmem:[%s9 + $0x33c] sm:$0xff]
        %v2958 = vld [vmem:[%s9 + $0x344] sm:$0xf]
        %v2959 = vld [vmem:[%s9 + $0x348] sm:$0xff]
        %v2960 = vld [vmem:[%s9 + $0x350] sm:$0xff]
        %v2961 = vld [vmem:[%s9 + $0x358] sm:$0xff]
        %v2962 = vld [vmem:[%s9 + $0x360] sm:$0xf]
        %v2963 = vld [vmem:[%s9 + $0x364] sm:$0xff]
        %v2964 = vld [vmem:[%s9 + $0x36c] sm:$0xff]
        %v2965 = vld [vmem:[%s9 + $0x374] sm:$0xff]
        %v2966 = vld [vmem:[%s9 + $0x37c] sm:$0xf]
        %v2967 = vld [vmem:[%s10] sm:$0xff]
        %v2969 = vperm.slane %v2967, 0
        %v2970 = vperm.slane %v2967, 1
        %v2971 = vperm.slane %v2967, 2
        %v2972 = vperm.slane %v2967, 3
        %v2973 = vperm.slane %v2967, 4
        %v2974 = vperm.slane %v2967, 5
        %v2975 = vperm.slane %v2967, 6
        %v3111 = vunpack.c.l.b16 %v2839
        %v3112 = vunpack.c.h.b16 %v2839
        %v3113 = vunpack.c.l.b16 %v2840
        %v3114 = vunpack.c.h.b16 %v2840
        %v3115 = vunpack.c.l.b16 %v2841
        %v3116 = vunpack.c.h.b16 %v2841
        %v3117 = vunpack.c.l.b16 %v2842
        %v3118 = vunpack.c.l.b16 %v2843
        %v3119 = vunpack.c.h.b16 %v2843
        %v3120 = vunpack.c.l.b16 %v2844
        %v3121 = vunpack.c.h.b16 %v2844
        %v3122 = vunpack.c.l.b16 %v2845
        %v3123 = vunpack.c.h.b16 %v2845
        %v3124 = vunpack.c.l.b16 %v2846
        %v3125 = vunpack.c.l.b16 %v2847
        %v3126 = vunpack.c.h.b16 %v2847
        %v3127 = vunpack.c.l.b16 %v2848
        %v3128 = vunpack.c.h.b16 %v2848
        %v3129 = vunpack.c.l.b16 %v2849
        %v3130 = vunpack.c.h.b16 %v2849
        %v3131 = vunpack.c.l.b16 %v2850
        %v3132 = vunpack.c.l.b16 %v2851
        %v3133 = vunpack.c.h.b16 %v2851
        %v3134 = vunpack.c.l.b16 %v2852
        %v3135 = vunpack.c.h.b16 %v2852
        %v3136 = vunpack.c.l.b16 %v2853
        %v3137 = vunpack.c.h.b16 %v2853
        %v3138 = vunpack.c.l.b16 %v2854
        %v3139 = vunpack.c.l.b16 %v2855
        %v3140 = vunpack.c.h.b16 %v2855
        %v3141 = vunpack.c.l.b16 %v2856
        %v3142 = vunpack.c.h.b16 %v2856
        %v3143 = vunpack.c.l.b16 %v2857
        %v3144 = vunpack.c.h.b16 %v2857
        %v3145 = vunpack.c.l.b16 %v2858
        %v3146 = vunpack.c.l.b16 %v2859
        %v3147 = vunpack.c.h.b16 %v2859
        %v3148 = vunpack.c.l.b16 %v2860
        %v3149 = vunpack.c.h.b16 %v2860
        %v3150 = vunpack.c.l.b16 %v2861
        %v3151 = vunpack.c.h.b16 %v2861
        %v3152 = vunpack.c.l.b16 %v2862
        %v3153 = vunpack.c.l.b16 %v2863
        %v3154 = vunpack.c.h.b16 %v2863
        %v3155 = vunpack.c.l.b16 %v2864
        %v3156 = vunpack.c.h.b16 %v2864
        %v3157 = vunpack.c.l.b16 %v2865
        %v3158 = vunpack.c.h.b16 %v2865
        %v3159 = vunpack.c.l.b16 %v2866
        %v3160 = vunpack.c.l.b16 %v2867
        %v3161 = vunpack.c.h.b16 %v2867
        %v3162 = vunpack.c.l.b16 %v2868
        %v3163 = vunpack.c.h.b16 %v2868
        %v3164 = vunpack.c.l.b16 %v2869
        %v3165 = vunpack.c.h.b16 %v2869
        %v3166 = vunpack.c.l.b16 %v2870
        %v3167 = vunpack.c.l.b16 %v2871
        %v3168 = vunpack.c.h.b16 %v2871
        %v3169 = vunpack.c.l.b16 %v2872
        %v3170 = vunpack.c.h.b16 %v2872
        %v3171 = vunpack.c.l.b16 %v2873
        %v3172 = vunpack.c.h.b16 %v2873
        %v3173 = vunpack.c.l.b16 %v2874
        %v3174 = vunpack.c.l.b16 %v2875
        %v3175 = vunpack.c.h.b16 %v2875
        %v3176 = vunpack.c.l.b16 %v2876
        %v3177 = vunpack.c.h.b16 %v2876
        %v3178 = vunpack.c.l.b16 %v2877
        %v3179 = vunpack.c.h.b16 %v2877
        %v3180 = vunpack.c.l.b16 %v2878
        %v3181 = vunpack.c.l.b16 %v2879
        %v3182 = vunpack.c.h.b16 %v2879
        %v3183 = vunpack.c.l.b16 %v2880
        %v3184 = vunpack.c.h.b16 %v2880
        %v3185 = vunpack.c.l.b16 %v2881
        %v3186 = vunpack.c.h.b16 %v2881
        %v3187 = vunpack.c.l.b16 %v2882
        %v3188 = vunpack.c.l.b16 %v2883
        %v3189 = vunpack.c.h.b16 %v2883
        %v3190 = vunpack.c.l.b16 %v2884
        %v3191 = vunpack.c.h.b16 %v2884
        %v3192 = vunpack.c.l.b16 %v2885
        %v3193 = vunpack.c.h.b16 %v2885
        %v3194 = vunpack.c.l.b16 %v2886
        %v3195 = vunpack.c.l.b16 %v2887
        %v3196 = vunpack.c.h.b16 %v2887
        %v3197 = vunpack.c.l.b16 %v2888
        %v3198 = vunpack.c.h.b16 %v2888
        %v3199 = vunpack.c.l.b16 %v2889
        %v3200 = vunpack.c.h.b16 %v2889
        %v3201 = vunpack.c.l.b16 %v2890
        %v3202 = vunpack.c.l.b16 %v2891
        %v3203 = vunpack.c.h.b16 %v2891
        %v3204 = vunpack.c.l.b16 %v2892
        %v3205 = vunpack.c.h.b16 %v2892
        %v3206 = vunpack.c.l.b16 %v2893
        %v3207 = vunpack.c.h.b16 %v2893
        %v3208 = vunpack.c.l.b16 %v2894
        %v3209 = vunpack.c.l.b16 %v2895
        %v3210 = vunpack.c.h.b16 %v2895
        %v3211 = vunpack.c.l.b16 %v2896
        %v3212 = vunpack.c.h.b16 %v2896
        %v3213 = vunpack.c.l.b16 %v2897
        %v3214 = vunpack.c.h.b16 %v2897
        %v3215 = vunpack.c.l.b16 %v2898
        %v3216 = vunpack.c.l.b16 %v2899
        %v3217 = vunpack.c.h.b16 %v2899
        %v3218 = vunpack.c.l.b16 %v2900
        %v3219 = vunpack.c.h.b16 %v2900
        %v3220 = vunpack.c.l.b16 %v2901
        %v3221 = vunpack.c.h.b16 %v2901
        %v3222 = vunpack.c.l.b16 %v2902
        %v3223 = vunpack.c.l.b16 %v2903
        %v3224 = vunpack.c.h.b16 %v2903
        %v3225 = vunpack.c.l.b16 %v2904
        %v3226 = vunpack.c.h.b16 %v2904
        %v3227 = vunpack.c.l.b16 %v2905
        %v3228 = vunpack.c.h.b16 %v2905
        %v3229 = vunpack.c.l.b16 %v2906
        %v3230 = vunpack.c.l.b16 %v2907
        %v3231 = vunpack.c.h.b16 %v2907
        %v3232 = vunpack.c.l.b16 %v2908
        %v3233 = vunpack.c.h.b16 %v2908
        %v3234 = vunpack.c.l.b16 %v2909
        %v3235 = vunpack.c.h.b16 %v2909
        %v3236 = vunpack.c.l.b16 %v2910
        %v3237 = vunpack.c.l.b16 %v2911
        %v3238 = vunpack.c.h.b16 %v2911
        %v3239 = vunpack.c.l.b16 %v2912
        %v3240 = vunpack.c.h.b16 %v2912
        %v3241 = vunpack.c.l.b16 %v2913
        %v3242 = vunpack.c.h.b16 %v2913
        %v3243 = vunpack.c.l.b16 %v2914
        %v3244 = vunpack.c.l.b16 %v2915
        %v3245 = vunpack.c.h.b16 %v2915
        %v3246 = vunpack.c.l.b16 %v2916
        %v3247 = vunpack.c.h.b16 %v2916
        %v3248 = vunpack.c.l.b16 %v2917
        %v3249 = vunpack.c.h.b16 %v2917
        %v3250 = vunpack.c.l.b16 %v2918
        %v3251 = vunpack.c.l.b16 %v2919
        %v3252 = vunpack.c.h.b16 %v2919
        %v3253 = vunpack.c.l.b16 %v2920
        %v3254 = vunpack.c.h.b16 %v2920
        %v3255 = vunpack.c.l.b16 %v2921
        %v3256 = vunpack.c.h.b16 %v2921
        %v3257 = vunpack.c.l.b16 %v2922
        %v3258 = vunpack.c.l.b16 %v2923
        %v3259 = vunpack.c.h.b16 %v2923
        %v3260 = vunpack.c.l.b16 %v2924
        %v3261 = vunpack.c.h.b16 %v2924
        %v3262 = vunpack.c.l.b16 %v2925
        %v3263 = vunpack.c.h.b16 %v2925
        %v3264 = vunpack.c.l.b16 %v2926
        %v3265 = vunpack.c.l.b16 %v2927
        %v3266 = vunpack.c.h.b16 %v2927
        %v3267 = vunpack.c.l.b16 %v2928
        %v3268 = vunpack.c.h.b16 %v2928
        %v3269 = vunpack.c.l.b16 %v2929
        %v3270 = vunpack.c.h.b16 %v2929
        %v3271 = vunpack.c.l.b16 %v2930
        %v3272 = vunpack.c.l.b16 %v2931
        %v3273 = vunpack.c.h.b16 %v2931
        %v3274 = vunpack.c.l.b16 %v2932
        %v3275 = vunpack.c.h.b16 %v2932
        %v3276 = vunpack.c.l.b16 %v2933
        %v3277 = vunpack.c.h.b16 %v2933
        %v3278 = vunpack.c.l.b16 %v2934
        %v3279 = vunpack.c.l.b16 %v2935
        %v3280 = vunpack.c.h.b16 %v2935
        %v3281 = vunpack.c.l.b16 %v2936
        %v3282 = vunpack.c.h.b16 %v2936
        %v3283 = vunpack.c.l.b16 %v2937
        %v3284 = vunpack.c.h.b16 %v2937
        %v3285 = vunpack.c.l.b16 %v2938
        %v3286 = vunpack.c.l.b16 %v2939
        %v3287 = vunpack.c.h.b16 %v2939
        %v3288 = vunpack.c.l.b16 %v2940
        %v3289 = vunpack.c.h.b16 %v2940
        %v3290 = vunpack.c.l.b16 %v2941
        %v3291 = vunpack.c.h.b16 %v2941
        %v3292 = vunpack.c.l.b16 %v2942
        %v3293 = vunpack.c.l.b16 %v2943
        %v3294 = vunpack.c.h.b16 %v2943
        %v3295 = vunpack.c.l.b16 %v2944
        %v3296 = vunpack.c.h.b16 %v2944
        %v3297 = vunpack.c.l.b16 %v2945
        %v3298 = vunpack.c.h.b16 %v2945
        %v3299 = vunpack.c.l.b16 %v2946
        %v3300 = vunpack.c.l.b16 %v2947
        %v3301 = vunpack.c.h.b16 %v2947
        %v3302 = vunpack.c.l.b16 %v2948
        %v3303 = vunpack.c.h.b16 %v2948
        %v3304 = vunpack.c.l.b16 %v2949
        %v3305 = vunpack.c.h.b16 %v2949
        %v3306 = vunpack.c.l.b16 %v2950
        %v3307 = vunpack.c.l.b16 %v2951
        %v3308 = vunpack.c.h.b16 %v2951
        %v3309 = vunpack.c.l.b16 %v2952
        %v3310 = vunpack.c.h.b16 %v2952
        %v3311 = vunpack.c.l.b16 %v2953
        %v3312 = vunpack.c.h.b16 %v2953
        %v3313 = vunpack.c.l.b16 %v2954
        %v3314 = vunpack.c.l.b16 %v2955
        %v3315 = vunpack.c.h.b16 %v2955
        %v3316 = vunpack.c.l.b16 %v2956
        %v3317 = vunpack.c.h.b16 %v2956
        %v3318 = vunpack.c.l.b16 %v2957
        %v3319 = vunpack.c.h.b16 %v2957
        %v3320 = vunpack.c.l.b16 %v2958
        %v3321 = vunpack.c.l.b16 %v2959
        %v3322 = vunpack.c.h.b16 %v2959
        %v3323 = vunpack.c.l.b16 %v2960
        %v3324 = vunpack.c.h.b16 %v2960
        %v3325 = vunpack.c.l.b16 %v2961
        %v3326 = vunpack.c.h.b16 %v2961
        %v3327 = vunpack.c.l.b16 %v2962
        %v3328 = vunpack.c.l.b16 %v2963
        %v3329 = vunpack.c.h.b16 %v2963
        %v3330 = vunpack.c.l.b16 %v2964
        %v3331 = vunpack.c.h.b16 %v2964
        %v3332 = vunpack.c.l.b16 %v2965
        %v3333 = vunpack.c.h.b16 %v2965
        %v3334 = vunpack.c.l.b16 %v2966
        %v3335 = vpack.c.b16 %v3118, %v3111
        %v3336 = vpack.c.b16 %v3119, %v3112
        %v3337 = vpack.c.b16 %v3120, %v3113
        %v3338 = vpack.c.b16 %v3121, %v3114
        %v3339 = vpack.c.b16 %v3122, %v3115
        %v3340 = vpack.c.b16 %v3123, %v3116
        %v3341 = vpack.c.b16 %v3124, %v3117
        %v3342 = vpack.c.b16 %v3132, %v3125
        %v3343 = vpack.c.b16 %v3133, %v3126
        %v3344 = vpack.c.b16 %v3134, %v3127
        %v3345 = vpack.c.b16 %v3135, %v3128
        %v3346 = vpack.c.b16 %v3136, %v3129
        %v3347 = vpack.c.b16 %v3137, %v3130
        %v3348 = vpack.c.b16 %v3138, %v3131
        %v3349 = vpack.c.b16 %v3146, %v3139
        %v3350 = vpack.c.b16 %v3147, %v3140
        %v3351 = vpack.c.b16 %v3148, %v3141
        %v3352 = vpack.c.b16 %v3149, %v3142
        %v3353 = vpack.c.b16 %v3150, %v3143
        %v3354 = vpack.c.b16 %v3151, %v3144
        %v3355 = vpack.c.b16 %v3152, %v3145
        %v3356 = vpack.c.b16 %v3160, %v3153
        %v3357 = vpack.c.b16 %v3161, %v3154
        %v3358 = vpack.c.b16 %v3162, %v3155
        %v3359 = vpack.c.b16 %v3163, %v3156
        %v3360 = vpack.c.b16 %v3164, %v3157
        %v3361 = vpack.c.b16 %v3165, %v3158
        %v3362 = vpack.c.b16 %v3166, %v3159
        %v3363 = vpack.c.b16 %v3174, %v3167
        %v3364 = vpack.c.b16 %v3175, %v3168
        %v3365 = vpack.c.b16 %v3176, %v3169
        %v3366 = vpack.c.b16 %v3177, %v3170
        %v3367 = vpack.c.b16 %v3178, %v3171
        %v3368 = vpack.c.b16 %v3179, %v3172
        %v3369 = vpack.c.b16 %v3180, %v3173
        %v3370 = vpack.c.b16 %v3188, %v3181
        %v3371 = vpack.c.b16 %v3189, %v3182
        %v3372 = vpack.c.b16 %v3190, %v3183
        %v3373 = vpack.c.b16 %v3191, %v3184
        %v3374 = vpack.c.b16 %v3192, %v3185
        %v3375 = vpack.c.b16 %v3193, %v3186
        %v3376 = vpack.c.b16 %v3194, %v3187
        %v3377 = vpack.c.b16 %v3202, %v3195
        %v3378 = vpack.c.b16 %v3203, %v3196
        %v3379 = vpack.c.b16 %v3204, %v3197
        %v3380 = vpack.c.b16 %v3205, %v3198
        %v3381 = vpack.c.b16 %v3206, %v3199
        %v3382 = vpack.c.b16 %v3207, %v3200
        %v3383 = vpack.c.b16 %v3208, %v3201
        %v3384 = vpack.c.b16 %v3216, %v3209
        %v3385 = vpack.c.b16 %v3217, %v3210
        %v3386 = vpack.c.b16 %v3218, %v3211
        %v3387 = vpack.c.b16 %v3219, %v3212
        %v3388 = vpack.c.b16 %v3220, %v3213
        %v3389 = vpack.c.b16 %v3221, %v3214
        %v3390 = vpack.c.b16 %v3222, %v3215
        %v3391 = vpack.c.b16 %v3230, %v3223
        %v3392 = vpack.c.b16 %v3231, %v3224
        %v3393 = vpack.c.b16 %v3232, %v3225
        %v3394 = vpack.c.b16 %v3233, %v3226
        %v3395 = vpack.c.b16 %v3234, %v3227
        %v3396 = vpack.c.b16 %v3235, %v3228
        %v3397 = vpack.c.b16 %v3236, %v3229
        %v3398 = vpack.c.b16 %v3244, %v3237
        %v3399 = vpack.c.b16 %v3245, %v3238
        %v3400 = vpack.c.b16 %v3246, %v3239
        %v3401 = vpack.c.b16 %v3247, %v3240
        %v3402 = vpack.c.b16 %v3248, %v3241
        %v3403 = vpack.c.b16 %v3249, %v3242
        %v3404 = vpack.c.b16 %v3250, %v3243
        %v3405 = vpack.c.b16 %v3258, %v3251
        %v3406 = vpack.c.b16 %v3259, %v3252
        %v3407 = vpack.c.b16 %v3260, %v3253
        %v3408 = vpack.c.b16 %v3261, %v3254
        %v3409 = vpack.c.b16 %v3262, %v3255
        %v3410 = vpack.c.b16 %v3263, %v3256
        %v3411 = vpack.c.b16 %v3264, %v3257
        %v3412 = vpack.c.b16 %v3272, %v3265
        %v3413 = vpack.c.b16 %v3273, %v3266
        %v3414 = vpack.c.b16 %v3274, %v3267
        %v3415 = vpack.c.b16 %v3275, %v3268
        %v3416 = vpack.c.b16 %v3276, %v3269
        %v3417 = vpack.c.b16 %v3277, %v3270
        %v3418 = vpack.c.b16 %v3278, %v3271
        %v3419 = vpack.c.b16 %v3286, %v3279
        %v3420 = vpack.c.b16 %v3287, %v3280
        %v3421 = vpack.c.b16 %v3288, %v3281
        %v3422 = vpack.c.b16 %v3289, %v3282
        %v3423 = vpack.c.b16 %v3290, %v3283
        %v3424 = vpack.c.b16 %v3291, %v3284
        %v3425 = vpack.c.b16 %v3292, %v3285
        %v3426 = vpack.c.b16 %v3300, %v3293
        %v3427 = vpack.c.b16 %v3301, %v3294
        %v3428 = vpack.c.b16 %v3302, %v3295
        %v3429 = vpack.c.b16 %v3303, %v3296
        %v3430 = vpack.c.b16 %v3304, %v3297
        %v3431 = vpack.c.b16 %v3305, %v3298
        %v3432 = vpack.c.b16 %v3306, %v3299
        %v3433 = vpack.c.b16 %v3314, %v3307
        %v3434 = vpack.c.b16 %v3315, %v3308
        %v3435 = vpack.c.b16 %v3316, %v3309
        %v3436 = vpack.c.b16 %v3317, %v3310
        %v3437 = vpack.c.b16 %v3318, %v3311
        %v3438 = vpack.c.b16 %v3319, %v3312
        %v3439 = vpack.c.b16 %v3320, %v3313
        %v3440 = vpack.c.b16 %v3328, %v3321
        %v3441 = vpack.c.b16 %v3329, %v3322
        %v3442 = vpack.c.b16 %v3330, %v3323
        %v3443 = vpack.c.b16 %v3331, %v3324
        %v3444 = vpack.c.b16 %v3332, %v3325
        %v3445 = vpack.c.b16 %v3333, %v3326
        %v3446 = vpack.c.b16 %v3334, %v3327
        %3559 = vmatpush.bf16.msra.mxu0 %v3384
        %3560 = vmatpush.bf16.msra.mxu0 %v3377
        %3561 = vmatpush.bf16.msra.mxu0 %v3370
        %3562 = vmatpush.bf16.msra.mxu0 %v3363
        %3563 = vmatpush.bf16.msra.mxu0 %v3356
        %3564 = vmatpush.bf16.msra.mxu0 %v3349
        %3565 = vmatpush.bf16.msra.mxu0 %v3342
        %3566 = vmatpush.bf16.msra.mxu0 %v3335
        %3567 = vmatmul.bf16.gmra.mxu0 %v2831
        %v3568 = vpop.f32.mrf.mxu0
        %v3569 = vadd.f32 %v2969, %v3568
        %v3570 = vpop.f32.mrf.mxu0
        %v3571 = vadd.f32 %v2969, %v3570
        %3572 = vmatmul.bf16.gmra.mxu0 %v2833
        %v3573 = vpop.f32.mrf.mxu0
        %v3574 = vadd.f32 %v2969, %v3573
        %v3575 = vpop.f32.mrf.mxu0
        %v3576 = vadd.f32 %v2969, %v3575
        %3577 = vmatmul.bf16.gmra.mxu0 %v2835
        %v3578 = vpop.f32.mrf.mxu0
        %v3579 = vadd.f32 %v2969, %v3578
        %v3580 = vpop.f32.mrf.mxu0
        %v3581 = vadd.f32 %v2969, %v3580
        %3582 = vmatmul.bf16.gmra.mxu0 %v2837
        %v3583 = vpop.f32.mrf.mxu0
        %v3584 = vadd.f32 %v2969, %v3583
        %v3585 = vpop.f32.mrf.mxu0
        %v3586 = vadd.f32 %v2969, %v3585
        %3587 = vdwg.mxu0
        %3588 = vmatpush.bf16.msra.mxu0 %v3440
        %3589 = vmatpush.bf16.msra.mxu0 %v3433
        %3590 = vmatpush.bf16.msra.mxu0 %v3426
        %3591 = vmatpush.bf16.msra.mxu0 %v3419
        %3592 = vmatpush.bf16.msra.mxu0 %v3412
        %3593 = vmatpush.bf16.msra.mxu0 %v3405
        %3594 = vmatpush.bf16.msra.mxu0 %v3398
        %3595 = vmatpush.bf16.msra.mxu0 %v3391
        %3596 = vmatmul.bf16.gmra.mxu0 %v2832
        %v3597 = vpop.f32.mrf.mxu0
        %v3598 = vadd.f32 %v3569, %v3597
        %v3599 = vpop.f32.mrf.mxu0
        %v3600 = vadd.f32 %v3571, %v3599
        %3601 = vmatmul.bf16.gmra.mxu0 %v2834
        %v3602 = vpop.f32.mrf.mxu0
        %v3603 = vadd.f32 %v3574, %v3602
        %v3604 = vpop.f32.mrf.mxu0
        %v3605 = vadd.f32 %v3576, %v3604
        %3606 = vmatmul.bf16.gmra.mxu0 %v2836
        %v3607 = vpop.f32.mrf.mxu0
        %v3608 = vadd.f32 %v3579, %v3607
        %v3609 = vpop.f32.mrf.mxu0
        %v3610 = vadd.f32 %v3581, %v3609
        %3611 = vmatmul.bf16.gmra.mxu0 %v2838
        %v3612 = vpop.f32.mrf.mxu0
        %v3613 = vadd.f32 %v3584, %v3612
        %v3614 = vpop.f32.mrf.mxu0
        %v3615 = vadd.f32 %v3586, %v3614
        %3616 = vdwg.mxu0
        %3617 = vmatpush.bf16.msra.mxu0 %v3385
        %3618 = vmatpush.bf16.msra.mxu0 %v3378
        %3619 = vmatpush.bf16.msra.mxu0 %v3371
        %3620 = vmatpush.bf16.msra.mxu0 %v3364
        %3621 = vmatpush.bf16.msra.mxu0 %v3357
        %3622 = vmatpush.bf16.msra.mxu0 %v3350
        %3623 = vmatpush.bf16.msra.mxu0 %v3343
        %3624 = vmatpush.bf16.msra.mxu0 %v3336
        %3625 = vmatmul.bf16.gmra.mxu0 %v2831
        %v3626 = vpop.f32.mrf.mxu0
        %v3627 = vadd.f32 %v2970, %v3626
        %v3628 = vpop.f32.mrf.mxu0
        %v3629 = vadd.f32 %v2970, %v3628
        %3630 = vmatmul.bf16.gmra.mxu0 %v2833
        %v3631 = vpop.f32.mrf.mxu0
        %v3632 = vadd.f32 %v2970, %v3631
        %v3633 = vpop.f32.mrf.mxu0
        %v3634 = vadd.f32 %v2970, %v3633
        %3635 = vmatmul.bf16.gmra.mxu0 %v2835
        %v3636 = vpop.f32.mrf.mxu0
        %v3637 = vadd.f32 %v2970, %v3636
        %v3638 = vpop.f32.mrf.mxu0
        %v3639 = vadd.f32 %v2970, %v3638
        %3640 = vmatmul.bf16.gmra.mxu0 %v2837
        %v3641 = vpop.f32.mrf.mxu0
        %v3642 = vadd.f32 %v2970, %v3641
        %v3643 = vpop.f32.mrf.mxu0
        %v3644 = vadd.f32 %v2970, %v3643
        %3645 = vdwg.mxu0
        %3646 = vmatpush.bf16.msra.mxu0 %v3441
        %3647 = vmatpush.bf16.msra.mxu0 %v3434
        %3648 = vmatpush.bf16.msra.mxu0 %v3427
        %3649 = vmatpush.bf16.msra.mxu0 %v3420
        %3650 = vmatpush.bf16.msra.mxu0 %v3413
        %3651 = vmatpush.bf16.msra.mxu0 %v3406
        %3652 = vmatpush.bf16.msra.mxu0 %v3399
        %3653 = vmatpush.bf16.msra.mxu0 %v3392
        %3654 = vmatmul.bf16.gmra.mxu0 %v2832
        %v3655 = vpop.f32.mrf.mxu0
        %v3656 = vadd.f32 %v3627, %v3655
        %v3657 = vpop.f32.mrf.mxu0
        %v3658 = vadd.f32 %v3629, %v3657
        %3659 = vmatmul.bf16.gmra.mxu0 %v2834
        %v3660 = vpop.f32.mrf.mxu0
        %v3661 = vadd.f32 %v3632, %v3660
        %v3662 = vpop.f32.mrf.mxu0
        %v3663 = vadd.f32 %v3634, %v3662
        %3664 = vmatmul.bf16.gmra.mxu0 %v2836
        %v3665 = vpop.f32.mrf.mxu0
        %v3666 = vadd.f32 %v3637, %v3665
        %v3667 = vpop.f32.mrf.mxu0
        %v3668 = vadd.f32 %v3639, %v3667
        %3669 = vmatmul.bf16.gmra.mxu0 %v2838
        %v3670 = vpop.f32.mrf.mxu0
        %v3671 = vadd.f32 %v3642, %v3670
        %v3672 = vpop.f32.mrf.mxu0
        %v3673 = vadd.f32 %v3644, %v3672
        %3674 = vdwg.mxu0
        %3675 = vmatpush.bf16.msra.mxu0 %v3386
        %3676 = vmatpush.bf16.msra.mxu0 %v3379
        %3677 = vmatpush.bf16.msra.mxu0 %v3372
        %3678 = vmatpush.bf16.msra.mxu0 %v3365
        %3679 = vmatpush.bf16.msra.mxu0 %v3358
        %3680 = vmatpush.bf16.msra.mxu0 %v3351
        %3681 = vmatpush.bf16.msra.mxu0 %v3344
        %3682 = vmatpush.bf16.msra.mxu0 %v3337
        %3683 = vmatmul.bf16.gmra.mxu0 %v2831
        %v3684 = vpop.f32.mrf.mxu0
        %v3685 = vadd.f32 %v2971, %v3684
        %v3686 = vpop.f32.mrf.mxu0
        %v3687 = vadd.f32 %v2971, %v3686
        %3688 = vmatmul.bf16.gmra.mxu0 %v2833
        %v3689 = vpop.f32.mrf.mxu0
        %v3690 = vadd.f32 %v2971, %v3689
        %v3691 = vpop.f32.mrf.mxu0
        %v3692 = vadd.f32 %v2971, %v3691
        %3693 = vmatmul.bf16.gmra.mxu0 %v2835
        %v3694 = vpop.f32.mrf.mxu0
        %v3695 = vadd.f32 %v2971, %v3694
        %v3696 = vpop.f32.mrf.mxu0
        %v3697 = vadd.f32 %v2971, %v3696
        %3698 = vmatmul.bf16.gmra.mxu0 %v2837
        %v3699 = vpop.f32.mrf.mxu0
        %v3700 = vadd.f32 %v2971, %v3699
        %v3701 = vpop.f32.mrf.mxu0
        %v3702 = vadd.f32 %v2971, %v3701
        %3703 = vdwg.mxu0
        %3704 = vmatpush.bf16.msra.mxu0 %v3442
        %3705 = vmatpush.bf16.msra.mxu0 %v3435
        %3706 = vmatpush.bf16.msra.mxu0 %v3428
        %3707 = vmatpush.bf16.msra.mxu0 %v3421
        %3708 = vmatpush.bf16.msra.mxu0 %v3414
        %3709 = vmatpush.bf16.msra.mxu0 %v3407
        %3710 = vmatpush.bf16.msra.mxu0 %v3400
        %3711 = vmatpush.bf16.msra.mxu0 %v3393
        %3712 = vmatmul.bf16.gmra.mxu0 %v2832
        %v3713 = vpop.f32.mrf.mxu0
        %v3714 = vadd.f32 %v3685, %v3713
        %v3715 = vpop.f32.mrf.mxu0
        %v3716 = vadd.f32 %v3687, %v3715
        %3717 = vmatmul.bf16.gmra.mxu0 %v2834
        %v3718 = vpop.f32.mrf.mxu0
        %v3719 = vadd.f32 %v3690, %v3718
        %v3720 = vpop.f32.mrf.mxu0
        %v3721 = vadd.f32 %v3692, %v3720
        %3722 = vmatmul.bf16.gmra.mxu0 %v2836
        %v3723 = vpop.f32.mrf.mxu0
        %v3724 = vadd.f32 %v3695, %v3723
        %v3725 = vpop.f32.mrf.mxu0
        %v3726 = vadd.f32 %v3697, %v3725
        %3727 = vmatmul.bf16.gmra.mxu0 %v2838
        %v3728 = vpop.f32.mrf.mxu0
        %v3729 = vadd.f32 %v3700, %v3728
        %v3730 = vpop.f32.mrf.mxu0
        %v3731 = vadd.f32 %v3702, %v3730
        %3732 = vdwg.mxu0
        %3733 = vmatpush.bf16.msra.mxu0 %v3387
        %3734 = vmatpush.bf16.msra.mxu0 %v3380
        %3735 = vmatpush.bf16.msra.mxu0 %v3373
        %3736 = vmatpush.bf16.msra.mxu0 %v3366
        %3737 = vmatpush.bf16.msra.mxu0 %v3359
        %3738 = vmatpush.bf16.msra.mxu0 %v3352
        %3739 = vmatpush.bf16.msra.mxu0 %v3345
        %3740 = vmatpush.bf16.msra.mxu0 %v3338
        %3741 = vmatmul.bf16.gmra.mxu0 %v2831
        %v3742 = vpop.f32.mrf.mxu0
        %v3743 = vadd.f32 %v2972, %v3742
        %v3744 = vpop.f32.mrf.mxu0
        %v3745 = vadd.f32 %v2972, %v3744
        %3746 = vmatmul.bf16.gmra.mxu0 %v2833
        %v3747 = vpop.f32.mrf.mxu0
        %v3748 = vadd.f32 %v2972, %v3747
        %v3749 = vpop.f32.mrf.mxu0
        %v3750 = vadd.f32 %v2972, %v3749
        %3751 = vmatmul.bf16.gmra.mxu0 %v2835
        %v3752 = vpop.f32.mrf.mxu0
        %v3753 = vadd.f32 %v2972, %v3752
        %v3754 = vpop.f32.mrf.mxu0
        %v3755 = vadd.f32 %v2972, %v3754
        %3756 = vmatmul.bf16.gmra.mxu0 %v2837
        %v3757 = vpop.f32.mrf.mxu0
        %v3758 = vadd.f32 %v2972, %v3757
        %v3759 = vpop.f32.mrf.mxu0
        %v3760 = vadd.f32 %v2972, %v3759
        %3761 = vdwg.mxu0
        %3762 = vmatpush.bf16.msra.mxu0 %v3443
        %3763 = vmatpush.bf16.msra.mxu0 %v3436
        %3764 = vmatpush.bf16.msra.mxu0 %v3429
        %3765 = vmatpush.bf16.msra.mxu0 %v3422
        %3766 = vmatpush.bf16.msra.mxu0 %v3415
        %3767 = vmatpush.bf16.msra.mxu0 %v3408
        %3768 = vmatpush.bf16.msra.mxu0 %v3401
        %3769 = vmatpush.bf16.msra.mxu0 %v3394
        %3770 = vmatmul.bf16.gmra.mxu0 %v2832
        %v3771 = vpop.f32.mrf.mxu0
        %v3772 = vadd.f32 %v3743, %v3771
        %v3773 = vpop.f32.mrf.mxu0
        %v3774 = vadd.f32 %v3745, %v3773
        %3775 = vmatmul.bf16.gmra.mxu0 %v2834
        %v3776 = vpop.f32.mrf.mxu0
        %v3777 = vadd.f32 %v3748, %v3776
        %v3778 = vpop.f32.mrf.mxu0
        %v3779 = vadd.f32 %v3750, %v3778
        %3780 = vmatmul.bf16.gmra.mxu0 %v2836
        %v3781 = vpop.f32.mrf.mxu0
        %v3782 = vadd.f32 %v3753, %v3781
        %v3783 = vpop.f32.mrf.mxu0
        %v3784 = vadd.f32 %v3755, %v3783
        %3785 = vmatmul.bf16.gmra.mxu0 %v2838
        %v3786 = vpop.f32.mrf.mxu0
        %v3787 = vadd.f32 %v3758, %v3786
        %v3788 = vpop.f32.mrf.mxu0
        %v3789 = vadd.f32 %v3760, %v3788
        %3790 = vdwg.mxu0
        %3791 = vmatpush.bf16.msra.mxu0 %v3388
        %3792 = vmatpush.bf16.msra.mxu0 %v3381
        %3793 = vmatpush.bf16.msra.mxu0 %v3374
        %3794 = vmatpush.bf16.msra.mxu0 %v3367
        %3795 = vmatpush.bf16.msra.mxu0 %v3360
        %3796 = vmatpush.bf16.msra.mxu0 %v3353
        %3797 = vmatpush.bf16.msra.mxu0 %v3346
        %3798 = vmatpush.bf16.msra.mxu0 %v3339
        %3799 = vmatmul.bf16.gmra.mxu0 %v2831
        %v3800 = vpop.f32.mrf.mxu0
        %v3801 = vadd.f32 %v2973, %v3800
        %v3802 = vpop.f32.mrf.mxu0
        %v3803 = vadd.f32 %v2973, %v3802
        %3804 = vmatmul.bf16.gmra.mxu0 %v2833
        %v3805 = vpop.f32.mrf.mxu0
        %v3806 = vadd.f32 %v2973, %v3805
        %v3807 = vpop.f32.mrf.mxu0
        %v3808 = vadd.f32 %v2973, %v3807
        %3809 = vmatmul.bf16.gmra.mxu0 %v2835
        %v3810 = vpop.f32.mrf.mxu0
        %v3811 = vadd.f32 %v2973, %v3810
        %v3812 = vpop.f32.mrf.mxu0
        %v3813 = vadd.f32 %v2973, %v3812
        %3814 = vmatmul.bf16.gmra.mxu0 %v2837
        %v3815 = vpop.f32.mrf.mxu0
        %v3816 = vadd.f32 %v2973, %v3815
        %v3817 = vpop.f32.mrf.mxu0
        %v3818 = vadd.f32 %v2973, %v3817
        %3819 = vdwg.mxu0
        %3820 = vmatpush.bf16.msra.mxu0 %v3444
        %3821 = vmatpush.bf16.msra.mxu0 %v3437
        %3822 = vmatpush.bf16.msra.mxu0 %v3430
        %3823 = vmatpush.bf16.msra.mxu0 %v3423
        %3824 = vmatpush.bf16.msra.mxu0 %v3416
        %3825 = vmatpush.bf16.msra.mxu0 %v3409
        %3826 = vmatpush.bf16.msra.mxu0 %v3402
        %3827 = vmatpush.bf16.msra.mxu0 %v3395
        %3828 = vmatmul.bf16.gmra.mxu0 %v2832
        %v3829 = vpop.f32.mrf.mxu0
        %v3830 = vadd.f32 %v3801, %v3829
        %v3831 = vpop.f32.mrf.mxu0
        %v3832 = vadd.f32 %v3803, %v3831
        %3833 = vmatmul.bf16.gmra.mxu0 %v2834
        %v3834 = vpop.f32.mrf.mxu0
        %v3835 = vadd.f32 %v3806, %v3834
        %v3836 = vpop.f32.mrf.mxu0
        %v3837 = vadd.f32 %v3808, %v3836
        %3838 = vmatmul.bf16.gmra.mxu0 %v2836
        %v3839 = vpop.f32.mrf.mxu0
        %v3840 = vadd.f32 %v3811, %v3839
        %v3841 = vpop.f32.mrf.mxu0
        %v3842 = vadd.f32 %v3813, %v3841
        %3843 = vmatmul.bf16.gmra.mxu0 %v2838
        %v3844 = vpop.f32.mrf.mxu0
        %v3845 = vadd.f32 %v3816, %v3844
        %v3846 = vpop.f32.mrf.mxu0
        %v3847 = vadd.f32 %v3818, %v3846
        %3848 = vdwg.mxu0
        %3849 = vmatpush.bf16.msra.mxu0 %v3389
        %3850 = vmatpush.bf16.msra.mxu0 %v3382
        %3851 = vmatpush.bf16.msra.mxu0 %v3375
        %3852 = vmatpush.bf16.msra.mxu0 %v3368
        %3853 = vmatpush.bf16.msra.mxu0 %v3361
        %3854 = vmatpush.bf16.msra.mxu0 %v3354
        %3855 = vmatpush.bf16.msra.mxu0 %v3347
        %3856 = vmatpush.bf16.msra.mxu0 %v3340
        %3857 = vmatmul.bf16.gmra.mxu0 %v2831
        %v3858 = vpop.f32.mrf.mxu0
        %v3859 = vadd.f32 %v2974, %v3858
        %v3860 = vpop.f32.mrf.mxu0
        %v3861 = vadd.f32 %v2974, %v3860
        %3862 = vmatmul.bf16.gmra.mxu0 %v2833
        %v3863 = vpop.f32.mrf.mxu0
        %v3864 = vadd.f32 %v2974, %v3863
        %v3865 = vpop.f32.mrf.mxu0
        %v3866 = vadd.f32 %v2974, %v3865
        %3867 = vmatmul.bf16.gmra.mxu0 %v2835
        %v3868 = vpop.f32.mrf.mxu0
        %v3869 = vadd.f32 %v2974, %v3868
        %v3870 = vpop.f32.mrf.mxu0
        %v3871 = vadd.f32 %v2974, %v3870
        %3872 = vmatmul.bf16.gmra.mxu0 %v2837
        %v3873 = vpop.f32.mrf.mxu0
        %v3874 = vadd.f32 %v2974, %v3873
        %v3875 = vpop.f32.mrf.mxu0
        %v3876 = vadd.f32 %v2974, %v3875
        %3877 = vdwg.mxu0
        %3878 = vmatpush.bf16.msra.mxu0 %v3445
        %3879 = vmatpush.bf16.msra.mxu0 %v3438
        %3880 = vmatpush.bf16.msra.mxu0 %v3431
        %3881 = vmatpush.bf16.msra.mxu0 %v3424
        %3882 = vmatpush.bf16.msra.mxu0 %v3417
        %3883 = vmatpush.bf16.msra.mxu0 %v3410
        %3884 = vmatpush.bf16.msra.mxu0 %v3403
        %3885 = vmatpush.bf16.msra.mxu0 %v3396
        %3886 = vmatmul.bf16.gmra.mxu0 %v2832
        %v3887 = vpop.f32.mrf.mxu0
        %v3888 = vadd.f32 %v3859, %v3887
        %v3889 = vpop.f32.mrf.mxu0
        %v3890 = vadd.f32 %v3861, %v3889
        %3891 = vmatmul.bf16.gmra.mxu0 %v2834
        %v3892 = vpop.f32.mrf.mxu0
        %v3893 = vadd.f32 %v3864, %v3892
        %v3894 = vpop.f32.mrf.mxu0
        %v3895 = vadd.f32 %v3866, %v3894
        %3896 = vmatmul.bf16.gmra.mxu0 %v2836
        %v3897 = vpop.f32.mrf.mxu0
        %v3898 = vadd.f32 %v3869, %v3897
        %v3899 = vpop.f32.mrf.mxu0
        %v3900 = vadd.f32 %v3871, %v3899
        %3901 = vmatmul.bf16.gmra.mxu0 %v2838
        %v3902 = vpop.f32.mrf.mxu0
        %v3903 = vadd.f32 %v3874, %v3902
        %v3904 = vpop.f32.mrf.mxu0
        %v3905 = vadd.f32 %v3876, %v3904
        %3906 = vdwg.mxu0
        %3907 = vmatpush.bf16.msra.mxu0 %v3390
        %3908 = vmatpush.bf16.msra.mxu0 %v3383
        %3909 = vmatpush.bf16.msra.mxu0 %v3376
        %3910 = vmatpush.bf16.msra.mxu0 %v3369
        %3911 = vmatpush.bf16.msra.mxu0 %v3362
        %3912 = vmatpush.bf16.msra.mxu0 %v3355
        %3913 = vmatpush.bf16.msra.mxu0 %v3348
        %3914 = vmatpush.bf16.msra.mxu0 %v3341
        %3915 = vmatmul.bf16.gmra.mxu0 %v2831
        %v3916 = vpop.f32.mrf.mxu0
        %v3917 = vadd.f32 %v2975, %v3916
        %v3918 = vpop.f32.mrf.mxu0
        %v3919 = vadd.f32 %v2975, %v3918
        %3920 = vmatmul.bf16.gmra.mxu0 %v2833
        %v3921 = vpop.f32.mrf.mxu0
        %v3922 = vadd.f32 %v2975, %v3921
        %v3923 = vpop.f32.mrf.mxu0
        %v3924 = vadd.f32 %v2975, %v3923
        %3925 = vmatmul.bf16.gmra.mxu0 %v2835
        %v3926 = vpop.f32.mrf.mxu0
        %v3927 = vadd.f32 %v2975, %v3926
        %v3928 = vpop.f32.mrf.mxu0
        %v3929 = vadd.f32 %v2975, %v3928
        %3930 = vmatmul.bf16.gmra.mxu0 %v2837
        %v3931 = vpop.f32.mrf.mxu0
        %v3932 = vadd.f32 %v2975, %v3931
        %v3933 = vpop.f32.mrf.mxu0
        %v3934 = vadd.f32 %v2975, %v3933
        %3935 = vdwg.mxu0
        %3936 = vmatpush.bf16.msra.mxu0 %v3446
        %3937 = vmatpush.bf16.msra.mxu0 %v3439
        %3938 = vmatpush.bf16.msra.mxu0 %v3432
        %3939 = vmatpush.bf16.msra.mxu0 %v3425
        %3940 = vmatpush.bf16.msra.mxu0 %v3418
        %3941 = vmatpush.bf16.msra.mxu0 %v3411
        %3942 = vmatpush.bf16.msra.mxu0 %v3404
        %3943 = vmatpush.bf16.msra.mxu0 %v3397
        %3944 = vmatmul.bf16.gmra.mxu0 %v2832
        %v3945 = vpop.f32.mrf.mxu0
        %v3946 = vadd.f32 %v3917, %v3945
        %v3947 = vpop.f32.mrf.mxu0
        %v3948 = vadd.f32 %v3919, %v3947
        %3949 = vmatmul.bf16.gmra.mxu0 %v2834
        %v3950 = vpop.f32.mrf.mxu0
        %v3951 = vadd.f32 %v3922, %v3950
        %v3952 = vpop.f32.mrf.mxu0
        %v3953 = vadd.f32 %v3924, %v3952
        %3954 = vmatmul.bf16.gmra.mxu0 %v2836
        %v3955 = vpop.f32.mrf.mxu0
        %v3956 = vadd.f32 %v3927, %v3955
        %v3957 = vpop.f32.mrf.mxu0
        %v3958 = vadd.f32 %v3929, %v3957
        %3959 = vmatmul.bf16.gmra.mxu0 %v2838
        %v3960 = vpop.f32.mrf.mxu0
        %v3961 = vadd.f32 %v3932, %v3960
        %v3962 = vpop.f32.mrf.mxu0
        %v3963 = vadd.f32 %v3934, %v3962
        %3964 = vdwg.mxu0
        %v3965 = vadd.f32 %v3598, %v442
        %v3966 = vadd.f32 %v3656, %v443
        %v3967 = vadd.f32 %v3714, %v444
        %v3968 = vadd.f32 %v3772, %v445
        %v3969 = vadd.f32 %v3830, %v446
        %v3970 = vadd.f32 %v3888, %v447
        %v3971 = vadd.f32 %v3946, %v448
        %v3972 = vadd.f32 %v3600, %v449
        %v3973 = vadd.f32 %v3658, %v450
        %v3974 = vadd.f32 %v3716, %v451
        %v3975 = vadd.f32 %v3774, %v452
        %v3976 = vadd.f32 %v3832, %v453
        %v3977 = vadd.f32 %v3890, %v454
        %v3978 = vadd.f32 %v3948, %v455
        %v3979 = vadd.f32 %v3603, %v456
        %v3980 = vadd.f32 %v3661, %v457
        %v3981 = vadd.f32 %v3719, %v458
        %v3982 = vadd.f32 %v3777, %v459
        %v3983 = vadd.f32 %v3835, %v460
        %v3984 = vadd.f32 %v3893, %v461
        %v3985 = vadd.f32 %v3951, %v462
        %v3986 = vadd.f32 %v3605, %v463
        %v3987 = vadd.f32 %v3663, %v464
        %v3988 = vadd.f32 %v3721, %v465
        %v3989 = vadd.f32 %v3779, %v466
        %v3990 = vadd.f32 %v3837, %v467
        %v3991 = vadd.f32 %v3895, %v468
        %v3992 = vadd.f32 %v3953, %v469
        %v3993 = vadd.f32 %v3608, %v470
        %v3994 = vadd.f32 %v3666, %v471
        %v3995 = vadd.f32 %v3724, %v472
        %v3996 = vadd.f32 %v3782, %v473
        %v3997 = vadd.f32 %v3840, %v474
        %v3998 = vadd.f32 %v3898, %v475
        %v3999 = vadd.f32 %v3956, %v476
        %v4000 = vadd.f32 %v3610, %v477
        %v4001 = vadd.f32 %v3668, %v478
        %v4002 = vadd.f32 %v3726, %v479
        %v4003 = vadd.f32 %v3784, %v480
        %v4004 = vadd.f32 %v3842, %v481
        %v4005 = vadd.f32 %v3900, %v482
        %v4006 = vadd.f32 %v3958, %v483
        %v4007 = vadd.f32 %v3613, %v484
        %v4008 = vadd.f32 %v3671, %v485
        %v4009 = vadd.f32 %v3729, %v486
        %v4010 = vadd.f32 %v3787, %v487
        %v4011 = vadd.f32 %v3845, %v488
        %v4012 = vadd.f32 %v3903, %v489
        %v4013 = vadd.f32 %v3961, %v490
        %v4014 = vadd.f32 %v3615, %v491
        %v4015 = vadd.f32 %v3673, %v492
        %v4016 = vadd.f32 %v3731, %v493
        %v4017 = vadd.f32 %v3789, %v494
        %v4018 = vadd.f32 %v3847, %v495
        %v4019 = vadd.f32 %v3905, %v496
        %v4020 = vadd.f32 %v3963, %v497
        %v4021 = vmax.f32 %v3965, 0.0
        %v4022 = vmax.f32 %v3966, 0.0
        %v4023 = vmax.f32 %v3967, 0.0
        %v4024 = vmax.f32 %v3968, 0.0
        %v4025 = vmax.f32 %v3969, 0.0
        %v4026 = vmax.f32 %v3970, 0.0
        %v4027 = vmax.f32 %v3971, 0.0
        %v4028 = vmax.f32 %v3972, 0.0
        %v4029 = vmax.f32 %v3973, 0.0
        %v4030 = vmax.f32 %v3974, 0.0
        %v4031 = vmax.f32 %v3975, 0.0
        %v4032 = vmax.f32 %v3976, 0.0
        %v4033 = vmax.f32 %v3977, 0.0
        %v4034 = vmax.f32 %v3978, 0.0
        %v4035 = vmax.f32 %v3979, 0.0
        %v4036 = vmax.f32 %v3980, 0.0
        %v4037 = vmax.f32 %v3981, 0.0
        %v4038 = vmax.f32 %v3982, 0.0
        %v4039 = vmax.f32 %v3983, 0.0
        %v4040 = vmax.f32 %v3984, 0.0
        %v4041 = vmax.f32 %v3985, 0.0
        %v4042 = vmax.f32 %v3986, 0.0
        %v4043 = vmax.f32 %v3987, 0.0
        %v4044 = vmax.f32 %v3988, 0.0
        %v4045 = vmax.f32 %v3989, 0.0
        %v4046 = vmax.f32 %v3990, 0.0
        %v4047 = vmax.f32 %v3991, 0.0
        %v4048 = vmax.f32 %v3992, 0.0
        %v4049 = vmax.f32 %v3993, 0.0
        %v4050 = vmax.f32 %v3994, 0.0
        %v4051 = vmax.f32 %v3995, 0.0
        %v4052 = vmax.f32 %v3996, 0.0
        %v4053 = vmax.f32 %v3997, 0.0
        %v4054 = vmax.f32 %v3998, 0.0
        %v4055 = vmax.f32 %v3999, 0.0
        %v4056 = vmax.f32 %v4000, 0.0
        %v4057 = vmax.f32 %v4001, 0.0
        %v4058 = vmax.f32 %v4002, 0.0
        %v4059 = vmax.f32 %v4003, 0.0
        %v4060 = vmax.f32 %v4004, 0.0
        %v4061 = vmax.f32 %v4005, 0.0
        %v4062 = vmax.f32 %v4006, 0.0
        %v4063 = vmax.f32 %v4007, 0.0
        %v4064 = vmax.f32 %v4008, 0.0
        %v4065 = vmax.f32 %v4009, 0.0
        %v4066 = vmax.f32 %v4010, 0.0
        %v4067 = vmax.f32 %v4011, 0.0
        %v4068 = vmax.f32 %v4012, 0.0
        %v4069 = vmax.f32 %v4013, 0.0
        %v4070 = vmax.f32 %v4014, 0.0
        %v4071 = vmax.f32 %v4015, 0.0
        %v4072 = vmax.f32 %v4016, 0.0
        %v4073 = vmax.f32 %v4017, 0.0
        %v4074 = vmax.f32 %v4018, 0.0
        %v4075 = vmax.f32 %v4019, 0.0
        %v4076 = vmax.f32 %v4020, 0.0
        %4077 = vst [vmem:[%s426] sm:$0xff] %v4021
        %4078 = vst [vmem:[%s426 + $0x8] sm:$0xff] %v4022
        %4079 = vst [vmem:[%s426 + $0x10] sm:$0xff] %v4023
        %4080 = vst [vmem:[%s426 + $0x18] sm:$0xff] %v4024
        %4081 = vst [vmem:[%s426 + $0x20] sm:$0xff] %v4025
        %4082 = vst [vmem:[%s426 + $0x28] sm:$0xff] %v4026
        %4083 = vst [vmem:[%s426 + $0x30] sm:$0xff] %v4027
        %4084 = vst [vmem:[%s426 + $0x38] sm:$0xff] %v4028
        %4085 = vst [vmem:[%s426 + $0x40] sm:$0xff] %v4029
        %4086 = vst [vmem:[%s426 + $0x48] sm:$0xff] %v4030
        %4087 = vst [vmem:[%s426 + $0x50] sm:$0xff] %v4031
        %4088 = vst [vmem:[%s426 + $0x58] sm:$0xff] %v4032
        %4089 = vst [vmem:[%s426 + $0x60] sm:$0xff] %v4033
        %4090 = vst [vmem:[%s426 + $0x68] sm:$0xff] %v4034
        %4091 = vst [vmem:[%s426 + $0x70] sm:$0xff] %v4035
        %4092 = vst [vmem:[%s426 + $0x78] sm:$0xff] %v4036
        %4093 = vst [vmem:[%s426 + $0x80] sm:$0xff] %v4037
        %4094 = vst [vmem:[%s426 + $0x88] sm:$0xff] %v4038
        %4095 = vst [vmem:[%s426 + $0x90] sm:$0xff] %v4039
        %4096 = vst [vmem:[%s426 + $0x98] sm:$0xff] %v4040
        %4097 = vst [vmem:[%s426 + $0xa0] sm:$0xff] %v4041
        %4098 = vst [vmem:[%s426 + $0xa8] sm:$0xff] %v4042
        %4099 = vst [vmem:[%s426 + $0xb0] sm:$0xff] %v4043
        %4100 = vst [vmem:[%s426 + $0xb8] sm:$0xff] %v4044
        %4101 = vst [vmem:[%s426 + $0xc0] sm:$0xff] %v4045
        %4102 = vst [vmem:[%s426 + $0xc8] sm:$0xff] %v4046
        %4103 = vst [vmem:[%s426 + $0xd0] sm:$0xff] %v4047
        %4104 = vst [vmem:[%s426 + $0xd8] sm:$0xff] %v4048
        %4105 = vst [vmem:[%s426 + $0xe0] sm:$0xff] %v4049
        %4106 = vst [vmem:[%s426 + $0xe8] sm:$0xff] %v4050
        %4107 = vst [vmem:[%s426 + $0xf0] sm:$0xff] %v4051
        %4108 = vst [vmem:[%s426 + $0xf8] sm:$0xff] %v4052
        %4109 = vst [vmem:[%s426 + $0x100] sm:$0xff] %v4053
        %4110 = vst [vmem:[%s426 + $0x108] sm:$0xff] %v4054
        %4111 = vst [vmem:[%s426 + $0x110] sm:$0xff] %v4055
        %4112 = vst [vmem:[%s426 + $0x118] sm:$0xff] %v4056
        %4113 = vst [vmem:[%s426 + $0x120] sm:$0xff] %v4057
        %4114 = vst [vmem:[%s426 + $0x128] sm:$0xff] %v4058
        %4115 = vst [vmem:[%s426 + $0x130] sm:$0xff] %v4059
        %4116 = vst [vmem:[%s426 + $0x138] sm:$0xff] %v4060
        %4117 = vst [vmem:[%s426 + $0x140] sm:$0xff] %v4061
        %4118 = vst [vmem:[%s426 + $0x148] sm:$0xff] %v4062
        %4119 = vst [vmem:[%s426 + $0x150] sm:$0xff] %v4063
        %4120 = vst [vmem:[%s426 + $0x158] sm:$0xff] %v4064
        %4121 = vst [vmem:[%s426 + $0x160] sm:$0xff] %v4065
        %4122 = vst [vmem:[%s426 + $0x168] sm:$0xff] %v4066
        %4123 = vst [vmem:[%s426 + $0x170] sm:$0xff] %v4067
        %4124 = vst [vmem:[%s426 + $0x178] sm:$0xff] %v4068
        %4125 = vst [vmem:[%s426 + $0x180] sm:$0xff] %v4069
        %4126 = vst [vmem:[%s426 + $0x188] sm:$0xff] %v4070
        %4127 = vst [vmem:[%s426 + $0x190] sm:$0xff] %v4071
        %4128 = vst [vmem:[%s426 + $0x198] sm:$0xff] %v4072
        %4129 = vst [vmem:[%s426 + $0x1a0] sm:$0xff] %v4073
        %4130 = vst [vmem:[%s426 + $0x1a8] sm:$0xff] %v4074
        %4131 = vst [vmem:[%s426 + $0x1b0] sm:$0xff] %v4075
        %4132 = vst [vmem:[%s426 + $0x1b8] sm:$0xff] %v4076
        %s4133 = sand.u32 %s280, 1
        %s4134 = scalar_lea.sflag [#allocation4], %s4133
        %s4135 = sand.u32 %s280, 1
        %s4136 = smul.addr %s4135, 448
        %s4137 = scalar_lea.vmem [#allocation5], %s4136
        // Predicated region
        $region69: #{block17_pallas.5} parent=63 // pred_check
          %p4138 = pneg %p290
        $region70: #{block17_pallas.5} parent=63 // pred_check_branch
          %4140 = sbr.rel (%p4138) target = $region72
        $region71: #{block17_pallas.5} parent=63 // pred_region
          %4142 = vsyncadd %s4134, 0
          %s4143 = smul.addr %s26, 56
          %s4144 = smul.addr %s4143, 8
          %s4145 = scalar_lea.hbm %s11, %s4144
          %s4146 = sshll.u32 %s4137, 4
          %s4147 = int_to_ptr.vmem [resolvable:$true] %s4146
          %s4148 = sshll.u32 %s4145, 4
          %s4149 = int_to_ptr.hbm [resolvable:$true] %s4148
          %4154 = dma.vmem_to_hbm [thread:$0]  %s4147, 7168, %s4149, %s4134, 896, 896, 56
        $region72: #{block17_pallas.5} parent=63 // pred_fallthru
          _
      $region64: #{block17_pallas.5} parent=5 // pred_fallthru
        _
      %p4155 = scmp.le.s32.totalorder 2, %s21
      // Predicated region
      $region73: #{block17_pallas.5} parent=5 // pred_check
        %p4156 = pneg %p4155
      $region74: #{block17_pallas.5} parent=5 // pred_check_branch
        %4158 = sbr.rel (%p4156) target = $region76
      $region75: #{block17_pallas.5} parent=5 // pred_region
        %s4159 = ssub.s32 %s21, 2
        // Predicated region
        $region77: #{block17_pallas.5} parent=75 // pred_check
          %p4160 = pneg %p296
        $region78: #{block17_pallas.5} parent=75 // pred_check_branch
          %4162 = sbr.rel (%p4160) target = $region80
        $region79: #{block17_pallas.5} parent=75 // pred_region
          %s4163 = sand.u32 %s281, 1
          %s4164 = scalar_lea.sflag [#allocation4], %s4163
          %s4165 = sand.u32 %s281, 1
          %s4166 = smul.addr %s4165, 448
          %s4167 = scalar_lea.vmem [#allocation5], %s4166
          %4169 = dma.done %s4164, 7168
        $region80: #{block17_pallas.5} parent=75 // pred_fallthru
          _
      $region76: #{block17_pallas.5} parent=5 // pred_fallthru
        _
    $region6: #{block17_pallas.5} parent=1 // loop_footer
      %s25 = sadd.s32 1, %s21
    $region7: #{block17_pallas.5} parent=1 // loop_footer_branch
      %20 = sbr.rel target = $region3
    $region8: #{block17_pallas.5} parent=1 // loop_exit
      _
    %4170 = vsyncpa [#allocation3], 1
    %s4171 = scalar_lea.sflag [#allocation3], 1
    %4172 = vsyncpa %s4171, 1
    %4173 = vsyncpa [#allocation4], 1
    %s4174 = scalar_lea.sflag [#allocation4], 1
    %4175 = vsyncpa %s4174, 1

// kernel: block17_pallas.4
$region0: #{block17_pallas.4}
  #allocation0 [shape = 'u32[]', space=smem, size = 0x4, offset = 0x4, fixed_abs, tag = 'smem constant byte address 0x4 - core index']
  #allocation1 [shape = 'u32[72,128]{1,0:T(1,128)}', space=vmem, size = 0x9000, scoped, tag = 'internal scratch']
  %s0 = inlined_call_operand.vmem [shape: bf16[2,8,14,128], index: 0, kind: input, shape index: {}]
  %s1 = inlined_call_operand.vmem [shape: bf16[896,128], index: 1, kind: input, shape index: {}]
  %s2 = inlined_call_operand.vmem [shape: f32[1,128], index: 2, kind: input, shape index: {}]
  %s3 = inlined_call_operand.vmem [shape: f32[1,128], index: 3, kind: input, shape index: {}]
  %s4 = inlined_call_operand.hbm [shape: bf16[896,128], index: 4, kind: input, shape index: {}]
  %s5 = inlined_call_operand.vmem [shape: f32[1,128], index: 5, kind: input, shape index: {}]
  %s6 = inlined_call_operand.vmem [shape: f32[1,128], index: 6, kind: input, shape index: {}]
  %s7 = inlined_call_operand.vmem [shape: bf16[2,64,128], index: 7, kind: output, shape index: {}]
  %s8 = sld [smem:[#allocation0]]
  $region65: #{block17_pallas.4} parent=0
    _
  %s10 = ssub.s32 1, %s8
  %s11 = scalar_select 0, %s10, %s8
  $region1: #{block17_pallas.4} parent=0
    #allocation2 [shape = 'u8[229376]{0}', space=vmem, size = 0x38000, scoped, tag = 'input window, operand 4, single buffered']
    #allocation3 [shape = 's32[2]{0}', space=sflag, size = 0x8, scoped, tag = 'scoped memory for block17_pallas.4']
    %12 = vsyncpa [#allocation3], 0
    loop: start=0, step=1, limit=4
    $region2: #{block17_pallas.4} parent=1 // loop_pre_header
      _
    $region3: #{block17_pallas.4} parent=1 // loop_header
      %s14 = sphi 0, %s18
      %p15 = scmp.ge.s32.totalorder %s14, 4
      %s24 = sphi 0, %s26
      %s27 = sphi 0, %s24
      %s28 = sphi 0, %s27
      %s44 = sphi 0, %s28
      %s48 = sphi 0, %s48
      %s50 = sphi 0, %s48
      %s51 = sphi 0, %s50
      %s65 = sphi 0, %s51
      %s69 = sphi 0, %s69
      %s71 = sphi 0, %s69
      %s72 = sphi 0, %s71
      %s86 = sphi 0, %s72
      %s90 = sphi 0, %s90
      %s92 = sphi 0, %s90
      %s93 = sphi 0, %s92
      %s107 = sphi 0, %s93
      %s111 = sphi 0, %s111
      %s113 = sphi 0, %s111
      %s114 = sphi 0, %s113
      %s128 = sphi 0, %s114
      %s132 = sphi 0, %s132
      %s134 = sphi 0, %s132
      %s135 = sphi 0, %s134
      %s149 = sphi 0, %s135
      %s153 = sphi 0, %s153
      %s155 = sphi 0, %s153
      %s156 = sphi 0, %s155
      %s170 = sphi 0, %s156
      %s176 = sphi 0, %s178
      %s179 = sphi 0, %s176
      %s180 = sphi 0, %s179
      %s196 = sphi 0, %s180
    $region4: #{block17_pallas.4} parent=1 // loop_header_branch
      %17 = sbr.rel (%p15) target = $region8
    $region5: #{block17_pallas.4} parent=1 // loop_body
      %s19 = ssub.s32 %s14, 1
      %s20 = ssub.s32 %s14, 2
      %s21 = sadd.s32 %s14, 1
      %s22 = ssub.s32 %s14, %s21
      %p23 = scmp.eq.s32.totalorder %s22, 0
      %s25 = sadd.s32 %s24, 1
      %s26 = scalar_select %p23, %s24, %s25
      %p29 = pneg %p23
      %p30 = scmp.eq.s32.totalorder %s14, 1
      %p31 = por %p29, %p30
      %p32 = scmp.ne.s32.totalorder %s24, %s27
      %p33 = scmp.eq.s32.totalorder %s14, 0
      %p34 = por %p32, %p33
      %p35 = scmp.ne.s32.totalorder %s24, %s27
      %p36 = scmp.eq.s32.totalorder %s19, 1
      %p37 = por %p35, %p36
      %p38 = scmp.ne.s32.totalorder %s27, %s28
      %p39 = scmp.eq.s32.totalorder %s19, 0
      %p40 = por %p38, %p39
      %p41 = scmp.ne.s32.totalorder %s27, %s28
      %p42 = scmp.eq.s32.totalorder %s20, 1
      %p43 = por %p41, %p42
      %p45 = scmp.ne.s32.totalorder %s28, %s44
      %p46 = scmp.eq.s32.totalorder %s20, 0
      %p47 = por %p45, %p46
      %s49 = sadd.s32 %s48, 1
      %p52 = scmp.eq.s32.totalorder %s14, 1
      %p53 = scmp.ne.s32.totalorder %s48, %s50
      %p54 = scmp.eq.s32.totalorder %s14, 0
      %p55 = por %p53, %p54
      %p56 = scmp.ne.s32.totalorder %s48, %s50
      %p57 = scmp.eq.s32.totalorder %s19, 1
      %p58 = por %p56, %p57
      %p59 = scmp.ne.s32.totalorder %s50, %s51
      %p60 = scmp.eq.s32.totalorder %s19, 0
      %p61 = por %p59, %p60
      %p62 = scmp.ne.s32.totalorder %s50, %s51
      %p63 = scmp.eq.s32.totalorder %s20, 1
      %p64 = por %p62, %p63
      %p66 = scmp.ne.s32.totalorder %s51, %s65
      %p67 = scmp.eq.s32.totalorder %s20, 0
      %p68 = por %p66, %p67
      %s70 = sadd.s32 %s69, 1
      %p73 = scmp.eq.s32.totalorder %s14, 1
      %p74 = scmp.ne.s32.totalorder %s69, %s71
      %p75 = scmp.eq.s32.totalorder %s14, 0
      %p76 = por %p74, %p75
      %p77 = scmp.ne.s32.totalorder %s69, %s71
      %p78 = scmp.eq.s32.totalorder %s19, 1
      %p79 = por %p77, %p78
      %p80 = scmp.ne.s32.totalorder %s71, %s72
      %p81 = scmp.eq.s32.totalorder %s19, 0
      %p82 = por %p80, %p81
      %p83 = scmp.ne.s32.totalorder %s71, %s72
      %p84 = scmp.eq.s32.totalorder %s20, 1
      %p85 = por %p83, %p84
      %p87 = scmp.ne.s32.totalorder %s72, %s86
      %p88 = scmp.eq.s32.totalorder %s20, 0
      %p89 = por %p87, %p88
      %s91 = sadd.s32 %s90, 1
      %p94 = scmp.eq.s32.totalorder %s14, 1
      %p95 = scmp.ne.s32.totalorder %s90, %s92
      %p96 = scmp.eq.s32.totalorder %s14, 0
      %p97 = por %p95, %p96
      %p98 = scmp.ne.s32.totalorder %s90, %s92
      %p99 = scmp.eq.s32.totalorder %s19, 1
      %p100 = por %p98, %p99
      %p101 = scmp.ne.s32.totalorder %s92, %s93
      %p102 = scmp.eq.s32.totalorder %s19, 0
      %p103 = por %p101, %p102
      %p104 = scmp.ne.s32.totalorder %s92, %s93
      %p105 = scmp.eq.s32.totalorder %s20, 1
      %p106 = por %p104, %p105
      %p108 = scmp.ne.s32.totalorder %s93, %s107
      %p109 = scmp.eq.s32.totalorder %s20, 0
      %p110 = por %p108, %p109
      %s112 = sadd.s32 %s111, 1
      %p115 = scmp.eq.s32.totalorder %s14, 1
      %p116 = scmp.ne.s32.totalorder %s111, %s113
      %p117 = scmp.eq.s32.totalorder %s14, 0
      %p118 = por %p116, %p117
      %p119 = scmp.ne.s32.totalorder %s111, %s113
      %p120 = scmp.eq.s32.totalorder %s19, 1
      %p121 = por %p119, %p120
      %p122 = scmp.ne.s32.totalorder %s113, %s114
      %p123 = scmp.eq.s32.totalorder %s19, 0
      %p124 = por %p122, %p123
      %p125 = scmp.ne.s32.totalorder %s113, %s114
      %p126 = scmp.eq.s32.totalorder %s20, 1
      %p127 = por %p125, %p126
      %p129 = scmp.ne.s32.totalorder %s114, %s128
      %p130 = scmp.eq.s32.totalorder %s20, 0
      %p131 = por %p129, %p130
      %s133 = sadd.s32 %s132, 1
      %p136 = scmp.eq.s32.totalorder %s14, 1
      %p137 = scmp.ne.s32.totalorder %s132, %s134
      %p138 = scmp.eq.s32.totalorder %s14, 0
      %p139 = por %p137, %p138
      %p140 = scmp.ne.s32.totalorder %s132, %s134
      %p141 = scmp.eq.s32.totalorder %s19, 1
      %p142 = por %p140, %p141
      %p143 = scmp.ne.s32.totalorder %s134, %s135
      %p144 = scmp.eq.s32.totalorder %s19, 0
      %p145 = por %p143, %p144
      %p146 = scmp.ne.s32.totalorder %s134, %s135
      %p147 = scmp.eq.s32.totalorder %s20, 1
      %p148 = por %p146, %p147
      %p150 = scmp.ne.s32.totalorder %s135, %s149
      %p151 = scmp.eq.s32.totalorder %s20, 0
      %p152 = por %p150, %p151
      %s154 = sadd.s32 %s153, 1
      %p157 = scmp.eq.s32.totalorder %s14, 1
      %p158 = scmp.ne.s32.totalorder %s153, %s155
      %p159 = scmp.eq.s32.totalorder %s14, 0
      %p160 = por %p158, %p159
      %p161 = scmp.ne.s32.totalorder %s153, %s155
      %p162 = scmp.eq.s32.totalorder %s19, 1
      %p163 = por %p161, %p162
      %p164 = scmp.ne.s32.totalorder %s155, %s156
      %p165 = scmp.eq.s32.totalorder %s19, 0
      %p166 = por %p164, %p165
      %p167 = scmp.ne.s32.totalorder %s155, %s156
      %p168 = scmp.eq.s32.totalorder %s20, 1
      %p169 = por %p167, %p168
      %p171 = scmp.ne.s32.totalorder %s156, %s170
      %p172 = scmp.eq.s32.totalorder %s20, 0
      %p173 = por %p171, %p172
      %s174 = ssub.s32 %s14, %s21
      %p175 = scmp.eq.s32.totalorder %s174, 0
      %s177 = sadd.s32 %s176, 1
      %s178 = scalar_select %p175, %s176, %s177
      %p181 = pneg %p175
      %p182 = scmp.eq.s32.totalorder %s14, 1
      %p183 = por %p181, %p182
      %p184 = scmp.ne.s32.totalorder %s176, %s179
      %p185 = scmp.eq.s32.totalorder %s14, 0
      %p186 = por %p184, %p185
      %p187 = scmp.ne.s32.totalorder %s176, %s179
      %p188 = scmp.eq.s32.totalorder %s19, 1
      %p189 = por %p187, %p188
      %p190 = scmp.ne.s32.totalorder %s179, %s180
      %p191 = scmp.eq.s32.totalorder %s19, 0
      %p192 = por %p190, %p191
      %p193 = scmp.ne.s32.totalorder %s179, %s180
      %p194 = scmp.eq.s32.totalorder %s20, 1
      %p195 = por %p193, %p194
      %p197 = scmp.ne.s32.totalorder %s180, %s196
      %p198 = scmp.eq.s32.totalorder %s20, 0
      %p199 = por %p197, %p198
      %p200 = scmp.le.s32.totalorder 1, %s14
      %p201 = scmp.lt.s32.totalorder %s14, 3
      %p202 = pnand %p200, %p201
      %p203 = pneg %p202
      // Predicated region
      $region9: #{block17_pallas.4} parent=5 // pred_check
        _
      $region10: #{block17_pallas.4} parent=5 // pred_check_branch
        %205 = sbr.rel (%p202) target = $region12
      $region11: #{block17_pallas.4} parent=5 // pred_region
        %s206 = ssub.s32 %s14, 1
        // Predicated region
        $region13: #{block17_pallas.4} parent=11 // pred_check
          %p207 = pneg %p61
        $region14: #{block17_pallas.4} parent=11 // pred_check_branch
          %209 = sbr.rel (%p207) target = $region16
        $region15: #{block17_pallas.4} parent=11 // pred_region
          _
        $region16: #{block17_pallas.4} parent=11 // pred_fallthru
          _
        // Predicated region
        $region17: #{block17_pallas.4} parent=11 // pred_check
          %p210 = pneg %p82
        $region18: #{block17_pallas.4} parent=11 // pred_check_branch
          %212 = sbr.rel (%p210) target = $region20
        $region19: #{block17_pallas.4} parent=11 // pred_region
          _
        $region20: #{block17_pallas.4} parent=11 // pred_fallthru
          _
        // Predicated region
        $region21: #{block17_pallas.4} parent=11 // pred_check
          %p213 = pneg %p103
        $region22: #{block17_pallas.4} parent=11 // pred_check_branch
          %215 = sbr.rel (%p213) target = $region24
        $region23: #{block17_pallas.4} parent=11 // pred_region
          _
        $region24: #{block17_pallas.4} parent=11 // pred_fallthru
          _
        // Predicated region
        $region25: #{block17_pallas.4} parent=11 // pred_check
          %p216 = pneg %p124
        $region26: #{block17_pallas.4} parent=11 // pred_check_branch
          %218 = sbr.rel (%p216) target = $region28
        $region27: #{block17_pallas.4} parent=11 // pred_region
          %220 = vsyncadd [#allocation3], 0
          %s221 = sshll.u32 %s4, 4
          %s222 = int_to_ptr.hbm [resolvable:$true] %s221
          %s223 = sshll.u32 [#allocation2], 4
          %s224 = int_to_ptr.vmem [resolvable:$true] %s223
          %229 = dma.hbm_to_vmem [thread:$0]  %s222, 7168, %s224, [#allocation3], 64, 64, 4
        $region28: #{block17_pallas.4} parent=11 // pred_fallthru
          _
        // Predicated region
        $region29: #{block17_pallas.4} parent=11 // pred_check
          %p230 = pneg %p145
        $region30: #{block17_pallas.4} parent=11 // pred_check_branch
          %232 = sbr.rel (%p230) target = $region32
        $region31: #{block17_pallas.4} parent=11 // pred_region
          _
        $region32: #{block17_pallas.4} parent=11 // pred_fallthru
          _
        // Predicated region
        $region33: #{block17_pallas.4} parent=11 // pred_check
          %p233 = pneg %p166
        $region34: #{block17_pallas.4} parent=11 // pred_check_branch
          %235 = sbr.rel (%p233) target = $region36
        $region35: #{block17_pallas.4} parent=11 // pred_region
          _
        $region36: #{block17_pallas.4} parent=11 // pred_fallthru
          _
      $region12: #{block17_pallas.4} parent=5 // pred_fallthru
        _
      %p236 = scmp.lt.s32.totalorder %s14, 2
      // Predicated region
      $region37: #{block17_pallas.4} parent=5 // pred_check
        %p237 = pneg %p236
      $region38: #{block17_pallas.4} parent=5 // pred_check_branch
        %239 = sbr.rel (%p237) target = $region40
      $region39: #{block17_pallas.4} parent=5 // pred_region
        // Predicated region
        $region41: #{block17_pallas.4} parent=39 // pred_check
          %p240 = pneg %p34
        $region42: #{block17_pallas.4} parent=39 // pred_check_branch
          %242 = sbr.rel (%p240) target = $region44
        $region43: #{block17_pallas.4} parent=39 // pred_region
          %p243 = scmp.lt.s32.totalorder %s14, 1
          %s244 = scalar_select %p243, %s14, 1
          %s245 = smul.addr %s244, 16
          %s246 = smul.addr %s245, 4
          %s247 = scalar_lea.vmem %s0, %s246
        $region44: #{block17_pallas.4} parent=39 // pred_fallthru
          _
      $region40: #{block17_pallas.4} parent=5 // pred_fallthru
        _
      %p248 = scmp.le.s32.totalorder 1, %s14
      %p249 = scmp.lt.s32.totalorder %s14, 3
      %p250 = pnand %p248, %p249
      %p251 = pneg %p250
      // Predicated region
      $region45: #{block17_pallas.4} parent=5 // pred_check
        _
      $region46: #{block17_pallas.4} parent=5 // pred_check_branch
        %253 = sbr.rel (%p250) target = $region48
      $region47: #{block17_pallas.4} parent=5 // pred_region
        %s254 = ssub.s32 %s14, 1
        // Predicated region
        $region49: #{block17_pallas.4} parent=47 // pred_check
          %p255 = pneg %p124
        $region50: #{block17_pallas.4} parent=47 // pred_check_branch
          %257 = sbr.rel (%p255) target = $region52
        $region51: #{block17_pallas.4} parent=47 // pred_region
          %259 = dma.done [#allocation3], 7168
        $region52: #{block17_pallas.4} parent=47 // pred_fallthru
          _
        %p260 = scmp.lt.s32.totalorder %s19, 1
        %s261 = scalar_select %p260, %s19, 1
        %s262 = smul.addr %s261, 16
        %s263 = smul.addr %s262, 4
        %s264 = scalar_lea.vmem %s0, %s263
        %p265 = pneg %p40
        %p266 = pneg %p37
        %p267 = pneg %p61
        %p268 = pneg %p58
        %p269 = pneg %p82
        %p270 = pneg %p79
        %p271 = pneg %p103
        %p272 = pneg %p100
        %p273 = pneg %p124
        %p274 = pneg %p121
        %p275 = pneg %p145
        %p276 = pneg %p142
        %p277 = pneg %p166
        %p278 = pneg %p163
        %p279 = pneg %p192
        %p280 = pneg %p189
        %p281 = scmp.lt.s32.totalorder %s19, 1
        %s282 = scalar_select %p281, %s19, 1
        %s283 = smul.addr %s282, 8
        %s284 = smul.addr %s283, 4
        %s285 = scalar_lea.vmem %s7, %s284
        %p286 = scmp.lt.s32.totalorder %s19, 1
        %s287 = scalar_select %p286, %s19, 1
        %s288 = smul.addr %s287, 16
        %s289 = smul.addr %s288, 4
        %s290 = scalar_lea.vmem %s0, %s289
        %p291 = scmp.lt.s32.totalorder %s19, 1
        %s292 = scalar_select %p291, %s19, 1
        %s293 = smul.addr %s292, 8
        %s294 = smul.addr %s293, 4
        %s295 = scalar_lea.vmem %s7, %s294
        %v297 = vld [vmem:[%s290] sm:$0xf]
        %v298 = vld [vmem:[%s290 + $0x4] sm:$0x7]
        %v299 = vld [vmem:[%s290 + $0x8] sm:$0xf]
        %v300 = vld [vmem:[%s290 + $0xc] sm:$0x7]
        %v301 = vld [vmem:[%s290 + $0x10] sm:$0xf]
        %v302 = vld [vmem:[%s290 + $0x14] sm:$0x7]
        %v303 = vld [vmem:[%s290 + $0x18] sm:$0xf]
        %v304 = vld [vmem:[%s290 + $0x1c] sm:$0x7]
        %v305 = vld [vmem:[%s290 + $0x20] sm:$0xf]
        %v306 = vld [vmem:[%s290 + $0x24] sm:$0x7]
        %v307 = vld [vmem:[%s290 + $0x28] sm:$0xf]
        %v308 = vld [vmem:[%s290 + $0x2c] sm:$0x7]
        %v309 = vld [vmem:[%s290 + $0x30] sm:$0xf]
        %v310 = vld [vmem:[%s290 + $0x34] sm:$0x7]
        %v311 = vld [vmem:[%s290 + $0x38] sm:$0xf]
        %v312 = vld [vmem:[%s290 + $0x3c] sm:$0x7]
        %v329 = vunpack.c.l.b16 %v297
        %v330 = vunpack.c.l.b16 %v298
        %v331 = vunpack.c.l.b16 %v299
        %v332 = vunpack.c.l.b16 %v300
        %v333 = vunpack.c.l.b16 %v301
        %v334 = vunpack.c.l.b16 %v302
        %v335 = vunpack.c.l.b16 %v303
        %v336 = vunpack.c.l.b16 %v304
        %v337 = vunpack.c.l.b16 %v305
        %v338 = vunpack.c.l.b16 %v306
        %v339 = vunpack.c.l.b16 %v307
        %v340 = vunpack.c.l.b16 %v308
        %v341 = vunpack.c.l.b16 %v309
        %v342 = vunpack.c.l.b16 %v310
        %v343 = vunpack.c.l.b16 %v311
        %v344 = vunpack.c.l.b16 %v312
        %v345 = vpack.c.b16 %v330, %v329
        %v346 = vpack.c.b16 %v332, %v331
        %v347 = vpack.c.b16 %v334, %v333
        %v348 = vpack.c.b16 %v336, %v335
        %v349 = vpack.c.b16 %v338, %v337
        %v350 = vpack.c.b16 %v340, %v339
        %v351 = vpack.c.b16 %v342, %v341
        %v352 = vpack.c.b16 %v344, %v343
        %v354 = vshrl.u32 %v345, 16
        %v356 = vshll.u32 %v345, 16
        %v358 = vrot.slane %v356, 1
        %v359 = vor.u32 %v354, %v358
        %v361 = vshrl.u32 %v346, 16
        %v363 = vshll.u32 %v346, 16
        %v365 = vrot.slane %v363, 1
        %v366 = vor.u32 %v361, %v365
        %v368 = vshrl.u32 %v347, 16
        %v370 = vshll.u32 %v347, 16
        %v372 = vrot.slane %v370, 1
        %v373 = vor.u32 %v368, %v372
        %v375 = vshrl.u32 %v348, 16
        %v377 = vshll.u32 %v348, 16
        %v379 = vrot.slane %v377, 1
        %v380 = vor.u32 %v375, %v379
        %v382 = vshrl.u32 %v349, 16
        %v384 = vshll.u32 %v349, 16
        %v386 = vrot.slane %v384, 1
        %v387 = vor.u32 %v382, %v386
        %v389 = vshrl.u32 %v350, 16
        %v391 = vshll.u32 %v350, 16
        %v393 = vrot.slane %v391, 1
        %v394 = vor.u32 %v389, %v393
        %v396 = vshrl.u32 %v351, 16
        %v398 = vshll.u32 %v351, 16
        %v400 = vrot.slane %v398, 1
        %v401 = vor.u32 %v396, %v400
        %v403 = vshrl.u32 %v352, 16
        %v405 = vshll.u32 %v352, 16
        %v407 = vrot.slane %v405, 1
        %v408 = vor.u32 %v403, %v407
        %v409 = vrot.slane %v345, 1
        %v410 = vrot.slane %v346, 1
        %v411 = vrot.slane %v347, 1
        %v412 = vrot.slane %v348, 1
        %v413 = vrot.slane %v349, 1
        %v414 = vrot.slane %v350, 1
        %v415 = vrot.slane %v351, 1
        %v416 = vrot.slane %v352, 1
        %v417 = vrot.slane %v354, 1
        %v418 = vrot.slane %v356, 2
        %v419 = vor.u32 %v417, %v418
        %v420 = vrot.slane %v361, 1
        %v421 = vrot.slane %v363, 2
        %v422 = vor.u32 %v420, %v421
        %v423 = vrot.slane %v368, 1
        %v424 = vrot.slane %v370, 2
        %v425 = vor.u32 %v423, %v424
        %v426 = vrot.slane %v375, 1
        %v427 = vrot.slane %v377, 2
        %v428 = vor.u32 %v426, %v427
        %v429 = vrot.slane %v382, 1
        %v430 = vrot.slane %v384, 2
        %v431 = vor.u32 %v429, %v430
        %v432 = vrot.slane %v389, 1
        %v433 = vrot.slane %v391, 2
        %v434 = vor.u32 %v432, %v433
        %v435 = vrot.slane %v396, 1
        %v436 = vrot.slane %v398, 2
        %v437 = vor.u32 %v435, %v436
        %v438 = vrot.slane %v403, 1
        %v439 = vrot.slane %v405, 2
        %v440 = vor.u32 %v438, %v439
        %v441 = vrot.slane %v345, 2
        %v442 = vrot.slane %v346, 2
        %v443 = vrot.slane %v347, 2
        %v444 = vrot.slane %v348, 2
        %v445 = vrot.slane %v349, 2
        %v446 = vrot.slane %v350, 2
        %v447 = vrot.slane %v351, 2
        %v448 = vrot.slane %v352, 2
        %v449 = vrot.slane %v354, 2
        %v450 = vrot.slane %v356, 3
        %v451 = vor.u32 %v449, %v450
        %v452 = vrot.slane %v361, 2
        %v453 = vrot.slane %v363, 3
        %v454 = vor.u32 %v452, %v453
        %v455 = vrot.slane %v368, 2
        %v456 = vrot.slane %v370, 3
        %v457 = vor.u32 %v455, %v456
        %v458 = vrot.slane %v375, 2
        %v459 = vrot.slane %v377, 3
        %v460 = vor.u32 %v458, %v459
        %v461 = vrot.slane %v382, 2
        %v462 = vrot.slane %v384, 3
        %v463 = vor.u32 %v461, %v462
        %v464 = vrot.slane %v389, 2
        %v465 = vrot.slane %v391, 3
        %v466 = vor.u32 %v464, %v465
        %v467 = vrot.slane %v396, 2
        %v468 = vrot.slane %v398, 3
        %v469 = vor.u32 %v467, %v468
        %v470 = vrot.slane %v403, 2
        %v471 = vrot.slane %v405, 3
        %v472 = vor.u32 %v470, %v471
        %v473 = vrot.slane %v345, 3
        %v474 = vrot.slane %v346, 3
        %v475 = vrot.slane %v347, 3
        %v476 = vrot.slane %v348, 3
        %v477 = vrot.slane %v349, 3
        %v478 = vrot.slane %v350, 3
        %v479 = vrot.slane %v351, 3
        %v480 = vrot.slane %v352, 3
        %v481 = vunpack.c.l.b16 %v359
        %v482 = vunpack.c.l.b16 %v409
        %v483 = vunpack.c.l.b16 %v419
        %v484 = vunpack.c.l.b16 %v441
        %v485 = vunpack.c.l.b16 %v451
        %v486 = vunpack.c.l.b16 %v473
        %v487 = vunpack.c.l.b16 %v366
        %v488 = vunpack.c.l.b16 %v410
        %v489 = vunpack.c.l.b16 %v422
        %v490 = vunpack.c.l.b16 %v442
        %v491 = vunpack.c.l.b16 %v454
        %v492 = vunpack.c.l.b16 %v474
        %v493 = vunpack.c.l.b16 %v373
        %v494 = vunpack.c.l.b16 %v411
        %v495 = vunpack.c.l.b16 %v425
        %v496 = vunpack.c.l.b16 %v443
        %v497 = vunpack.c.l.b16 %v457
        %v498 = vunpack.c.l.b16 %v475
        %v499 = vunpack.c.l.b16 %v380
        %v500 = vunpack.c.l.b16 %v412
        %v501 = vunpack.c.l.b16 %v428
        %v502 = vunpack.c.l.b16 %v444
        %v503 = vunpack.c.l.b16 %v460
        %v504 = vunpack.c.l.b16 %v476
        %v505 = vunpack.c.l.b16 %v387
        %v506 = vunpack.c.l.b16 %v413
        %v507 = vunpack.c.l.b16 %v431
        %v508 = vunpack.c.l.b16 %v445
        %v509 = vunpack.c.l.b16 %v463
        %v510 = vunpack.c.l.b16 %v477
        %v511 = vunpack.c.l.b16 %v394
        %v512 = vunpack.c.l.b16 %v414
        %v513 = vunpack.c.l.b16 %v434
        %v514 = vunpack.c.l.b16 %v446
        %v515 = vunpack.c.l.b16 %v466
        %v516 = vunpack.c.l.b16 %v478
        %v517 = vunpack.c.l.b16 %v401
        %v518 = vunpack.c.l.b16 %v415
        %v519 = vunpack.c.l.b16 %v437
        %v520 = vunpack.c.l.b16 %v447
        %v521 = vunpack.c.l.b16 %v469
        %v522 = vunpack.c.l.b16 %v479
        %v523 = vunpack.c.l.b16 %v408
        %v524 = vunpack.c.l.b16 %v416
        %v525 = vunpack.c.l.b16 %v440
        %v526 = vunpack.c.l.b16 %v448
        %v527 = vunpack.c.l.b16 %v472
        %v528 = vunpack.c.l.b16 %v480
        %v529 = vld [vmem:[%s1] sm:$0xf]
        %v530 = vld [vmem:[%s1 + $0x4] sm:$0xf]
        %v531 = vld [vmem:[%s1 + $0x8] sm:$0xf]
        %v532 = vld [vmem:[%s1 + $0xc] sm:$0xf]
        %v533 = vld [vmem:[%s1 + $0x10] sm:$0xf]
        %v534 = vld [vmem:[%s1 + $0x14] sm:$0xf]
        %v535 = vld [vmem:[%s1 + $0x18] sm:$0xf]
        %v536 = vld [vmem:[%s1 + $0x1c] sm:$0xf]
        %v537 = vld [vmem:[%s1 + $0x20] sm:$0xf]
        %v538 = vld [vmem:[%s1 + $0x24] sm:$0xf]
        %v539 = vld [vmem:[%s1 + $0x28] sm:$0xf]
        %v540 = vld [vmem:[%s1 + $0x2c] sm:$0xf]
        %v541 = vld [vmem:[%s1 + $0x30] sm:$0xf]
        %v542 = vld [vmem:[%s1 + $0x34] sm:$0xf]
        %v543 = vld [vmem:[%s1 + $0x38] sm:$0xf]
        %v544 = vld [vmem:[%s1 + $0x3c] sm:$0xf]
        %v545 = vld [vmem:[%s1 + $0x40] sm:$0xf]
        %v546 = vld [vmem:[%s1 + $0x44] sm:$0xf]
        %v547 = vld [vmem:[%s1 + $0x48] sm:$0xf]
        %v548 = vld [vmem:[%s1 + $0x4c] sm:$0xf]
        %v549 = vld [vmem:[%s1 + $0x50] sm:$0xf]
        %v550 = vld [vmem:[%s1 + $0x54] sm:$0xf]
        %v551 = vld [vmem:[%s1 + $0x58] sm:$0xf]
        %v552 = vld [vmem:[%s1 + $0x5c] sm:$0xf]
        %v553 = vld [vmem:[%s1 + $0x60] sm:$0xf]
        %v554 = vld [vmem:[%s1 + $0x64] sm:$0xf]
        %v555 = vld [vmem:[%s1 + $0x68] sm:$0xf]
        %v556 = vld [vmem:[%s1 + $0x6c] sm:$0xf]
        %v557 = vld [vmem:[%s1 + $0x70] sm:$0xf]
        %v558 = vld [vmem:[%s1 + $0x74] sm:$0xf]
        %v559 = vld [vmem:[%s1 + $0x78] sm:$0xf]
        %v560 = vld [vmem:[%s1 + $0x7c] sm:$0xf]
        %v561 = vld [vmem:[%s1 + $0x80] sm:$0xf]
        %v562 = vld [vmem:[%s1 + $0x84] sm:$0xf]
        %v563 = vld [vmem:[%s1 + $0x88] sm:$0xf]
        %v564 = vld [vmem:[%s1 + $0x8c] sm:$0xf]
        %v565 = vld [vmem:[%s1 + $0x90] sm:$0xf]
        %v566 = vld [vmem:[%s1 + $0x94] sm:$0xf]
        %v567 = vld [vmem:[%s1 + $0x98] sm:$0xf]
        %v568 = vld [vmem:[%s1 + $0x9c] sm:$0xf]
        %v569 = vld [vmem:[%s1 + $0xa0] sm:$0xf]
        %v570 = vld [vmem:[%s1 + $0xa4] sm:$0xf]
        %v571 = vld [vmem:[%s1 + $0xa8] sm:$0xf]
        %v572 = vld [vmem:[%s1 + $0xac] sm:$0xf]
        %v573 = vld [vmem:[%s1 + $0xb0] sm:$0xf]
        %v574 = vld [vmem:[%s1 + $0xb4] sm:$0xf]
        %v575 = vld [vmem:[%s1 + $0xb8] sm:$0xf]
        %v576 = vld [vmem:[%s1 + $0xbc] sm:$0xf]
        %v577 = vld [vmem:[%s1 + $0xc0] sm:$0xf]
        %v578 = vld [vmem:[%s1 + $0xc4] sm:$0xf]
        %v579 = vld [vmem:[%s1 + $0xc8] sm:$0xf]
        %v580 = vld [vmem:[%s1 + $0xcc] sm:$0xf]
        %v581 = vld [vmem:[%s1 + $0xd0] sm:$0xf]
        %v582 = vld [vmem:[%s1 + $0xd4] sm:$0xf]
        %v583 = vld [vmem:[%s1 + $0xd8] sm:$0xf]
        %v584 = vld [vmem:[%s1 + $0xdc] sm:$0xf]
        %v585 = vld [vmem:[%s1 + $0xe0] sm:$0xf]
        %v586 = vld [vmem:[%s1 + $0xe4] sm:$0xf]
        %v587 = vld [vmem:[%s1 + $0xe8] sm:$0xf]
        %v588 = vld [vmem:[%s1 + $0xec] sm:$0xf]
        %v589 = vld [vmem:[%s1 + $0xf0] sm:$0xf]
        %v590 = vld [vmem:[%s1 + $0xf4] sm:$0xf]
        %v591 = vld [vmem:[%s1 + $0xf8] sm:$0xf]
        %v592 = vld [vmem:[%s1 + $0xfc] sm:$0xf]
        %v593 = vld [vmem:[%s1 + $0x100] sm:$0xf]
        %v594 = vld [vmem:[%s1 + $0x104] sm:$0xf]
        %v595 = vld [vmem:[%s1 + $0x108] sm:$0xf]
        %v596 = vld [vmem:[%s1 + $0x10c] sm:$0xf]
        %v597 = vld [vmem:[%s1 + $0x110] sm:$0xf]
        %v598 = vld [vmem:[%s1 + $0x114] sm:$0xf]
        %v599 = vld [vmem:[%s1 + $0x118] sm:$0xf]
        %v600 = vld [vmem:[%s1 + $0x11c] sm:$0xf]
        %v601 = vld [vmem:[%s1 + $0x120] sm:$0xf]
        %v602 = vld [vmem:[%s1 + $0x124] sm:$0xf]
        %v603 = vld [vmem:[%s1 + $0x128] sm:$0xf]
        %v604 = vld [vmem:[%s1 + $0x12c] sm:$0xf]
        %v605 = vld [vmem:[%s1 + $0x130] sm:$0xf]
        %v606 = vld [vmem:[%s1 + $0x134] sm:$0xf]
        %v607 = vld [vmem:[%s1 + $0x138] sm:$0xf]
        %v608 = vld [vmem:[%s1 + $0x13c] sm:$0xf]
        %v609 = vld [vmem:[%s1 + $0x140] sm:$0xf]
        %v610 = vld [vmem:[%s1 + $0x144] sm:$0xf]
        %v611 = vld [vmem:[%s1 + $0x148] sm:$0xf]
        %v612 = vld [vmem:[%s1 + $0x14c] sm:$0xf]
        %v613 = vld [vmem:[%s1 + $0x150] sm:$0xf]
        %v614 = vld [vmem:[%s1 + $0x154] sm:$0xf]
        %v615 = vld [vmem:[%s1 + $0x158] sm:$0xf]
        %v616 = vld [vmem:[%s1 + $0x15c] sm:$0xf]
        %v617 = vld [vmem:[%s1 + $0x160] sm:$0xf]
        %v618 = vld [vmem:[%s1 + $0x164] sm:$0xf]
        %v619 = vld [vmem:[%s1 + $0x168] sm:$0xf]
        %v620 = vld [vmem:[%s1 + $0x16c] sm:$0xf]
        %v621 = vld [vmem:[%s1 + $0x170] sm:$0xf]
        %v622 = vld [vmem:[%s1 + $0x174] sm:$0xf]
        %v623 = vld [vmem:[%s1 + $0x178] sm:$0xf]
        %v624 = vld [vmem:[%s1 + $0x17c] sm:$0xf]
        %v625 = vld [vmem:[%s1 + $0x180] sm:$0xf]
        %v626 = vld [vmem:[%s1 + $0x184] sm:$0xf]
        %v627 = vld [vmem:[%s1 + $0x188] sm:$0xf]
        %v628 = vld [vmem:[%s1 + $0x18c] sm:$0xf]
        %v629 = vld [vmem:[%s1 + $0x190] sm:$0xf]
        %v630 = vld [vmem:[%s1 + $0x194] sm:$0xf]
        %v631 = vld [vmem:[%s1 + $0x198] sm:$0xf]
        %v632 = vld [vmem:[%s1 + $0x19c] sm:$0xf]
        %v633 = vld [vmem:[%s1 + $0x1a0] sm:$0xf]
        %v634 = vld [vmem:[%s1 + $0x1a4] sm:$0xf]
        %v635 = vld [vmem:[%s1 + $0x1a8] sm:$0xf]
        %v636 = vld [vmem:[%s1 + $0x1ac] sm:$0xf]
        %v637 = vld [vmem:[%s1 + $0x1b0] sm:$0xf]
        %v638 = vld [vmem:[%s1 + $0x1b4] sm:$0xf]
        %v639 = vld [vmem:[%s1 + $0x1b8] sm:$0xf]
        %v640 = vld [vmem:[%s1 + $0x1bc] sm:$0xf]
        %v641 = vpack.c.b16 %v331, %v329
        %v642 = vpack.c.b16 %v487, %v481
        %v643 = vpack.c.b16 %v488, %v482
        %v644 = vpack.c.b16 %v489, %v483
        %v645 = vpack.c.b16 %v490, %v484
        %v646 = vpack.c.b16 %v491, %v485
        %v647 = vpack.c.b16 %v492, %v486
        %v648 = vpack.c.b16 %v335, %v333
        %v649 = vpack.c.b16 %v499, %v493
        %v650 = vpack.c.b16 %v500, %v494
        %v651 = vpack.c.b16 %v501, %v495
        %v652 = vpack.c.b16 %v502, %v496
        %v653 = vpack.c.b16 %v503, %v497
        %v654 = vpack.c.b16 %v504, %v498
        %v655 = vpack.c.b16 %v339, %v337
        %v656 = vpack.c.b16 %v511, %v505
        %v657 = vpack.c.b16 %v512, %v506
        %v658 = vpack.c.b16 %v513, %v507
        %v659 = vpack.c.b16 %v514, %v508
        %v660 = vpack.c.b16 %v515, %v509
        %v661 = vpack.c.b16 %v516, %v510
        %v662 = vpack.c.b16 %v343, %v341
        %v663 = vpack.c.b16 %v523, %v517
        %v664 = vpack.c.b16 %v524, %v518
        %v665 = vpack.c.b16 %v525, %v519
        %v666 = vpack.c.b16 %v526, %v520
        %v667 = vpack.c.b16 %v527, %v521
        %v668 = vpack.c.b16 %v528, %v522
        %v809 = vunpack.c.l.b16 %v529
        %v810 = vunpack.c.l.b16 %v530
        %v811 = vunpack.c.l.b16 %v531
        %v812 = vunpack.c.l.b16 %v532
        %v813 = vunpack.c.l.b16 %v533
        %v814 = vunpack.c.l.b16 %v534
        %v815 = vunpack.c.l.b16 %v535
        %v816 = vunpack.c.l.b16 %v536
        %v817 = vunpack.c.l.b16 %v537
        %v818 = vunpack.c.l.b16 %v538
        %v819 = vunpack.c.l.b16 %v539
        %v820 = vunpack.c.l.b16 %v540
        %v821 = vunpack.c.l.b16 %v541
        %v822 = vunpack.c.l.b16 %v542
        %v823 = vunpack.c.l.b16 %v543
        %v824 = vunpack.c.l.b16 %v544
        %v825 = vunpack.c.l.b16 %v545
        %v826 = vunpack.c.l.b16 %v546
        %v827 = vunpack.c.l.b16 %v547
        %v828 = vunpack.c.l.b16 %v548
        %v829 = vunpack.c.l.b16 %v549
        %v830 = vunpack.c.l.b16 %v550
        %v831 = vunpack.c.l.b16 %v551
        %v832 = vunpack.c.l.b16 %v552
        %v833 = vunpack.c.l.b16 %v553
        %v834 = vunpack.c.l.b16 %v554
        %v835 = vunpack.c.l.b16 %v555
        %v836 = vunpack.c.l.b16 %v556
        %v837 = vunpack.c.l.b16 %v557
        %v838 = vunpack.c.l.b16 %v558
        %v839 = vunpack.c.l.b16 %v559
        %v840 = vunpack.c.l.b16 %v560
        %v841 = vunpack.c.l.b16 %v561
        %v842 = vunpack.c.l.b16 %v562
        %v843 = vunpack.c.l.b16 %v563
        %v844 = vunpack.c.l.b16 %v564
        %v845 = vunpack.c.l.b16 %v565
        %v846 = vunpack.c.l.b16 %v566
        %v847 = vunpack.c.l.b16 %v567
        %v848 = vunpack.c.l.b16 %v568
        %v849 = vunpack.c.l.b16 %v569
        %v850 = vunpack.c.l.b16 %v570
        %v851 = vunpack.c.l.b16 %v571
        %v852 = vunpack.c.l.b16 %v572
        %v853 = vunpack.c.l.b16 %v573
        %v854 = vunpack.c.l.b16 %v574
        %v855 = vunpack.c.l.b16 %v575
        %v856 = vunpack.c.l.b16 %v576
        %v857 = vunpack.c.l.b16 %v577
        %v858 = vunpack.c.l.b16 %v578
        %v859 = vunpack.c.l.b16 %v579
        %v860 = vunpack.c.l.b16 %v580
        %v861 = vunpack.c.l.b16 %v581
        %v862 = vunpack.c.l.b16 %v582
        %v863 = vunpack.c.l.b16 %v583
        %v864 = vunpack.c.l.b16 %v584
        %v865 = vunpack.c.l.b16 %v585
        %v866 = vunpack.c.l.b16 %v586
        %v867 = vunpack.c.l.b16 %v587
        %v868 = vunpack.c.l.b16 %v588
        %v869 = vunpack.c.l.b16 %v589
        %v870 = vunpack.c.l.b16 %v590
        %v871 = vunpack.c.l.b16 %v591
        %v872 = vunpack.c.l.b16 %v592
        %v873 = vunpack.c.l.b16 %v593
        %v874 = vunpack.c.l.b16 %v594
        %v875 = vunpack.c.l.b16 %v595
        %v876 = vunpack.c.l.b16 %v596
        %v877 = vunpack.c.l.b16 %v597
        %v878 = vunpack.c.l.b16 %v598
        %v879 = vunpack.c.l.b16 %v599
        %v880 = vunpack.c.l.b16 %v600
        %v881 = vunpack.c.l.b16 %v601
        %v882 = vunpack.c.l.b16 %v602
        %v883 = vunpack.c.l.b16 %v603
        %v884 = vunpack.c.l.b16 %v604
        %v885 = vunpack.c.l.b16 %v605
        %v886 = vunpack.c.l.b16 %v606
        %v887 = vunpack.c.l.b16 %v607
        %v888 = vunpack.c.l.b16 %v608
        %v889 = vunpack.c.l.b16 %v609
        %v890 = vunpack.c.l.b16 %v610
        %v891 = vunpack.c.l.b16 %v611
        %v892 = vunpack.c.l.b16 %v612
        %v893 = vunpack.c.l.b16 %v613
        %v894 = vunpack.c.l.b16 %v614
        %v895 = vunpack.c.l.b16 %v615
        %v896 = vunpack.c.l.b16 %v616
        %v897 = vunpack.c.l.b16 %v617
        %v898 = vunpack.c.l.b16 %v618
        %v899 = vunpack.c.l.b16 %v619
        %v900 = vunpack.c.l.b16 %v620
        %v901 = vunpack.c.l.b16 %v621
        %v902 = vunpack.c.l.b16 %v622
        %v903 = vunpack.c.l.b16 %v623
        %v904 = vunpack.c.l.b16 %v624
        %v905 = vunpack.c.l.b16 %v625
        %v906 = vunpack.c.l.b16 %v626
        %v907 = vunpack.c.l.b16 %v627
        %v908 = vunpack.c.l.b16 %v628
        %v909 = vunpack.c.l.b16 %v629
        %v910 = vunpack.c.l.b16 %v630
        %v911 = vunpack.c.l.b16 %v631
        %v912 = vunpack.c.l.b16 %v632
        %v913 = vunpack.c.l.b16 %v633
        %v914 = vunpack.c.l.b16 %v634
        %v915 = vunpack.c.l.b16 %v635
        %v916 = vunpack.c.l.b16 %v636
        %v917 = vunpack.c.l.b16 %v637
        %v918 = vunpack.c.l.b16 %v638
        %v919 = vunpack.c.l.b16 %v639
        %v920 = vunpack.c.l.b16 %v640
        %v921 = vpack.c.b16 %v810, %v809
        %v922 = vpack.c.b16 %v812, %v811
        %v923 = vpack.c.b16 %v814, %v813
        %v924 = vpack.c.b16 %v816, %v815
        %v925 = vpack.c.b16 %v818, %v817
        %v926 = vpack.c.b16 %v820, %v819
        %v927 = vpack.c.b16 %v822, %v821
        %v928 = vpack.c.b16 %v824, %v823
        %v929 = vpack.c.b16 %v826, %v825
        %v930 = vpack.c.b16 %v828, %v827
        %v931 = vpack.c.b16 %v830, %v829
        %v932 = vpack.c.b16 %v832, %v831
        %v933 = vpack.c.b16 %v834, %v833
        %v934 = vpack.c.b16 %v836, %v835
        %v935 = vpack.c.b16 %v838, %v837
        %v936 = vpack.c.b16 %v840, %v839
        %v937 = vpack.c.b16 %v842, %v841
        %v938 = vpack.c.b16 %v844, %v843
        %v939 = vpack.c.b16 %v846, %v845
        %v940 = vpack.c.b16 %v848, %v847
        %v941 = vpack.c.b16 %v850, %v849
        %v942 = vpack.c.b16 %v852, %v851
        %v943 = vpack.c.b16 %v854, %v853
        %v944 = vpack.c.b16 %v856, %v855
        %v945 = vpack.c.b16 %v858, %v857
        %v946 = vpack.c.b16 %v860, %v859
        %v947 = vpack.c.b16 %v862, %v861
        %v948 = vpack.c.b16 %v864, %v863
        %v949 = vpack.c.b16 %v866, %v865
        %v950 = vpack.c.b16 %v868, %v867
        %v951 = vpack.c.b16 %v870, %v869
        %v952 = vpack.c.b16 %v872, %v871
        %v953 = vpack.c.b16 %v874, %v873
        %v954 = vpack.c.b16 %v876, %v875
        %v955 = vpack.c.b16 %v878, %v877
        %v956 = vpack.c.b16 %v880, %v879
        %v957 = vpack.c.b16 %v882, %v881
        %v958 = vpack.c.b16 %v884, %v883
        %v959 = vpack.c.b16 %v886, %v885
        %v960 = vpack.c.b16 %v888, %v887
        %v961 = vpack.c.b16 %v890, %v889
        %v962 = vpack.c.b16 %v892, %v891
        %v963 = vpack.c.b16 %v894, %v893
        %v964 = vpack.c.b16 %v896, %v895
        %v965 = vpack.c.b16 %v898, %v897
        %v966 = vpack.c.b16 %v900, %v899
        %v967 = vpack.c.b16 %v902, %v901
        %v968 = vpack.c.b16 %v904, %v903
        %v969 = vpack.c.b16 %v906, %v905
        %v970 = vpack.c.b16 %v908, %v907
        %v971 = vpack.c.b16 %v910, %v909
        %v972 = vpack.c.b16 %v912, %v911
        %v973 = vpack.c.b16 %v914, %v913
        %v974 = vpack.c.b16 %v916, %v915
        %v975 = vpack.c.b16 %v918, %v917
        %v976 = vpack.c.b16 %v920, %v919
        %1033 = vmatpush.bf16.msra.mxu0 %v928
        %1034 = vmatpush.bf16.msra.mxu0 %v927
        %1035 = vmatpush.bf16.msra.mxu0 %v926
        %1036 = vmatpush.bf16.msra.mxu0 %v925
        %1037 = vmatpush.bf16.msra.mxu0 %v924
        %1038 = vmatpush.bf16.msra.mxu0 %v923
        %1039 = vmatpush.bf16.msra.mxu0 %v922
        %1040 = vmatpush.bf16.msra.mxu0 %v921
        %1041 = vmatmul.bf16.gmra.mxu0 %v641
        %v1042 = vpop.f32.mrf.mxu0
        %v1043 = vadd.f32 0.0, %v1042
        %v1044 = vpop.f32.mrf.mxu0
        %v1045 = vadd.f32 0.0, %v1044
        %1046 = vmatmul.bf16.gmra.mxu0 %v648
        %v1047 = vpop.f32.mrf.mxu0
        %v1048 = vadd.f32 0.0, %v1047
        %v1049 = vpop.f32.mrf.mxu0
        %v1050 = vadd.f32 0.0, %v1049
        %1051 = vmatmul.bf16.gmra.mxu0 %v655
        %v1052 = vpop.f32.mrf.mxu0
        %v1053 = vadd.f32 0.0, %v1052
        %v1054 = vpop.f32.mrf.mxu0
        %v1055 = vadd.f32 0.0, %v1054
        %1056 = vmatmul.bf16.gmra.mxu0 %v662
        %v1057 = vpop.f32.mrf.mxu0
        %v1058 = vadd.f32 0.0, %v1057
        %v1059 = vpop.f32.mrf.mxu0
        %v1060 = vadd.f32 0.0, %v1059
        %1061 = vdwg.mxu0
        %1062 = vmatpush.bf16.msra.mxu0 %v936
        %1063 = vmatpush.bf16.msra.mxu0 %v935
        %1064 = vmatpush.bf16.msra.mxu0 %v934
        %1065 = vmatpush.bf16.msra.mxu0 %v933
        %1066 = vmatpush.bf16.msra.mxu0 %v932
        %1067 = vmatpush.bf16.msra.mxu0 %v931
        %1068 = vmatpush.bf16.msra.mxu0 %v930
        %1069 = vmatpush.bf16.msra.mxu0 %v929
        %1070 = vmatmul.bf16.gmra.mxu0 %v642
        %v1071 = vpop.f32.mrf.mxu0
        %v1072 = vadd.f32 %v1043, %v1071
        %v1073 = vpop.f32.mrf.mxu0
        %v1074 = vadd.f32 %v1045, %v1073
        %1075 = vmatmul.bf16.gmra.mxu0 %v649
        %v1076 = vpop.f32.mrf.mxu0
        %v1077 = vadd.f32 %v1048, %v1076
        %v1078 = vpop.f32.mrf.mxu0
        %v1079 = vadd.f32 %v1050, %v1078
        %1080 = vmatmul.bf16.gmra.mxu0 %v656
        %v1081 = vpop.f32.mrf.mxu0
        %v1082 = vadd.f32 %v1053, %v1081
        %v1083 = vpop.f32.mrf.mxu0
        %v1084 = vadd.f32 %v1055, %v1083
        %1085 = vmatmul.bf16.gmra.mxu0 %v663
        %v1086 = vpop.f32.mrf.mxu0
        %v1087 = vadd.f32 %v1058, %v1086
        %v1088 = vpop.f32.mrf.mxu0
        %v1089 = vadd.f32 %v1060, %v1088
        %1090 = vdwg.mxu0
        %1091 = vmatpush.bf16.msra.mxu0 %v944
        %1092 = vmatpush.bf16.msra.mxu0 %v943
        %1093 = vmatpush.bf16.msra.mxu0 %v942
        %1094 = vmatpush.bf16.msra.mxu0 %v941
        %1095 = vmatpush.bf16.msra.mxu0 %v940
        %1096 = vmatpush.bf16.msra.mxu0 %v939
        %1097 = vmatpush.bf16.msra.mxu0 %v938
        %1098 = vmatpush.bf16.msra.mxu0 %v937
        %1099 = vmatmul.bf16.gmra.mxu0 %v643
        %v1100 = vpop.f32.mrf.mxu0
        %v1101 = vadd.f32 %v1072, %v1100
        %v1102 = vpop.f32.mrf.mxu0
        %v1103 = vadd.f32 %v1074, %v1102
        %1104 = vmatmul.bf16.gmra.mxu0 %v650
        %v1105 = vpop.f32.mrf.mxu0
        %v1106 = vadd.f32 %v1077, %v1105
        %v1107 = vpop.f32.mrf.mxu0
        %v1108 = vadd.f32 %v1079, %v1107
        %1109 = vmatmul.bf16.gmra.mxu0 %v657
        %v1110 = vpop.f32.mrf.mxu0
        %v1111 = vadd.f32 %v1082, %v1110
        %v1112 = vpop.f32.mrf.mxu0
        %v1113 = vadd.f32 %v1084, %v1112
        %1114 = vmatmul.bf16.gmra.mxu0 %v664
        %v1115 = vpop.f32.mrf.mxu0
        %v1116 = vadd.f32 %v1087, %v1115
        %v1117 = vpop.f32.mrf.mxu0
        %v1118 = vadd.f32 %v1089, %v1117
        %1119 = vdwg.mxu0
        %1120 = vmatpush.bf16.msra.mxu0 %v952
        %1121 = vmatpush.bf16.msra.mxu0 %v951
        %1122 = vmatpush.bf16.msra.mxu0 %v950
        %1123 = vmatpush.bf16.msra.mxu0 %v949
        %1124 = vmatpush.bf16.msra.mxu0 %v948
        %1125 = vmatpush.bf16.msra.mxu0 %v947
        %1126 = vmatpush.bf16.msra.mxu0 %v946
        %1127 = vmatpush.bf16.msra.mxu0 %v945
        %1128 = vmatmul.bf16.gmra.mxu0 %v644
        %v1129 = vpop.f32.mrf.mxu0
        %v1130 = vadd.f32 %v1101, %v1129
        %v1131 = vpop.f32.mrf.mxu0
        %v1132 = vadd.f32 %v1103, %v1131
        %1133 = vmatmul.bf16.gmra.mxu0 %v651
        %v1134 = vpop.f32.mrf.mxu0
        %v1135 = vadd.f32 %v1106, %v1134
        %v1136 = vpop.f32.mrf.mxu0
        %v1137 = vadd.f32 %v1108, %v1136
        %1138 = vmatmul.bf16.gmra.mxu0 %v658
        %v1139 = vpop.f32.mrf.mxu0
        %v1140 = vadd.f32 %v1111, %v1139
        %v1141 = vpop.f32.mrf.mxu0
        %v1142 = vadd.f32 %v1113, %v1141
        %1143 = vmatmul.bf16.gmra.mxu0 %v665
        %v1144 = vpop.f32.mrf.mxu0
        %v1145 = vadd.f32 %v1116, %v1144
        %v1146 = vpop.f32.mrf.mxu0
        %v1147 = vadd.f32 %v1118, %v1146
        %1148 = vdwg.mxu0
        %1149 = vmatpush.bf16.msra.mxu0 %v960
        %1150 = vmatpush.bf16.msra.mxu0 %v959
        %1151 = vmatpush.bf16.msra.mxu0 %v958
        %1152 = vmatpush.bf16.msra.mxu0 %v957
        %1153 = vmatpush.bf16.msra.mxu0 %v956
        %1154 = vmatpush.bf16.msra.mxu0 %v955
        %1155 = vmatpush.bf16.msra.mxu0 %v954
        %1156 = vmatpush.bf16.msra.mxu0 %v953
        %1157 = vmatmul.bf16.gmra.mxu0 %v645
        %v1158 = vpop.f32.mrf.mxu0
        %v1159 = vadd.f32 %v1130, %v1158
        %v1160 = vpop.f32.mrf.mxu0
        %v1161 = vadd.f32 %v1132, %v1160
        %1162 = vmatmul.bf16.gmra.mxu0 %v652
        %v1163 = vpop.f32.mrf.mxu0
        %v1164 = vadd.f32 %v1135, %v1163
        %v1165 = vpop.f32.mrf.mxu0
        %v1166 = vadd.f32 %v1137, %v1165
        %1167 = vmatmul.bf16.gmra.mxu0 %v659
        %v1168 = vpop.f32.mrf.mxu0
        %v1169 = vadd.f32 %v1140, %v1168
        %v1170 = vpop.f32.mrf.mxu0
        %v1171 = vadd.f32 %v1142, %v1170
        %1172 = vmatmul.bf16.gmra.mxu0 %v666
        %v1173 = vpop.f32.mrf.mxu0
        %v1174 = vadd.f32 %v1145, %v1173
        %v1175 = vpop.f32.mrf.mxu0
        %v1176 = vadd.f32 %v1147, %v1175
        %1177 = vdwg.mxu0
        %1178 = vmatpush.bf16.msra.mxu0 %v968
        %1179 = vmatpush.bf16.msra.mxu0 %v967
        %1180 = vmatpush.bf16.msra.mxu0 %v966
        %1181 = vmatpush.bf16.msra.mxu0 %v965
        %1182 = vmatpush.bf16.msra.mxu0 %v964
        %1183 = vmatpush.bf16.msra.mxu0 %v963
        %1184 = vmatpush.bf16.msra.mxu0 %v962
        %1185 = vmatpush.bf16.msra.mxu0 %v961
        %1186 = vmatmul.bf16.gmra.mxu0 %v646
        %v1187 = vpop.f32.mrf.mxu0
        %v1188 = vadd.f32 %v1159, %v1187
        %v1189 = vpop.f32.mrf.mxu0
        %v1190 = vadd.f32 %v1161, %v1189
        %1191 = vmatmul.bf16.gmra.mxu0 %v653
        %v1192 = vpop.f32.mrf.mxu0
        %v1193 = vadd.f32 %v1164, %v1192
        %v1194 = vpop.f32.mrf.mxu0
        %v1195 = vadd.f32 %v1166, %v1194
        %1196 = vmatmul.bf16.gmra.mxu0 %v660
        %v1197 = vpop.f32.mrf.mxu0
        %v1198 = vadd.f32 %v1169, %v1197
        %v1199 = vpop.f32.mrf.mxu0
        %v1200 = vadd.f32 %v1171, %v1199
        %1201 = vmatmul.bf16.gmra.mxu0 %v667
        %v1202 = vpop.f32.mrf.mxu0
        %v1203 = vadd.f32 %v1174, %v1202
        %v1204 = vpop.f32.mrf.mxu0
        %v1205 = vadd.f32 %v1176, %v1204
        %1206 = vdwg.mxu0
        %1207 = vmatpush.bf16.msra.mxu0 %v976
        %1208 = vmatpush.bf16.msra.mxu0 %v975
        %1209 = vmatpush.bf16.msra.mxu0 %v974
        %1210 = vmatpush.bf16.msra.mxu0 %v973
        %1211 = vmatpush.bf16.msra.mxu0 %v972
        %1212 = vmatpush.bf16.msra.mxu0 %v971
        %1213 = vmatpush.bf16.msra.mxu0 %v970
        %1214 = vmatpush.bf16.msra.mxu0 %v969
        %1215 = vmatmul.bf16.gmra.mxu0 %v647
        %v1216 = vpop.f32.mrf.mxu0
        %v1217 = vadd.f32 %v1188, %v1216
        %v1218 = vpop.f32.mrf.mxu0
        %v1219 = vadd.f32 %v1190, %v1218
        %1220 = vmatmul.bf16.gmra.mxu0 %v654
        %v1221 = vpop.f32.mrf.mxu0
        %v1222 = vadd.f32 %v1193, %v1221
        %v1223 = vpop.f32.mrf.mxu0
        %v1224 = vadd.f32 %v1195, %v1223
        %1225 = vmatmul.bf16.gmra.mxu0 %v661
        %v1226 = vpop.f32.mrf.mxu0
        %v1227 = vadd.f32 %v1198, %v1226
        %v1228 = vpop.f32.mrf.mxu0
        %v1229 = vadd.f32 %v1200, %v1228
        %1230 = vmatmul.bf16.gmra.mxu0 %v668
        %v1231 = vpop.f32.mrf.mxu0
        %v1232 = vadd.f32 %v1203, %v1231
        %v1233 = vpop.f32.mrf.mxu0
        %v1234 = vadd.f32 %v1205, %v1233
        %1235 = vdwg.mxu0
        %v1236 = vld [vmem:[%s2] sm:$0x1]
        %v1238 = vperm.slane %v1236, 0
        %v1240 = vmul.f32 %v1217, %v1238
        %v1241 = vmul.f32 %v1219, %v1238
        %v1242 = vmul.f32 %v1222, %v1238
        %v1243 = vmul.f32 %v1224, %v1238
        %v1244 = vmul.f32 %v1227, %v1238
        %v1245 = vmul.f32 %v1229, %v1238
        %v1246 = vmul.f32 %v1232, %v1238
        %v1247 = vmul.f32 %v1234, %v1238
        %v1248 = vld [vmem:[%s3] sm:$0x1]
        %v1250 = vperm.slane %v1248, 0
        %v1252 = vadd.f32 %v1240, %v1250
        %v1253 = vadd.f32 %v1241, %v1250
        %v1254 = vadd.f32 %v1242, %v1250
        %v1255 = vadd.f32 %v1243, %v1250
        %v1256 = vadd.f32 %v1244, %v1250
        %v1257 = vadd.f32 %v1245, %v1250
        %v1258 = vadd.f32 %v1246, %v1250
        %v1259 = vadd.f32 %v1247, %v1250
        %v1260 = vmax.f32 %v1252, 0.0
        %v1261 = vmax.f32 %v1253, 0.0
        %v1262 = vmax.f32 %v1254, 0.0
        %v1263 = vmax.f32 %v1255, 0.0
        %v1264 = vmax.f32 %v1256, 0.0
        %v1265 = vmax.f32 %v1257, 0.0
        %v1266 = vmax.f32 %v1258, 0.0
        %v1267 = vmax.f32 %v1259, 0.0
        %v1268 = vpack.c.bf16 %v1260, %v1260
        %v1269 = vpack.c.bf16 %v1261, %v1261
        %v1270 = vpack.c.bf16 %v1262, %v1262
        %v1271 = vpack.c.bf16 %v1263, %v1263
        %v1272 = vpack.c.bf16 %v1264, %v1264
        %v1273 = vpack.c.bf16 %v1265, %v1265
        %v1274 = vpack.c.bf16 %v1266, %v1266
        %v1275 = vpack.c.bf16 %v1267, %v1267
        %v1285 = vunpack.c.l.b16 0
        %v1286 = vunpack.c.l.b16 %v1268
        %v1287 = vunpack.c.l.b16 %v1269
        %v1288 = vunpack.c.l.b16 %v1270
        %v1289 = vunpack.c.l.b16 %v1271
        %v1290 = vunpack.c.l.b16 %v1272
        %v1291 = vunpack.c.l.b16 %v1273
        %v1292 = vunpack.c.l.b16 %v1274
        %v1293 = vunpack.c.l.b16 %v1275
        %v1294 = vld [vmem:[#allocation2] sm:$0xf]
        %v1295 = vld [vmem:[#allocation2 + $0x4] sm:$0xf]
        %v1296 = vld [vmem:[#allocation2 + $0x8] sm:$0xf]
        %v1297 = vld [vmem:[#allocation2 + $0xc] sm:$0xf]
        %v1298 = vld [vmem:[#allocation2 + $0x10] sm:$0xf]
        %v1299 = vld [vmem:[#allocation2 + $0x14] sm:$0xf]
        %v1300 = vld [vmem:[#allocation2 + $0x18] sm:$0xf]
        %v1301 = vld [vmem:[#allocation2 + $0x1c] sm:$0xf]
        %v1302 = vld [vmem:[#allocation2 + $0x20] sm:$0xf]
        %v1303 = vld [vmem:[#allocation2 + $0x24] sm:$0xf]
        %v1304 = vld [vmem:[#allocation2 + $0x28] sm:$0xf]
        %v1305 = vld [vmem:[#allocation2 + $0x2c] sm:$0xf]
        %v1306 = vld [vmem:[#allocation2 + $0x30] sm:$0xf]
        %v1307 = vld [vmem:[#allocation2 + $0x34] sm:$0xf]
        %v1308 = vld [vmem:[#allocation2 + $0x38] sm:$0xf]
        %v1309 = vld [vmem:[#allocation2 + $0x3c] sm:$0xf]
        %v1310 = vld [vmem:[#allocation2 + $0x40] sm:$0xf]
        %v1311 = vld [vmem:[#allocation2 + $0x44] sm:$0xf]
        %v1312 = vld [vmem:[#allocation2 + $0x48] sm:$0xf]
        %v1313 = vld [vmem:[#allocation2 + $0x4c] sm:$0xf]
        %v1314 = vld [vmem:[#allocation2 + $0x50] sm:$0xf]
        %v1315 = vld [vmem:[#allocation2 + $0x54] sm:$0xf]
        %v1316 = vld [vmem:[#allocation2 + $0x58] sm:$0xf]
        %v1317 = vld [vmem:[#allocation2 + $0x5c] sm:$0xf]
        %v1318 = vld [vmem:[#allocation2 + $0x60] sm:$0xf]
        %v1319 = vld [vmem:[#allocation2 + $0x64] sm:$0xf]
        %v1320 = vld [vmem:[#allocation2 + $0x68] sm:$0xf]
        %v1321 = vld [vmem:[#allocation2 + $0x6c] sm:$0xf]
        %v1322 = vld [vmem:[#allocation2 + $0x70] sm:$0xf]
        %v1323 = vld [vmem:[#allocation2 + $0x74] sm:$0xf]
        %v1324 = vld [vmem:[#allocation2 + $0x78] sm:$0xf]
        %v1325 = vld [vmem:[#allocation2 + $0x7c] sm:$0xf]
        %v1326 = vld [vmem:[#allocation2 + $0x80] sm:$0xf]
        %v1327 = vld [vmem:[#allocation2 + $0x84] sm:$0xf]
        %v1328 = vld [vmem:[#allocation2 + $0x88] sm:$0xf]
        %v1329 = vld [vmem:[#allocation2 + $0x8c] sm:$0xf]
        %v1330 = vld [vmem:[#allocation2 + $0x90] sm:$0xf]
        %v1331 = vld [vmem:[#allocation2 + $0x94] sm:$0xf]
        %v1332 = vld [vmem:[#allocation2 + $0x98] sm:$0xf]
        %v1333 = vld [vmem:[#allocation2 + $0x9c] sm:$0xf]
        %v1334 = vld [vmem:[#allocation2 + $0xa0] sm:$0xf]
        %v1335 = vld [vmem:[#allocation2 + $0xa4] sm:$0xf]
        %v1336 = vld [vmem:[#allocation2 + $0xa8] sm:$0xf]
        %v1337 = vld [vmem:[#allocation2 + $0xac] sm:$0xf]
        %v1338 = vld [vmem:[#allocation2 + $0xb0] sm:$0xf]
        %v1339 = vld [vmem:[#allocation2 + $0xb4] sm:$0xf]
        %v1340 = vld [vmem:[#allocation2 + $0xb8] sm:$0xf]
        %v1341 = vld [vmem:[#allocation2 + $0xbc] sm:$0xf]
        %v1342 = vld [vmem:[#allocation2 + $0xc0] sm:$0xf]
        %v1343 = vld [vmem:[#allocation2 + $0xc4] sm:$0xf]
        %v1344 = vld [vmem:[#allocation2 + $0xc8] sm:$0xf]
        %v1345 = vld [vmem:[#allocation2 + $0xcc] sm:$0xf]
        %v1346 = vld [vmem:[#allocation2 + $0xd0] sm:$0xf]
        %v1347 = vld [vmem:[#allocation2 + $0xd4] sm:$0xf]
        %v1348 = vld [vmem:[#allocation2 + $0xd8] sm:$0xf]
        %v1349 = vld [vmem:[#allocation2 + $0xdc] sm:$0xf]
        %v1350 = vld [vmem:[#allocation2 + $0xe0] sm:$0xf]
        %v1351 = vld [vmem:[#allocation2 + $0xe4] sm:$0xf]
        %v1352 = vld [vmem:[#allocation2 + $0xe8] sm:$0xf]
        %v1353 = vld [vmem:[#allocation2 + $0xec] sm:$0xf]
        %v1354 = vld [vmem:[#allocation2 + $0xf0] sm:$0xf]
        %v1355 = vld [vmem:[#allocation2 + $0xf4] sm:$0xf]
        %v1356 = vld [vmem:[#allocation2 + $0xf8] sm:$0xf]
        %v1357 = vld [vmem:[#allocation2 + $0xfc] sm:$0xf]
        %v1358 = vld [vmem:[#allocation2 + $0x100] sm:$0xf]
        %v1359 = vld [vmem:[#allocation2 + $0x104] sm:$0xf]
        %v1360 = vld [vmem:[#allocation2 + $0x108] sm:$0xf]
        %v1361 = vld [vmem:[#allocation2 + $0x10c] sm:$0xf]
        %v1362 = vld [vmem:[#allocation2 + $0x110] sm:$0xf]
        %v1363 = vld [vmem:[#allocation2 + $0x114] sm:$0xf]
        %v1364 = vld [vmem:[#allocation2 + $0x118] sm:$0xf]
        %v1365 = vld [vmem:[#allocation2 + $0x11c] sm:$0xf]
        %v1366 = vld [vmem:[#allocation2 + $0x120] sm:$0xf]
        %v1367 = vld [vmem:[#allocation2 + $0x124] sm:$0xf]
        %v1368 = vld [vmem:[#allocation2 + $0x128] sm:$0xf]
        %v1369 = vld [vmem:[#allocation2 + $0x12c] sm:$0xf]
        %v1370 = vld [vmem:[#allocation2 + $0x130] sm:$0xf]
        %v1371 = vld [vmem:[#allocation2 + $0x134] sm:$0xf]
        %v1372 = vld [vmem:[#allocation2 + $0x138] sm:$0xf]
        %v1373 = vld [vmem:[#allocation2 + $0x13c] sm:$0xf]
        %v1374 = vld [vmem:[#allocation2 + $0x140] sm:$0xf]
        %v1375 = vld [vmem:[#allocation2 + $0x144] sm:$0xf]
        %v1376 = vld [vmem:[#allocation2 + $0x148] sm:$0xf]
        %v1377 = vld [vmem:[#allocation2 + $0x14c] sm:$0xf]
        %v1378 = vld [vmem:[#allocation2 + $0x150] sm:$0xf]
        %v1379 = vld [vmem:[#allocation2 + $0x154] sm:$0xf]
        %v1380 = vld [vmem:[#allocation2 + $0x158] sm:$0xf]
        %v1381 = vld [vmem:[#allocation2 + $0x15c] sm:$0xf]
        %v1382 = vld [vmem:[#allocation2 + $0x160] sm:$0xf]
        %v1383 = vld [vmem:[#allocation2 + $0x164] sm:$0xf]
        %v1384 = vld [vmem:[#allocation2 + $0x168] sm:$0xf]
        %v1385 = vld [vmem:[#allocation2 + $0x16c] sm:$0xf]
        %v1386 = vld [vmem:[#allocation2 + $0x170] sm:$0xf]
        %v1387 = vld [vmem:[#allocation2 + $0x174] sm:$0xf]
        %v1388 = vld [vmem:[#allocation2 + $0x178] sm:$0xf]
        %v1389 = vld [vmem:[#allocation2 + $0x17c] sm:$0xf]
        %v1390 = vld [vmem:[#allocation2 + $0x180] sm:$0xf]
        %v1391 = vld [vmem:[#allocation2 + $0x184] sm:$0xf]
        %v1392 = vld [vmem:[#allocation2 + $0x188] sm:$0xf]
        %v1393 = vld [vmem:[#allocation2 + $0x18c] sm:$0xf]
        %v1394 = vld [vmem:[#allocation2 + $0x190] sm:$0xf]
        %v1395 = vld [vmem:[#allocation2 + $0x194] sm:$0xf]
        %v1396 = vld [vmem:[#allocation2 + $0x198] sm:$0xf]
        %v1397 = vld [vmem:[#allocation2 + $0x19c] sm:$0xf]
        %v1398 = vld [vmem:[#allocation2 + $0x1a0] sm:$0xf]
        %v1399 = vld [vmem:[#allocation2 + $0x1a4] sm:$0xf]
        %v1400 = vld [vmem:[#allocation2 + $0x1a8] sm:$0xf]
        %v1401 = vld [vmem:[#allocation2 + $0x1ac] sm:$0xf]
        %v1402 = vld [vmem:[#allocation2 + $0x1b0] sm:$0xf]
        %v1403 = vld [vmem:[#allocation2 + $0x1b4] sm:$0xf]
        %v1404 = vld [vmem:[#allocation2 + $0x1b8] sm:$0xf]
        %v1405 = vld [vmem:[#allocation2 + $0x1bc] sm:$0xf]
        %v1406 = vpack.c.b16 %v1285, %v1285
        %v1407 = vpack.c.b16 %v1286, %v1285
        %v1408 = vpack.c.b16 %v1287, %v1286
        %v1409 = vpack.c.b16 %v1288, %v1287
        %v1410 = vpack.c.b16 %v1289, %v1288
        %v1411 = vpack.c.b16 %v1290, %v1289
        %v1412 = vpack.c.b16 %v1291, %v1290
        %v1413 = vpack.c.b16 %v1292, %v1291
        %v1414 = vpack.c.b16 %v1293, %v1292
        %v1415 = vpack.c.b16 %v1285, %v1293
        %v1538 = vunpack.c.l.b16 %v1294
        %v1539 = vunpack.c.l.b16 %v1295
        %v1540 = vunpack.c.l.b16 %v1296
        %v1541 = vunpack.c.l.b16 %v1297
        %v1542 = vunpack.c.l.b16 %v1298
        %v1543 = vunpack.c.l.b16 %v1299
        %v1544 = vunpack.c.l.b16 %v1300
        %v1545 = vunpack.c.l.b16 %v1301
        %v1546 = vunpack.c.l.b16 %v1302
        %v1547 = vunpack.c.l.b16 %v1303
        %v1548 = vunpack.c.l.b16 %v1304
        %v1549 = vunpack.c.l.b16 %v1305
        %v1550 = vunpack.c.l.b16 %v1306
        %v1551 = vunpack.c.l.b16 %v1307
        %v1552 = vunpack.c.l.b16 %v1308
        %v1553 = vunpack.c.l.b16 %v1309
        %v1554 = vunpack.c.l.b16 %v1310
        %v1555 = vunpack.c.l.b16 %v1311
        %v1556 = vunpack.c.l.b16 %v1312
        %v1557 = vunpack.c.l.b16 %v1313
        %v1558 = vunpack.c.l.b16 %v1314
        %v1559 = vunpack.c.l.b16 %v1315
        %v1560 = vunpack.c.l.b16 %v1316
        %v1561 = vunpack.c.l.b16 %v1317
        %v1562 = vunpack.c.l.b16 %v1318
        %v1563 = vunpack.c.l.b16 %v1319
        %v1564 = vunpack.c.l.b16 %v1320
        %v1565 = vunpack.c.l.b16 %v1321
        %v1566 = vunpack.c.l.b16 %v1322
        %v1567 = vunpack.c.l.b16 %v1323
        %v1568 = vunpack.c.l.b16 %v1324
        %v1569 = vunpack.c.l.b16 %v1325
        %v1570 = vunpack.c.l.b16 %v1326
        %v1571 = vunpack.c.l.b16 %v1327
        %v1572 = vunpack.c.l.b16 %v1328
        %v1573 = vunpack.c.l.b16 %v1329
        %v1574 = vunpack.c.l.b16 %v1330
        %v1575 = vunpack.c.l.b16 %v1331
        %v1576 = vunpack.c.l.b16 %v1332
        %v1577 = vunpack.c.l.b16 %v1333
        %v1578 = vunpack.c.l.b16 %v1334
        %v1579 = vunpack.c.l.b16 %v1335
        %v1580 = vunpack.c.l.b16 %v1336
        %v1581 = vunpack.c.l.b16 %v1337
        %v1582 = vunpack.c.l.b16 %v1338
        %v1583 = vunpack.c.l.b16 %v1339
        %v1584 = vunpack.c.l.b16 %v1340
        %v1585 = vunpack.c.l.b16 %v1341
        %v1586 = vunpack.c.l.b16 %v1342
        %v1587 = vunpack.c.l.b16 %v1343
        %v1588 = vunpack.c.l.b16 %v1344
        %v1589 = vunpack.c.l.b16 %v1345
        %v1590 = vunpack.c.l.b16 %v1346
        %v1591 = vunpack.c.l.b16 %v1347
        %v1592 = vunpack.c.l.b16 %v1348
        %v1593 = vunpack.c.l.b16 %v1349
        %v1594 = vunpack.c.l.b16 %v1350
        %v1595 = vunpack.c.l.b16 %v1351
        %v1596 = vunpack.c.l.b16 %v1352
        %v1597 = vunpack.c.l.b16 %v1353
        %v1598 = vunpack.c.l.b16 %v1354
        %v1599 = vunpack.c.l.b16 %v1355
        %v1600 = vunpack.c.l.b16 %v1356
        %v1601 = vunpack.c.l.b16 %v1357
        %v1602 = vunpack.c.l.b16 %v1358
        %v1603 = vunpack.c.l.b16 %v1359
        %v1604 = vunpack.c.l.b16 %v1360
        %v1605 = vunpack.c.l.b16 %v1361
        %v1606 = vunpack.c.l.b16 %v1362
        %v1607 = vunpack.c.l.b16 %v1363
        %v1608 = vunpack.c.l.b16 %v1364
        %v1609 = vunpack.c.l.b16 %v1365
        %v1610 = vunpack.c.l.b16 %v1366
        %v1611 = vunpack.c.l.b16 %v1367
        %v1612 = vunpack.c.l.b16 %v1368
        %v1613 = vunpack.c.l.b16 %v1369
        %v1614 = vunpack.c.l.b16 %v1370
        %v1615 = vunpack.c.l.b16 %v1371
        %v1616 = vunpack.c.l.b16 %v1372
        %v1617 = vunpack.c.l.b16 %v1373
        %v1618 = vunpack.c.l.b16 %v1374
        %v1619 = vunpack.c.l.b16 %v1375
        %v1620 = vunpack.c.l.b16 %v1376
        %v1621 = vunpack.c.l.b16 %v1377
        %v1622 = vunpack.c.l.b16 %v1378
        %v1623 = vunpack.c.l.b16 %v1379
        %v1624 = vunpack.c.l.b16 %v1380
        %v1625 = vunpack.c.l.b16 %v1381
        %v1626 = vunpack.c.l.b16 %v1382
        %v1627 = vunpack.c.l.b16 %v1383
        %v1628 = vunpack.c.l.b16 %v1384
        %v1629 = vunpack.c.l.b16 %v1385
        %v1630 = vunpack.c.l.b16 %v1386
        %v1631 = vunpack.c.l.b16 %v1387
        %v1632 = vunpack.c.l.b16 %v1388
        %v1633 = vunpack.c.l.b16 %v1389
        %v1634 = vunpack.c.l.b16 %v1390
        %v1635 = vunpack.c.l.b16 %v1391
        %v1636 = vunpack.c.l.b16 %v1392
        %v1637 = vunpack.c.l.b16 %v1393
        %v1638 = vunpack.c.l.b16 %v1394
        %v1639 = vunpack.c.l.b16 %v1395
        %v1640 = vunpack.c.l.b16 %v1396
        %v1641 = vunpack.c.l.b16 %v1397
        %v1642 = vunpack.c.l.b16 %v1398
        %v1643 = vunpack.c.l.b16 %v1399
        %v1644 = vunpack.c.l.b16 %v1400
        %v1645 = vunpack.c.l.b16 %v1401
        %v1646 = vunpack.c.l.b16 %v1402
        %v1647 = vunpack.c.l.b16 %v1403
        %v1648 = vunpack.c.l.b16 %v1404
        %v1649 = vunpack.c.l.b16 %v1405
        %v1650 = vpack.c.b16 %v1539, %v1538
        %v1651 = vpack.c.b16 %v1541, %v1540
        %v1652 = vpack.c.b16 %v1543, %v1542
        %v1653 = vpack.c.b16 %v1545, %v1544
        %v1654 = vpack.c.b16 %v1547, %v1546
        %v1655 = vpack.c.b16 %v1549, %v1548
        %v1656 = vpack.c.b16 %v1551, %v1550
        %v1657 = vpack.c.b16 %v1553, %v1552
        %v1658 = vpack.c.b16 %v1555, %v1554
        %v1659 = vpack.c.b16 %v1557, %v1556
        %v1660 = vpack.c.b16 %v1559, %v1558
        %v1661 = vpack.c.b16 %v1561, %v1560
        %v1662 = vpack.c.b16 %v1563, %v1562
        %v1663 = vpack.c.b16 %v1565, %v1564
        %v1664 = vpack.c.b16 %v1567, %v1566
        %v1665 = vpack.c.b16 %v1569, %v1568
        %v1666 = vpack.c.b16 %v1571, %v1570
        %v1667 = vpack.c.b16 %v1573, %v1572
        %v1668 = vpack.c.b16 %v1575, %v1574
        %v1669 = vpack.c.b16 %v1577, %v1576
        %v1670 = vpack.c.b16 %v1579, %v1578
        %v1671 = vpack.c.b16 %v1581, %v1580
        %v1672 = vpack.c.b16 %v1583, %v1582
        %v1673 = vpack.c.b16 %v1585, %v1584
        %v1674 = vpack.c.b16 %v1587, %v1586
        %v1675 = vpack.c.b16 %v1589, %v1588
        %v1676 = vpack.c.b16 %v1591, %v1590
        %v1677 = vpack.c.b16 %v1593, %v1592
        %v1678 = vpack.c.b16 %v1595, %v1594
        %v1679 = vpack.c.b16 %v1597, %v1596
        %v1680 = vpack.c.b16 %v1599, %v1598
        %v1681 = vpack.c.b16 %v1601, %v1600
        %v1682 = vpack.c.b16 %v1603, %v1602
        %v1683 = vpack.c.b16 %v1605, %v1604
        %v1684 = vpack.c.b16 %v1607, %v1606
        %v1685 = vpack.c.b16 %v1609, %v1608
        %v1686 = vpack.c.b16 %v1611, %v1610
        %v1687 = vpack.c.b16 %v1613, %v1612
        %v1688 = vpack.c.b16 %v1615, %v1614
        %v1689 = vpack.c.b16 %v1617, %v1616
        %v1690 = vpack.c.b16 %v1619, %v1618
        %v1691 = vpack.c.b16 %v1621, %v1620
        %v1692 = vpack.c.b16 %v1623, %v1622
        %v1693 = vpack.c.b16 %v1625, %v1624
        %v1694 = vpack.c.b16 %v1627, %v1626
        %v1695 = vpack.c.b16 %v1629, %v1628
        %v1696 = vpack.c.b16 %v1631, %v1630
        %v1697 = vpack.c.b16 %v1633, %v1632
        %v1698 = vpack.c.b16 %v1635, %v1634
        %v1699 = vpack.c.b16 %v1637, %v1636
        %v1700 = vpack.c.b16 %v1639, %v1638
        %v1701 = vpack.c.b16 %v1641, %v1640
        %v1702 = vpack.c.b16 %v1643, %v1642
        %v1703 = vpack.c.b16 %v1645, %v1644
        %v1704 = vpack.c.b16 %v1647, %v1646
        %v1705 = vpack.c.b16 %v1649, %v1648
        %1762 = vmatpush.bf16.msra.mxu0 %v1657
        %1763 = vmatpush.bf16.msra.mxu0 %v1656
        %1764 = vmatpush.bf16.msra.mxu0 %v1655
        %1765 = vmatpush.bf16.msra.mxu0 %v1654
        %1766 = vmatpush.bf16.msra.mxu0 %v1653
        %1767 = vmatpush.bf16.msra.mxu0 %v1652
        %1768 = vmatpush.bf16.msra.mxu0 %v1651
        %1769 = vmatpush.bf16.msra.mxu0 %v1650
        %1770 = vmatmul.bf16.gmra.mxu0 %v1406
        %v1771 = vpop.f32.mrf.mxu0
        %v1772 = vadd.f32 0.0, %v1771
        %v1773 = vpop.f32.mrf.mxu0
        %v1774 = vadd.f32 0.0, %v1773
        %1775 = vmatmul.bf16.gmra.mxu0 %v1407
        %v1776 = vpop.f32.mrf.mxu0
        %v1777 = vadd.f32 0.0, %v1776
        %v1778 = vpop.f32.mrf.mxu0
        %v1779 = vadd.f32 0.0, %v1778
        %1780 = vmatmul.bf16.gmra.mxu0 %v1409
        %v1781 = vpop.f32.mrf.mxu0
        %v1782 = vadd.f32 0.0, %v1781
        %v1783 = vpop.f32.mrf.mxu0
        %v1784 = vadd.f32 0.0, %v1783
        %1785 = vmatmul.bf16.gmra.mxu0 %v1411
        %v1786 = vpop.f32.mrf.mxu0
        %v1787 = vadd.f32 0.0, %v1786
        %v1788 = vpop.f32.mrf.mxu0
        %v1789 = vadd.f32 0.0, %v1788
        %1790 = vdwg.mxu0
        %1791 = vmatpush.bf16.msra.mxu0 %v1665
        %1792 = vmatpush.bf16.msra.mxu0 %v1664
        %1793 = vmatpush.bf16.msra.mxu0 %v1663
        %1794 = vmatpush.bf16.msra.mxu0 %v1662
        %1795 = vmatpush.bf16.msra.mxu0 %v1661
        %1796 = vmatpush.bf16.msra.mxu0 %v1660
        %1797 = vmatpush.bf16.msra.mxu0 %v1659
        %1798 = vmatpush.bf16.msra.mxu0 %v1658
        %1799 = vmatmul.bf16.gmra.mxu0 %v1406
        %v1800 = vpop.f32.mrf.mxu0
        %v1801 = vadd.f32 %v1772, %v1800
        %v1802 = vpop.f32.mrf.mxu0
        %v1803 = vadd.f32 %v1774, %v1802
        %1804 = vmatmul.bf16.gmra.mxu0 %v1408
        %v1805 = vpop.f32.mrf.mxu0
        %v1806 = vadd.f32 %v1777, %v1805
        %v1807 = vpop.f32.mrf.mxu0
        %v1808 = vadd.f32 %v1779, %v1807
        %1809 = vmatmul.bf16.gmra.mxu0 %v1410
        %v1810 = vpop.f32.mrf.mxu0
        %v1811 = vadd.f32 %v1782, %v1810
        %v1812 = vpop.f32.mrf.mxu0
        %v1813 = vadd.f32 %v1784, %v1812
        %1814 = vmatmul.bf16.gmra.mxu0 %v1412
        %v1815 = vpop.f32.mrf.mxu0
        %v1816 = vadd.f32 %v1787, %v1815
        %v1817 = vpop.f32.mrf.mxu0
        %v1818 = vadd.f32 %v1789, %v1817
        %1819 = vdwg.mxu0
        %1820 = vmatpush.bf16.msra.mxu0 %v1673
        %1821 = vmatpush.bf16.msra.mxu0 %v1672
        %1822 = vmatpush.bf16.msra.mxu0 %v1671
        %1823 = vmatpush.bf16.msra.mxu0 %v1670
        %1824 = vmatpush.bf16.msra.mxu0 %v1669
        %1825 = vmatpush.bf16.msra.mxu0 %v1668
        %1826 = vmatpush.bf16.msra.mxu0 %v1667
        %1827 = vmatpush.bf16.msra.mxu0 %v1666
        %1828 = vmatmul.bf16.gmra.mxu0 %v1407
        %v1829 = vpop.f32.mrf.mxu0
        %v1830 = vadd.f32 %v1801, %v1829
        %v1831 = vpop.f32.mrf.mxu0
        %v1832 = vadd.f32 %v1803, %v1831
        %1833 = vmatmul.bf16.gmra.mxu0 %v1409
        %v1834 = vpop.f32.mrf.mxu0
        %v1835 = vadd.f32 %v1806, %v1834
        %v1836 = vpop.f32.mrf.mxu0
        %v1837 = vadd.f32 %v1808, %v1836
        %1838 = vmatmul.bf16.gmra.mxu0 %v1411
        %v1839 = vpop.f32.mrf.mxu0
        %v1840 = vadd.f32 %v1811, %v1839
        %v1841 = vpop.f32.mrf.mxu0
        %v1842 = vadd.f32 %v1813, %v1841
        %1843 = vmatmul.bf16.gmra.mxu0 %v1413
        %v1844 = vpop.f32.mrf.mxu0
        %v1845 = vadd.f32 %v1816, %v1844
        %v1846 = vpop.f32.mrf.mxu0
        %v1847 = vadd.f32 %v1818, %v1846
        %1848 = vdwg.mxu0
        %1849 = vmatpush.bf16.msra.mxu0 %v1681
        %1850 = vmatpush.bf16.msra.mxu0 %v1680
        %1851 = vmatpush.bf16.msra.mxu0 %v1679
        %1852 = vmatpush.bf16.msra.mxu0 %v1678
        %1853 = vmatpush.bf16.msra.mxu0 %v1677
        %1854 = vmatpush.bf16.msra.mxu0 %v1676
        %1855 = vmatpush.bf16.msra.mxu0 %v1675
        %1856 = vmatpush.bf16.msra.mxu0 %v1674
        %1857 = vmatmul.bf16.gmra.mxu0 %v1408
        %v1858 = vpop.f32.mrf.mxu0
        %v1859 = vadd.f32 %v1830, %v1858
        %v1860 = vpop.f32.mrf.mxu0
        %v1861 = vadd.f32 %v1832, %v1860
        %1862 = vmatmul.bf16.gmra.mxu0 %v1410
        %v1863 = vpop.f32.mrf.mxu0
        %v1864 = vadd.f32 %v1835, %v1863
        %v1865 = vpop.f32.mrf.mxu0
        %v1866 = vadd.f32 %v1837, %v1865
        %1867 = vmatmul.bf16.gmra.mxu0 %v1412
        %v1868 = vpop.f32.mrf.mxu0
        %v1869 = vadd.f32 %v1840, %v1868
        %v1870 = vpop.f32.mrf.mxu0
        %v1871 = vadd.f32 %v1842, %v1870
        %1872 = vmatmul.bf16.gmra.mxu0 %v1414
        %v1873 = vpop.f32.mrf.mxu0
        %v1874 = vadd.f32 %v1845, %v1873
        %v1875 = vpop.f32.mrf.mxu0
        %v1876 = vadd.f32 %v1847, %v1875
        %1877 = vdwg.mxu0
        %1878 = vmatpush.bf16.msra.mxu0 %v1689
        %1879 = vmatpush.bf16.msra.mxu0 %v1688
        %1880 = vmatpush.bf16.msra.mxu0 %v1687
        %1881 = vmatpush.bf16.msra.mxu0 %v1686
        %1882 = vmatpush.bf16.msra.mxu0 %v1685
        %1883 = vmatpush.bf16.msra.mxu0 %v1684
        %1884 = vmatpush.bf16.msra.mxu0 %v1683
        %1885 = vmatpush.bf16.msra.mxu0 %v1682
        %1886 = vmatmul.bf16.gmra.mxu0 %v1409
        %v1887 = vpop.f32.mrf.mxu0
        %v1888 = vadd.f32 %v1859, %v1887
        %v1889 = vpop.f32.mrf.mxu0
        %v1890 = vadd.f32 %v1861, %v1889
        %1891 = vmatmul.bf16.gmra.mxu0 %v1411
        %v1892 = vpop.f32.mrf.mxu0
        %v1893 = vadd.f32 %v1864, %v1892
        %v1894 = vpop.f32.mrf.mxu0
        %v1895 = vadd.f32 %v1866, %v1894
        %1896 = vmatmul.bf16.gmra.mxu0 %v1413
        %v1897 = vpop.f32.mrf.mxu0
        %v1898 = vadd.f32 %v1869, %v1897
        %v1899 = vpop.f32.mrf.mxu0
        %v1900 = vadd.f32 %v1871, %v1899
        %1901 = vmatmul.bf16.gmra.mxu0 %v1415
        %v1902 = vpop.f32.mrf.mxu0
        %v1903 = vadd.f32 %v1874, %v1902
        %v1904 = vpop.f32.mrf.mxu0
        %v1905 = vadd.f32 %v1876, %v1904
        %1906 = vdwg.mxu0
        %1907 = vmatpush.bf16.msra.mxu0 %v1697
        %1908 = vmatpush.bf16.msra.mxu0 %v1696
        %1909 = vmatpush.bf16.msra.mxu0 %v1695
        %1910 = vmatpush.bf16.msra.mxu0 %v1694
        %1911 = vmatpush.bf16.msra.mxu0 %v1693
        %1912 = vmatpush.bf16.msra.mxu0 %v1692
        %1913 = vmatpush.bf16.msra.mxu0 %v1691
        %1914 = vmatpush.bf16.msra.mxu0 %v1690
        %1915 = vmatmul.bf16.gmra.mxu0 %v1410
        %v1916 = vpop.f32.mrf.mxu0
        %v1917 = vadd.f32 %v1888, %v1916
        %v1918 = vpop.f32.mrf.mxu0
        %v1919 = vadd.f32 %v1890, %v1918
        %1920 = vmatmul.bf16.gmra.mxu0 %v1412
        %v1921 = vpop.f32.mrf.mxu0
        %v1922 = vadd.f32 %v1893, %v1921
        %v1923 = vpop.f32.mrf.mxu0
        %v1924 = vadd.f32 %v1895, %v1923
        %1925 = vmatmul.bf16.gmra.mxu0 %v1414
        %v1926 = vpop.f32.mrf.mxu0
        %v1927 = vadd.f32 %v1898, %v1926
        %v1928 = vpop.f32.mrf.mxu0
        %v1929 = vadd.f32 %v1900, %v1928
        %1930 = vmatmul.bf16.gmra.mxu0 %v1406
        %v1931 = vpop.f32.mrf.mxu0
        %v1932 = vadd.f32 %v1903, %v1931
        %v1933 = vpop.f32.mrf.mxu0
        %v1934 = vadd.f32 %v1905, %v1933
        %1935 = vdwg.mxu0
        %1936 = vmatpush.bf16.msra.mxu0 %v1705
        %1937 = vmatpush.bf16.msra.mxu0 %v1704
        %1938 = vmatpush.bf16.msra.mxu0 %v1703
        %1939 = vmatpush.bf16.msra.mxu0 %v1702
        %1940 = vmatpush.bf16.msra.mxu0 %v1701
        %1941 = vmatpush.bf16.msra.mxu0 %v1700
        %1942 = vmatpush.bf16.msra.mxu0 %v1699
        %1943 = vmatpush.bf16.msra.mxu0 %v1698
        %1944 = vmatmul.bf16.gmra.mxu0 %v1411
        %v1945 = vpop.f32.mrf.mxu0
        %v1946 = vadd.f32 %v1917, %v1945
        %v1947 = vpop.f32.mrf.mxu0
        %v1948 = vadd.f32 %v1919, %v1947
        %1949 = vmatmul.bf16.gmra.mxu0 %v1413
        %v1950 = vpop.f32.mrf.mxu0
        %v1951 = vadd.f32 %v1922, %v1950
        %v1952 = vpop.f32.mrf.mxu0
        %v1953 = vadd.f32 %v1924, %v1952
        %1954 = vmatmul.bf16.gmra.mxu0 %v1415
        %v1955 = vpop.f32.mrf.mxu0
        %v1956 = vadd.f32 %v1927, %v1955
        %v1957 = vpop.f32.mrf.mxu0
        %v1958 = vadd.f32 %v1929, %v1957
        %1959 = vmatmul.bf16.gmra.mxu0 %v1406
        %v1960 = vpop.f32.mrf.mxu0
        %v1961 = vadd.f32 %v1932, %v1960
        %v1962 = vpop.f32.mrf.mxu0
        %v1963 = vadd.f32 %v1934, %v1962
        %1964 = vdwg.mxu0
        %v1965 = vld [vmem:[%s5] sm:$0x1]
        %v1967 = vperm.slane %v1965, 0
        %v1969 = vmul.f32 %v1946, %v1967
        %v1970 = vmul.f32 %v1948, %v1967
        %v1971 = vmul.f32 %v1951, %v1967
        %v1972 = vmul.f32 %v1953, %v1967
        %v1973 = vmul.f32 %v1956, %v1967
        %v1974 = vmul.f32 %v1958, %v1967
        %v1975 = vmul.f32 %v1961, %v1967
        %v1976 = vmul.f32 %v1963, %v1967
        %v1977 = vld [vmem:[%s6] sm:$0x1]
        %v1979 = vperm.slane %v1977, 0
        %v1981 = vadd.f32 %v1969, %v1979
        %v1982 = vadd.f32 %v1970, %v1979
        %v1983 = vadd.f32 %v1971, %v1979
        %v1984 = vadd.f32 %v1972, %v1979
        %v1985 = vadd.f32 %v1973, %v1979
        %v1986 = vadd.f32 %v1974, %v1979
        %v1987 = vadd.f32 %v1975, %v1979
        %v1988 = vadd.f32 %v1976, %v1979
        %v1989 = vmax.f32 %v1981, 0.0
        %v1990 = vmax.f32 %v1982, 0.0
        %v1991 = vmax.f32 %v1983, 0.0
        %v1992 = vmax.f32 %v1984, 0.0
        %v1993 = vmax.f32 %v1985, 0.0
        %v1994 = vmax.f32 %v1986, 0.0
        %v1995 = vmax.f32 %v1987, 0.0
        %v1996 = vmax.f32 %v1988, 0.0
        %v1997 = vpack.c.bf16 %v1989, %v1989
        %v1998 = vpack.c.bf16 %v1990, %v1990
        %v1999 = vpack.c.bf16 %v1991, %v1991
        %v2000 = vpack.c.bf16 %v1992, %v1992
        %v2001 = vpack.c.bf16 %v1993, %v1993
        %v2002 = vpack.c.bf16 %v1994, %v1994
        %v2003 = vpack.c.bf16 %v1995, %v1995
        %v2004 = vpack.c.bf16 %v1996, %v1996
        %2005 = vst [vmem:[%s295] sm:$0xf] %v1997
        %2006 = vst [vmem:[%s295 + $0x4] sm:$0xf] %v1998
        %2007 = vst [vmem:[%s295 + $0x8] sm:$0xf] %v1999
        %2008 = vst [vmem:[%s295 + $0xc] sm:$0xf] %v2000
        %2009 = vst [vmem:[%s295 + $0x10] sm:$0xf] %v2001
        %2010 = vst [vmem:[%s295 + $0x14] sm:$0xf] %v2002
        %2011 = vst [vmem:[%s295 + $0x18] sm:$0xf] %v2003
        %2012 = vst [vmem:[%s295 + $0x1c] sm:$0xf] %v2004
        %p2013 = scmp.lt.s32.totalorder %s19, 1
        %s2014 = scalar_select %p2013, %s19, 1
        %s2015 = smul.addr %s2014, 8
        %s2016 = smul.addr %s2015, 4
        %s2017 = scalar_lea.vmem %s7, %s2016
        // Predicated region
        $region53: #{block17_pallas.4} parent=47 // pred_check
          %p2018 = pneg %p189
        $region54: #{block17_pallas.4} parent=47 // pred_check_branch
          %2020 = sbr.rel (%p2018) target = $region56
        $region55: #{block17_pallas.4} parent=47 // pred_region
          _
        $region56: #{block17_pallas.4} parent=47 // pred_fallthru
          _
      $region48: #{block17_pallas.4} parent=5 // pred_fallthru
        _
      %p2021 = scmp.le.s32.totalorder 2, %s14
      // Predicated region
      $region57: #{block17_pallas.4} parent=5 // pred_check
        %p2022 = pneg %p2021
      $region58: #{block17_pallas.4} parent=5 // pred_check_branch
        %2024 = sbr.rel (%p2022) target = $region60
      $region59: #{block17_pallas.4} parent=5 // pred_region
        %s2025 = ssub.s32 %s14, 2
        // Predicated region
        $region61: #{block17_pallas.4} parent=59 // pred_check
          %p2026 = pneg %p195
        $region62: #{block17_pallas.4} parent=59 // pred_check_branch
          %2028 = sbr.rel (%p2026) target = $region64
        $region63: #{block17_pallas.4} parent=59 // pred_region
          %p2029 = scmp.lt.s32.totalorder %s20, 1
          %s2030 = scalar_select %p2029, %s20, 1
          %s2031 = smul.addr %s2030, 8
          %s2032 = smul.addr %s2031, 4
          %s2033 = scalar_lea.vmem %s7, %s2032
        $region64: #{block17_pallas.4} parent=59 // pred_fallthru
          _
      $region60: #{block17_pallas.4} parent=5 // pred_fallthru
        _
    $region6: #{block17_pallas.4} parent=1 // loop_footer
      %s18 = sadd.s32 1, %s14
    $region7: #{block17_pallas.4} parent=1 // loop_footer_branch
      %13 = sbr.rel target = $region3
    $region8: #{block17_pallas.4} parent=1 // loop_exit
      _
    %2034 = vsyncpa [#allocation3], 1
    %s2035 = scalar_lea.sflag [#allocation3], 1
    %2036 = vsyncpa %s2035, 1

</llo_original>
